<compile_context>
chip_gen: v5e
topology: v5e:2x2
jax: 0.10.0
libtpu: 0.0.40
codegen_flags: <defaults>
</compile_context>

<pallas_src>
import functools
import math

import jax
import jax.numpy as jnp
from jax import lax
from jax.experimental import pallas as pl
from jax.experimental.pallas import tpu as pltpu


def _round_up(n, m):
    return -(-n // m) * m


def _decoder_kernel(pre_ref, ctx_ref, whh_ref, wh_ref, wc_ref, bout_ref, tbias_ref,
                    pred_ref, attn_ref, *, unroll):
    L, Bp, _ = pre_ref.shape
    H2 = whh_ref.shape[0]
    Ep = wh_ref.shape[1]
    Tp = ctx_ref.shape[1]

    # Grid-invariant operands: loaded once, reused across all L steps.
    ctx = ctx_ref[...]                                    # (Bp, Tp, H2) bf16 listener slab
    whh = whh_ref[...]                                    # (H2, 4*H2)   bf16
    wh = wh_ref[...]                                      # (H2, Ep)     bf16
    wc = wc_ref[...]                                      # (H2, Ep)     bf16
    # Hoisted broadcasts (JAX does not CSE broadcast_in_dim inside the loop).
    bout = jnp.broadcast_to(bout_ref[...], (Bp, Ep))      # f32, padded cols carry -1e30
    tbias = jnp.broadcast_to(tbias_ref[...], (Bp, Tp))    # f32, padded T cols carry -1e30

    def step(i, carry):
        h, c = carry                                      # (Bp, H2) f32 loop-carried state

        # ---- LSTM cell (PyTorch gate order i, f, g, o); input-side gates precomputed. ----
        # NOTE: h/W_hh go through the MXU in bf16 (single cast); cell state stays f32.
        gates = pre_ref[i] + jnp.dot(h.astype(jnp.bfloat16), whh,
                                     preferred_element_type=jnp.float32)  # (Bp, 4*H2) f32
        i_g = jax.nn.sigmoid(gates[:, 0 * H2:1 * H2])
        f_g = jax.nn.sigmoid(gates[:, 1 * H2:2 * H2])
        g_g = jnp.tanh(gates[:, 2 * H2:3 * H2])
        o_g = jax.nn.sigmoid(gates[:, 3 * H2:4 * H2])
        c_new = f_g * c + i_g * g_g                       # f32 cell state
        h_new = o_g * jnp.tanh(c_new)                     # rnn_output.squeeze(1)
        h_bf = h_new.astype(jnp.bfloat16)                 # single bf16 cast, reused 3x

        # ---- Attention: energy = h . ctx^T on the MXU, additive pad bias, exact softmax. ----
        energy = jnp.einsum('bqh,bth->bqt', h_bf[:, None, :], ctx,
                            preferred_element_type=jnp.float32)[:, 0, :] + tbias  # (Bp, Tp)
        m = jnp.max(energy, axis=-1, keepdims=True)
        e = jnp.exp(energy - m)                           # (Bp, Tp) f32, padded cols -> 0
        inv = 1.0 / jnp.sum(e, axis=-1, keepdims=True)    # exact normalization (correctness)
        # Deferred normalization: un-normalized probs feed the MXU; scale result once.
        ctx_un = jnp.einsum('bqt,bth->bqh', e.astype(jnp.bfloat16)[:, None, :], ctx,
                            preferred_element_type=jnp.float32)[:, 0, :]          # (Bp, H2)
        context = ctx_un * inv
        attn_ref[i] = e * inv                             # lane-dense (Bp, Tp) store

        # ---- character_distribution([h_new, context]) + LogSoftmax: two accumulating dots. ----
        logits = (jnp.dot(h_bf, wh, preferred_element_type=jnp.float32)
                  + jnp.dot(context.astype(jnp.bfloat16), wc,
                            preferred_element_type=jnp.float32)
                  + bout)                                 # (Bp, Ep); padded cols ~ -1e30
        lm = jnp.max(logits, axis=-1, keepdims=True)
        z = logits - lm
        lse = jnp.log(jnp.sum(jnp.exp(z), axis=-1, keepdims=True))
        pred_ref[i] = z - lse                             # lane-dense (Bp, Ep) log-prob store

        return h_new, c_new

    # hidden_state=None in the reference -> zero-initialized (h, c), carried in vregs.
    h0 = jnp.zeros((Bp, H2), jnp.float32)
    c0 = jnp.zeros((Bp, H2), jnp.float32)
    lax.fori_loop(0, L, step, (h0, c0), unroll=unroll)


def decoder_forward(params, context_tensor, ground_truth):
    """Runs the full teacher-forced decode loop (L steps) as one Pallas call."""
    B, T, H2 = context_tensor.shape
    L, E = ground_truth.shape[1], ground_truth.shape[2]
    Bp = _round_up(max(B, 8), 8)     # full sublane groups for every vreg / MXU push
    Tp = _round_up(T, 128)           # lane-dense attention output / MXU-friendly N
    Ep = _round_up(E, 128)           # lane-dense prediction output

    # Word fed at step i: one-hot(index 0) at i==0 (CreateOnehotVariable of zeros),
    # else ground_truth[:, i-1, :] (teacher forcing).  Shape (L, B, E).
    word0 = jnp.zeros((1, B, E), jnp.float32).at[:, :, 0].set(1.0)
    words = jnp.concatenate(
        [word0, jnp.transpose(ground_truth[:, :L - 1, :], (1, 0, 2)).astype(jnp.float32)],
        axis=0)

    # Hoisted input-side gate pre-activations for all L steps: one batched matmul here
    # replaces two per-step MXU ops in the recurrence and removes the K=E one-hot matmul.
    ctx0 = context_tensor[:, 0, :]                                     # (B, H2)
    pre_gates = (jnp.einsum('lbe,eg->lbg', words, params["wih_word"])
                 + jnp.dot(ctx0, params["wih_ctx"])[None]
                 + params["b"][None]).astype(jnp.float32)              # (L, B, 4*H2)
    pre_gates = jnp.pad(pre_gates, ((0, 0), (0, Bp - B), (0, 0)))      # (L, Bp, 4*H2)

    # bf16 MXU operands; listener features zero-padded over B (sublanes) and T (lanes).
    ctx_pad = jnp.pad(context_tensor.astype(jnp.bfloat16),
                      ((0, Bp - B), (0, Tp - T), (0, 0)))              # (Bp, Tp, H2)
    whh = params["whh"].astype(jnp.bfloat16)                           # (H2, 4*H2)
    wh = jnp.pad(params["wout_h"], ((0, 0), (0, Ep - E))).astype(jnp.bfloat16)   # (H2, Ep)
    wc = jnp.pad(params["wout_c"], ((0, 0), (0, Ep - E))).astype(jnp.bfloat16)   # (H2, Ep)
    bout = jnp.concatenate(
        [params["bout"].astype(jnp.float32), jnp.full((1, Ep - E), -1e30, jnp.float32)],
        axis=-1)                                                       # (1, Ep)
    tbias = jnp.concatenate(
        [jnp.zeros((1, T), jnp.float32), jnp.full((1, Tp - T), -1e30, jnp.float32)],
        axis=-1)                                                       # (1, Tp)

    kernel_fn = functools.partial(_decoder_kernel, unroll=(L <= 16))

    # Single kernel invocation (no grid): the serial recurrence lives inside the kernel,
    # state is carried in vregs, and all operands stay resident in VMEM (~1.5 MiB here).
    # (On v6e raise vmem_limit_bytes if B/T tiles are enlarged; keep <= ~48 MiB on v7x.)
    preds_p, attn_p = pl.pallas_call(
        kernel_fn,
        out_shape=(jax.ShapeDtypeStruct((L, Bp, Ep), jnp.float32),
                   jax.ShapeDtypeStruct((L, Bp, Tp), jnp.float32)),
        in_specs=[pl.BlockSpec(memory_space=pltpu.MemorySpace.VMEM)] * 7,
        out_specs=(pl.BlockSpec(memory_space=pltpu.MemorySpace.VMEM),
                   pl.BlockSpec(memory_space=pltpu.MemorySpace.VMEM)),
    )(pre_gates, ctx_pad, whh, wh, wc, bout, tbias)

    return preds_p[:, :B, :E], attn_p[:, :B, :T]


def init_params(key, embedding_dim, hidden_dim):
    """Deterministic parameter init mimicking PyTorch default uniform ranges."""
    H2 = 2 * hidden_dim
    in_lstm = embedding_dim + H2
    k = jax.random.split(key, 8)
    kl = 1.0 / math.sqrt(H2)            # LSTM init bound
    ko = 1.0 / math.sqrt(2 * H2)        # Linear(4*hidden -> embedding) init bound
    u = lambda kk, shape, b: jax.random.uniform(kk, shape, jnp.float32, -b, b)
    wih_t = u(k[0], (in_lstm, 4 * H2), kl)          # W_ih^T
    return {
        "wih_word": wih_t[:embedding_dim, :],
        "wih_ctx": wih_t[embedding_dim:, :],
        "whh": u(k[1], (H2, 4 * H2), kl),           # W_hh^T
        "b": u(k[2], (1, 4 * H2), kl) + u(k[3], (1, 4 * H2), kl),   # b_ih + b_hh
        "wout_h": u(k[4], (H2, embedding_dim), ko),
        "wout_c": u(k[5], (H2, embedding_dim), ko),
        "bout": u(k[6], (1, embedding_dim), ko),
    }


if __name__ == "__main__":
    embedding_dim = 3
    hidden_dim = 128
    # NOTE: B=2 follows the module spec; for real throughput, stack many decode streams
    # (>=128/256) along the batch axis — per-step latency is fixed by the serial recurrence,
    # so filling MXU rows is nearly free throughput.
    B, T, L = 2, 8, 4
    H2 = 2 * hidden_dim

    key = jax.random.PRNGKey(0)
    k_ctx, k_gt, k_par = jax.random.split(key, 3)
    context_tensor = jax.random.normal(k_ctx, (B, T, H2), jnp.float32)
    gt_idx = jax.random.randint(k_gt, (B, L), 0, embedding_dim)
    ground_truth = jax.nn.one_hot(gt_idx, embedding_dim, dtype=jnp.float32)

    params = init_params(k_par, embedding_dim, hidden_dim)

    preds, attn = decoder_forward(params, context_tensor, ground_truth)
    jax.block_until_ready((preds, attn))

    assert preds.shape == (L, B, embedding_dim)
    assert attn.shape == (L, B, T)
    assert bool(jnp.all(jnp.isfinite(preds))) and bool(jnp.all(jnp.isfinite(attn)))
    # attention rows are an exact softmax over the real T positions
    assert bool(jnp.all(jnp.abs(jnp.sum(attn, axis=-1) - 1.0) < 1e-3))
    # predictions are log-probabilities over the vocabulary
    assert bool(jnp.all(jnp.abs(jnp.sum(jnp.exp(preds), axis=-1) - 1.0) < 1e-3))
    print("KERNEL_OK")
</pallas_src>

<mosaic_0001>
module attributes {stable_mosaic.version = 11 : i64} {
  func.func @_decoder_kernel(%arg0: memref<4x8x1024xf32, #tpu.memory_space<vmem>>, %arg1: memref<8x128x256xbf16, #tpu.memory_space<vmem>>, %arg2: memref<256x1024xbf16, #tpu.memory_space<vmem>>, %arg3: memref<256x128xbf16, #tpu.memory_space<vmem>>, %arg4: memref<256x128xbf16, #tpu.memory_space<vmem>>, %arg5: memref<1x128xf32, #tpu.memory_space<vmem>>, %arg6: memref<1x128xf32, #tpu.memory_space<vmem>>, %arg7: memref<4x8x128xf32, #tpu.memory_space<vmem>>, %arg8: memref<4x8x128xf32, #tpu.memory_space<vmem>>) attributes {dimension_semantics = [], scalar_prefetch = 0 : i64, scratch_operands = 0 : i64, tpu.core_type = #tpu.core_type<tc>} {
    %c0 = arith.constant 0 : index
    %c0_0 = arith.constant 0 : index
    %c0_1 = arith.constant 0 : index
    %0 = vector.load %arg1[%c0, %c0_0, %c0_1] : memref<8x128x256xbf16, #tpu.memory_space<vmem>>, vector<8x128x256xbf16>
    %c0_2 = arith.constant 0 : index
    %c0_3 = arith.constant 0 : index
    %1 = vector.load %arg2[%c0_2, %c0_3] : memref<256x1024xbf16, #tpu.memory_space<vmem>>, vector<256x1024xbf16>
    %c0_4 = arith.constant 0 : index
    %c0_5 = arith.constant 0 : index
    %2 = vector.load %arg3[%c0_4, %c0_5] : memref<256x128xbf16, #tpu.memory_space<vmem>>, vector<256x128xbf16>
    %c0_6 = arith.constant 0 : index
    %c0_7 = arith.constant 0 : index
    %3 = vector.load %arg4[%c0_6, %c0_7] : memref<256x128xbf16, #tpu.memory_space<vmem>>, vector<256x128xbf16>
    %c0_8 = arith.constant 0 : index
    %c0_9 = arith.constant 0 : index
    %4 = vector.load %arg5[%c0_8, %c0_9] : memref<1x128xf32, #tpu.memory_space<vmem>>, vector<1x128xf32>
    %5 = vector.shape_cast %4 : vector<1x128xf32> to vector<1x128xf32>
    %6 = vector.broadcast %5 : vector<1x128xf32> to vector<8x128xf32>
    %c0_10 = arith.constant 0 : index
    %c0_11 = arith.constant 0 : index
    %7 = vector.load %arg6[%c0_10, %c0_11] : memref<1x128xf32, #tpu.memory_space<vmem>>, vector<1x128xf32>
    %8 = vector.shape_cast %7 : vector<1x128xf32> to vector<1x128xf32>
    %9 = vector.broadcast %8 : vector<1x128xf32> to vector<8x128xf32>
    %cst = arith.constant 0.000000e+00 : f32
    %10 = vector.broadcast %cst : f32 to vector<8x256xf32>
    %cst_12 = arith.constant 0.000000e+00 : f32
    %11 = vector.broadcast %cst_12 : f32 to vector<8x256xf32>
    %c0_i32 = arith.constant 0 : i32
    %12 = arith.index_cast %c0_i32 : i32 to index
    %c0_13 = arith.constant 0 : index
    %c0_14 = arith.constant 0 : index
    %13 = vector.load %arg0[%12, %c0_13, %c0_14] : memref<4x8x1024xf32, #tpu.memory_space<vmem>>, vector<1x8x1024xf32>
    %14 = vector.shape_cast %13 : vector<1x8x1024xf32> to vector<8x1024xf32>
    %15 = arith.truncf %10 : vector<8x256xf32> to vector<8x256xbf16>
    %cst_15 = arith.constant dense<0.000000e+00> : vector<8x1024xf32>
    %16 = tpu.matmul %15, %1, %cst_15 {dimension_numbers = #tpu.dot_dimension_numbers<[1], [0], [0], [1], [0, 0, 1, 1], [], []>} : vector<8x256xbf16>, vector<256x1024xbf16>, vector<8x1024xf32> -> vector<8x1024xf32>
    %17 = arith.addf %14, %16 : vector<8x1024xf32>
    %18 = vector.extract_strided_slice %17 {offsets = [0, 0], sizes = [8, 256], strides = [1, 1]} : vector<8x1024xf32> to vector<8x256xf32>
    %19 = arith.negf %18 : vector<8x256xf32>
    %20 = math.exp %19 : vector<8x256xf32>
    %cst_16 = arith.constant 1.000000e+00 : f32
    %21 = vector.broadcast %cst_16 : f32 to vector<8x256xf32>
    %22 = arith.addf %21, %20 : vector<8x256xf32>
    %23 = arith.divf %21, %22 : vector<8x256xf32>
    %24 = vector.extract_strided_slice %17 {offsets = [0, 256], sizes = [8, 256], strides = [1, 1]} : vector<8x1024xf32> to vector<8x256xf32>
    %25 = arith.negf %24 : vector<8x256xf32>
    %26 = math.exp %25 : vector<8x256xf32>
    %cst_17 = arith.constant 1.000000e+00 : f32
    %27 = vector.broadcast %cst_17 : f32 to vector<8x256xf32>
    %28 = arith.addf %27, %26 : vector<8x256xf32>
    %29 = arith.divf %27, %28 : vector<8x256xf32>
    %30 = vector.extract_strided_slice %17 {offsets = [0, 512], sizes = [8, 256], strides = [1, 1]} : vector<8x1024xf32> to vector<8x256xf32>
    %31 = math.tanh %30 : vector<8x256xf32>
    %32 = vector.extract_strided_slice %17 {offsets = [0, 768], sizes = [8, 256], strides = [1, 1]} : vector<8x1024xf32> to vector<8x256xf32>
    %33 = arith.negf %32 : vector<8x256xf32>
    %34 = math.exp %33 : vector<8x256xf32>
    %cst_18 = arith.constant 1.000000e+00 : f32
    %35 = vector.broadcast %cst_18 : f32 to vector<8x256xf32>
    %36 = arith.addf %35, %34 : vector<8x256xf32>
    %37 = arith.divf %35, %36 : vector<8x256xf32>
    %38 = arith.mulf %29, %11 : vector<8x256xf32>
    %39 = arith.mulf %23, %31 : vector<8x256xf32>
    %40 = arith.addf %38, %39 : vector<8x256xf32>
    %41 = math.tanh %40 : vector<8x256xf32>
    %42 = arith.mulf %37, %41 : vector<8x256xf32>
    %43 = arith.truncf %42 : vector<8x256xf32> to vector<8x256xbf16>
    %44 = vector.shape_cast %43 : vector<8x256xbf16> to vector<8x1x256xbf16>
    "tpu.trace_start"() <{level = 10 : i32, message = "bqh,bth->bqt"}> : () -> ()
    %cst_19 = arith.constant dense<0.000000e+00> : vector<8x1x128xf32>
    %45 = tpu.matmul %44, %0, %cst_19 {dimension_numbers = #tpu.dot_dimension_numbers<[2], [2], [1], [1], [0, 0, 0, 1, 1, 1], [0], [0]>} : vector<8x1x256xbf16>, vector<8x128x256xbf16>, vector<8x1x128xf32> -> vector<8x1x128xf32>
    "tpu.trace_stop"() : () -> ()
    %46 = vector.shape_cast %45 : vector<8x1x128xf32> to vector<8x128xf32>
    %47 = arith.addf %46, %9 : vector<8x128xf32>
    %cst_20 = arith.constant dense<0xFF800000> : vector<8xf32>
    %48 = vector.multi_reduction <maximumf>, %47, %cst_20 [1] : vector<8x128xf32> to vector<8xf32>
    %49 = vector.shape_cast %48 : vector<8xf32> to vector<8x1xf32>
    %50 = vector.broadcast %49 : vector<8x1xf32> to vector<8x128xf32>
    %51 = arith.subf %47, %50 : vector<8x128xf32>
    %52 = math.exp %51 : vector<8x128xf32>
    %cst_21 = arith.constant dense<0.000000e+00> : vector<8xf32>
    %53 = vector.multi_reduction <add>, %52, %cst_21 [1] : vector<8x128xf32> to vector<8xf32>
    %54 = vector.shape_cast %53 : vector<8xf32> to vector<8x1xf32>
    %cst_22 = arith.constant 1.000000e+00 : f32
    %55 = vector.broadcast %cst_22 : f32 to vector<8x1xf32>
    %56 = arith.divf %55, %54 : vector<8x1xf32>
    %57 = arith.truncf %52 : vector<8x128xf32> to vector<8x128xbf16>
    %58 = vector.shape_cast %57 : vector<8x128xbf16> to vector<8x1x128xbf16>
    "tpu.trace_start"() <{level = 10 : i32, message = "bqt,bth->bqh"}> : () -> ()
    %cst_23 = arith.constant dense<0.000000e+00> : vector<8x1x256xf32>
    %59 = tpu.matmul %58, %0, %cst_23 {dimension_numbers = #tpu.dot_dimension_numbers<[2], [1], [1], [2], [0, 0, 0, 1, 1, 2], [0], [0]>} : vector<8x1x128xbf16>, vector<8x128x256xbf16>, vector<8x1x256xf32> -> vector<8x1x256xf32>
    "tpu.trace_stop"() : () -> ()
    %60 = vector.shape_cast %59 : vector<8x1x256xf32> to vector<8x256xf32>
    %61 = vector.broadcast %56 : vector<8x1xf32> to vector<8x256xf32>
    %62 = arith.mulf %60, %61 : vector<8x256xf32>
    %63 = vector.broadcast %56 : vector<8x1xf32> to vector<8x128xf32>
    %64 = arith.mulf %52, %63 : vector<8x128xf32>
    %65 = arith.index_cast %c0_i32 : i32 to index
    %c0_24 = arith.constant 0 : index
    %c0_25 = arith.constant 0 : index
    %66 = vector.load %arg8[%65, %c0_24, %c0_25] : memref<4x8x128xf32, #tpu.memory_space<vmem>>, vector<1x8x128xf32>
    %67 = vector.shape_cast %66 : vector<1x8x128xf32> to vector<8x128xf32>
    %68 = vector.shape_cast %64 : vector<8x128xf32> to vector<1x8x128xf32>
    tpu.vector_store %arg8[%65, %c0_24, %c0_25], %68 {strides = array<i32>} : memref<4x8x128xf32, #tpu.memory_space<vmem>>, vector<1x8x128xf32>,
    %cst_26 = arith.constant dense<0.000000e+00> : vector<8x128xf32>
    %69 = tpu.matmul %43, %2, %cst_26 {dimension_numbers = #tpu.dot_dimension_numbers<[1], [0], [0], [1], [0, 0, 1, 1], [], []>} : vector<8x256xbf16>, vector<256x128xbf16>, vector<8x128xf32> -> vector<8x128xf32>
    %70 = arith.truncf %62 : vector<8x256xf32> to vector<8x256xbf16>
    %cst_27 = arith.constant dense<0.000000e+00> : vector<8x128xf32>
    %71 = tpu.matmul %70, %3, %cst_27 {dimension_numbers = #tpu.dot_dimension_numbers<[1], [0], [0], [1], [0, 0, 1, 1], [], []>} : vector<8x256xbf16>, vector<256x128xbf16>, vector<8x128xf32> -> vector<8x128xf32>
    %72 = arith.addf %69, %71 : vector<8x128xf32>
    %73 = arith.addf %72, %6 : vector<8x128xf32>
    %cst_28 = arith.constant dense<0xFF800000> : vector<8xf32>
    %74 = vector.multi_reduction <maximumf>, %73, %cst_28 [1] : vector<8x128xf32> to vector<8xf32>
    %75 = vector.shape_cast %74 : vector<8xf32> to vector<8x1xf32>
    %76 = vector.broadcast %75 : vector<8x1xf32> to vector<8x128xf32>
    %77 = arith.subf %73, %76 : vector<8x128xf32>
    %78 = math.exp %77 : vector<8x128xf32>
    %cst_29 = arith.constant dense<0.000000e+00> : vector<8xf32>
    %79 = vector.multi_reduction <add>, %78, %cst_29 [1] : vector<8x128xf32> to vector<8xf32>
    %80 = vector.shape_cast %79 : vector<8xf32> to vector<8x1xf32>
    %81 = math.log %80 : vector<8x1xf32>
    %82 = vector.broadcast %81 : vector<8x1xf32> to vector<8x128xf32>
    %83 = arith.subf %77, %82 : vector<8x128xf32>
    %84 = arith.index_cast %c0_i32 : i32 to index
    %c0_30 = arith.constant 0 : index
    %c0_31 = arith.constant 0 : index
    %85 = vector.load %arg7[%84, %c0_30, %c0_31] : memref<4x8x128xf32, #tpu.memory_space<vmem>>, vector<1x8x128xf32>
    %86 = vector.shape_cast %85 : vector<1x8x128xf32> to vector<8x128xf32>
    %87 = vector.shape_cast %83 : vector<8x128xf32> to vector<1x8x128xf32>
    tpu.vector_store %arg7[%84, %c0_30, %c0_31], %87 {strides = array<i32>} : memref<4x8x128xf32, #tpu.memory_space<vmem>>, vector<1x8x128xf32>,
    %c1_i32 = arith.constant 1 : i32
    %88 = arith.index_cast %c1_i32 : i32 to index
    %c0_32 = arith.constant 0 : index
    %c0_33 = arith.constant 0 : index
    %89 = vector.load %arg0[%88, %c0_32, %c0_33] : memref<4x8x1024xf32, #tpu.memory_space<vmem>>, vector<1x8x1024xf32>
    %90 = vector.shape_cast %89 : vector<1x8x1024xf32> to vector<8x1024xf32>
    %91 = arith.truncf %42 : vector<8x256xf32> to vector<8x256xbf16>
    %cst_34 = arith.constant dense<0.000000e+00> : vector<8x1024xf32>
    %92 = tpu.matmul %91, %1, %cst_34 {dimension_numbers = #tpu.dot_dimension_numbers<[1], [0], [0], [1], [0, 0, 1, 1], [], []>} : vector<8x256xbf16>, vector<256x1024xbf16>, vector<8x1024xf32> -> vector<8x1024xf32>
    %93 = arith.addf %90, %92 : vector<8x1024xf32>
    %94 = vector.extract_strided_slice %93 {offsets = [0, 0], sizes = [8, 256], strides = [1, 1]} : vector<8x1024xf32> to vector<8x256xf32>
    %95 = arith.negf %94 : vector<8x256xf32>
    %96 = math.exp %95 : vector<8x256xf32>
    %cst_35 = arith.constant 1.000000e+00 : f32
    %97 = vector.broadcast %cst_35 : f32 to vector<8x256xf32>
    %98 = arith.addf %97, %96 : vector<8x256xf32>
    %99 = arith.divf %97, %98 : vector<8x256xf32>
    %100 = vector.extract_strided_slice %93 {offsets = [0, 256], sizes = [8, 256], strides = [1, 1]} : vector<8x1024xf32> to vector<8x256xf32>
    %101 = arith.negf %100 : vector<8x256xf32>
    %102 = math.exp %101 : vector<8x256xf32>
    %cst_36 = arith.constant 1.000000e+00 : f32
    %103 = vector.broadcast %cst_36 : f32 to vector<8x256xf32>
    %104 = arith.addf %103, %102 : vector<8x256xf32>
    %105 = arith.divf %103, %104 : vector<8x256xf32>
    %106 = vector.extract_strided_slice %93 {offsets = [0, 512], sizes = [8, 256], strides = [1, 1]} : vector<8x1024xf32> to vector<8x256xf32>
    %107 = math.tanh %106 : vector<8x256xf32>
    %108 = vector.extract_strided_slice %93 {offsets = [0, 768], sizes = [8, 256], strides = [1, 1]} : vector<8x1024xf32> to vector<8x256xf32>
    %109 = arith.negf %108 : vector<8x256xf32>
    %110 = math.exp %109 : vector<8x256xf32>
    %cst_37 = arith.constant 1.000000e+00 : f32
    %111 = vector.broadcast %cst_37 : f32 to vector<8x256xf32>
    %112 = arith.addf %111, %110 : vector<8x256xf32>
    %113 = arith.divf %111, %112 : vector<8x256xf32>
    %114 = arith.mulf %105, %40 : vector<8x256xf32>
    %115 = arith.mulf %99, %107 : vector<8x256xf32>
    %116 = arith.addf %114, %115 : vector<8x256xf32>
    %117 = math.tanh %116 : vector<8x256xf32>
    %118 = arith.mulf %113, %117 : vector<8x256xf32>
    %119 = arith.truncf %118 : vector<8x256xf32> to vector<8x256xbf16>
    %120 = vector.shape_cast %119 : vector<8x256xbf16> to vector<8x1x256xbf16>
    "tpu.trace_start"() <{level = 10 : i32, message = "bqh,bth->bqt"}> : () -> ()
    %cst_38 = arith.constant dense<0.000000e+00> : vector<8x1x128xf32>
    %121 = tpu.matmul %120, %0, %cst_38 {dimension_numbers = #tpu.dot_dimension_numbers<[2], [2], [1], [1], [0, 0, 0, 1, 1, 1], [0], [0]>} : vector<8x1x256xbf16>, vector<8x128x256xbf16>, vector<8x1x128xf32> -> vector<8x1x128xf32>
    "tpu.trace_stop"() : () -> ()
    %122 = vector.shape_cast %121 : vector<8x1x128xf32> to vector<8x128xf32>
    %123 = arith.addf %122, %9 : vector<8x128xf32>
    %cst_39 = arith.constant dense<0xFF800000> : vector<8xf32>
    %124 = vector.multi_reduction <maximumf>, %123, %cst_39 [1] : vector<8x128xf32> to vector<8xf32>
    %125 = vector.shape_cast %124 : vector<8xf32> to vector<8x1xf32>
    %126 = vector.broadcast %125 : vector<8x1xf32> to vector<8x128xf32>
    %127 = arith.subf %123, %126 : vector<8x128xf32>
    %128 = math.exp %127 : vector<8x128xf32>
    %cst_40 = arith.constant dense<0.000000e+00> : vector<8xf32>
    %129 = vector.multi_reduction <add>, %128, %cst_40 [1] : vector<8x128xf32> to vector<8xf32>
    %130 = vector.shape_cast %129 : vector<8xf32> to vector<8x1xf32>
    %cst_41 = arith.constant 1.000000e+00 : f32
    %131 = vector.broadcast %cst_41 : f32 to vector<8x1xf32>
    %132 = arith.divf %131, %130 : vector<8x1xf32>
    %133 = arith.truncf %128 : vector<8x128xf32> to vector<8x128xbf16>
    %134 = vector.shape_cast %133 : vector<8x128xbf16> to vector<8x1x128xbf16>
    "tpu.trace_start"() <{level = 10 : i32, message = "bqt,bth->bqh"}> : () -> ()
    %cst_42 = arith.constant dense<0.000000e+00> : vector<8x1x256xf32>
    %135 = tpu.matmul %134, %0, %cst_42 {dimension_numbers = #tpu.dot_dimension_numbers<[2], [1], [1], [2], [0, 0, 0, 1, 1, 2], [0], [0]>} : vector<8x1x128xbf16>, vector<8x128x256xbf16>, vector<8x1x256xf32> -> vector<8x1x256xf32>
    "tpu.trace_stop"() : () -> ()
    %136 = vector.shape_cast %135 : vector<8x1x256xf32> to vector<8x256xf32>
    %137 = vector.broadcast %132 : vector<8x1xf32> to vector<8x256xf32>
    %138 = arith.mulf %136, %137 : vector<8x256xf32>
    %139 = vector.broadcast %132 : vector<8x1xf32> to vector<8x128xf32>
    %140 = arith.mulf %128, %139 : vector<8x128xf32>
    %141 = arith.index_cast %c1_i32 : i32 to index
    %c0_43 = arith.constant 0 : index
    %c0_44 = arith.constant 0 : index
    %142 = vector.load %arg8[%141, %c0_43, %c0_44] : memref<4x8x128xf32, #tpu.memory_space<vmem>>, vector<1x8x128xf32>
    %143 = vector.shape_cast %142 : vector<1x8x128xf32> to vector<8x128xf32>
    %144 = vector.shape_cast %140 : vector<8x128xf32> to vector<1x8x128xf32>
    tpu.vector_store %arg8[%141, %c0_43, %c0_44], %144 {strides = array<i32>} : memref<4x8x128xf32, #tpu.memory_space<vmem>>, vector<1x8x128xf32>,
    %cst_45 = arith.constant dense<0.000000e+00> : vector<8x128xf32>
    %145 = tpu.matmul %119, %2, %cst_45 {dimension_numbers = #tpu.dot_dimension_numbers<[1], [0], [0], [1], [0, 0, 1, 1], [], []>} : vector<8x256xbf16>, vector<256x128xbf16>, vector<8x128xf32> -> vector<8x128xf32>
    %146 = arith.truncf %138 : vector<8x256xf32> to vector<8x256xbf16>
    %cst_46 = arith.constant dense<0.000000e+00> : vector<8x128xf32>
    %147 = tpu.matmul %146, %3, %cst_46 {dimension_numbers = #tpu.dot_dimension_numbers<[1], [0], [0], [1], [0, 0, 1, 1], [], []>} : vector<8x256xbf16>, vector<256x128xbf16>, vector<8x128xf32> -> vector<8x128xf32>
    %148 = arith.addf %145, %147 : vector<8x128xf32>
    %149 = arith.addf %148, %6 : vector<8x128xf32>
    %cst_47 = arith.constant dense<0xFF800000> : vector<8xf32>
    %150 = vector.multi_reduction <maximumf>, %149, %cst_47 [1] : vector<8x128xf32> to vector<8xf32>
    %151 = vector.shape_cast %150 : vector<8xf32> to vector<8x1xf32>
    %152 = vector.broadcast %151 : vector<8x1xf32> to vector<8x128xf32>
    %153 = arith.subf %149, %152 : vector<8x128xf32>
    %154 = math.exp %153 : vector<8x128xf32>
    %cst_48 = arith.constant dense<0.000000e+00> : vector<8xf32>
    %155 = vector.multi_reduction <add>, %154, %cst_48 [1] : vector<8x128xf32> to vector<8xf32>
    %156 = vector.shape_cast %155 : vector<8xf32> to vector<8x1xf32>
    %157 = math.log %156 : vector<8x1xf32>
    %158 = vector.broadcast %157 : vector<8x1xf32> to vector<8x128xf32>
    %159 = arith.subf %153, %158 : vector<8x128xf32>
    %160 = arith.index_cast %c1_i32 : i32 to index
    %c0_49 = arith.constant 0 : index
    %c0_50 = arith.constant 0 : index
    %161 = vector.load %arg7[%160, %c0_49, %c0_50] : memref<4x8x128xf32, #tpu.memory_space<vmem>>, vector<1x8x128xf32>
    %162 = vector.shape_cast %161 : vector<1x8x128xf32> to vector<8x128xf32>
    %163 = vector.shape_cast %159 : vector<8x128xf32> to vector<1x8x128xf32>
    tpu.vector_store %arg7[%160, %c0_49, %c0_50], %163 {strides = array<i32>} : memref<4x8x128xf32, #tpu.memory_space<vmem>>, vector<1x8x128xf32>,
    %c2_i32 = arith.constant 2 : i32
    %164 = arith.index_cast %c2_i32 : i32 to index
    %c0_51 = arith.constant 0 : index
    %c0_52 = arith.constant 0 : index
    %165 = vector.load %arg0[%164, %c0_51, %c0_52] : memref<4x8x1024xf32, #tpu.memory_space<vmem>>, vector<1x8x1024xf32>
    %166 = vector.shape_cast %165 : vector<1x8x1024xf32> to vector<8x1024xf32>
    %167 = arith.truncf %118 : vector<8x256xf32> to vector<8x256xbf16>
    %cst_53 = arith.constant dense<0.000000e+00> : vector<8x1024xf32>
    %168 = tpu.matmul %167, %1, %cst_53 {dimension_numbers = #tpu.dot_dimension_numbers<[1], [0], [0], [1], [0, 0, 1, 1], [], []>} : vector<8x256xbf16>, vector<256x1024xbf16>, vector<8x1024xf32> -> vector<8x1024xf32>
    %169 = arith.addf %166, %168 : vector<8x1024xf32>
    %170 = vector.extract_strided_slice %169 {offsets = [0, 0], sizes = [8, 256], strides = [1, 1]} : vector<8x1024xf32> to vector<8x256xf32>
    %171 = arith.negf %170 : vector<8x256xf32>
    %172 = math.exp %171 : vector<8x256xf32>
    %cst_54 = arith.constant 1.000000e+00 : f32
    %173 = vector.broadcast %cst_54 : f32 to vector<8x256xf32>
    %174 = arith.addf %173, %172 : vector<8x256xf32>
    %175 = arith.divf %173, %174 : vector<8x256xf32>
    %176 = vector.extract_strided_slice %169 {offsets = [0, 256], sizes = [8, 256], strides = [1, 1]} : vector<8x1024xf32> to vector<8x256xf32>
    %177 = arith.negf %176 : vector<8x256xf32>
    %178 = math.exp %177 : vector<8x256xf32>
    %cst_55 = arith.constant 1.000000e+00 : f32
    %179 = vector.broadcast %cst_55 : f32 to vector<8x256xf32>
    %180 = arith.addf %179, %178 : vector<8x256xf32>
    %181 = arith.divf %179, %180 : vector<8x256xf32>
    %182 = vector.extract_strided_slice %169 {offsets = [0, 512], sizes = [8, 256], strides = [1, 1]} : vector<8x1024xf32> to vector<8x256xf32>
    %183 = math.tanh %182 : vector<8x256xf32>
    %184 = vector.extract_strided_slice %169 {offsets = [0, 768], sizes = [8, 256], strides = [1, 1]} : vector<8x1024xf32> to vector<8x256xf32>
    %185 = arith.negf %184 : vector<8x256xf32>
    %186 = math.exp %185 : vector<8x256xf32>
    %cst_56 = arith.constant 1.000000e+00 : f32
    %187 = vector.broadcast %cst_56 : f32 to vector<8x256xf32>
    %188 = arith.addf %187, %186 : vector<8x256xf32>
    %189 = arith.divf %187, %188 : vector<8x256xf32>
    %190 = arith.mulf %181, %116 : vector<8x256xf32>
    %191 = arith.mulf %175, %183 : vector<8x256xf32>
    %192 = arith.addf %190, %191 : vector<8x256xf32>
    %193 = math.tanh %192 : vector<8x256xf32>
    %194 = arith.mulf %189, %193 : vector<8x256xf32>
    %195 = arith.truncf %194 : vector<8x256xf32> to vector<8x256xbf16>
    %196 = vector.shape_cast %195 : vector<8x256xbf16> to vector<8x1x256xbf16>
    "tpu.trace_start"() <{level = 10 : i32, message = "bqh,bth->bqt"}> : () -> ()
    %cst_57 = arith.constant dense<0.000000e+00> : vector<8x1x128xf32>
    %197 = tpu.matmul %196, %0, %cst_57 {dimension_numbers = #tpu.dot_dimension_numbers<[2], [2], [1], [1], [0, 0, 0, 1, 1, 1], [0], [0]>} : vector<8x1x256xbf16>, vector<8x128x256xbf16>, vector<8x1x128xf32> -> vector<8x1x128xf32>
    "tpu.trace_stop"() : () -> ()
    %198 = vector.shape_cast %197 : vector<8x1x128xf32> to vector<8x128xf32>
    %199 = arith.addf %198, %9 : vector<8x128xf32>
    %cst_58 = arith.constant dense<0xFF800000> : vector<8xf32>
    %200 = vector.multi_reduction <maximumf>, %199, %cst_58 [1] : vector<8x128xf32> to vector<8xf32>
    %201 = vector.shape_cast %200 : vector<8xf32> to vector<8x1xf32>
    %202 = vector.broadcast %201 : vector<8x1xf32> to vector<8x128xf32>
    %203 = arith.subf %199, %202 : vector<8x128xf32>
    %204 = math.exp %203 : vector<8x128xf32>
    %cst_59 = arith.constant dense<0.000000e+00> : vector<8xf32>
    %205 = vector.multi_reduction <add>, %204, %cst_59 [1] : vector<8x128xf32> to vector<8xf32>
    %206 = vector.shape_cast %205 : vector<8xf32> to vector<8x1xf32>
    %cst_60 = arith.constant 1.000000e+00 : f32
    %207 = vector.broadcast %cst_60 : f32 to vector<8x1xf32>
    %208 = arith.divf %207, %206 : vector<8x1xf32>
    %209 = arith.truncf %204 : vector<8x128xf32> to vector<8x128xbf16>
    %210 = vector.shape_cast %209 : vector<8x128xbf16> to vector<8x1x128xbf16>
    "tpu.trace_start"() <{level = 10 : i32, message = "bqt,bth->bqh"}> : () -> ()
    %cst_61 = arith.constant dense<0.000000e+00> : vector<8x1x256xf32>
    %211 = tpu.matmul %210, %0, %cst_61 {dimension_numbers = #tpu.dot_dimension_numbers<[2], [1], [1], [2], [0, 0, 0, 1, 1, 2], [0], [0]>} : vector<8x1x128xbf16>, vector<8x128x256xbf16>, vector<8x1x256xf32> -> vector<8x1x256xf32>
    "tpu.trace_stop"() : () -> ()
    %212 = vector.shape_cast %211 : vector<8x1x256xf32> to vector<8x256xf32>
    %213 = vector.broadcast %208 : vector<8x1xf32> to vector<8x256xf32>
    %214 = arith.mulf %212, %213 : vector<8x256xf32>
    %215 = vector.broadcast %208 : vector<8x1xf32> to vector<8x128xf32>
    %216 = arith.mulf %204, %215 : vector<8x128xf32>
    %217 = arith.index_cast %c2_i32 : i32 to index
    %c0_62 = arith.constant 0 : index
    %c0_63 = arith.constant 0 : index
    %218 = vector.load %arg8[%217, %c0_62, %c0_63] : memref<4x8x128xf32, #tpu.memory_space<vmem>>, vector<1x8x128xf32>
    %219 = vector.shape_cast %218 : vector<1x8x128xf32> to vector<8x128xf32>
    %220 = vector.shape_cast %216 : vector<8x128xf32> to vector<1x8x128xf32>
    tpu.vector_store %arg8[%217, %c0_62, %c0_63], %220 {strides = array<i32>} : memref<4x8x128xf32, #tpu.memory_space<vmem>>, vector<1x8x128xf32>,
    %cst_64 = arith.constant dense<0.000000e+00> : vector<8x128xf32>
    %221 = tpu.matmul %195, %2, %cst_64 {dimension_numbers = #tpu.dot_dimension_numbers<[1], [0], [0], [1], [0, 0, 1, 1], [], []>} : vector<8x256xbf16>, vector<256x128xbf16>, vector<8x128xf32> -> vector<8x128xf32>
    %222 = arith.truncf %214 : vector<8x256xf32> to vector<8x256xbf16>
    %cst_65 = arith.constant dense<0.000000e+00> : vector<8x128xf32>
    %223 = tpu.matmul %222, %3, %cst_65 {dimension_numbers = #tpu.dot_dimension_numbers<[1], [0], [0], [1], [0, 0, 1, 1], [], []>} : vector<8x256xbf16>, vector<256x128xbf16>, vector<8x128xf32> -> vector<8x128xf32>
    %224 = arith.addf %221, %223 : vector<8x128xf32>
    %225 = arith.addf %224, %6 : vector<8x128xf32>
    %cst_66 = arith.constant dense<0xFF800000> : vector<8xf32>
    %226 = vector.multi_reduction <maximumf>, %225, %cst_66 [1] : vector<8x128xf32> to vector<8xf32>
    %227 = vector.shape_cast %226 : vector<8xf32> to vector<8x1xf32>
    %228 = vector.broadcast %227 : vector<8x1xf32> to vector<8x128xf32>
    %229 = arith.subf %225, %228 : vector<8x128xf32>
    %230 = math.exp %229 : vector<8x128xf32>
    %cst_67 = arith.constant dense<0.000000e+00> : vector<8xf32>
    %231 = vector.multi_reduction <add>, %230, %cst_67 [1] : vector<8x128xf32> to vector<8xf32>
    %232 = vector.shape_cast %231 : vector<8xf32> to vector<8x1xf32>
    %233 = math.log %232 : vector<8x1xf32>
    %234 = vector.broadcast %233 : vector<8x1xf32> to vector<8x128xf32>
    %235 = arith.subf %229, %234 : vector<8x128xf32>
    %236 = arith.index_cast %c2_i32 : i32 to index
    %c0_68 = arith.constant 0 : index
    %c0_69 = arith.constant 0 : index
    %237 = vector.load %arg7[%236, %c0_68, %c0_69] : memref<4x8x128xf32, #tpu.memory_space<vmem>>, vector<1x8x128xf32>
    %238 = vector.shape_cast %237 : vector<1x8x128xf32> to vector<8x128xf32>
    %239 = vector.shape_cast %235 : vector<8x128xf32> to vector<1x8x128xf32>
    tpu.vector_store %arg7[%236, %c0_68, %c0_69], %239 {strides = array<i32>} : memref<4x8x128xf32, #tpu.memory_space<vmem>>, vector<1x8x128xf32>,
    %c3_i32 = arith.constant 3 : i32
    %240 = arith.index_cast %c3_i32 : i32 to index
    %c0_70 = arith.constant 0 : index
    %c0_71 = arith.constant 0 : index
    %241 = vector.load %arg0[%240, %c0_70, %c0_71] : memref<4x8x1024xf32, #tpu.memory_space<vmem>>, vector<1x8x1024xf32>
    %242 = vector.shape_cast %241 : vector<1x8x1024xf32> to vector<8x1024xf32>
    %243 = arith.truncf %194 : vector<8x256xf32> to vector<8x256xbf16>
    %cst_72 = arith.constant dense<0.000000e+00> : vector<8x1024xf32>
    %244 = tpu.matmul %243, %1, %cst_72 {dimension_numbers = #tpu.dot_dimension_numbers<[1], [0], [0], [1], [0, 0, 1, 1], [], []>} : vector<8x256xbf16>, vector<256x1024xbf16>, vector<8x1024xf32> -> vector<8x1024xf32>
    %245 = arith.addf %242, %244 : vector<8x1024xf32>
    %246 = vector.extract_strided_slice %245 {offsets = [0, 0], sizes = [8, 256], strides = [1, 1]} : vector<8x1024xf32> to vector<8x256xf32>
    %247 = arith.negf %246 : vector<8x256xf32>
    %248 = math.exp %247 : vector<8x256xf32>
    %cst_73 = arith.constant 1.000000e+00 : f32
    %249 = vector.broadcast %cst_73 : f32 to vector<8x256xf32>
    %250 = arith.addf %249, %248 : vector<8x256xf32>
    %251 = arith.divf %249, %250 : vector<8x256xf32>
    %252 = vector.extract_strided_slice %245 {offsets = [0, 256], sizes = [8, 256], strides = [1, 1]} : vector<8x1024xf32> to vector<8x256xf32>
    %253 = arith.negf %252 : vector<8x256xf32>
    %254 = math.exp %253 : vector<8x256xf32>
    %cst_74 = arith.constant 1.000000e+00 : f32
    %255 = vector.broadcast %cst_74 : f32 to vector<8x256xf32>
    %256 = arith.addf %255, %254 : vector<8x256xf32>
    %257 = arith.divf %255, %256 : vector<8x256xf32>
    %258 = vector.extract_strided_slice %245 {offsets = [0, 512], sizes = [8, 256], strides = [1, 1]} : vector<8x1024xf32> to vector<8x256xf32>
    %259 = math.tanh %258 : vector<8x256xf32>
    %260 = vector.extract_strided_slice %245 {offsets = [0, 768], sizes = [8, 256], strides = [1, 1]} : vector<8x1024xf32> to vector<8x256xf32>
    %261 = arith.negf %260 : vector<8x256xf32>
    %262 = math.exp %261 : vector<8x256xf32>
    %cst_75 = arith.constant 1.000000e+00 : f32
    %263 = vector.broadcast %cst_75 : f32 to vector<8x256xf32>
    %264 = arith.addf %263, %262 : vector<8x256xf32>
    %265 = arith.divf %263, %264 : vector<8x256xf32>
    %266 = arith.mulf %257, %192 : vector<8x256xf32>
    %267 = arith.mulf %251, %259 : vector<8x256xf32>
    %268 = arith.addf %266, %267 : vector<8x256xf32>
    %269 = math.tanh %268 : vector<8x256xf32>
    %270 = arith.mulf %265, %269 : vector<8x256xf32>
    %271 = arith.truncf %270 : vector<8x256xf32> to vector<8x256xbf16>
    %272 = vector.shape_cast %271 : vector<8x256xbf16> to vector<8x1x256xbf16>
    "tpu.trace_start"() <{level = 10 : i32, message = "bqh,bth->bqt"}> : () -> ()
    %cst_76 = arith.constant dense<0.000000e+00> : vector<8x1x128xf32>
    %273 = tpu.matmul %272, %0, %cst_76 {dimension_numbers = #tpu.dot_dimension_numbers<[2], [2], [1], [1], [0, 0, 0, 1, 1, 1], [0], [0]>} : vector<8x1x256xbf16>, vector<8x128x256xbf16>, vector<8x1x128xf32> -> vector<8x1x128xf32>
    "tpu.trace_stop"() : () -> ()
    %274 = vector.shape_cast %273 : vector<8x1x128xf32> to vector<8x128xf32>
    %275 = arith.addf %274, %9 : vector<8x128xf32>
    %cst_77 = arith.constant dense<0xFF800000> : vector<8xf32>
    %276 = vector.multi_reduction <maximumf>, %275, %cst_77 [1] : vector<8x128xf32> to vector<8xf32>
    %277 = vector.shape_cast %276 : vector<8xf32> to vector<8x1xf32>
    %278 = vector.broadcast %277 : vector<8x1xf32> to vector<8x128xf32>
    %279 = arith.subf %275, %278 : vector<8x128xf32>
    %280 = math.exp %279 : vector<8x128xf32>
    %cst_78 = arith.constant dense<0.000000e+00> : vector<8xf32>
    %281 = vector.multi_reduction <add>, %280, %cst_78 [1] : vector<8x128xf32> to vector<8xf32>
    %282 = vector.shape_cast %281 : vector<8xf32> to vector<8x1xf32>
    %cst_79 = arith.constant 1.000000e+00 : f32
    %283 = vector.broadcast %cst_79 : f32 to vector<8x1xf32>
    %284 = arith.divf %283, %282 : vector<8x1xf32>
    %285 = arith.truncf %280 : vector<8x128xf32> to vector<8x128xbf16>
    %286 = vector.shape_cast %285 : vector<8x128xbf16> to vector<8x1x128xbf16>
    "tpu.trace_start"() <{level = 10 : i32, message = "bqt,bth->bqh"}> : () -> ()
    %cst_80 = arith.constant dense<0.000000e+00> : vector<8x1x256xf32>
    %287 = tpu.matmul %286, %0, %cst_80 {dimension_numbers = #tpu.dot_dimension_numbers<[2], [1], [1], [2], [0, 0, 0, 1, 1, 2], [0], [0]>} : vector<8x1x128xbf16>, vector<8x128x256xbf16>, vector<8x1x256xf32> -> vector<8x1x256xf32>
    "tpu.trace_stop"() : () -> ()
    %288 = vector.shape_cast %287 : vector<8x1x256xf32> to vector<8x256xf32>
    %289 = vector.broadcast %284 : vector<8x1xf32> to vector<8x256xf32>
    %290 = arith.mulf %288, %289 : vector<8x256xf32>
    %291 = vector.broadcast %284 : vector<8x1xf32> to vector<8x128xf32>
    %292 = arith.mulf %280, %291 : vector<8x128xf32>
    %293 = arith.index_cast %c3_i32 : i32 to index
    %c0_81 = arith.constant 0 : index
    %c0_82 = arith.constant 0 : index
    %294 = vector.load %arg8[%293, %c0_81, %c0_82] : memref<4x8x128xf32, #tpu.memory_space<vmem>>, vector<1x8x128xf32>
    %295 = vector.shape_cast %294 : vector<1x8x128xf32> to vector<8x128xf32>
    %296 = vector.shape_cast %292 : vector<8x128xf32> to vector<1x8x128xf32>
    tpu.vector_store %arg8[%293, %c0_81, %c0_82], %296 {strides = array<i32>} : memref<4x8x128xf32, #tpu.memory_space<vmem>>, vector<1x8x128xf32>,
    %cst_83 = arith.constant dense<0.000000e+00> : vector<8x128xf32>
    %297 = tpu.matmul %271, %2, %cst_83 {dimension_numbers = #tpu.dot_dimension_numbers<[1], [0], [0], [1], [0, 0, 1, 1], [], []>} : vector<8x256xbf16>, vector<256x128xbf16>, vector<8x128xf32> -> vector<8x128xf32>
    %298 = arith.truncf %290 : vector<8x256xf32> to vector<8x256xbf16>
    %cst_84 = arith.constant dense<0.000000e+00> : vector<8x128xf32>
    %299 = tpu.matmul %298, %3, %cst_84 {dimension_numbers = #tpu.dot_dimension_numbers<[1], [0], [0], [1], [0, 0, 1, 1], [], []>} : vector<8x256xbf16>, vector<256x128xbf16>, vector<8x128xf32> -> vector<8x128xf32>
    %300 = arith.addf %297, %299 : vector<8x128xf32>
    %301 = arith.addf %300, %6 : vector<8x128xf32>
    %cst_85 = arith.constant dense<0xFF800000> : vector<8xf32>
    %302 = vector.multi_reduction <maximumf>, %301, %cst_85 [1] : vector<8x128xf32> to vector<8xf32>
    %303 = vector.shape_cast %302 : vector<8xf32> to vector<8x1xf32>
    %304 = vector.broadcast %303 : vector<8x1xf32> to vector<8x128xf32>
    %305 = arith.subf %301, %304 : vector<8x128xf32>
    %306 = math.exp %305 : vector<8x128xf32>
    %cst_86 = arith.constant dense<0.000000e+00> : vector<8xf32>
    %307 = vector.multi_reduction <add>, %306, %cst_86 [1] : vector<8x128xf32> to vector<8xf32>
    %308 = vector.shape_cast %307 : vector<8xf32> to vector<8x1xf32>
    %309 = math.log %308 : vector<8x1xf32>
    %310 = vector.broadcast %309 : vector<8x1xf32> to vector<8x128xf32>
    %311 = arith.subf %305, %310 : vector<8x128xf32>
    %312 = arith.index_cast %c3_i32 : i32 to index
    %c0_87 = arith.constant 0 : index
    %c0_88 = arith.constant 0 : index
    %313 = vector.load %arg7[%312, %c0_87, %c0_88] : memref<4x8x128xf32, #tpu.memory_space<vmem>>, vector<1x8x128xf32>
    %314 = vector.shape_cast %313 : vector<1x8x128xf32> to vector<8x128xf32>
    %315 = vector.shape_cast %311 : vector<8x128xf32> to vector<1x8x128xf32>
    tpu.vector_store %arg7[%312, %c0_87, %c0_88], %315 {strides = array<i32>} : memref<4x8x128xf32, #tpu.memory_space<vmem>>, vector<1x8x128xf32>,
    %c4_i32 = arith.constant 4 : i32
    return
  }
}

</mosaic_0001>

<llo_original>
// kernel: tpu_custom_call.1
$region0: #{tpu_custom_call.1}
  #allocation0 [shape = 'u32[]', space=smem, size = 0x4, offset = 0x4, fixed_abs, tag = 'smem constant byte address 0x4 - core index']
  #allocation1 [shape = 'u32[72,128]{1,0:T(1,128)}', space=vmem, size = 0x9000, scoped, tag = 'internal scratch']
  %s0 = inlined_call_operand.hbm [shape: f32[4,8,1024], index: 0, kind: input, shape index: {}]
  %s1 = inlined_call_operand.hbm [shape: bf16[8,128,256], index: 1, kind: input, shape index: {}]
  %s2 = inlined_call_operand.hbm [shape: bf16[256,1024], index: 2, kind: input, shape index: {}]
  %s3 = inlined_call_operand.hbm [shape: bf16[256,128], index: 3, kind: input, shape index: {}]
  %s4 = inlined_call_operand.hbm [shape: bf16[256,128], index: 4, kind: input, shape index: {}]
  %s5 = inlined_call_operand.vmem [shape: f32[1,128], index: 5, kind: input, shape index: {}]
  %s6 = inlined_call_operand.vmem [shape: f32[1,128], index: 6, kind: input, shape index: {}]
  %s7 = inlined_call_operand.hbm [shape: f32[4,8,128], index: 7, kind: output, shape index: {0}]
  %s8 = inlined_call_operand.hbm [shape: f32[4,8,128], index: 8, kind: output, shape index: {1}]
  %9 = xla_tuple %s7, %s8
  %s10 = sld [smem:[#allocation0]]
  $region66: #{tpu_custom_call.1} parent=0
    _
  %s12 = ssub.s32 1, %s10
  %s13 = scalar_select 0, %s12, %s10
  $region1: #{tpu_custom_call.1} parent=0
    #allocation2 [shape = 'u8[131072]{0}', space=vmem, size = 0x20000, scoped, tag = 'input window, operand 0, single buffered']
    #allocation3 [shape = 's32[1]{0}', space=sflag, size = 0x4, scoped, tag = 'scoped memory for tpu_custom_call.1']
    #allocation4 [shape = 's32[1]{0}', space=sflag, size = 0x4, scoped, tag = 'scoped memory for tpu_custom_call.1']
    #allocation5 [shape = 'u8[524288]{0}', space=vmem, size = 0x80000, scoped, tag = 'input window, operand 1, single buffered']
    #allocation6 [shape = 's32[1]{0}', space=sflag, size = 0x4, scoped, tag = 'scoped memory for tpu_custom_call.1']
    #allocation7 [shape = 'u8[524288]{0}', space=vmem, size = 0x80000, scoped, tag = 'input window, operand 2, single buffered']
    #allocation8 [shape = 'u8[65536]{0}', space=vmem, size = 0x10000, scoped, tag = 'input window, operand 3, single buffered']
    #allocation9 [shape = 's32[1]{0}', space=sflag, size = 0x4, scoped, tag = 'scoped memory for tpu_custom_call.1']
    #allocation10 [shape = 'u8[65536]{0}', space=vmem, size = 0x10000, scoped, tag = 'input window, operand 4, single buffered']
    #allocation11 [shape = 'u8[16384]{0}', space=vmem, size = 0x4000, scoped, tag = 'output window, operand 0, single buffered']
    #allocation12 [shape = 'u8[16384]{0}', space=vmem, size = 0x4000, scoped, tag = 'output window, operand 1, single buffered']
    #allocation13 [shape = 's32[1]{0}', space=sflag, size = 0x4, scoped, tag = 'scoped memory for tpu_custom_call.1']
    %14 = vsyncpa [#allocation3], 0
    %15 = vsyncpa [#allocation6], 0
    %16 = vsyncpa [#allocation9], 0
    %17 = vsyncpa [#allocation4], 0
    %18 = vsyncpa [#allocation13], 0
    // Predicated region
    $region2: #{tpu_custom_call.1} parent=1 // pred_check
      _
    $region3: #{tpu_custom_call.1} parent=1 // pred_check_branch
      %20 = sbr.rel (0) target = $region5
    $region4: #{tpu_custom_call.1} parent=1 // pred_region
      %22 = vsyncadd [#allocation3], 0
      %s23 = sshll.u32 %s0, 4
      %s24 = int_to_ptr.hbm [resolvable:$true] %s23
      %s25 = sshll.u32 [#allocation2], 4
      %s26 = int_to_ptr.vmem [resolvable:$true] %s25
      %31 = dma.hbm_to_vmem [thread:$0]  %s24, 4096, %s26, [#allocation3], 1024, 1024, 64
    $region5: #{tpu_custom_call.1} parent=1 // pred_fallthru
      _
    // Predicated region
    $region6: #{tpu_custom_call.1} parent=1 // pred_check
      _
    $region7: #{tpu_custom_call.1} parent=1 // pred_check_branch
      %33 = sbr.rel (0) target = $region9
    $region8: #{tpu_custom_call.1} parent=1 // pred_region
      %35 = vsyncadd [#allocation6], 0
      %s36 = sshll.u32 %s1, 4
      %s37 = int_to_ptr.hbm [resolvable:$true] %s36
      %s38 = sshll.u32 [#allocation5], 4
      %s39 = int_to_ptr.vmem [resolvable:$true] %s38
      %44 = dma.hbm_to_vmem [thread:$0]  %s37, 16384, %s39, [#allocation6], 128, 128, 8
    $region9: #{tpu_custom_call.1} parent=1 // pred_fallthru
      _
    // Predicated region
    $region10: #{tpu_custom_call.1} parent=1 // pred_check
      _
    $region11: #{tpu_custom_call.1} parent=1 // pred_check_branch
      %46 = sbr.rel (0) target = $region13
    $region12: #{tpu_custom_call.1} parent=1 // pred_region
      %48 = vsyncadd [#allocation6], 0
      %s49 = sshll.u32 %s2, 4
      %s50 = int_to_ptr.hbm [resolvable:$true] %s49
      %s51 = sshll.u32 [#allocation7], 4
      %s52 = int_to_ptr.vmem [resolvable:$true] %s51
      %57 = dma.hbm_to_vmem [thread:$0]  %s50, 16384, %s52, [#allocation6], 512, 512, 32
    $region13: #{tpu_custom_call.1} parent=1 // pred_fallthru
      _
    // Predicated region
    $region14: #{tpu_custom_call.1} parent=1 // pred_check
      _
    $region15: #{tpu_custom_call.1} parent=1 // pred_check_branch
      %59 = sbr.rel (0) target = $region17
    $region16: #{tpu_custom_call.1} parent=1 // pred_region
      %61 = vsyncadd [#allocation9], 0
      %s62 = sshll.u32 %s3, 4
      %s63 = int_to_ptr.hbm [resolvable:$true] %s62
      %s64 = sshll.u32 [#allocation8], 4
      %s65 = int_to_ptr.vmem [resolvable:$true] %s64
      %70 = dma.hbm_to_vmem [thread:$0]  %s63, 2048, %s65, [#allocation9], 64, 64, 4
    $region17: #{tpu_custom_call.1} parent=1 // pred_fallthru
      _
    // Predicated region
    $region18: #{tpu_custom_call.1} parent=1 // pred_check
      _
    $region19: #{tpu_custom_call.1} parent=1 // pred_check_branch
      %72 = sbr.rel (0) target = $region21
    $region20: #{tpu_custom_call.1} parent=1 // pred_region
      %74 = vsyncadd [#allocation9], 0
      %s75 = sshll.u32 %s4, 4
      %s76 = int_to_ptr.hbm [resolvable:$true] %s75
      %s77 = sshll.u32 [#allocation10], 4
      %s78 = int_to_ptr.vmem [resolvable:$true] %s77
      %83 = dma.hbm_to_vmem [thread:$0]  %s76, 2048, %s78, [#allocation9], 64, 64, 4
    $region21: #{tpu_custom_call.1} parent=1 // pred_fallthru
      _
    // Predicated region
    $region22: #{tpu_custom_call.1} parent=1 // pred_check
      _
    $region23: #{tpu_custom_call.1} parent=1 // pred_check_branch
      %85 = sbr.rel (0) target = $region25
    $region24: #{tpu_custom_call.1} parent=1 // pred_region
      _
    $region25: #{tpu_custom_call.1} parent=1 // pred_fallthru
      _
    // Predicated region
    $region26: #{tpu_custom_call.1} parent=1 // pred_check
      _
    $region27: #{tpu_custom_call.1} parent=1 // pred_check_branch
      %87 = sbr.rel (0) target = $region29
    $region28: #{tpu_custom_call.1} parent=1 // pred_region
      _
    $region29: #{tpu_custom_call.1} parent=1 // pred_fallthru
      _
    // Predicated region
    $region30: #{tpu_custom_call.1} parent=1 // pred_check
      _
    $region31: #{tpu_custom_call.1} parent=1 // pred_check_branch
      %89 = sbr.rel (0) target = $region33
    $region32: #{tpu_custom_call.1} parent=1 // pred_region
      %91 = dma.done [#allocation3], 4096
    $region33: #{tpu_custom_call.1} parent=1 // pred_fallthru
      _
    // Predicated region
    $region34: #{tpu_custom_call.1} parent=1 // pred_check
      _
    $region35: #{tpu_custom_call.1} parent=1 // pred_check_branch
      %93 = sbr.rel (0) target = $region37
    $region36: #{tpu_custom_call.1} parent=1 // pred_region
      %95 = dma.done [#allocation6], 16384
    $region37: #{tpu_custom_call.1} parent=1 // pred_fallthru
      _
    // Predicated region
    $region38: #{tpu_custom_call.1} parent=1 // pred_check
      _
    $region39: #{tpu_custom_call.1} parent=1 // pred_check_branch
      %97 = sbr.rel (0) target = $region41
    $region40: #{tpu_custom_call.1} parent=1 // pred_region
      %99 = dma.done [#allocation6], 16384
    $region41: #{tpu_custom_call.1} parent=1 // pred_fallthru
      _
    // Predicated region
    $region42: #{tpu_custom_call.1} parent=1 // pred_check
      _
    $region43: #{tpu_custom_call.1} parent=1 // pred_check_branch
      %101 = sbr.rel (0) target = $region45
    $region44: #{tpu_custom_call.1} parent=1 // pred_region
      %103 = dma.done [#allocation9], 2048
    $region45: #{tpu_custom_call.1} parent=1 // pred_fallthru
      _
    // Predicated region
    $region46: #{tpu_custom_call.1} parent=1 // pred_check
      _
    $region47: #{tpu_custom_call.1} parent=1 // pred_check_branch
      %105 = sbr.rel (0) target = $region49
    $region48: #{tpu_custom_call.1} parent=1 // pred_region
      %107 = dma.done [#allocation9], 2048
    $region49: #{tpu_custom_call.1} parent=1 // pred_fallthru
      _
    %v109 = vld [vmem:[#allocation5] sm:$0xff]
    %v110 = vld [vmem:[#allocation5 + $0x8] sm:$0xff]
    %v111 = vld [vmem:[#allocation5 + $0x10] sm:$0xff]
    %v112 = vld [vmem:[#allocation5 + $0x18] sm:$0xff]
    %v113 = vld [vmem:[#allocation5 + $0x20] sm:$0xff]
    %v114 = vld [vmem:[#allocation5 + $0x28] sm:$0xff]
    %v115 = vld [vmem:[#allocation5 + $0x30] sm:$0xff]
    %v116 = vld [vmem:[#allocation5 + $0x38] sm:$0xff]
    %v117 = vld [vmem:[#allocation5 + $0x40] sm:$0xff]
    %v118 = vld [vmem:[#allocation5 + $0x48] sm:$0xff]
    %v119 = vld [vmem:[#allocation5 + $0x50] sm:$0xff]
    %v120 = vld [vmem:[#allocation5 + $0x58] sm:$0xff]
    %v121 = vld [vmem:[#allocation5 + $0x60] sm:$0xff]
    %v122 = vld [vmem:[#allocation5 + $0x68] sm:$0xff]
    %v123 = vld [vmem:[#allocation5 + $0x70] sm:$0xff]
    %v124 = vld [vmem:[#allocation5 + $0x78] sm:$0xff]
    %v125 = vld [vmem:[#allocation5 + $0x80] sm:$0xff]
    %v126 = vld [vmem:[#allocation5 + $0x88] sm:$0xff]
    %v127 = vld [vmem:[#allocation5 + $0x90] sm:$0xff]
    %v128 = vld [vmem:[#allocation5 + $0x98] sm:$0xff]
    %v129 = vld [vmem:[#allocation5 + $0xa0] sm:$0xff]
    %v130 = vld [vmem:[#allocation5 + $0xa8] sm:$0xff]
    %v131 = vld [vmem:[#allocation5 + $0xb0] sm:$0xff]
    %v132 = vld [vmem:[#allocation5 + $0xb8] sm:$0xff]
    %v133 = vld [vmem:[#allocation5 + $0xc0] sm:$0xff]
    %v134 = vld [vmem:[#allocation5 + $0xc8] sm:$0xff]
    %v135 = vld [vmem:[#allocation5 + $0xd0] sm:$0xff]
    %v136 = vld [vmem:[#allocation5 + $0xd8] sm:$0xff]
    %v137 = vld [vmem:[#allocation5 + $0xe0] sm:$0xff]
    %v138 = vld [vmem:[#allocation5 + $0xe8] sm:$0xff]
    %v139 = vld [vmem:[#allocation5 + $0xf0] sm:$0xff]
    %v140 = vld [vmem:[#allocation5 + $0xf8] sm:$0xff]
    %v141 = vld [vmem:[#allocation5 + $0x100] sm:$0xff]
    %v142 = vld [vmem:[#allocation5 + $0x108] sm:$0xff]
    %v143 = vld [vmem:[#allocation5 + $0x110] sm:$0xff]
    %v144 = vld [vmem:[#allocation5 + $0x118] sm:$0xff]
    %v145 = vld [vmem:[#allocation5 + $0x120] sm:$0xff]
    %v146 = vld [vmem:[#allocation5 + $0x128] sm:$0xff]
    %v147 = vld [vmem:[#allocation5 + $0x130] sm:$0xff]
    %v148 = vld [vmem:[#allocation5 + $0x138] sm:$0xff]
    %v149 = vld [vmem:[#allocation5 + $0x140] sm:$0xff]
    %v150 = vld [vmem:[#allocation5 + $0x148] sm:$0xff]
    %v151 = vld [vmem:[#allocation5 + $0x150] sm:$0xff]
    %v152 = vld [vmem:[#allocation5 + $0x158] sm:$0xff]
    %v153 = vld [vmem:[#allocation5 + $0x160] sm:$0xff]
    %v154 = vld [vmem:[#allocation5 + $0x168] sm:$0xff]
    %v155 = vld [vmem:[#allocation5 + $0x170] sm:$0xff]
    %v156 = vld [vmem:[#allocation5 + $0x178] sm:$0xff]
    %v157 = vld [vmem:[#allocation5 + $0x180] sm:$0xff]
    %v158 = vld [vmem:[#allocation5 + $0x188] sm:$0xff]
    %v159 = vld [vmem:[#allocation5 + $0x190] sm:$0xff]
    %v160 = vld [vmem:[#allocation5 + $0x198] sm:$0xff]
    %v161 = vld [vmem:[#allocation5 + $0x1a0] sm:$0xff]
    %v162 = vld [vmem:[#allocation5 + $0x1a8] sm:$0xff]
    %v163 = vld [vmem:[#allocation5 + $0x1b0] sm:$0xff]
    %v164 = vld [vmem:[#allocation5 + $0x1b8] sm:$0xff]
    %v165 = vld [vmem:[#allocation5 + $0x1c0] sm:$0xff]
    %v166 = vld [vmem:[#allocation5 + $0x1c8] sm:$0xff]
    %v167 = vld [vmem:[#allocation5 + $0x1d0] sm:$0xff]
    %v168 = vld [vmem:[#allocation5 + $0x1d8] sm:$0xff]
    %v169 = vld [vmem:[#allocation5 + $0x1e0] sm:$0xff]
    %v170 = vld [vmem:[#allocation5 + $0x1e8] sm:$0xff]
    %v171 = vld [vmem:[#allocation5 + $0x1f0] sm:$0xff]
    %v172 = vld [vmem:[#allocation5 + $0x1f8] sm:$0xff]
    %v173 = vld [vmem:[#allocation5 + $0x200] sm:$0xff]
    %v174 = vld [vmem:[#allocation5 + $0x208] sm:$0xff]
    %v175 = vld [vmem:[#allocation5 + $0x210] sm:$0xff]
    %v176 = vld [vmem:[#allocation5 + $0x218] sm:$0xff]
    %v177 = vld [vmem:[#allocation5 + $0x220] sm:$0xff]
    %v178 = vld [vmem:[#allocation5 + $0x228] sm:$0xff]
    %v179 = vld [vmem:[#allocation5 + $0x230] sm:$0xff]
    %v180 = vld [vmem:[#allocation5 + $0x238] sm:$0xff]
    %v181 = vld [vmem:[#allocation5 + $0x240] sm:$0xff]
    %v182 = vld [vmem:[#allocation5 + $0x248] sm:$0xff]
    %v183 = vld [vmem:[#allocation5 + $0x250] sm:$0xff]
    %v184 = vld [vmem:[#allocation5 + $0x258] sm:$0xff]
    %v185 = vld [vmem:[#allocation5 + $0x260] sm:$0xff]
    %v186 = vld [vmem:[#allocation5 + $0x268] sm:$0xff]
    %v187 = vld [vmem:[#allocation5 + $0x270] sm:$0xff]
    %v188 = vld [vmem:[#allocation5 + $0x278] sm:$0xff]
    %v189 = vld [vmem:[#allocation5 + $0x280] sm:$0xff]
    %v190 = vld [vmem:[#allocation5 + $0x288] sm:$0xff]
    %v191 = vld [vmem:[#allocation5 + $0x290] sm:$0xff]
    %v192 = vld [vmem:[#allocation5 + $0x298] sm:$0xff]
    %v193 = vld [vmem:[#allocation5 + $0x2a0] sm:$0xff]
    %v194 = vld [vmem:[#allocation5 + $0x2a8] sm:$0xff]
    %v195 = vld [vmem:[#allocation5 + $0x2b0] sm:$0xff]
    %v196 = vld [vmem:[#allocation5 + $0x2b8] sm:$0xff]
    %v197 = vld [vmem:[#allocation5 + $0x2c0] sm:$0xff]
    %v198 = vld [vmem:[#allocation5 + $0x2c8] sm:$0xff]
    %v199 = vld [vmem:[#allocation5 + $0x2d0] sm:$0xff]
    %v200 = vld [vmem:[#allocation5 + $0x2d8] sm:$0xff]
    %v201 = vld [vmem:[#allocation5 + $0x2e0] sm:$0xff]
    %v202 = vld [vmem:[#allocation5 + $0x2e8] sm:$0xff]
    %v203 = vld [vmem:[#allocation5 + $0x2f0] sm:$0xff]
    %v204 = vld [vmem:[#allocation5 + $0x2f8] sm:$0xff]
    %v205 = vld [vmem:[#allocation5 + $0x300] sm:$0xff]
    %v206 = vld [vmem:[#allocation5 + $0x308] sm:$0xff]
    %v207 = vld [vmem:[#allocation5 + $0x310] sm:$0xff]
    %v208 = vld [vmem:[#allocation5 + $0x318] sm:$0xff]
    %v209 = vld [vmem:[#allocation5 + $0x320] sm:$0xff]
    %v210 = vld [vmem:[#allocation5 + $0x328] sm:$0xff]
    %v211 = vld [vmem:[#allocation5 + $0x330] sm:$0xff]
    %v212 = vld [vmem:[#allocation5 + $0x338] sm:$0xff]
    %v213 = vld [vmem:[#allocation5 + $0x340] sm:$0xff]
    %v214 = vld [vmem:[#allocation5 + $0x348] sm:$0xff]
    %v215 = vld [vmem:[#allocation5 + $0x350] sm:$0xff]
    %v216 = vld [vmem:[#allocation5 + $0x358] sm:$0xff]
    %v217 = vld [vmem:[#allocation5 + $0x360] sm:$0xff]
    %v218 = vld [vmem:[#allocation5 + $0x368] sm:$0xff]
    %v219 = vld [vmem:[#allocation5 + $0x370] sm:$0xff]
    %v220 = vld [vmem:[#allocation5 + $0x378] sm:$0xff]
    %v221 = vld [vmem:[#allocation5 + $0x380] sm:$0xff]
    %v222 = vld [vmem:[#allocation5 + $0x388] sm:$0xff]
    %v223 = vld [vmem:[#allocation5 + $0x390] sm:$0xff]
    %v224 = vld [vmem:[#allocation5 + $0x398] sm:$0xff]
    %v225 = vld [vmem:[#allocation5 + $0x3a0] sm:$0xff]
    %v226 = vld [vmem:[#allocation5 + $0x3a8] sm:$0xff]
    %v227 = vld [vmem:[#allocation5 + $0x3b0] sm:$0xff]
    %v228 = vld [vmem:[#allocation5 + $0x3b8] sm:$0xff]
    %v229 = vld [vmem:[#allocation5 + $0x3c0] sm:$0xff]
    %v230 = vld [vmem:[#allocation5 + $0x3c8] sm:$0xff]
    %v231 = vld [vmem:[#allocation5 + $0x3d0] sm:$0xff]
    %v232 = vld [vmem:[#allocation5 + $0x3d8] sm:$0xff]
    %v233 = vld [vmem:[#allocation5 + $0x3e0] sm:$0xff]
    %v234 = vld [vmem:[#allocation5 + $0x3e8] sm:$0xff]
    %v235 = vld [vmem:[#allocation5 + $0x3f0] sm:$0xff]
    %v236 = vld [vmem:[#allocation5 + $0x3f8] sm:$0xff]
    %v237 = vld [vmem:[#allocation7] sm:$0xff]
    %v238 = vld [vmem:[#allocation7 + $0x8] sm:$0xff]
    %v239 = vld [vmem:[#allocation7 + $0x10] sm:$0xff]
    %v240 = vld [vmem:[#allocation7 + $0x18] sm:$0xff]
    %v241 = vld [vmem:[#allocation7 + $0x20] sm:$0xff]
    %v242 = vld [vmem:[#allocation7 + $0x28] sm:$0xff]
    %v243 = vld [vmem:[#allocation7 + $0x30] sm:$0xff]
    %v244 = vld [vmem:[#allocation7 + $0x38] sm:$0xff]
    %v245 = vld [vmem:[#allocation7 + $0x40] sm:$0xff]
    %v246 = vld [vmem:[#allocation7 + $0x48] sm:$0xff]
    %v247 = vld [vmem:[#allocation7 + $0x50] sm:$0xff]
    %v248 = vld [vmem:[#allocation7 + $0x58] sm:$0xff]
    %v249 = vld [vmem:[#allocation7 + $0x60] sm:$0xff]
    %v250 = vld [vmem:[#allocation7 + $0x68] sm:$0xff]
    %v251 = vld [vmem:[#allocation7 + $0x70] sm:$0xff]
    %v252 = vld [vmem:[#allocation7 + $0x78] sm:$0xff]
    %v253 = vld [vmem:[#allocation7 + $0x80] sm:$0xff]
    %v254 = vld [vmem:[#allocation7 + $0x88] sm:$0xff]
    %v255 = vld [vmem:[#allocation7 + $0x90] sm:$0xff]
    %v256 = vld [vmem:[#allocation7 + $0x98] sm:$0xff]
    %v257 = vld [vmem:[#allocation7 + $0xa0] sm:$0xff]
    %v258 = vld [vmem:[#allocation7 + $0xa8] sm:$0xff]
    %v259 = vld [vmem:[#allocation7 + $0xb0] sm:$0xff]
    %v260 = vld [vmem:[#allocation7 + $0xb8] sm:$0xff]
    %v261 = vld [vmem:[#allocation7 + $0xc0] sm:$0xff]
    %v262 = vld [vmem:[#allocation7 + $0xc8] sm:$0xff]
    %v263 = vld [vmem:[#allocation7 + $0xd0] sm:$0xff]
    %v264 = vld [vmem:[#allocation7 + $0xd8] sm:$0xff]
    %v265 = vld [vmem:[#allocation7 + $0xe0] sm:$0xff]
    %v266 = vld [vmem:[#allocation7 + $0xe8] sm:$0xff]
    %v267 = vld [vmem:[#allocation7 + $0xf0] sm:$0xff]
    %v268 = vld [vmem:[#allocation7 + $0xf8] sm:$0xff]
    %v269 = vld [vmem:[#allocation7 + $0x100] sm:$0xff]
    %v270 = vld [vmem:[#allocation7 + $0x108] sm:$0xff]
    %v271 = vld [vmem:[#allocation7 + $0x110] sm:$0xff]
    %v272 = vld [vmem:[#allocation7 + $0x118] sm:$0xff]
    %v273 = vld [vmem:[#allocation7 + $0x120] sm:$0xff]
    %v274 = vld [vmem:[#allocation7 + $0x128] sm:$0xff]
    %v275 = vld [vmem:[#allocation7 + $0x130] sm:$0xff]
    %v276 = vld [vmem:[#allocation7 + $0x138] sm:$0xff]
    %v277 = vld [vmem:[#allocation7 + $0x140] sm:$0xff]
    %v278 = vld [vmem:[#allocation7 + $0x148] sm:$0xff]
    %v279 = vld [vmem:[#allocation7 + $0x150] sm:$0xff]
    %v280 = vld [vmem:[#allocation7 + $0x158] sm:$0xff]
    %v281 = vld [vmem:[#allocation7 + $0x160] sm:$0xff]
    %v282 = vld [vmem:[#allocation7 + $0x168] sm:$0xff]
    %v283 = vld [vmem:[#allocation7 + $0x170] sm:$0xff]
    %v284 = vld [vmem:[#allocation7 + $0x178] sm:$0xff]
    %v285 = vld [vmem:[#allocation7 + $0x180] sm:$0xff]
    %v286 = vld [vmem:[#allocation7 + $0x188] sm:$0xff]
    %v287 = vld [vmem:[#allocation7 + $0x190] sm:$0xff]
    %v288 = vld [vmem:[#allocation7 + $0x198] sm:$0xff]
    %v289 = vld [vmem:[#allocation7 + $0x1a0] sm:$0xff]
    %v290 = vld [vmem:[#allocation7 + $0x1a8] sm:$0xff]
    %v291 = vld [vmem:[#allocation7 + $0x1b0] sm:$0xff]
    %v292 = vld [vmem:[#allocation7 + $0x1b8] sm:$0xff]
    %v293 = vld [vmem:[#allocation7 + $0x1c0] sm:$0xff]
    %v294 = vld [vmem:[#allocation7 + $0x1c8] sm:$0xff]
    %v295 = vld [vmem:[#allocation7 + $0x1d0] sm:$0xff]
    %v296 = vld [vmem:[#allocation7 + $0x1d8] sm:$0xff]
    %v297 = vld [vmem:[#allocation7 + $0x1e0] sm:$0xff]
    %v298 = vld [vmem:[#allocation7 + $0x1e8] sm:$0xff]
    %v299 = vld [vmem:[#allocation7 + $0x1f0] sm:$0xff]
    %v300 = vld [vmem:[#allocation7 + $0x1f8] sm:$0xff]
    %v301 = vld [vmem:[#allocation7 + $0x200] sm:$0xff]
    %v302 = vld [vmem:[#allocation7 + $0x208] sm:$0xff]
    %v303 = vld [vmem:[#allocation7 + $0x210] sm:$0xff]
    %v304 = vld [vmem:[#allocation7 + $0x218] sm:$0xff]
    %v305 = vld [vmem:[#allocation7 + $0x220] sm:$0xff]
    %v306 = vld [vmem:[#allocation7 + $0x228] sm:$0xff]
    %v307 = vld [vmem:[#allocation7 + $0x230] sm:$0xff]
    %v308 = vld [vmem:[#allocation7 + $0x238] sm:$0xff]
    %v309 = vld [vmem:[#allocation7 + $0x240] sm:$0xff]
    %v310 = vld [vmem:[#allocation7 + $0x248] sm:$0xff]
    %v311 = vld [vmem:[#allocation7 + $0x250] sm:$0xff]
    %v312 = vld [vmem:[#allocation7 + $0x258] sm:$0xff]
    %v313 = vld [vmem:[#allocation7 + $0x260] sm:$0xff]
    %v314 = vld [vmem:[#allocation7 + $0x268] sm:$0xff]
    %v315 = vld [vmem:[#allocation7 + $0x270] sm:$0xff]
    %v316 = vld [vmem:[#allocation7 + $0x278] sm:$0xff]
    %v317 = vld [vmem:[#allocation7 + $0x280] sm:$0xff]
    %v318 = vld [vmem:[#allocation7 + $0x288] sm:$0xff]
    %v319 = vld [vmem:[#allocation7 + $0x290] sm:$0xff]
    %v320 = vld [vmem:[#allocation7 + $0x298] sm:$0xff]
    %v321 = vld [vmem:[#allocation7 + $0x2a0] sm:$0xff]
    %v322 = vld [vmem:[#allocation7 + $0x2a8] sm:$0xff]
    %v323 = vld [vmem:[#allocation7 + $0x2b0] sm:$0xff]
    %v324 = vld [vmem:[#allocation7 + $0x2b8] sm:$0xff]
    %v325 = vld [vmem:[#allocation7 + $0x2c0] sm:$0xff]
    %v326 = vld [vmem:[#allocation7 + $0x2c8] sm:$0xff]
    %v327 = vld [vmem:[#allocation7 + $0x2d0] sm:$0xff]
    %v328 = vld [vmem:[#allocation7 + $0x2d8] sm:$0xff]
    %v329 = vld [vmem:[#allocation7 + $0x2e0] sm:$0xff]
    %v330 = vld [vmem:[#allocation7 + $0x2e8] sm:$0xff]
    %v331 = vld [vmem:[#allocation7 + $0x2f0] sm:$0xff]
    %v332 = vld [vmem:[#allocation7 + $0x2f8] sm:$0xff]
    %v333 = vld [vmem:[#allocation7 + $0x300] sm:$0xff]
    %v334 = vld [vmem:[#allocation7 + $0x308] sm:$0xff]
    %v335 = vld [vmem:[#allocation7 + $0x310] sm:$0xff]
    %v336 = vld [vmem:[#allocation7 + $0x318] sm:$0xff]
    %v337 = vld [vmem:[#allocation7 + $0x320] sm:$0xff]
    %v338 = vld [vmem:[#allocation7 + $0x328] sm:$0xff]
    %v339 = vld [vmem:[#allocation7 + $0x330] sm:$0xff]
    %v340 = vld [vmem:[#allocation7 + $0x338] sm:$0xff]
    %v341 = vld [vmem:[#allocation7 + $0x340] sm:$0xff]
    %v342 = vld [vmem:[#allocation7 + $0x348] sm:$0xff]
    %v343 = vld [vmem:[#allocation7 + $0x350] sm:$0xff]
    %v344 = vld [vmem:[#allocation7 + $0x358] sm:$0xff]
    %v345 = vld [vmem:[#allocation7 + $0x360] sm:$0xff]
    %v346 = vld [vmem:[#allocation7 + $0x368] sm:$0xff]
    %v347 = vld [vmem:[#allocation7 + $0x370] sm:$0xff]
    %v348 = vld [vmem:[#allocation7 + $0x378] sm:$0xff]
    %v349 = vld [vmem:[#allocation7 + $0x380] sm:$0xff]
    %v350 = vld [vmem:[#allocation7 + $0x388] sm:$0xff]
    %v351 = vld [vmem:[#allocation7 + $0x390] sm:$0xff]
    %v352 = vld [vmem:[#allocation7 + $0x398] sm:$0xff]
    %v353 = vld [vmem:[#allocation7 + $0x3a0] sm:$0xff]
    %v354 = vld [vmem:[#allocation7 + $0x3a8] sm:$0xff]
    %v355 = vld [vmem:[#allocation7 + $0x3b0] sm:$0xff]
    %v356 = vld [vmem:[#allocation7 + $0x3b8] sm:$0xff]
    %v357 = vld [vmem:[#allocation7 + $0x3c0] sm:$0xff]
    %v358 = vld [vmem:[#allocation7 + $0x3c8] sm:$0xff]
    %v359 = vld [vmem:[#allocation7 + $0x3d0] sm:$0xff]
    %v360 = vld [vmem:[#allocation7 + $0x3d8] sm:$0xff]
    %v361 = vld [vmem:[#allocation7 + $0x3e0] sm:$0xff]
    %v362 = vld [vmem:[#allocation7 + $0x3e8] sm:$0xff]
    %v363 = vld [vmem:[#allocation7 + $0x3f0] sm:$0xff]
    %v364 = vld [vmem:[#allocation7 + $0x3f8] sm:$0xff]
    %v365 = vld [vmem:[#allocation8] sm:$0xf]
    %v366 = vld [vmem:[#allocation8 + $0x4] sm:$0xf]
    %v367 = vld [vmem:[#allocation8 + $0x8] sm:$0xf]
    %v368 = vld [vmem:[#allocation8 + $0xc] sm:$0xf]
    %v369 = vld [vmem:[#allocation8 + $0x10] sm:$0xf]
    %v370 = vld [vmem:[#allocation8 + $0x14] sm:$0xf]
    %v371 = vld [vmem:[#allocation8 + $0x18] sm:$0xf]
    %v372 = vld [vmem:[#allocation8 + $0x1c] sm:$0xf]
    %v373 = vld [vmem:[#allocation8 + $0x20] sm:$0xf]
    %v374 = vld [vmem:[#allocation8 + $0x24] sm:$0xf]
    %v375 = vld [vmem:[#allocation8 + $0x28] sm:$0xf]
    %v376 = vld [vmem:[#allocation8 + $0x2c] sm:$0xf]
    %v377 = vld [vmem:[#allocation8 + $0x30] sm:$0xf]
    %v378 = vld [vmem:[#allocation8 + $0x34] sm:$0xf]
    %v379 = vld [vmem:[#allocation8 + $0x38] sm:$0xf]
    %v380 = vld [vmem:[#allocation8 + $0x3c] sm:$0xf]
    %v381 = vld [vmem:[#allocation8 + $0x40] sm:$0xf]
    %v382 = vld [vmem:[#allocation8 + $0x44] sm:$0xf]
    %v383 = vld [vmem:[#allocation8 + $0x48] sm:$0xf]
    %v384 = vld [vmem:[#allocation8 + $0x4c] sm:$0xf]
    %v385 = vld [vmem:[#allocation8 + $0x50] sm:$0xf]
    %v386 = vld [vmem:[#allocation8 + $0x54] sm:$0xf]
    %v387 = vld [vmem:[#allocation8 + $0x58] sm:$0xf]
    %v388 = vld [vmem:[#allocation8 + $0x5c] sm:$0xf]
    %v389 = vld [vmem:[#allocation8 + $0x60] sm:$0xf]
    %v390 = vld [vmem:[#allocation8 + $0x64] sm:$0xf]
    %v391 = vld [vmem:[#allocation8 + $0x68] sm:$0xf]
    %v392 = vld [vmem:[#allocation8 + $0x6c] sm:$0xf]
    %v393 = vld [vmem:[#allocation8 + $0x70] sm:$0xf]
    %v394 = vld [vmem:[#allocation8 + $0x74] sm:$0xf]
    %v395 = vld [vmem:[#allocation8 + $0x78] sm:$0xf]
    %v396 = vld [vmem:[#allocation8 + $0x7c] sm:$0xf]
    %v397 = vld [vmem:[#allocation10] sm:$0xf]
    %v398 = vld [vmem:[#allocation10 + $0x4] sm:$0xf]
    %v399 = vld [vmem:[#allocation10 + $0x8] sm:$0xf]
    %v400 = vld [vmem:[#allocation10 + $0xc] sm:$0xf]
    %v401 = vld [vmem:[#allocation10 + $0x10] sm:$0xf]
    %v402 = vld [vmem:[#allocation10 + $0x14] sm:$0xf]
    %v403 = vld [vmem:[#allocation10 + $0x18] sm:$0xf]
    %v404 = vld [vmem:[#allocation10 + $0x1c] sm:$0xf]
    %v405 = vld [vmem:[#allocation10 + $0x20] sm:$0xf]
    %v406 = vld [vmem:[#allocation10 + $0x24] sm:$0xf]
    %v407 = vld [vmem:[#allocation10 + $0x28] sm:$0xf]
    %v408 = vld [vmem:[#allocation10 + $0x2c] sm:$0xf]
    %v409 = vld [vmem:[#allocation10 + $0x30] sm:$0xf]
    %v410 = vld [vmem:[#allocation10 + $0x34] sm:$0xf]
    %v411 = vld [vmem:[#allocation10 + $0x38] sm:$0xf]
    %v412 = vld [vmem:[#allocation10 + $0x3c] sm:$0xf]
    %v413 = vld [vmem:[#allocation10 + $0x40] sm:$0xf]
    %v414 = vld [vmem:[#allocation10 + $0x44] sm:$0xf]
    %v415 = vld [vmem:[#allocation10 + $0x48] sm:$0xf]
    %v416 = vld [vmem:[#allocation10 + $0x4c] sm:$0xf]
    %v417 = vld [vmem:[#allocation10 + $0x50] sm:$0xf]
    %v418 = vld [vmem:[#allocation10 + $0x54] sm:$0xf]
    %v419 = vld [vmem:[#allocation10 + $0x58] sm:$0xf]
    %v420 = vld [vmem:[#allocation10 + $0x5c] sm:$0xf]
    %v421 = vld [vmem:[#allocation10 + $0x60] sm:$0xf]
    %v422 = vld [vmem:[#allocation10 + $0x64] sm:$0xf]
    %v423 = vld [vmem:[#allocation10 + $0x68] sm:$0xf]
    %v424 = vld [vmem:[#allocation10 + $0x6c] sm:$0xf]
    %v425 = vld [vmem:[#allocation10 + $0x70] sm:$0xf]
    %v426 = vld [vmem:[#allocation10 + $0x74] sm:$0xf]
    %v427 = vld [vmem:[#allocation10 + $0x78] sm:$0xf]
    %v428 = vld [vmem:[#allocation10 + $0x7c] sm:$0xf]
    %v429 = vld [vmem:[%s5] sm:$0x1]
    %v431 = vperm.slane %v429, 0
    %v433 = vld [vmem:[%s6] sm:$0x1]
    %v435 = vperm.slane %v433, 0
    %v437 = vld [vmem:[#allocation2] sm:$0xff]
    %v438 = vld [vmem:[#allocation2 + $0x8] sm:$0xff]
    %v439 = vld [vmem:[#allocation2 + $0x10] sm:$0xff]
    %v440 = vld [vmem:[#allocation2 + $0x18] sm:$0xff]
    %v441 = vld [vmem:[#allocation2 + $0x20] sm:$0xff]
    %v442 = vld [vmem:[#allocation2 + $0x28] sm:$0xff]
    %v443 = vld [vmem:[#allocation2 + $0x30] sm:$0xff]
    %v444 = vld [vmem:[#allocation2 + $0x38] sm:$0xff]
    %v573 = vunpack.c.l.b16 %v237
    %v574 = vunpack.c.h.b16 %v237
    %v575 = vunpack.c.l.b16 %v238
    %v576 = vunpack.c.h.b16 %v238
    %v577 = vunpack.c.l.b16 %v239
    %v578 = vunpack.c.h.b16 %v239
    %v579 = vunpack.c.l.b16 %v240
    %v580 = vunpack.c.h.b16 %v240
    %v581 = vunpack.c.l.b16 %v241
    %v582 = vunpack.c.h.b16 %v241
    %v583 = vunpack.c.l.b16 %v242
    %v584 = vunpack.c.h.b16 %v242
    %v585 = vunpack.c.l.b16 %v243
    %v586 = vunpack.c.h.b16 %v243
    %v587 = vunpack.c.l.b16 %v244
    %v588 = vunpack.c.h.b16 %v244
    %v589 = vunpack.c.l.b16 %v245
    %v590 = vunpack.c.h.b16 %v245
    %v591 = vunpack.c.l.b16 %v246
    %v592 = vunpack.c.h.b16 %v246
    %v593 = vunpack.c.l.b16 %v247
    %v594 = vunpack.c.h.b16 %v247
    %v595 = vunpack.c.l.b16 %v248
    %v596 = vunpack.c.h.b16 %v248
    %v597 = vunpack.c.l.b16 %v249
    %v598 = vunpack.c.h.b16 %v249
    %v599 = vunpack.c.l.b16 %v250
    %v600 = vunpack.c.h.b16 %v250
    %v601 = vunpack.c.l.b16 %v251
    %v602 = vunpack.c.h.b16 %v251
    %v603 = vunpack.c.l.b16 %v252
    %v604 = vunpack.c.h.b16 %v252
    %v605 = vunpack.c.l.b16 %v253
    %v606 = vunpack.c.h.b16 %v253
    %v607 = vunpack.c.l.b16 %v254
    %v608 = vunpack.c.h.b16 %v254
    %v609 = vunpack.c.l.b16 %v255
    %v610 = vunpack.c.h.b16 %v255
    %v611 = vunpack.c.l.b16 %v256
    %v612 = vunpack.c.h.b16 %v256
    %v613 = vunpack.c.l.b16 %v257
    %v614 = vunpack.c.h.b16 %v257
    %v615 = vunpack.c.l.b16 %v258
    %v616 = vunpack.c.h.b16 %v258
    %v617 = vunpack.c.l.b16 %v259
    %v618 = vunpack.c.h.b16 %v259
    %v619 = vunpack.c.l.b16 %v260
    %v620 = vunpack.c.h.b16 %v260
    %v621 = vunpack.c.l.b16 %v261
    %v622 = vunpack.c.h.b16 %v261
    %v623 = vunpack.c.l.b16 %v262
    %v624 = vunpack.c.h.b16 %v262
    %v625 = vunpack.c.l.b16 %v263
    %v626 = vunpack.c.h.b16 %v263
    %v627 = vunpack.c.l.b16 %v264
    %v628 = vunpack.c.h.b16 %v264
    %v629 = vunpack.c.l.b16 %v265
    %v630 = vunpack.c.h.b16 %v265
    %v631 = vunpack.c.l.b16 %v266
    %v632 = vunpack.c.h.b16 %v266
    %v633 = vunpack.c.l.b16 %v267
    %v634 = vunpack.c.h.b16 %v267
    %v635 = vunpack.c.l.b16 %v268
    %v636 = vunpack.c.h.b16 %v268
    %v637 = vunpack.c.l.b16 %v269
    %v638 = vunpack.c.h.b16 %v269
    %v639 = vunpack.c.l.b16 %v270
    %v640 = vunpack.c.h.b16 %v270
    %v641 = vunpack.c.l.b16 %v271
    %v642 = vunpack.c.h.b16 %v271
    %v643 = vunpack.c.l.b16 %v272
    %v644 = vunpack.c.h.b16 %v272
    %v645 = vunpack.c.l.b16 %v273
    %v646 = vunpack.c.h.b16 %v273
    %v647 = vunpack.c.l.b16 %v274
    %v648 = vunpack.c.h.b16 %v274
    %v649 = vunpack.c.l.b16 %v275
    %v650 = vunpack.c.h.b16 %v275
    %v651 = vunpack.c.l.b16 %v276
    %v652 = vunpack.c.h.b16 %v276
    %v653 = vunpack.c.l.b16 %v277
    %v654 = vunpack.c.h.b16 %v277
    %v655 = vunpack.c.l.b16 %v278
    %v656 = vunpack.c.h.b16 %v278
    %v657 = vunpack.c.l.b16 %v279
    %v658 = vunpack.c.h.b16 %v279
    %v659 = vunpack.c.l.b16 %v280
    %v660 = vunpack.c.h.b16 %v280
    %v661 = vunpack.c.l.b16 %v281
    %v662 = vunpack.c.h.b16 %v281
    %v663 = vunpack.c.l.b16 %v282
    %v664 = vunpack.c.h.b16 %v282
    %v665 = vunpack.c.l.b16 %v283
    %v666 = vunpack.c.h.b16 %v283
    %v667 = vunpack.c.l.b16 %v284
    %v668 = vunpack.c.h.b16 %v284
    %v669 = vunpack.c.l.b16 %v285
    %v670 = vunpack.c.h.b16 %v285
    %v671 = vunpack.c.l.b16 %v286
    %v672 = vunpack.c.h.b16 %v286
    %v673 = vunpack.c.l.b16 %v287
    %v674 = vunpack.c.h.b16 %v287
    %v675 = vunpack.c.l.b16 %v288
    %v676 = vunpack.c.h.b16 %v288
    %v677 = vunpack.c.l.b16 %v289
    %v678 = vunpack.c.h.b16 %v289
    %v679 = vunpack.c.l.b16 %v290
    %v680 = vunpack.c.h.b16 %v290
    %v681 = vunpack.c.l.b16 %v291
    %v682 = vunpack.c.h.b16 %v291
    %v683 = vunpack.c.l.b16 %v292
    %v684 = vunpack.c.h.b16 %v292
    %v685 = vunpack.c.l.b16 %v293
    %v686 = vunpack.c.h.b16 %v293
    %v687 = vunpack.c.l.b16 %v294
    %v688 = vunpack.c.h.b16 %v294
    %v689 = vunpack.c.l.b16 %v295
    %v690 = vunpack.c.h.b16 %v295
    %v691 = vunpack.c.l.b16 %v296
    %v692 = vunpack.c.h.b16 %v296
    %v693 = vunpack.c.l.b16 %v297
    %v694 = vunpack.c.h.b16 %v297
    %v695 = vunpack.c.l.b16 %v298
    %v696 = vunpack.c.h.b16 %v298
    %v697 = vunpack.c.l.b16 %v299
    %v698 = vunpack.c.h.b16 %v299
    %v699 = vunpack.c.l.b16 %v300
    %v700 = vunpack.c.h.b16 %v300
    %v701 = vunpack.c.l.b16 %v301
    %v702 = vunpack.c.h.b16 %v301
    %v703 = vunpack.c.l.b16 %v302
    %v704 = vunpack.c.h.b16 %v302
    %v705 = vunpack.c.l.b16 %v303
    %v706 = vunpack.c.h.b16 %v303
    %v707 = vunpack.c.l.b16 %v304
    %v708 = vunpack.c.h.b16 %v304
    %v709 = vunpack.c.l.b16 %v305
    %v710 = vunpack.c.h.b16 %v305
    %v711 = vunpack.c.l.b16 %v306
    %v712 = vunpack.c.h.b16 %v306
    %v713 = vunpack.c.l.b16 %v307
    %v714 = vunpack.c.h.b16 %v307
    %v715 = vunpack.c.l.b16 %v308
    %v716 = vunpack.c.h.b16 %v308
    %v717 = vunpack.c.l.b16 %v309
    %v718 = vunpack.c.h.b16 %v309
    %v719 = vunpack.c.l.b16 %v310
    %v720 = vunpack.c.h.b16 %v310
    %v721 = vunpack.c.l.b16 %v311
    %v722 = vunpack.c.h.b16 %v311
    %v723 = vunpack.c.l.b16 %v312
    %v724 = vunpack.c.h.b16 %v312
    %v725 = vunpack.c.l.b16 %v313
    %v726 = vunpack.c.h.b16 %v313
    %v727 = vunpack.c.l.b16 %v314
    %v728 = vunpack.c.h.b16 %v314
    %v729 = vunpack.c.l.b16 %v315
    %v730 = vunpack.c.h.b16 %v315
    %v731 = vunpack.c.l.b16 %v316
    %v732 = vunpack.c.h.b16 %v316
    %v733 = vunpack.c.l.b16 %v317
    %v734 = vunpack.c.h.b16 %v317
    %v735 = vunpack.c.l.b16 %v318
    %v736 = vunpack.c.h.b16 %v318
    %v737 = vunpack.c.l.b16 %v319
    %v738 = vunpack.c.h.b16 %v319
    %v739 = vunpack.c.l.b16 %v320
    %v740 = vunpack.c.h.b16 %v320
    %v741 = vunpack.c.l.b16 %v321
    %v742 = vunpack.c.h.b16 %v321
    %v743 = vunpack.c.l.b16 %v322
    %v744 = vunpack.c.h.b16 %v322
    %v745 = vunpack.c.l.b16 %v323
    %v746 = vunpack.c.h.b16 %v323
    %v747 = vunpack.c.l.b16 %v324
    %v748 = vunpack.c.h.b16 %v324
    %v749 = vunpack.c.l.b16 %v325
    %v750 = vunpack.c.h.b16 %v325
    %v751 = vunpack.c.l.b16 %v326
    %v752 = vunpack.c.h.b16 %v326
    %v753 = vunpack.c.l.b16 %v327
    %v754 = vunpack.c.h.b16 %v327
    %v755 = vunpack.c.l.b16 %v328
    %v756 = vunpack.c.h.b16 %v328
    %v757 = vunpack.c.l.b16 %v329
    %v758 = vunpack.c.h.b16 %v329
    %v759 = vunpack.c.l.b16 %v330
    %v760 = vunpack.c.h.b16 %v330
    %v761 = vunpack.c.l.b16 %v331
    %v762 = vunpack.c.h.b16 %v331
    %v763 = vunpack.c.l.b16 %v332
    %v764 = vunpack.c.h.b16 %v332
    %v765 = vunpack.c.l.b16 %v333
    %v766 = vunpack.c.h.b16 %v333
    %v767 = vunpack.c.l.b16 %v334
    %v768 = vunpack.c.h.b16 %v334
    %v769 = vunpack.c.l.b16 %v335
    %v770 = vunpack.c.h.b16 %v335
    %v771 = vunpack.c.l.b16 %v336
    %v772 = vunpack.c.h.b16 %v336
    %v773 = vunpack.c.l.b16 %v337
    %v774 = vunpack.c.h.b16 %v337
    %v775 = vunpack.c.l.b16 %v338
    %v776 = vunpack.c.h.b16 %v338
    %v777 = vunpack.c.l.b16 %v339
    %v778 = vunpack.c.h.b16 %v339
    %v779 = vunpack.c.l.b16 %v340
    %v780 = vunpack.c.h.b16 %v340
    %v781 = vunpack.c.l.b16 %v341
    %v782 = vunpack.c.h.b16 %v341
    %v783 = vunpack.c.l.b16 %v342
    %v784 = vunpack.c.h.b16 %v342
    %v785 = vunpack.c.l.b16 %v343
    %v786 = vunpack.c.h.b16 %v343
    %v787 = vunpack.c.l.b16 %v344
    %v788 = vunpack.c.h.b16 %v344
    %v789 = vunpack.c.l.b16 %v345
    %v790 = vunpack.c.h.b16 %v345
    %v791 = vunpack.c.l.b16 %v346
    %v792 = vunpack.c.h.b16 %v346
    %v793 = vunpack.c.l.b16 %v347
    %v794 = vunpack.c.h.b16 %v347
    %v795 = vunpack.c.l.b16 %v348
    %v796 = vunpack.c.h.b16 %v348
    %v797 = vunpack.c.l.b16 %v349
    %v798 = vunpack.c.h.b16 %v349
    %v799 = vunpack.c.l.b16 %v350
    %v800 = vunpack.c.h.b16 %v350
    %v801 = vunpack.c.l.b16 %v351
    %v802 = vunpack.c.h.b16 %v351
    %v803 = vunpack.c.l.b16 %v352
    %v804 = vunpack.c.h.b16 %v352
    %v805 = vunpack.c.l.b16 %v353
    %v806 = vunpack.c.h.b16 %v353
    %v807 = vunpack.c.l.b16 %v354
    %v808 = vunpack.c.h.b16 %v354
    %v809 = vunpack.c.l.b16 %v355
    %v810 = vunpack.c.h.b16 %v355
    %v811 = vunpack.c.l.b16 %v356
    %v812 = vunpack.c.h.b16 %v356
    %v813 = vunpack.c.l.b16 %v357
    %v814 = vunpack.c.h.b16 %v357
    %v815 = vunpack.c.l.b16 %v358
    %v816 = vunpack.c.h.b16 %v358
    %v817 = vunpack.c.l.b16 %v359
    %v818 = vunpack.c.h.b16 %v359
    %v819 = vunpack.c.l.b16 %v360
    %v820 = vunpack.c.h.b16 %v360
    %v821 = vunpack.c.l.b16 %v361
    %v822 = vunpack.c.h.b16 %v361
    %v823 = vunpack.c.l.b16 %v362
    %v824 = vunpack.c.h.b16 %v362
    %v825 = vunpack.c.l.b16 %v363
    %v826 = vunpack.c.h.b16 %v363
    %v827 = vunpack.c.l.b16 %v364
    %v828 = vunpack.c.h.b16 %v364
    %v829 = vpack.c.b16 %v581, %v573
    %v830 = vpack.c.b16 %v582, %v574
    %v831 = vpack.c.b16 %v583, %v575
    %v832 = vpack.c.b16 %v584, %v576
    %v833 = vpack.c.b16 %v585, %v577
    %v834 = vpack.c.b16 %v586, %v578
    %v835 = vpack.c.b16 %v587, %v579
    %v836 = vpack.c.b16 %v588, %v580
    %v837 = vpack.c.b16 %v597, %v589
    %v838 = vpack.c.b16 %v598, %v590
    %v839 = vpack.c.b16 %v599, %v591
    %v840 = vpack.c.b16 %v600, %v592
    %v841 = vpack.c.b16 %v601, %v593
    %v842 = vpack.c.b16 %v602, %v594
    %v843 = vpack.c.b16 %v603, %v595
    %v844 = vpack.c.b16 %v604, %v596
    %v845 = vpack.c.b16 %v613, %v605
    %v846 = vpack.c.b16 %v614, %v606
    %v847 = vpack.c.b16 %v615, %v607
    %v848 = vpack.c.b16 %v616, %v608
    %v849 = vpack.c.b16 %v617, %v609
    %v850 = vpack.c.b16 %v618, %v610
    %v851 = vpack.c.b16 %v619, %v611
    %v852 = vpack.c.b16 %v620, %v612
    %v853 = vpack.c.b16 %v629, %v621
    %v854 = vpack.c.b16 %v630, %v622
    %v855 = vpack.c.b16 %v631, %v623
    %v856 = vpack.c.b16 %v632, %v624
    %v857 = vpack.c.b16 %v633, %v625
    %v858 = vpack.c.b16 %v634, %v626
    %v859 = vpack.c.b16 %v635, %v627
    %v860 = vpack.c.b16 %v636, %v628
    %v861 = vpack.c.b16 %v645, %v637
    %v862 = vpack.c.b16 %v646, %v638
    %v863 = vpack.c.b16 %v647, %v639
    %v864 = vpack.c.b16 %v648, %v640
    %v865 = vpack.c.b16 %v649, %v641
    %v866 = vpack.c.b16 %v650, %v642
    %v867 = vpack.c.b16 %v651, %v643
    %v868 = vpack.c.b16 %v652, %v644
    %v869 = vpack.c.b16 %v661, %v653
    %v870 = vpack.c.b16 %v662, %v654
    %v871 = vpack.c.b16 %v663, %v655
    %v872 = vpack.c.b16 %v664, %v656
    %v873 = vpack.c.b16 %v665, %v657
    %v874 = vpack.c.b16 %v666, %v658
    %v875 = vpack.c.b16 %v667, %v659
    %v876 = vpack.c.b16 %v668, %v660
    %v877 = vpack.c.b16 %v677, %v669
    %v878 = vpack.c.b16 %v678, %v670
    %v879 = vpack.c.b16 %v679, %v671
    %v880 = vpack.c.b16 %v680, %v672
    %v881 = vpack.c.b16 %v681, %v673
    %v882 = vpack.c.b16 %v682, %v674
    %v883 = vpack.c.b16 %v683, %v675
    %v884 = vpack.c.b16 %v684, %v676
    %v885 = vpack.c.b16 %v693, %v685
    %v886 = vpack.c.b16 %v694, %v686
    %v887 = vpack.c.b16 %v695, %v687
    %v888 = vpack.c.b16 %v696, %v688
    %v889 = vpack.c.b16 %v697, %v689
    %v890 = vpack.c.b16 %v698, %v690
    %v891 = vpack.c.b16 %v699, %v691
    %v892 = vpack.c.b16 %v700, %v692
    %v893 = vpack.c.b16 %v709, %v701
    %v894 = vpack.c.b16 %v710, %v702
    %v895 = vpack.c.b16 %v711, %v703
    %v896 = vpack.c.b16 %v712, %v704
    %v897 = vpack.c.b16 %v713, %v705
    %v898 = vpack.c.b16 %v714, %v706
    %v899 = vpack.c.b16 %v715, %v707
    %v900 = vpack.c.b16 %v716, %v708
    %v901 = vpack.c.b16 %v725, %v717
    %v902 = vpack.c.b16 %v726, %v718
    %v903 = vpack.c.b16 %v727, %v719
    %v904 = vpack.c.b16 %v728, %v720
    %v905 = vpack.c.b16 %v729, %v721
    %v906 = vpack.c.b16 %v730, %v722
    %v907 = vpack.c.b16 %v731, %v723
    %v908 = vpack.c.b16 %v732, %v724
    %v909 = vpack.c.b16 %v741, %v733
    %v910 = vpack.c.b16 %v742, %v734
    %v911 = vpack.c.b16 %v743, %v735
    %v912 = vpack.c.b16 %v744, %v736
    %v913 = vpack.c.b16 %v745, %v737
    %v914 = vpack.c.b16 %v746, %v738
    %v915 = vpack.c.b16 %v747, %v739
    %v916 = vpack.c.b16 %v748, %v740
    %v917 = vpack.c.b16 %v757, %v749
    %v918 = vpack.c.b16 %v758, %v750
    %v919 = vpack.c.b16 %v759, %v751
    %v920 = vpack.c.b16 %v760, %v752
    %v921 = vpack.c.b16 %v761, %v753
    %v922 = vpack.c.b16 %v762, %v754
    %v923 = vpack.c.b16 %v763, %v755
    %v924 = vpack.c.b16 %v764, %v756
    %v925 = vpack.c.b16 %v773, %v765
    %v926 = vpack.c.b16 %v774, %v766
    %v927 = vpack.c.b16 %v775, %v767
    %v928 = vpack.c.b16 %v776, %v768
    %v929 = vpack.c.b16 %v777, %v769
    %v930 = vpack.c.b16 %v778, %v770
    %v931 = vpack.c.b16 %v779, %v771
    %v932 = vpack.c.b16 %v780, %v772
    %v933 = vpack.c.b16 %v789, %v781
    %v934 = vpack.c.b16 %v790, %v782
    %v935 = vpack.c.b16 %v791, %v783
    %v936 = vpack.c.b16 %v792, %v784
    %v937 = vpack.c.b16 %v793, %v785
    %v938 = vpack.c.b16 %v794, %v786
    %v939 = vpack.c.b16 %v795, %v787
    %v940 = vpack.c.b16 %v796, %v788
    %v941 = vpack.c.b16 %v805, %v797
    %v942 = vpack.c.b16 %v806, %v798
    %v943 = vpack.c.b16 %v807, %v799
    %v944 = vpack.c.b16 %v808, %v800
    %v945 = vpack.c.b16 %v809, %v801
    %v946 = vpack.c.b16 %v810, %v802
    %v947 = vpack.c.b16 %v811, %v803
    %v948 = vpack.c.b16 %v812, %v804
    %v949 = vpack.c.b16 %v821, %v813
    %v950 = vpack.c.b16 %v822, %v814
    %v951 = vpack.c.b16 %v823, %v815
    %v952 = vpack.c.b16 %v824, %v816
    %v953 = vpack.c.b16 %v825, %v817
    %v954 = vpack.c.b16 %v826, %v818
    %v955 = vpack.c.b16 %v827, %v819
    %v956 = vpack.c.b16 %v828, %v820
    %1085 = vmatpush.bf16.msra.mxu0 %v885
    %1086 = vmatpush.bf16.msra.mxu0 %v877
    %1087 = vmatpush.bf16.msra.mxu0 %v869
    %1088 = vmatpush.bf16.msra.mxu0 %v861
    %1089 = vmatpush.bf16.msra.mxu0 %v853
    %1090 = vmatpush.bf16.msra.mxu0 %v845
    %1091 = vmatpush.bf16.msra.mxu0 %v837
    %1092 = vmatpush.bf16.msra.mxu0 %v829
    %1093 = vmatmul.bf16.gmra.mxu0 0
    %v1094 = vpop.f32.mrf.mxu0
    %v1095 = vadd.f32 0.0, %v1094
    %v1096 = vpop.f32.mrf.mxu0
    %1097 = vdwg.mxu0
    %1098 = vmatpush.bf16.msra.mxu0 %v949
    %1099 = vmatpush.bf16.msra.mxu0 %v941
    %1100 = vmatpush.bf16.msra.mxu0 %v933
    %1101 = vmatpush.bf16.msra.mxu0 %v925
    %1102 = vmatpush.bf16.msra.mxu0 %v917
    %1103 = vmatpush.bf16.msra.mxu0 %v909
    %1104 = vmatpush.bf16.msra.mxu0 %v901
    %1105 = vmatpush.bf16.msra.mxu0 %v893
    %1106 = vmatmul.bf16.gmra.mxu0 0
    %v1107 = vpop.f32.mrf.mxu0
    %v1108 = vadd.f32 %v1095, %v1107
    %v1109 = vpop.f32.mrf.mxu0
    %1110 = vdwg.mxu0
    %1111 = vmatpush.bf16.msra.mxu0 %v886
    %1112 = vmatpush.bf16.msra.mxu0 %v878
    %1113 = vmatpush.bf16.msra.mxu0 %v870
    %1114 = vmatpush.bf16.msra.mxu0 %v862
    %1115 = vmatpush.bf16.msra.mxu0 %v854
    %1116 = vmatpush.bf16.msra.mxu0 %v846
    %1117 = vmatpush.bf16.msra.mxu0 %v838
    %1118 = vmatpush.bf16.msra.mxu0 %v830
    %1119 = vmatmul.bf16.gmra.mxu0 0
    %v1120 = vpop.f32.mrf.mxu0
    %v1121 = vadd.f32 0.0, %v1120
    %v1122 = vpop.f32.mrf.mxu0
    %1123 = vdwg.mxu0
    %1124 = vmatpush.bf16.msra.mxu0 %v950
    %1125 = vmatpush.bf16.msra.mxu0 %v942
    %1126 = vmatpush.bf16.msra.mxu0 %v934
    %1127 = vmatpush.bf16.msra.mxu0 %v926
    %1128 = vmatpush.bf16.msra.mxu0 %v918
    %1129 = vmatpush.bf16.msra.mxu0 %v910
    %1130 = vmatpush.bf16.msra.mxu0 %v902
    %1131 = vmatpush.bf16.msra.mxu0 %v894
    %1132 = vmatmul.bf16.gmra.mxu0 0
    %v1133 = vpop.f32.mrf.mxu0
    %v1134 = vadd.f32 %v1121, %v1133
    %v1135 = vpop.f32.mrf.mxu0
    %1136 = vdwg.mxu0
    %1137 = vmatpush.bf16.msra.mxu0 %v887
    %1138 = vmatpush.bf16.msra.mxu0 %v879
    %1139 = vmatpush.bf16.msra.mxu0 %v871
    %1140 = vmatpush.bf16.msra.mxu0 %v863
    %1141 = vmatpush.bf16.msra.mxu0 %v855
    %1142 = vmatpush.bf16.msra.mxu0 %v847
    %1143 = vmatpush.bf16.msra.mxu0 %v839
    %1144 = vmatpush.bf16.msra.mxu0 %v831
    %1145 = vmatmul.bf16.gmra.mxu0 0
    %v1146 = vpop.f32.mrf.mxu0
    %v1147 = vadd.f32 0.0, %v1146
    %v1148 = vpop.f32.mrf.mxu0
    %1149 = vdwg.mxu0
    %1150 = vmatpush.bf16.msra.mxu0 %v951
    %1151 = vmatpush.bf16.msra.mxu0 %v943
    %1152 = vmatpush.bf16.msra.mxu0 %v935
    %1153 = vmatpush.bf16.msra.mxu0 %v927
    %1154 = vmatpush.bf16.msra.mxu0 %v919
    %1155 = vmatpush.bf16.msra.mxu0 %v911
    %1156 = vmatpush.bf16.msra.mxu0 %v903
    %1157 = vmatpush.bf16.msra.mxu0 %v895
    %1158 = vmatmul.bf16.gmra.mxu0 0
    %v1159 = vpop.f32.mrf.mxu0
    %v1160 = vadd.f32 %v1147, %v1159
    %v1161 = vpop.f32.mrf.mxu0
    %1162 = vdwg.mxu0
    %1163 = vmatpush.bf16.msra.mxu0 %v888
    %1164 = vmatpush.bf16.msra.mxu0 %v880
    %1165 = vmatpush.bf16.msra.mxu0 %v872
    %1166 = vmatpush.bf16.msra.mxu0 %v864
    %1167 = vmatpush.bf16.msra.mxu0 %v856
    %1168 = vmatpush.bf16.msra.mxu0 %v848
    %1169 = vmatpush.bf16.msra.mxu0 %v840
    %1170 = vmatpush.bf16.msra.mxu0 %v832
    %1171 = vmatmul.bf16.gmra.mxu0 0
    %v1172 = vpop.f32.mrf.mxu0
    %v1173 = vadd.f32 0.0, %v1172
    %v1174 = vpop.f32.mrf.mxu0
    %1175 = vdwg.mxu0
    %1176 = vmatpush.bf16.msra.mxu0 %v952
    %1177 = vmatpush.bf16.msra.mxu0 %v944
    %1178 = vmatpush.bf16.msra.mxu0 %v936
    %1179 = vmatpush.bf16.msra.mxu0 %v928
    %1180 = vmatpush.bf16.msra.mxu0 %v920
    %1181 = vmatpush.bf16.msra.mxu0 %v912
    %1182 = vmatpush.bf16.msra.mxu0 %v904
    %1183 = vmatpush.bf16.msra.mxu0 %v896
    %1184 = vmatmul.bf16.gmra.mxu0 0
    %v1185 = vpop.f32.mrf.mxu0
    %v1186 = vadd.f32 %v1173, %v1185
    %v1187 = vpop.f32.mrf.mxu0
    %1188 = vdwg.mxu0
    %1189 = vmatpush.bf16.msra.mxu0 %v889
    %1190 = vmatpush.bf16.msra.mxu0 %v881
    %1191 = vmatpush.bf16.msra.mxu0 %v873
    %1192 = vmatpush.bf16.msra.mxu0 %v865
    %1193 = vmatpush.bf16.msra.mxu0 %v857
    %1194 = vmatpush.bf16.msra.mxu0 %v849
    %1195 = vmatpush.bf16.msra.mxu0 %v841
    %1196 = vmatpush.bf16.msra.mxu0 %v833
    %1197 = vmatmul.bf16.gmra.mxu0 0
    %v1198 = vpop.f32.mrf.mxu0
    %v1199 = vadd.f32 0.0, %v1198
    %v1200 = vpop.f32.mrf.mxu0
    %1201 = vdwg.mxu0
    %1202 = vmatpush.bf16.msra.mxu0 %v953
    %1203 = vmatpush.bf16.msra.mxu0 %v945
    %1204 = vmatpush.bf16.msra.mxu0 %v937
    %1205 = vmatpush.bf16.msra.mxu0 %v929
    %1206 = vmatpush.bf16.msra.mxu0 %v921
    %1207 = vmatpush.bf16.msra.mxu0 %v913
    %1208 = vmatpush.bf16.msra.mxu0 %v905
    %1209 = vmatpush.bf16.msra.mxu0 %v897
    %1210 = vmatmul.bf16.gmra.mxu0 0
    %v1211 = vpop.f32.mrf.mxu0
    %v1212 = vadd.f32 %v1199, %v1211
    %v1213 = vpop.f32.mrf.mxu0
    %1214 = vdwg.mxu0
    %1215 = vmatpush.bf16.msra.mxu0 %v890
    %1216 = vmatpush.bf16.msra.mxu0 %v882
    %1217 = vmatpush.bf16.msra.mxu0 %v874
    %1218 = vmatpush.bf16.msra.mxu0 %v866
    %1219 = vmatpush.bf16.msra.mxu0 %v858
    %1220 = vmatpush.bf16.msra.mxu0 %v850
    %1221 = vmatpush.bf16.msra.mxu0 %v842
    %1222 = vmatpush.bf16.msra.mxu0 %v834
    %1223 = vmatmul.bf16.gmra.mxu0 0
    %v1224 = vpop.f32.mrf.mxu0
    %v1225 = vadd.f32 0.0, %v1224
    %v1226 = vpop.f32.mrf.mxu0
    %1227 = vdwg.mxu0
    %1228 = vmatpush.bf16.msra.mxu0 %v954
    %1229 = vmatpush.bf16.msra.mxu0 %v946
    %1230 = vmatpush.bf16.msra.mxu0 %v938
    %1231 = vmatpush.bf16.msra.mxu0 %v930
    %1232 = vmatpush.bf16.msra.mxu0 %v922
    %1233 = vmatpush.bf16.msra.mxu0 %v914
    %1234 = vmatpush.bf16.msra.mxu0 %v906
    %1235 = vmatpush.bf16.msra.mxu0 %v898
    %1236 = vmatmul.bf16.gmra.mxu0 0
    %v1237 = vpop.f32.mrf.mxu0
    %v1238 = vadd.f32 %v1225, %v1237
    %v1239 = vpop.f32.mrf.mxu0
    %1240 = vdwg.mxu0
    %1241 = vmatpush.bf16.msra.mxu0 %v891
    %1242 = vmatpush.bf16.msra.mxu0 %v883
    %1243 = vmatpush.bf16.msra.mxu0 %v875
    %1244 = vmatpush.bf16.msra.mxu0 %v867
    %1245 = vmatpush.bf16.msra.mxu0 %v859
    %1246 = vmatpush.bf16.msra.mxu0 %v851
    %1247 = vmatpush.bf16.msra.mxu0 %v843
    %1248 = vmatpush.bf16.msra.mxu0 %v835
    %1249 = vmatmul.bf16.gmra.mxu0 0
    %v1250 = vpop.f32.mrf.mxu0
    %v1251 = vadd.f32 0.0, %v1250
    %v1252 = vpop.f32.mrf.mxu0
    %1253 = vdwg.mxu0
    %1254 = vmatpush.bf16.msra.mxu0 %v955
    %1255 = vmatpush.bf16.msra.mxu0 %v947
    %1256 = vmatpush.bf16.msra.mxu0 %v939
    %1257 = vmatpush.bf16.msra.mxu0 %v931
    %1258 = vmatpush.bf16.msra.mxu0 %v923
    %1259 = vmatpush.bf16.msra.mxu0 %v915
    %1260 = vmatpush.bf16.msra.mxu0 %v907
    %1261 = vmatpush.bf16.msra.mxu0 %v899
    %1262 = vmatmul.bf16.gmra.mxu0 0
    %v1263 = vpop.f32.mrf.mxu0
    %v1264 = vadd.f32 %v1251, %v1263
    %v1265 = vpop.f32.mrf.mxu0
    %1266 = vdwg.mxu0
    %1267 = vmatpush.bf16.msra.mxu0 %v892
    %1268 = vmatpush.bf16.msra.mxu0 %v884
    %1269 = vmatpush.bf16.msra.mxu0 %v876
    %1270 = vmatpush.bf16.msra.mxu0 %v868
    %1271 = vmatpush.bf16.msra.mxu0 %v860
    %1272 = vmatpush.bf16.msra.mxu0 %v852
    %1273 = vmatpush.bf16.msra.mxu0 %v844
    %1274 = vmatpush.bf16.msra.mxu0 %v836
    %1275 = vmatmul.bf16.gmra.mxu0 0
    %v1276 = vpop.f32.mrf.mxu0
    %v1277 = vadd.f32 0.0, %v1276
    %v1278 = vpop.f32.mrf.mxu0
    %1279 = vdwg.mxu0
    %1280 = vmatpush.bf16.msra.mxu0 %v956
    %1281 = vmatpush.bf16.msra.mxu0 %v948
    %1282 = vmatpush.bf16.msra.mxu0 %v940
    %1283 = vmatpush.bf16.msra.mxu0 %v932
    %1284 = vmatpush.bf16.msra.mxu0 %v924
    %1285 = vmatpush.bf16.msra.mxu0 %v916
    %1286 = vmatpush.bf16.msra.mxu0 %v908
    %1287 = vmatpush.bf16.msra.mxu0 %v900
    %1288 = vmatmul.bf16.gmra.mxu0 0
    %v1289 = vpop.f32.mrf.mxu0
    %v1290 = vadd.f32 %v1277, %v1289
    %v1291 = vpop.f32.mrf.mxu0
    %1292 = vdwg.mxu0
    %v1293 = vadd.f32 %v437, %v1108
    %v1294 = vadd.f32 %v438, %v1134
    %v1295 = vadd.f32 %v439, %v1160
    %v1296 = vadd.f32 %v440, %v1186
    %v1297 = vadd.f32 %v441, %v1212
    %v1298 = vadd.f32 %v442, %v1238
    %v1299 = vadd.f32 %v443, %v1264
    %v1300 = vadd.f32 %v444, %v1290
    %v1301 = vxor.u32 %v1293, 2147483648
    %v1302 = vxor.u32 %v1294, 2147483648
    %v1303 = vmul.f32 %v1301, 1.442695
    %v1304 = vpow.pop %v1303
    %v1305 = vmul.f32 %v1302, 1.442695
    %v1306 = vpow.pop %v1305
    %v1307 = vadd.f32 %v1304, 1.0
    %v1308 = vadd.f32 %v1306, 1.0
    %v1309 = vrcp.pop %v1307
    %v1310 = vmul.f32 %v1307, %v1309
    %v1311 = vsub.f32 1.0, %v1310
    %v1312 = vmul.f32 %v1309, %v1311
    %v1313 = vadd.f32 %v1309, %v1312
    %vm1314 = vweird.f32 %v1307
    %vm1315 = vweird.f32 %v1309
    %vm1316 = vmor %vm1314, %vm1315
    %v1317 = vsel %vm1316, %v1309, %v1313
    %v1318 = vand.u32 2147483647, %v1307
    %vm1319 = vcmp.eq.f32.partialorder %v1318, 8.507059e+37
    %v1320 = vand.u32 %v1307, 2147483648
    %v1321 = vor.u32 1.1754944e-38, %v1320
    %v1322 = vsel %vm1319, %v1321, %v1317
    %v1323 = vmul.f32 1.0, %v1322
    %v1324 = vrcp.pop %v1308
    %v1325 = vmul.f32 %v1308, %v1324
    %v1326 = vsub.f32 1.0, %v1325
    %v1327 = vmul.f32 %v1324, %v1326
    %v1328 = vadd.f32 %v1324, %v1327
    %vm1329 = vweird.f32 %v1308
    %vm1330 = vweird.f32 %v1324
    %vm1331 = vmor %vm1329, %vm1330
    %v1332 = vsel %vm1331, %v1324, %v1328
    %v1333 = vand.u32 2147483647, %v1308
    %vm1334 = vcmp.eq.f32.partialorder %v1333, 8.507059e+37
    %v1335 = vand.u32 %v1308, 2147483648
    %v1336 = vor.u32 1.1754944e-38, %v1335
    %v1337 = vsel %vm1334, %v1336, %v1332
    %v1338 = vmul.f32 1.0, %v1337
    %v1339 = vxor.u32 %v1295, 2147483648
    %v1340 = vxor.u32 %v1296, 2147483648
    %v1341 = vmul.f32 %v1339, 1.442695
    %v1342 = vpow.pop %v1341
    %v1343 = vmul.f32 %v1340, 1.442695
    %v1344 = vpow.pop %v1343
    %v1345 = vadd.f32 %v1342, 1.0
    %v1346 = vadd.f32 %v1344, 1.0
    %v1347 = vrcp.pop %v1345
    %v1348 = vmul.f32 %v1345, %v1347
    %v1349 = vsub.f32 1.0, %v1348
    %v1350 = vmul.f32 %v1347, %v1349
    %v1351 = vadd.f32 %v1347, %v1350
    %vm1352 = vweird.f32 %v1345
    %vm1353 = vweird.f32 %v1347
    %vm1354 = vmor %vm1352, %vm1353
    %v1355 = vsel %vm1354, %v1347, %v1351
    %v1356 = vand.u32 2147483647, %v1345
    %vm1357 = vcmp.eq.f32.partialorder %v1356, 8.507059e+37
    %v1358 = vand.u32 %v1345, 2147483648
    %v1359 = vor.u32 1.1754944e-38, %v1358
    %v1360 = vsel %vm1357, %v1359, %v1355
    %v1361 = vmul.f32 1.0, %v1360
    %v1362 = vrcp.pop %v1346
    %v1363 = vmul.f32 %v1346, %v1362
    %v1364 = vsub.f32 1.0, %v1363
    %v1365 = vmul.f32 %v1362, %v1364
    %v1366 = vadd.f32 %v1362, %v1365
    %vm1367 = vweird.f32 %v1346
    %vm1368 = vweird.f32 %v1362
    %vm1369 = vmor %vm1367, %vm1368
    %v1370 = vsel %vm1369, %v1362, %v1366
    %v1371 = vand.u32 2147483647, %v1346
    %vm1372 = vcmp.eq.f32.partialorder %v1371, 8.507059e+37
    %v1373 = vand.u32 %v1346, 2147483648
    %v1374 = vor.u32 1.1754944e-38, %v1373
    %v1375 = vsel %vm1372, %v1374, %v1370
    %v1376 = vmul.f32 1.0, %v1375
    %v1377 = vtanh.pop %v1297
    %v1378 = vtanh.pop %v1298
    %v1379 = vxor.u32 %v1299, 2147483648
    %v1380 = vxor.u32 %v1300, 2147483648
    %v1381 = vmul.f32 %v1379, 1.442695
    %v1382 = vpow.pop %v1381
    %v1383 = vmul.f32 %v1380, 1.442695
    %v1384 = vpow.pop %v1383
    %v1385 = vadd.f32 %v1382, 1.0
    %v1386 = vadd.f32 %v1384, 1.0
    %v1387 = vrcp.pop %v1385
    %v1388 = vmul.f32 %v1385, %v1387
    %v1389 = vsub.f32 1.0, %v1388
    %v1390 = vmul.f32 %v1387, %v1389
    %v1391 = vadd.f32 %v1387, %v1390
    %vm1392 = vweird.f32 %v1385
    %vm1393 = vweird.f32 %v1387
    %vm1394 = vmor %vm1392, %vm1393
    %v1395 = vsel %vm1394, %v1387, %v1391
    %v1396 = vand.u32 2147483647, %v1385
    %vm1397 = vcmp.eq.f32.partialorder %v1396, 8.507059e+37
    %v1398 = vand.u32 %v1385, 2147483648
    %v1399 = vor.u32 1.1754944e-38, %v1398
    %v1400 = vsel %vm1397, %v1399, %v1395
    %v1401 = vmul.f32 1.0, %v1400
    %v1402 = vrcp.pop %v1386
    %v1403 = vmul.f32 %v1386, %v1402
    %v1404 = vsub.f32 1.0, %v1403
    %v1405 = vmul.f32 %v1402, %v1404
    %v1406 = vadd.f32 %v1402, %v1405
    %vm1407 = vweird.f32 %v1386
    %vm1408 = vweird.f32 %v1402
    %vm1409 = vmor %vm1407, %vm1408
    %v1410 = vsel %vm1409, %v1402, %v1406
    %v1411 = vand.u32 2147483647, %v1386
    %vm1412 = vcmp.eq.f32.partialorder %v1411, 8.507059e+37
    %v1413 = vand.u32 %v1386, 2147483648
    %v1414 = vor.u32 1.1754944e-38, %v1413
    %v1415 = vsel %vm1412, %v1414, %v1410
    %v1416 = vmul.f32 1.0, %v1415
    %v1417 = vmul.f32 %v1361, 0.0
    %v1418 = vmul.f32 %v1376, 0.0
    %v1419 = vmul.f32 %v1323, %v1377
    %v1420 = vmul.f32 %v1338, %v1378
    %v1421 = vadd.f32 %v1417, %v1419
    %v1422 = vadd.f32 %v1418, %v1420
    %v1423 = vtanh.pop %v1421
    %v1424 = vtanh.pop %v1422
    %v1425 = vmul.f32 %v1401, %v1423
    %v1426 = vmul.f32 %v1416, %v1424
    %v1427 = vpack.c.bf16 %v1426, %v1425
    %v1429 = vrot.slane %v1427, 3
    %vm1430 = vcmask 1040384
    %v1433 = vsel %vm1430, %v1427, %v1429
    %vm1435 = vcmask 1041409
    %v1436 = vsel %vm1435, %v1427, %v1429
    %v1438 = vrot.slane %v1436, 1
    %vm1439 = vcmask 1042434
    %v1440 = vsel %vm1439, %v1427, %v1429
    %v1442 = vrot.slane %v1440, 2
    %vm1443 = vcmask 1043459
    %v1444 = vsel %vm1443, %v1427, %v1429
    %v1446 = vrot.slane %v1444, 3
    %v1447 = vunpack.i.l.s16 %v1433
    %v1448 = vunpack.i.h.s16 %v1433
    %v1449 = vunpack.i.l.s16 %v1438
    %v1450 = vunpack.i.h.s16 %v1438
    %v1451 = vunpack.i.l.s16 %v1442
    %v1452 = vunpack.i.h.s16 %v1442
    %v1453 = vunpack.i.l.s16 %v1446
    %v1454 = vunpack.i.h.s16 %v1446
    %v1455 = vpack.i.b16 %v1447, %v1447
    %v1456 = vperm.slane %v1455, 0
    %v1457 = vperm.slane %v1455, 1
    %v1476 = vunpack.c.l.b16 %v109
    %v1477 = vunpack.c.h.b16 %v109
    %v1478 = vunpack.c.l.b16 %v110
    %v1479 = vunpack.c.h.b16 %v110
    %v1480 = vunpack.c.l.b16 %v111
    %v1481 = vunpack.c.h.b16 %v111
    %v1482 = vunpack.c.l.b16 %v112
    %v1483 = vunpack.c.h.b16 %v112
    %v1484 = vunpack.c.l.b16 %v113
    %v1485 = vunpack.c.h.b16 %v113
    %v1486 = vunpack.c.l.b16 %v114
    %v1487 = vunpack.c.h.b16 %v114
    %v1488 = vunpack.c.l.b16 %v115
    %v1489 = vunpack.c.h.b16 %v115
    %v1490 = vunpack.c.l.b16 %v116
    %v1491 = vunpack.c.h.b16 %v116
    %v1492 = vunpack.c.l.b16 %v117
    %v1493 = vunpack.c.h.b16 %v117
    %v1494 = vunpack.c.l.b16 %v118
    %v1495 = vunpack.c.h.b16 %v118
    %v1496 = vunpack.c.l.b16 %v119
    %v1497 = vunpack.c.h.b16 %v119
    %v1498 = vunpack.c.l.b16 %v120
    %v1499 = vunpack.c.h.b16 %v120
    %v1500 = vunpack.c.l.b16 %v121
    %v1501 = vunpack.c.h.b16 %v121
    %v1502 = vunpack.c.l.b16 %v122
    %v1503 = vunpack.c.h.b16 %v122
    %v1504 = vunpack.c.l.b16 %v123
    %v1505 = vunpack.c.h.b16 %v123
    %v1506 = vunpack.c.l.b16 %v124
    %v1507 = vunpack.c.h.b16 %v124
    %v1508 = vpack.c.b16 %v1478, %v1476
    %v1509 = vpack.c.b16 %v1479, %v1477
    %v1510 = vpack.c.b16 %v1482, %v1480
    %v1511 = vpack.c.b16 %v1483, %v1481
    %v1512 = vpack.c.b16 %v1486, %v1484
    %v1513 = vpack.c.b16 %v1487, %v1485
    %v1514 = vpack.c.b16 %v1490, %v1488
    %v1515 = vpack.c.b16 %v1491, %v1489
    %v1516 = vpack.c.b16 %v1494, %v1492
    %v1517 = vpack.c.b16 %v1495, %v1493
    %v1518 = vpack.c.b16 %v1498, %v1496
    %v1519 = vpack.c.b16 %v1499, %v1497
    %v1520 = vpack.c.b16 %v1502, %v1500
    %v1521 = vpack.c.b16 %v1503, %v1501
    %v1522 = vpack.c.b16 %v1506, %v1504
    %v1523 = vpack.c.b16 %v1507, %v1505
    %1540 = vmatpush.bf16.xpose.msra.mxu0 %v1522
    %1541 = vmatpush.bf16.xpose.msra.mxu0 %v1520
    %1542 = vmatpush.bf16.xpose.msra.mxu0 %v1518
    %1543 = vmatpush.bf16.xpose.msra.mxu0 %v1516
    %1544 = vmatpush.bf16.xpose.msra.mxu0 %v1514
    %1545 = vmatpush.bf16.xpose.msra.mxu0 %v1512
    %1546 = vmatpush.bf16.xpose.msra.mxu0 %v1510
    %1547 = vmatpush.bf16.xpose.msra.mxu0 %v1508
    %1548 = vmatmul.bf16.gmra.mxu0 %v1456
    %v1549 = vpop.f32.mrf.mxu0
    %v1550 = vadd.f32 0.0, %v1549
    %v1551 = vpop.f32.mrf.mxu0
    %1552 = vdwg.mxu0
    %1553 = vmatpush.bf16.xpose.msra.mxu0 %v1523
    %1554 = vmatpush.bf16.xpose.msra.mxu0 %v1521
    %1555 = vmatpush.bf16.xpose.msra.mxu0 %v1519
    %1556 = vmatpush.bf16.xpose.msra.mxu0 %v1517
    %1557 = vmatpush.bf16.xpose.msra.mxu0 %v1515
    %1558 = vmatpush.bf16.xpose.msra.mxu0 %v1513
    %1559 = vmatpush.bf16.xpose.msra.mxu0 %v1511
    %1560 = vmatpush.bf16.xpose.msra.mxu0 %v1509
    %1561 = vmatmul.bf16.gmra.mxu0 %v1457
    %v1562 = vpop.f32.mrf.mxu0
    %v1563 = vadd.f32 %v1550, %v1562
    %v1564 = vpop.f32.mrf.mxu0
    %1565 = vdwg.mxu0
    %v1566 = vpack.i.b16 %v1448, %v1448
    %v1567 = vperm.slane %v1566, 0
    %v1568 = vperm.slane %v1566, 1
    %v1587 = vunpack.c.l.b16 %v125
    %v1588 = vunpack.c.h.b16 %v125
    %v1589 = vunpack.c.l.b16 %v126
    %v1590 = vunpack.c.h.b16 %v126
    %v1591 = vunpack.c.l.b16 %v127
    %v1592 = vunpack.c.h.b16 %v127
    %v1593 = vunpack.c.l.b16 %v128
    %v1594 = vunpack.c.h.b16 %v128
    %v1595 = vunpack.c.l.b16 %v129
    %v1596 = vunpack.c.h.b16 %v129
    %v1597 = vunpack.c.l.b16 %v130
    %v1598 = vunpack.c.h.b16 %v130
    %v1599 = vunpack.c.l.b16 %v131
    %v1600 = vunpack.c.h.b16 %v131
    %v1601 = vunpack.c.l.b16 %v132
    %v1602 = vunpack.c.h.b16 %v132
    %v1603 = vunpack.c.l.b16 %v133
    %v1604 = vunpack.c.h.b16 %v133
    %v1605 = vunpack.c.l.b16 %v134
    %v1606 = vunpack.c.h.b16 %v134
    %v1607 = vunpack.c.l.b16 %v135
    %v1608 = vunpack.c.h.b16 %v135
    %v1609 = vunpack.c.l.b16 %v136
    %v1610 = vunpack.c.h.b16 %v136
    %v1611 = vunpack.c.l.b16 %v137
    %v1612 = vunpack.c.h.b16 %v137
    %v1613 = vunpack.c.l.b16 %v138
    %v1614 = vunpack.c.h.b16 %v138
    %v1615 = vunpack.c.l.b16 %v139
    %v1616 = vunpack.c.h.b16 %v139
    %v1617 = vunpack.c.l.b16 %v140
    %v1618 = vunpack.c.h.b16 %v140
    %v1619 = vpack.c.b16 %v1589, %v1587
    %v1620 = vpack.c.b16 %v1590, %v1588
    %v1621 = vpack.c.b16 %v1593, %v1591
    %v1622 = vpack.c.b16 %v1594, %v1592
    %v1623 = vpack.c.b16 %v1597, %v1595
    %v1624 = vpack.c.b16 %v1598, %v1596
    %v1625 = vpack.c.b16 %v1601, %v1599
    %v1626 = vpack.c.b16 %v1602, %v1600
    %v1627 = vpack.c.b16 %v1605, %v1603
    %v1628 = vpack.c.b16 %v1606, %v1604
    %v1629 = vpack.c.b16 %v1609, %v1607
    %v1630 = vpack.c.b16 %v1610, %v1608
    %v1631 = vpack.c.b16 %v1613, %v1611
    %v1632 = vpack.c.b16 %v1614, %v1612
    %v1633 = vpack.c.b16 %v1617, %v1615
    %v1634 = vpack.c.b16 %v1618, %v1616
    %1651 = vmatpush.bf16.xpose.msra.mxu0 %v1633
    %1652 = vmatpush.bf16.xpose.msra.mxu0 %v1631
    %1653 = vmatpush.bf16.xpose.msra.mxu0 %v1629
    %1654 = vmatpush.bf16.xpose.msra.mxu0 %v1627
    %1655 = vmatpush.bf16.xpose.msra.mxu0 %v1625
    %1656 = vmatpush.bf16.xpose.msra.mxu0 %v1623
    %1657 = vmatpush.bf16.xpose.msra.mxu0 %v1621
    %1658 = vmatpush.bf16.xpose.msra.mxu0 %v1619
    %1659 = vmatmul.bf16.gmra.mxu0 %v1567
    %v1660 = vpop.f32.mrf.mxu0
    %v1661 = vadd.f32 0.0, %v1660
    %v1662 = vpop.f32.mrf.mxu0
    %1663 = vdwg.mxu0
    %1664 = vmatpush.bf16.xpose.msra.mxu0 %v1634
    %1665 = vmatpush.bf16.xpose.msra.mxu0 %v1632
    %1666 = vmatpush.bf16.xpose.msra.mxu0 %v1630
    %1667 = vmatpush.bf16.xpose.msra.mxu0 %v1628
    %1668 = vmatpush.bf16.xpose.msra.mxu0 %v1626
    %1669 = vmatpush.bf16.xpose.msra.mxu0 %v1624
    %1670 = vmatpush.bf16.xpose.msra.mxu0 %v1622
    %1671 = vmatpush.bf16.xpose.msra.mxu0 %v1620
    %1672 = vmatmul.bf16.gmra.mxu0 %v1568
    %v1673 = vpop.f32.mrf.mxu0
    %v1674 = vadd.f32 %v1661, %v1673
    %v1675 = vpop.f32.mrf.mxu0
    %1676 = vdwg.mxu0
    %v1677 = vpack.i.b16 %v1449, %v1449
    %v1678 = vperm.slane %v1677, 0
    %v1679 = vperm.slane %v1677, 1
    %v1698 = vunpack.c.l.b16 %v141
    %v1699 = vunpack.c.h.b16 %v141
    %v1700 = vunpack.c.l.b16 %v142
    %v1701 = vunpack.c.h.b16 %v142
    %v1702 = vunpack.c.l.b16 %v143
    %v1703 = vunpack.c.h.b16 %v143
    %v1704 = vunpack.c.l.b16 %v144
    %v1705 = vunpack.c.h.b16 %v144
    %v1706 = vunpack.c.l.b16 %v145
    %v1707 = vunpack.c.h.b16 %v145
    %v1708 = vunpack.c.l.b16 %v146
    %v1709 = vunpack.c.h.b16 %v146
    %v1710 = vunpack.c.l.b16 %v147
    %v1711 = vunpack.c.h.b16 %v147
    %v1712 = vunpack.c.l.b16 %v148
    %v1713 = vunpack.c.h.b16 %v148
    %v1714 = vunpack.c.l.b16 %v149
    %v1715 = vunpack.c.h.b16 %v149
    %v1716 = vunpack.c.l.b16 %v150
    %v1717 = vunpack.c.h.b16 %v150
    %v1718 = vunpack.c.l.b16 %v151
    %v1719 = vunpack.c.h.b16 %v151
    %v1720 = vunpack.c.l.b16 %v152
    %v1721 = vunpack.c.h.b16 %v152
    %v1722 = vunpack.c.l.b16 %v153
    %v1723 = vunpack.c.h.b16 %v153
    %v1724 = vunpack.c.l.b16 %v154
    %v1725 = vunpack.c.h.b16 %v154
    %v1726 = vunpack.c.l.b16 %v155
    %v1727 = vunpack.c.h.b16 %v155
    %v1728 = vunpack.c.l.b16 %v156
    %v1729 = vunpack.c.h.b16 %v156
    %v1730 = vpack.c.b16 %v1700, %v1698
    %v1731 = vpack.c.b16 %v1701, %v1699
    %v1732 = vpack.c.b16 %v1704, %v1702
    %v1733 = vpack.c.b16 %v1705, %v1703
    %v1734 = vpack.c.b16 %v1708, %v1706
    %v1735 = vpack.c.b16 %v1709, %v1707
    %v1736 = vpack.c.b16 %v1712, %v1710
    %v1737 = vpack.c.b16 %v1713, %v1711
    %v1738 = vpack.c.b16 %v1716, %v1714
    %v1739 = vpack.c.b16 %v1717, %v1715
    %v1740 = vpack.c.b16 %v1720, %v1718
    %v1741 = vpack.c.b16 %v1721, %v1719
    %v1742 = vpack.c.b16 %v1724, %v1722
    %v1743 = vpack.c.b16 %v1725, %v1723
    %v1744 = vpack.c.b16 %v1728, %v1726
    %v1745 = vpack.c.b16 %v1729, %v1727
    %1762 = vmatpush.bf16.xpose.msra.mxu0 %v1744
    %1763 = vmatpush.bf16.xpose.msra.mxu0 %v1742
    %1764 = vmatpush.bf16.xpose.msra.mxu0 %v1740
    %1765 = vmatpush.bf16.xpose.msra.mxu0 %v1738
    %1766 = vmatpush.bf16.xpose.msra.mxu0 %v1736
    %1767 = vmatpush.bf16.xpose.msra.mxu0 %v1734
    %1768 = vmatpush.bf16.xpose.msra.mxu0 %v1732
    %1769 = vmatpush.bf16.xpose.msra.mxu0 %v1730
    %1770 = vmatmul.bf16.gmra.mxu0 %v1678
    %v1771 = vpop.f32.mrf.mxu0
    %v1772 = vadd.f32 0.0, %v1771
    %v1773 = vpop.f32.mrf.mxu0
    %1774 = vdwg.mxu0
    %1775 = vmatpush.bf16.xpose.msra.mxu0 %v1745
    %1776 = vmatpush.bf16.xpose.msra.mxu0 %v1743
    %1777 = vmatpush.bf16.xpose.msra.mxu0 %v1741
    %1778 = vmatpush.bf16.xpose.msra.mxu0 %v1739
    %1779 = vmatpush.bf16.xpose.msra.mxu0 %v1737
    %1780 = vmatpush.bf16.xpose.msra.mxu0 %v1735
    %1781 = vmatpush.bf16.xpose.msra.mxu0 %v1733
    %1782 = vmatpush.bf16.xpose.msra.mxu0 %v1731
    %1783 = vmatmul.bf16.gmra.mxu0 %v1679
    %v1784 = vpop.f32.mrf.mxu0
    %v1785 = vadd.f32 %v1772, %v1784
    %v1786 = vpop.f32.mrf.mxu0
    %1787 = vdwg.mxu0
    %v1788 = vpack.i.b16 %v1450, %v1450
    %v1789 = vperm.slane %v1788, 0
    %v1790 = vperm.slane %v1788, 1
    %v1809 = vunpack.c.l.b16 %v157
    %v1810 = vunpack.c.h.b16 %v157
    %v1811 = vunpack.c.l.b16 %v158
    %v1812 = vunpack.c.h.b16 %v158
    %v1813 = vunpack.c.l.b16 %v159
    %v1814 = vunpack.c.h.b16 %v159
    %v1815 = vunpack.c.l.b16 %v160
    %v1816 = vunpack.c.h.b16 %v160
    %v1817 = vunpack.c.l.b16 %v161
    %v1818 = vunpack.c.h.b16 %v161
    %v1819 = vunpack.c.l.b16 %v162
    %v1820 = vunpack.c.h.b16 %v162
    %v1821 = vunpack.c.l.b16 %v163
    %v1822 = vunpack.c.h.b16 %v163
    %v1823 = vunpack.c.l.b16 %v164
    %v1824 = vunpack.c.h.b16 %v164
    %v1825 = vunpack.c.l.b16 %v165
    %v1826 = vunpack.c.h.b16 %v165
    %v1827 = vunpack.c.l.b16 %v166
    %v1828 = vunpack.c.h.b16 %v166
    %v1829 = vunpack.c.l.b16 %v167
    %v1830 = vunpack.c.h.b16 %v167
    %v1831 = vunpack.c.l.b16 %v168
    %v1832 = vunpack.c.h.b16 %v168
    %v1833 = vunpack.c.l.b16 %v169
    %v1834 = vunpack.c.h.b16 %v169
    %v1835 = vunpack.c.l.b16 %v170
    %v1836 = vunpack.c.h.b16 %v170
    %v1837 = vunpack.c.l.b16 %v171
    %v1838 = vunpack.c.h.b16 %v171
    %v1839 = vunpack.c.l.b16 %v172
    %v1840 = vunpack.c.h.b16 %v172
    %v1841 = vpack.c.b16 %v1811, %v1809
    %v1842 = vpack.c.b16 %v1812, %v1810
    %v1843 = vpack.c.b16 %v1815, %v1813
    %v1844 = vpack.c.b16 %v1816, %v1814
    %v1845 = vpack.c.b16 %v1819, %v1817
    %v1846 = vpack.c.b16 %v1820, %v1818
    %v1847 = vpack.c.b16 %v1823, %v1821
    %v1848 = vpack.c.b16 %v1824, %v1822
    %v1849 = vpack.c.b16 %v1827, %v1825
    %v1850 = vpack.c.b16 %v1828, %v1826
    %v1851 = vpack.c.b16 %v1831, %v1829
    %v1852 = vpack.c.b16 %v1832, %v1830
    %v1853 = vpack.c.b16 %v1835, %v1833
    %v1854 = vpack.c.b16 %v1836, %v1834
    %v1855 = vpack.c.b16 %v1839, %v1837
    %v1856 = vpack.c.b16 %v1840, %v1838
    %1873 = vmatpush.bf16.xpose.msra.mxu0 %v1855
    %1874 = vmatpush.bf16.xpose.msra.mxu0 %v1853
    %1875 = vmatpush.bf16.xpose.msra.mxu0 %v1851
    %1876 = vmatpush.bf16.xpose.msra.mxu0 %v1849
    %1877 = vmatpush.bf16.xpose.msra.mxu0 %v1847
    %1878 = vmatpush.bf16.xpose.msra.mxu0 %v1845
    %1879 = vmatpush.bf16.xpose.msra.mxu0 %v1843
    %1880 = vmatpush.bf16.xpose.msra.mxu0 %v1841
    %1881 = vmatmul.bf16.gmra.mxu0 %v1789
    %v1882 = vpop.f32.mrf.mxu0
    %v1883 = vadd.f32 0.0, %v1882
    %v1884 = vpop.f32.mrf.mxu0
    %1885 = vdwg.mxu0
    %1886 = vmatpush.bf16.xpose.msra.mxu0 %v1856
    %1887 = vmatpush.bf16.xpose.msra.mxu0 %v1854
    %1888 = vmatpush.bf16.xpose.msra.mxu0 %v1852
    %1889 = vmatpush.bf16.xpose.msra.mxu0 %v1850
    %1890 = vmatpush.bf16.xpose.msra.mxu0 %v1848
    %1891 = vmatpush.bf16.xpose.msra.mxu0 %v1846
    %1892 = vmatpush.bf16.xpose.msra.mxu0 %v1844
    %1893 = vmatpush.bf16.xpose.msra.mxu0 %v1842
    %1894 = vmatmul.bf16.gmra.mxu0 %v1790
    %v1895 = vpop.f32.mrf.mxu0
    %v1896 = vadd.f32 %v1883, %v1895
    %v1897 = vpop.f32.mrf.mxu0
    %1898 = vdwg.mxu0
    %v1899 = vpack.i.b16 %v1451, %v1451
    %v1900 = vperm.slane %v1899, 0
    %v1901 = vperm.slane %v1899, 1
    %v1920 = vunpack.c.l.b16 %v173
    %v1921 = vunpack.c.h.b16 %v173
    %v1922 = vunpack.c.l.b16 %v174
    %v1923 = vunpack.c.h.b16 %v174
    %v1924 = vunpack.c.l.b16 %v175
    %v1925 = vunpack.c.h.b16 %v175
    %v1926 = vunpack.c.l.b16 %v176
    %v1927 = vunpack.c.h.b16 %v176
    %v1928 = vunpack.c.l.b16 %v177
    %v1929 = vunpack.c.h.b16 %v177
    %v1930 = vunpack.c.l.b16 %v178
    %v1931 = vunpack.c.h.b16 %v178
    %v1932 = vunpack.c.l.b16 %v179
    %v1933 = vunpack.c.h.b16 %v179
    %v1934 = vunpack.c.l.b16 %v180
    %v1935 = vunpack.c.h.b16 %v180
    %v1936 = vunpack.c.l.b16 %v181
    %v1937 = vunpack.c.h.b16 %v181
    %v1938 = vunpack.c.l.b16 %v182
    %v1939 = vunpack.c.h.b16 %v182
    %v1940 = vunpack.c.l.b16 %v183
    %v1941 = vunpack.c.h.b16 %v183
    %v1942 = vunpack.c.l.b16 %v184
    %v1943 = vunpack.c.h.b16 %v184
    %v1944 = vunpack.c.l.b16 %v185
    %v1945 = vunpack.c.h.b16 %v185
    %v1946 = vunpack.c.l.b16 %v186
    %v1947 = vunpack.c.h.b16 %v186
    %v1948 = vunpack.c.l.b16 %v187
    %v1949 = vunpack.c.h.b16 %v187
    %v1950 = vunpack.c.l.b16 %v188
    %v1951 = vunpack.c.h.b16 %v188
    %v1952 = vpack.c.b16 %v1922, %v1920
    %v1953 = vpack.c.b16 %v1923, %v1921
    %v1954 = vpack.c.b16 %v1926, %v1924
    %v1955 = vpack.c.b16 %v1927, %v1925
    %v1956 = vpack.c.b16 %v1930, %v1928
    %v1957 = vpack.c.b16 %v1931, %v1929
    %v1958 = vpack.c.b16 %v1934, %v1932
    %v1959 = vpack.c.b16 %v1935, %v1933
    %v1960 = vpack.c.b16 %v1938, %v1936
    %v1961 = vpack.c.b16 %v1939, %v1937
    %v1962 = vpack.c.b16 %v1942, %v1940
    %v1963 = vpack.c.b16 %v1943, %v1941
    %v1964 = vpack.c.b16 %v1946, %v1944
    %v1965 = vpack.c.b16 %v1947, %v1945
    %v1966 = vpack.c.b16 %v1950, %v1948
    %v1967 = vpack.c.b16 %v1951, %v1949
    %1984 = vmatpush.bf16.xpose.msra.mxu0 %v1966
    %1985 = vmatpush.bf16.xpose.msra.mxu0 %v1964
    %1986 = vmatpush.bf16.xpose.msra.mxu0 %v1962
    %1987 = vmatpush.bf16.xpose.msra.mxu0 %v1960
    %1988 = vmatpush.bf16.xpose.msra.mxu0 %v1958
    %1989 = vmatpush.bf16.xpose.msra.mxu0 %v1956
    %1990 = vmatpush.bf16.xpose.msra.mxu0 %v1954
    %1991 = vmatpush.bf16.xpose.msra.mxu0 %v1952
    %1992 = vmatmul.bf16.gmra.mxu0 %v1900
    %v1993 = vpop.f32.mrf.mxu0
    %v1994 = vadd.f32 0.0, %v1993
    %v1995 = vpop.f32.mrf.mxu0
    %1996 = vdwg.mxu0
    %1997 = vmatpush.bf16.xpose.msra.mxu0 %v1967
    %1998 = vmatpush.bf16.xpose.msra.mxu0 %v1965
    %1999 = vmatpush.bf16.xpose.msra.mxu0 %v1963
    %2000 = vmatpush.bf16.xpose.msra.mxu0 %v1961
    %2001 = vmatpush.bf16.xpose.msra.mxu0 %v1959
    %2002 = vmatpush.bf16.xpose.msra.mxu0 %v1957
    %2003 = vmatpush.bf16.xpose.msra.mxu0 %v1955
    %2004 = vmatpush.bf16.xpose.msra.mxu0 %v1953
    %2005 = vmatmul.bf16.gmra.mxu0 %v1901
    %v2006 = vpop.f32.mrf.mxu0
    %v2007 = vadd.f32 %v1994, %v2006
    %v2008 = vpop.f32.mrf.mxu0
    %2009 = vdwg.mxu0
    %v2010 = vpack.i.b16 %v1452, %v1452
    %v2011 = vperm.slane %v2010, 0
    %v2012 = vperm.slane %v2010, 1
    %v2031 = vunpack.c.l.b16 %v189
    %v2032 = vunpack.c.h.b16 %v189
    %v2033 = vunpack.c.l.b16 %v190
    %v2034 = vunpack.c.h.b16 %v190
    %v2035 = vunpack.c.l.b16 %v191
    %v2036 = vunpack.c.h.b16 %v191
    %v2037 = vunpack.c.l.b16 %v192
    %v2038 = vunpack.c.h.b16 %v192
    %v2039 = vunpack.c.l.b16 %v193
    %v2040 = vunpack.c.h.b16 %v193
    %v2041 = vunpack.c.l.b16 %v194
    %v2042 = vunpack.c.h.b16 %v194
    %v2043 = vunpack.c.l.b16 %v195
    %v2044 = vunpack.c.h.b16 %v195
    %v2045 = vunpack.c.l.b16 %v196
    %v2046 = vunpack.c.h.b16 %v196
    %v2047 = vunpack.c.l.b16 %v197
    %v2048 = vunpack.c.h.b16 %v197
    %v2049 = vunpack.c.l.b16 %v198
    %v2050 = vunpack.c.h.b16 %v198
    %v2051 = vunpack.c.l.b16 %v199
    %v2052 = vunpack.c.h.b16 %v199
    %v2053 = vunpack.c.l.b16 %v200
    %v2054 = vunpack.c.h.b16 %v200
    %v2055 = vunpack.c.l.b16 %v201
    %v2056 = vunpack.c.h.b16 %v201
    %v2057 = vunpack.c.l.b16 %v202
    %v2058 = vunpack.c.h.b16 %v202
    %v2059 = vunpack.c.l.b16 %v203
    %v2060 = vunpack.c.h.b16 %v203
    %v2061 = vunpack.c.l.b16 %v204
    %v2062 = vunpack.c.h.b16 %v204
    %v2063 = vpack.c.b16 %v2033, %v2031
    %v2064 = vpack.c.b16 %v2034, %v2032
    %v2065 = vpack.c.b16 %v2037, %v2035
    %v2066 = vpack.c.b16 %v2038, %v2036
    %v2067 = vpack.c.b16 %v2041, %v2039
    %v2068 = vpack.c.b16 %v2042, %v2040
    %v2069 = vpack.c.b16 %v2045, %v2043
    %v2070 = vpack.c.b16 %v2046, %v2044
    %v2071 = vpack.c.b16 %v2049, %v2047
    %v2072 = vpack.c.b16 %v2050, %v2048
    %v2073 = vpack.c.b16 %v2053, %v2051
    %v2074 = vpack.c.b16 %v2054, %v2052
    %v2075 = vpack.c.b16 %v2057, %v2055
    %v2076 = vpack.c.b16 %v2058, %v2056
    %v2077 = vpack.c.b16 %v2061, %v2059
    %v2078 = vpack.c.b16 %v2062, %v2060
    %2095 = vmatpush.bf16.xpose.msra.mxu0 %v2077
    %2096 = vmatpush.bf16.xpose.msra.mxu0 %v2075
    %2097 = vmatpush.bf16.xpose.msra.mxu0 %v2073
    %2098 = vmatpush.bf16.xpose.msra.mxu0 %v2071
    %2099 = vmatpush.bf16.xpose.msra.mxu0 %v2069
    %2100 = vmatpush.bf16.xpose.msra.mxu0 %v2067
    %2101 = vmatpush.bf16.xpose.msra.mxu0 %v2065
    %2102 = vmatpush.bf16.xpose.msra.mxu0 %v2063
    %2103 = vmatmul.bf16.gmra.mxu0 %v2011
    %v2104 = vpop.f32.mrf.mxu0
    %v2105 = vadd.f32 0.0, %v2104
    %v2106 = vpop.f32.mrf.mxu0
    %2107 = vdwg.mxu0
    %2108 = vmatpush.bf16.xpose.msra.mxu0 %v2078
    %2109 = vmatpush.bf16.xpose.msra.mxu0 %v2076
    %2110 = vmatpush.bf16.xpose.msra.mxu0 %v2074
    %2111 = vmatpush.bf16.xpose.msra.mxu0 %v2072
    %2112 = vmatpush.bf16.xpose.msra.mxu0 %v2070
    %2113 = vmatpush.bf16.xpose.msra.mxu0 %v2068
    %2114 = vmatpush.bf16.xpose.msra.mxu0 %v2066
    %2115 = vmatpush.bf16.xpose.msra.mxu0 %v2064
    %2116 = vmatmul.bf16.gmra.mxu0 %v2012
    %v2117 = vpop.f32.mrf.mxu0
    %v2118 = vadd.f32 %v2105, %v2117
    %v2119 = vpop.f32.mrf.mxu0
    %2120 = vdwg.mxu0
    %v2121 = vpack.i.b16 %v1453, %v1453
    %v2122 = vperm.slane %v2121, 0
    %v2123 = vperm.slane %v2121, 1
    %v2142 = vunpack.c.l.b16 %v205
    %v2143 = vunpack.c.h.b16 %v205
    %v2144 = vunpack.c.l.b16 %v206
    %v2145 = vunpack.c.h.b16 %v206
    %v2146 = vunpack.c.l.b16 %v207
    %v2147 = vunpack.c.h.b16 %v207
    %v2148 = vunpack.c.l.b16 %v208
    %v2149 = vunpack.c.h.b16 %v208
    %v2150 = vunpack.c.l.b16 %v209
    %v2151 = vunpack.c.h.b16 %v209
    %v2152 = vunpack.c.l.b16 %v210
    %v2153 = vunpack.c.h.b16 %v210
    %v2154 = vunpack.c.l.b16 %v211
    %v2155 = vunpack.c.h.b16 %v211
    %v2156 = vunpack.c.l.b16 %v212
    %v2157 = vunpack.c.h.b16 %v212
    %v2158 = vunpack.c.l.b16 %v213
    %v2159 = vunpack.c.h.b16 %v213
    %v2160 = vunpack.c.l.b16 %v214
    %v2161 = vunpack.c.h.b16 %v214
    %v2162 = vunpack.c.l.b16 %v215
    %v2163 = vunpack.c.h.b16 %v215
    %v2164 = vunpack.c.l.b16 %v216
    %v2165 = vunpack.c.h.b16 %v216
    %v2166 = vunpack.c.l.b16 %v217
    %v2167 = vunpack.c.h.b16 %v217
    %v2168 = vunpack.c.l.b16 %v218
    %v2169 = vunpack.c.h.b16 %v218
    %v2170 = vunpack.c.l.b16 %v219
    %v2171 = vunpack.c.h.b16 %v219
    %v2172 = vunpack.c.l.b16 %v220
    %v2173 = vunpack.c.h.b16 %v220
    %v2174 = vpack.c.b16 %v2144, %v2142
    %v2175 = vpack.c.b16 %v2145, %v2143
    %v2176 = vpack.c.b16 %v2148, %v2146
    %v2177 = vpack.c.b16 %v2149, %v2147
    %v2178 = vpack.c.b16 %v2152, %v2150
    %v2179 = vpack.c.b16 %v2153, %v2151
    %v2180 = vpack.c.b16 %v2156, %v2154
    %v2181 = vpack.c.b16 %v2157, %v2155
    %v2182 = vpack.c.b16 %v2160, %v2158
    %v2183 = vpack.c.b16 %v2161, %v2159
    %v2184 = vpack.c.b16 %v2164, %v2162
    %v2185 = vpack.c.b16 %v2165, %v2163
    %v2186 = vpack.c.b16 %v2168, %v2166
    %v2187 = vpack.c.b16 %v2169, %v2167
    %v2188 = vpack.c.b16 %v2172, %v2170
    %v2189 = vpack.c.b16 %v2173, %v2171
    %2206 = vmatpush.bf16.xpose.msra.mxu0 %v2188
    %2207 = vmatpush.bf16.xpose.msra.mxu0 %v2186
    %2208 = vmatpush.bf16.xpose.msra.mxu0 %v2184
    %2209 = vmatpush.bf16.xpose.msra.mxu0 %v2182
    %2210 = vmatpush.bf16.xpose.msra.mxu0 %v2180
    %2211 = vmatpush.bf16.xpose.msra.mxu0 %v2178
    %2212 = vmatpush.bf16.xpose.msra.mxu0 %v2176
    %2213 = vmatpush.bf16.xpose.msra.mxu0 %v2174
    %2214 = vmatmul.bf16.gmra.mxu0 %v2122
    %v2215 = vpop.f32.mrf.mxu0
    %v2216 = vadd.f32 0.0, %v2215
    %v2217 = vpop.f32.mrf.mxu0
    %2218 = vdwg.mxu0
    %2219 = vmatpush.bf16.xpose.msra.mxu0 %v2189
    %2220 = vmatpush.bf16.xpose.msra.mxu0 %v2187
    %2221 = vmatpush.bf16.xpose.msra.mxu0 %v2185
    %2222 = vmatpush.bf16.xpose.msra.mxu0 %v2183
    %2223 = vmatpush.bf16.xpose.msra.mxu0 %v2181
    %2224 = vmatpush.bf16.xpose.msra.mxu0 %v2179
    %2225 = vmatpush.bf16.xpose.msra.mxu0 %v2177
    %2226 = vmatpush.bf16.xpose.msra.mxu0 %v2175
    %2227 = vmatmul.bf16.gmra.mxu0 %v2123
    %v2228 = vpop.f32.mrf.mxu0
    %v2229 = vadd.f32 %v2216, %v2228
    %v2230 = vpop.f32.mrf.mxu0
    %2231 = vdwg.mxu0
    %v2232 = vpack.i.b16 %v1454, %v1454
    %v2233 = vperm.slane %v2232, 0
    %v2234 = vperm.slane %v2232, 1
    %v2253 = vunpack.c.l.b16 %v221
    %v2254 = vunpack.c.h.b16 %v221
    %v2255 = vunpack.c.l.b16 %v222
    %v2256 = vunpack.c.h.b16 %v222
    %v2257 = vunpack.c.l.b16 %v223
    %v2258 = vunpack.c.h.b16 %v223
    %v2259 = vunpack.c.l.b16 %v224
    %v2260 = vunpack.c.h.b16 %v224
    %v2261 = vunpack.c.l.b16 %v225
    %v2262 = vunpack.c.h.b16 %v225
    %v2263 = vunpack.c.l.b16 %v226
    %v2264 = vunpack.c.h.b16 %v226
    %v2265 = vunpack.c.l.b16 %v227
    %v2266 = vunpack.c.h.b16 %v227
    %v2267 = vunpack.c.l.b16 %v228
    %v2268 = vunpack.c.h.b16 %v228
    %v2269 = vunpack.c.l.b16 %v229
    %v2270 = vunpack.c.h.b16 %v229
    %v2271 = vunpack.c.l.b16 %v230
    %v2272 = vunpack.c.h.b16 %v230
    %v2273 = vunpack.c.l.b16 %v231
    %v2274 = vunpack.c.h.b16 %v231
    %v2275 = vunpack.c.l.b16 %v232
    %v2276 = vunpack.c.h.b16 %v232
    %v2277 = vunpack.c.l.b16 %v233
    %v2278 = vunpack.c.h.b16 %v233
    %v2279 = vunpack.c.l.b16 %v234
    %v2280 = vunpack.c.h.b16 %v234
    %v2281 = vunpack.c.l.b16 %v235
    %v2282 = vunpack.c.h.b16 %v235
    %v2283 = vunpack.c.l.b16 %v236
    %v2284 = vunpack.c.h.b16 %v236
    %v2285 = vpack.c.b16 %v2255, %v2253
    %v2286 = vpack.c.b16 %v2256, %v2254
    %v2287 = vpack.c.b16 %v2259, %v2257
    %v2288 = vpack.c.b16 %v2260, %v2258
    %v2289 = vpack.c.b16 %v2263, %v2261
    %v2290 = vpack.c.b16 %v2264, %v2262
    %v2291 = vpack.c.b16 %v2267, %v2265
    %v2292 = vpack.c.b16 %v2268, %v2266
    %v2293 = vpack.c.b16 %v2271, %v2269
    %v2294 = vpack.c.b16 %v2272, %v2270
    %v2295 = vpack.c.b16 %v2275, %v2273
    %v2296 = vpack.c.b16 %v2276, %v2274
    %v2297 = vpack.c.b16 %v2279, %v2277
    %v2298 = vpack.c.b16 %v2280, %v2278
    %v2299 = vpack.c.b16 %v2283, %v2281
    %v2300 = vpack.c.b16 %v2284, %v2282
    %2317 = vmatpush.bf16.xpose.msra.mxu0 %v2299
    %2318 = vmatpush.bf16.xpose.msra.mxu0 %v2297
    %2319 = vmatpush.bf16.xpose.msra.mxu0 %v2295
    %2320 = vmatpush.bf16.xpose.msra.mxu0 %v2293
    %2321 = vmatpush.bf16.xpose.msra.mxu0 %v2291
    %2322 = vmatpush.bf16.xpose.msra.mxu0 %v2289
    %2323 = vmatpush.bf16.xpose.msra.mxu0 %v2287
    %2324 = vmatpush.bf16.xpose.msra.mxu0 %v2285
    %2325 = vmatmul.bf16.gmra.mxu0 %v2233
    %v2326 = vpop.f32.mrf.mxu0
    %v2327 = vadd.f32 0.0, %v2326
    %v2328 = vpop.f32.mrf.mxu0
    %2329 = vdwg.mxu0
    %2330 = vmatpush.bf16.xpose.msra.mxu0 %v2300
    %2331 = vmatpush.bf16.xpose.msra.mxu0 %v2298
    %2332 = vmatpush.bf16.xpose.msra.mxu0 %v2296
    %2333 = vmatpush.bf16.xpose.msra.mxu0 %v2294
    %2334 = vmatpush.bf16.xpose.msra.mxu0 %v2292
    %2335 = vmatpush.bf16.xpose.msra.mxu0 %v2290
    %2336 = vmatpush.bf16.xpose.msra.mxu0 %v2288
    %2337 = vmatpush.bf16.xpose.msra.mxu0 %v2286
    %2338 = vmatmul.bf16.gmra.mxu0 %v2234
    %v2339 = vpop.f32.mrf.mxu0
    %v2340 = vadd.f32 %v2327, %v2339
    %v2341 = vpop.f32.mrf.mxu0
    %2342 = vdwg.mxu0
    %v2343 = vadd.f32 %v1563, %v435
    %v2344 = vadd.f32 %v1674, %v435
    %v2345 = vadd.f32 %v1785, %v435
    %v2346 = vadd.f32 %v1896, %v435
    %v2347 = vadd.f32 %v2007, %v435
    %v2348 = vadd.f32 %v2118, %v435
    %v2349 = vadd.f32 %v2229, %v435
    %v2350 = vadd.f32 %v2340, %v435
    %v2359 = vrot.slane %v2344, 7
    %v2360 = vsel %vm1435, %v2359, %v2343
    %v2361 = vrot.slane %v2345, 6
    %v2362 = vsel %vm1439, %v2361, %v2360
    %v2363 = vrot.slane %v2346, 5
    %v2364 = vsel %vm1443, %v2363, %v2362
    %v2365 = vrot.slane %v2347, 4
    %vm2366 = vcmask 1044484
    %v2367 = vsel %vm2366, %v2365, %v2364
    %v2368 = vrot.slane %v2348, 3
    %vm2369 = vcmask 1045509
    %v2370 = vsel %vm2369, %v2368, %v2367
    %v2371 = vrot.slane %v2349, 2
    %vm2372 = vcmask 1046534
    %v2373 = vsel %vm2372, %v2371, %v2370
    %v2374 = vrot.slane %v2350, 1
    %vm2375 = vcmask 1047559
    %v2376 = vsel %vm2375, %v2374, %v2373
    %2378 = vmax.xlane.f32.xlu0 %v2376
    %v2379 = vpop.xlane.xlu0 %2378
    %v2381 = vrot.slane %v2379, 1
    %v2382 = vrot.slane %v2379, 2
    %v2383 = vrot.slane %v2379, 3
    %v2384 = vrot.slane %v2379, 4
    %v2385 = vrot.slane %v2379, 5
    %v2386 = vrot.slane %v2379, 6
    %v2387 = vrot.slane %v2379, 7
    %v2396 = vsub.f32 %v2343, %v2379
    %v2397 = vsub.f32 %v2344, %v2381
    %v2398 = vsub.f32 %v2345, %v2382
    %v2399 = vsub.f32 %v2346, %v2383
    %v2400 = vsub.f32 %v2347, %v2384
    %v2401 = vsub.f32 %v2348, %v2385
    %v2402 = vsub.f32 %v2349, %v2386
    %v2403 = vsub.f32 %v2350, %v2387
    %v2404 = vmul.f32 %v2396, 1.442695
    %v2405 = vpow.pop %v2404
    %v2406 = vmul.f32 %v2397, 1.442695
    %v2407 = vpow.pop %v2406
    %v2408 = vmul.f32 %v2398, 1.442695
    %v2409 = vpow.pop %v2408
    %v2410 = vmul.f32 %v2399, 1.442695
    %v2411 = vpow.pop %v2410
    %v2412 = vmul.f32 %v2400, 1.442695
    %v2413 = vpow.pop %v2412
    %v2414 = vmul.f32 %v2401, 1.442695
    %v2415 = vpow.pop %v2414
    %v2416 = vmul.f32 %v2402, 1.442695
    %v2417 = vpow.pop %v2416
    %v2418 = vmul.f32 %v2403, 1.442695
    %v2419 = vpow.pop %v2418
    %v2428 = vrot.slane %v2407, 7
    %v2429 = vsel %vm1435, %v2428, %v2405
    %v2430 = vrot.slane %v2409, 6
    %v2431 = vsel %vm1439, %v2430, %v2429
    %v2432 = vrot.slane %v2411, 5
    %v2433 = vsel %vm1443, %v2432, %v2431
    %v2434 = vrot.slane %v2413, 4
    %v2435 = vsel %vm2366, %v2434, %v2433
    %v2436 = vrot.slane %v2415, 3
    %v2437 = vsel %vm2369, %v2436, %v2435
    %v2438 = vrot.slane %v2417, 2
    %v2439 = vsel %vm2372, %v2438, %v2437
    %v2440 = vrot.slane %v2419, 1
    %v2441 = vsel %vm2375, %v2440, %v2439
    %2443 = vadd.xlane.f32.xlu0 %v2441
    %v2444 = vpop.xlane.xlu0 %2443
    %v2445 = vrcp.pop %v2444
    %v2446 = vmul.f32 %v2444, %v2445
    %v2447 = vsub.f32 1.0, %v2446
    %v2448 = vmul.f32 %v2445, %v2447
    %v2449 = vadd.f32 %v2445, %v2448
    %vm2450 = vweird.f32 %v2444
    %vm2451 = vweird.f32 %v2445
    %vm2452 = vmor %vm2450, %vm2451
    %v2453 = vsel %vm2452, %v2445, %v2449
    %v2454 = vand.u32 2147483647, %v2444
    %vm2455 = vcmp.eq.f32.partialorder %v2454, 8.507059e+37
    %v2456 = vand.u32 %v2444, 2147483648
    %v2457 = vor.u32 1.1754944e-38, %v2456
    %v2458 = vsel %vm2455, %v2457, %v2453
    %v2459 = vmul.f32 1.0, %v2458
    %v2460 = vpack.c.bf16 %v2405, %v2405
    %v2461 = vpack.c.bf16 %v2407, %v2407
    %v2462 = vpack.c.bf16 %v2409, %v2409
    %v2463 = vpack.c.bf16 %v2411, %v2411
    %v2464 = vpack.c.bf16 %v2413, %v2413
    %v2465 = vpack.c.bf16 %v2415, %v2415
    %v2466 = vpack.c.bf16 %v2417, %v2417
    %v2467 = vpack.c.bf16 %v2419, %v2419
    %2468 = vmatpush.bf16.msra.mxu0 %v1522
    %2469 = vmatpush.bf16.msra.mxu0 %v1520
    %2470 = vmatpush.bf16.msra.mxu0 %v1518
    %2471 = vmatpush.bf16.msra.mxu0 %v1516
    %2472 = vmatpush.bf16.msra.mxu0 %v1514
    %2473 = vmatpush.bf16.msra.mxu0 %v1512
    %2474 = vmatpush.bf16.msra.mxu0 %v1510
    %2475 = vmatpush.bf16.msra.mxu0 %v1508
    %2476 = vmatmul.bf16.gmra.mxu0 %v2460
    %v2477 = vpop.f32.mrf.mxu0
    %v2478 = vadd.f32 0.0, %v2477
    %v2479 = vpop.f32.mrf.mxu0
    %2480 = vdwg.mxu0
    %2481 = vmatpush.bf16.msra.mxu0 %v1523
    %2482 = vmatpush.bf16.msra.mxu0 %v1521
    %2483 = vmatpush.bf16.msra.mxu0 %v1519
    %2484 = vmatpush.bf16.msra.mxu0 %v1517
    %2485 = vmatpush.bf16.msra.mxu0 %v1515
    %2486 = vmatpush.bf16.msra.mxu0 %v1513
    %2487 = vmatpush.bf16.msra.mxu0 %v1511
    %2488 = vmatpush.bf16.msra.mxu0 %v1509
    %2489 = vmatmul.bf16.gmra.mxu0 %v2460
    %v2490 = vpop.f32.mrf.mxu0
    %v2491 = vadd.f32 0.0, %v2490
    %v2492 = vpop.f32.mrf.mxu0
    %2493 = vdwg.mxu0
    %2494 = vmatpush.bf16.msra.mxu0 %v1633
    %2495 = vmatpush.bf16.msra.mxu0 %v1631
    %2496 = vmatpush.bf16.msra.mxu0 %v1629
    %2497 = vmatpush.bf16.msra.mxu0 %v1627
    %2498 = vmatpush.bf16.msra.mxu0 %v1625
    %2499 = vmatpush.bf16.msra.mxu0 %v1623
    %2500 = vmatpush.bf16.msra.mxu0 %v1621
    %2501 = vmatpush.bf16.msra.mxu0 %v1619
    %2502 = vmatmul.bf16.gmra.mxu0 %v2461
    %v2503 = vpop.f32.mrf.mxu0
    %v2504 = vadd.f32 0.0, %v2503
    %v2505 = vpop.f32.mrf.mxu0
    %2506 = vdwg.mxu0
    %2507 = vmatpush.bf16.msra.mxu0 %v1634
    %2508 = vmatpush.bf16.msra.mxu0 %v1632
    %2509 = vmatpush.bf16.msra.mxu0 %v1630
    %2510 = vmatpush.bf16.msra.mxu0 %v1628
    %2511 = vmatpush.bf16.msra.mxu0 %v1626
    %2512 = vmatpush.bf16.msra.mxu0 %v1624
    %2513 = vmatpush.bf16.msra.mxu0 %v1622
    %2514 = vmatpush.bf16.msra.mxu0 %v1620
    %2515 = vmatmul.bf16.gmra.mxu0 %v2461
    %v2516 = vpop.f32.mrf.mxu0
    %v2517 = vadd.f32 0.0, %v2516
    %v2518 = vpop.f32.mrf.mxu0
    %2519 = vdwg.mxu0
    %2520 = vmatpush.bf16.msra.mxu0 %v1744
    %2521 = vmatpush.bf16.msra.mxu0 %v1742
    %2522 = vmatpush.bf16.msra.mxu0 %v1740
    %2523 = vmatpush.bf16.msra.mxu0 %v1738
    %2524 = vmatpush.bf16.msra.mxu0 %v1736
    %2525 = vmatpush.bf16.msra.mxu0 %v1734
    %2526 = vmatpush.bf16.msra.mxu0 %v1732
    %2527 = vmatpush.bf16.msra.mxu0 %v1730
    %2528 = vmatmul.bf16.gmra.mxu0 %v2462
    %v2529 = vpop.f32.mrf.mxu0
    %v2530 = vadd.f32 0.0, %v2529
    %v2531 = vpop.f32.mrf.mxu0
    %2532 = vdwg.mxu0
    %2533 = vmatpush.bf16.msra.mxu0 %v1745
    %2534 = vmatpush.bf16.msra.mxu0 %v1743
    %2535 = vmatpush.bf16.msra.mxu0 %v1741
    %2536 = vmatpush.bf16.msra.mxu0 %v1739
    %2537 = vmatpush.bf16.msra.mxu0 %v1737
    %2538 = vmatpush.bf16.msra.mxu0 %v1735
    %2539 = vmatpush.bf16.msra.mxu0 %v1733
    %2540 = vmatpush.bf16.msra.mxu0 %v1731
    %2541 = vmatmul.bf16.gmra.mxu0 %v2462
    %v2542 = vpop.f32.mrf.mxu0
    %v2543 = vadd.f32 0.0, %v2542
    %v2544 = vpop.f32.mrf.mxu0
    %2545 = vdwg.mxu0
    %2546 = vmatpush.bf16.msra.mxu0 %v1855
    %2547 = vmatpush.bf16.msra.mxu0 %v1853
    %2548 = vmatpush.bf16.msra.mxu0 %v1851
    %2549 = vmatpush.bf16.msra.mxu0 %v1849
    %2550 = vmatpush.bf16.msra.mxu0 %v1847
    %2551 = vmatpush.bf16.msra.mxu0 %v1845
    %2552 = vmatpush.bf16.msra.mxu0 %v1843
    %2553 = vmatpush.bf16.msra.mxu0 %v1841
    %2554 = vmatmul.bf16.gmra.mxu0 %v2463
    %v2555 = vpop.f32.mrf.mxu0
    %v2556 = vadd.f32 0.0, %v2555
    %v2557 = vpop.f32.mrf.mxu0
    %2558 = vdwg.mxu0
    %2559 = vmatpush.bf16.msra.mxu0 %v1856
    %2560 = vmatpush.bf16.msra.mxu0 %v1854
    %2561 = vmatpush.bf16.msra.mxu0 %v1852
    %2562 = vmatpush.bf16.msra.mxu0 %v1850
    %2563 = vmatpush.bf16.msra.mxu0 %v1848
    %2564 = vmatpush.bf16.msra.mxu0 %v1846
    %2565 = vmatpush.bf16.msra.mxu0 %v1844
    %2566 = vmatpush.bf16.msra.mxu0 %v1842
    %2567 = vmatmul.bf16.gmra.mxu0 %v2463
    %v2568 = vpop.f32.mrf.mxu0
    %v2569 = vadd.f32 0.0, %v2568
    %v2570 = vpop.f32.mrf.mxu0
    %2571 = vdwg.mxu0
    %2572 = vmatpush.bf16.msra.mxu0 %v1966
    %2573 = vmatpush.bf16.msra.mxu0 %v1964
    %2574 = vmatpush.bf16.msra.mxu0 %v1962
    %2575 = vmatpush.bf16.msra.mxu0 %v1960
    %2576 = vmatpush.bf16.msra.mxu0 %v1958
    %2577 = vmatpush.bf16.msra.mxu0 %v1956
    %2578 = vmatpush.bf16.msra.mxu0 %v1954
    %2579 = vmatpush.bf16.msra.mxu0 %v1952
    %2580 = vmatmul.bf16.gmra.mxu0 %v2464
    %v2581 = vpop.f32.mrf.mxu0
    %v2582 = vadd.f32 0.0, %v2581
    %v2583 = vpop.f32.mrf.mxu0
    %2584 = vdwg.mxu0
    %2585 = vmatpush.bf16.msra.mxu0 %v1967
    %2586 = vmatpush.bf16.msra.mxu0 %v1965
    %2587 = vmatpush.bf16.msra.mxu0 %v1963
    %2588 = vmatpush.bf16.msra.mxu0 %v1961
    %2589 = vmatpush.bf16.msra.mxu0 %v1959
    %2590 = vmatpush.bf16.msra.mxu0 %v1957
    %2591 = vmatpush.bf16.msra.mxu0 %v1955
    %2592 = vmatpush.bf16.msra.mxu0 %v1953
    %2593 = vmatmul.bf16.gmra.mxu0 %v2464
    %v2594 = vpop.f32.mrf.mxu0
    %v2595 = vadd.f32 0.0, %v2594
    %v2596 = vpop.f32.mrf.mxu0
    %2597 = vdwg.mxu0
    %2598 = vmatpush.bf16.msra.mxu0 %v2077
    %2599 = vmatpush.bf16.msra.mxu0 %v2075
    %2600 = vmatpush.bf16.msra.mxu0 %v2073
    %2601 = vmatpush.bf16.msra.mxu0 %v2071
    %2602 = vmatpush.bf16.msra.mxu0 %v2069
    %2603 = vmatpush.bf16.msra.mxu0 %v2067
    %2604 = vmatpush.bf16.msra.mxu0 %v2065
    %2605 = vmatpush.bf16.msra.mxu0 %v2063
    %2606 = vmatmul.bf16.gmra.mxu0 %v2465
    %v2607 = vpop.f32.mrf.mxu0
    %v2608 = vadd.f32 0.0, %v2607
    %v2609 = vpop.f32.mrf.mxu0
    %2610 = vdwg.mxu0
    %2611 = vmatpush.bf16.msra.mxu0 %v2078
    %2612 = vmatpush.bf16.msra.mxu0 %v2076
    %2613 = vmatpush.bf16.msra.mxu0 %v2074
    %2614 = vmatpush.bf16.msra.mxu0 %v2072
    %2615 = vmatpush.bf16.msra.mxu0 %v2070
    %2616 = vmatpush.bf16.msra.mxu0 %v2068
    %2617 = vmatpush.bf16.msra.mxu0 %v2066
    %2618 = vmatpush.bf16.msra.mxu0 %v2064
    %2619 = vmatmul.bf16.gmra.mxu0 %v2465
    %v2620 = vpop.f32.mrf.mxu0
    %v2621 = vadd.f32 0.0, %v2620
    %v2622 = vpop.f32.mrf.mxu0
    %2623 = vdwg.mxu0
    %2624 = vmatpush.bf16.msra.mxu0 %v2188
    %2625 = vmatpush.bf16.msra.mxu0 %v2186
    %2626 = vmatpush.bf16.msra.mxu0 %v2184
    %2627 = vmatpush.bf16.msra.mxu0 %v2182
    %2628 = vmatpush.bf16.msra.mxu0 %v2180
    %2629 = vmatpush.bf16.msra.mxu0 %v2178
    %2630 = vmatpush.bf16.msra.mxu0 %v2176
    %2631 = vmatpush.bf16.msra.mxu0 %v2174
    %2632 = vmatmul.bf16.gmra.mxu0 %v2466
    %v2633 = vpop.f32.mrf.mxu0
    %v2634 = vadd.f32 0.0, %v2633
    %v2635 = vpop.f32.mrf.mxu0
    %2636 = vdwg.mxu0
    %2637 = vmatpush.bf16.msra.mxu0 %v2189
    %2638 = vmatpush.bf16.msra.mxu0 %v2187
    %2639 = vmatpush.bf16.msra.mxu0 %v2185
    %2640 = vmatpush.bf16.msra.mxu0 %v2183
    %2641 = vmatpush.bf16.msra.mxu0 %v2181
    %2642 = vmatpush.bf16.msra.mxu0 %v2179
    %2643 = vmatpush.bf16.msra.mxu0 %v2177
    %2644 = vmatpush.bf16.msra.mxu0 %v2175
    %2645 = vmatmul.bf16.gmra.mxu0 %v2466
    %v2646 = vpop.f32.mrf.mxu0
    %v2647 = vadd.f32 0.0, %v2646
    %v2648 = vpop.f32.mrf.mxu0
    %2649 = vdwg.mxu0
    %2650 = vmatpush.bf16.msra.mxu0 %v2299
    %2651 = vmatpush.bf16.msra.mxu0 %v2297
    %2652 = vmatpush.bf16.msra.mxu0 %v2295
    %2653 = vmatpush.bf16.msra.mxu0 %v2293
    %2654 = vmatpush.bf16.msra.mxu0 %v2291
    %2655 = vmatpush.bf16.msra.mxu0 %v2289
    %2656 = vmatpush.bf16.msra.mxu0 %v2287
    %2657 = vmatpush.bf16.msra.mxu0 %v2285
    %2658 = vmatmul.bf16.gmra.mxu0 %v2467
    %v2659 = vpop.f32.mrf.mxu0
    %v2660 = vadd.f32 0.0, %v2659
    %v2661 = vpop.f32.mrf.mxu0
    %2662 = vdwg.mxu0
    %2663 = vmatpush.bf16.msra.mxu0 %v2300
    %2664 = vmatpush.bf16.msra.mxu0 %v2298
    %2665 = vmatpush.bf16.msra.mxu0 %v2296
    %2666 = vmatpush.bf16.msra.mxu0 %v2294
    %2667 = vmatpush.bf16.msra.mxu0 %v2292
    %2668 = vmatpush.bf16.msra.mxu0 %v2290
    %2669 = vmatpush.bf16.msra.mxu0 %v2288
    %2670 = vmatpush.bf16.msra.mxu0 %v2286
    %2671 = vmatmul.bf16.gmra.mxu0 %v2467
    %v2672 = vpop.f32.mrf.mxu0
    %v2673 = vadd.f32 0.0, %v2672
    %v2674 = vpop.f32.mrf.mxu0
    %2675 = vdwg.mxu0
    %v2677 = vrot.slane %v2459, 1
    %v2678 = vrot.slane %v2459, 2
    %v2679 = vrot.slane %v2459, 3
    %v2680 = vrot.slane %v2459, 4
    %v2681 = vrot.slane %v2459, 5
    %v2682 = vrot.slane %v2459, 6
    %v2683 = vrot.slane %v2459, 7
    %v2692 = vmul.f32 %v2478, %v2459
    %v2693 = vmul.f32 %v2491, %v2459
    %v2694 = vmul.f32 %v2504, %v2677
    %v2695 = vmul.f32 %v2517, %v2677
    %v2696 = vmul.f32 %v2530, %v2678
    %v2697 = vmul.f32 %v2543, %v2678
    %v2698 = vmul.f32 %v2556, %v2679
    %v2699 = vmul.f32 %v2569, %v2679
    %v2700 = vmul.f32 %v2582, %v2680
    %v2701 = vmul.f32 %v2595, %v2680
    %v2702 = vmul.f32 %v2608, %v2681
    %v2703 = vmul.f32 %v2621, %v2681
    %v2704 = vmul.f32 %v2634, %v2682
    %v2705 = vmul.f32 %v2647, %v2682
    %v2706 = vmul.f32 %v2660, %v2683
    %v2707 = vmul.f32 %v2673, %v2683
    %v2708 = vmul.f32 %v2405, %v2459
    %v2709 = vmul.f32 %v2407, %v2677
    %v2710 = vmul.f32 %v2409, %v2678
    %v2711 = vmul.f32 %v2411, %v2679
    %v2712 = vmul.f32 %v2413, %v2680
    %v2713 = vmul.f32 %v2415, %v2681
    %v2714 = vmul.f32 %v2417, %v2682
    %v2715 = vmul.f32 %v2419, %v2683
    %v2724 = vrot.slane %v2709, 7
    %v2725 = vsel %vm1435, %v2724, %v2708
    %v2726 = vrot.slane %v2710, 6
    %v2727 = vsel %vm1439, %v2726, %v2725
    %v2728 = vrot.slane %v2711, 5
    %v2729 = vsel %vm1443, %v2728, %v2727
    %v2730 = vrot.slane %v2712, 4
    %v2731 = vsel %vm2366, %v2730, %v2729
    %v2732 = vrot.slane %v2713, 3
    %v2733 = vsel %vm2369, %v2732, %v2731
    %v2734 = vrot.slane %v2714, 2
    %v2735 = vsel %vm2372, %v2734, %v2733
    %v2736 = vrot.slane %v2715, 1
    %v2737 = vsel %vm2375, %v2736, %v2735
    %2739 = vst [vmem:[#allocation12] sm:$0xff] %v2737
    %v2740 = vpack.c.bf16 %v2692, %v2692
    %v2741 = vpack.c.bf16 %v2693, %v2693
    %v2742 = vpack.c.bf16 %v2694, %v2694
    %v2743 = vpack.c.bf16 %v2695, %v2695
    %v2744 = vpack.c.bf16 %v2696, %v2696
    %v2745 = vpack.c.bf16 %v2697, %v2697
    %v2746 = vpack.c.bf16 %v2698, %v2698
    %v2747 = vpack.c.bf16 %v2699, %v2699
    %v2748 = vpack.c.bf16 %v2700, %v2700
    %v2749 = vpack.c.bf16 %v2701, %v2701
    %v2750 = vpack.c.bf16 %v2702, %v2702
    %v2751 = vpack.c.bf16 %v2703, %v2703
    %v2752 = vpack.c.bf16 %v2704, %v2704
    %v2753 = vpack.c.bf16 %v2705, %v2705
    %v2754 = vpack.c.bf16 %v2706, %v2706
    %v2755 = vpack.c.bf16 %v2707, %v2707
    %v2772 = vunpack.c.l.b16 %v2740
    %v2773 = vunpack.c.l.b16 %v2741
    %v2774 = vunpack.c.l.b16 %v2742
    %v2775 = vunpack.c.l.b16 %v2743
    %v2776 = vunpack.c.l.b16 %v2744
    %v2777 = vunpack.c.l.b16 %v2745
    %v2778 = vunpack.c.l.b16 %v2746
    %v2779 = vunpack.c.l.b16 %v2747
    %v2780 = vunpack.c.l.b16 %v2748
    %v2781 = vunpack.c.l.b16 %v2749
    %v2782 = vunpack.c.l.b16 %v2750
    %v2783 = vunpack.c.l.b16 %v2751
    %v2784 = vunpack.c.l.b16 %v2752
    %v2785 = vunpack.c.l.b16 %v2753
    %v2786 = vunpack.c.l.b16 %v2754
    %v2787 = vunpack.c.l.b16 %v2755
    %v2788 = vrot.slane %v2774, 7
    %v2789 = vsel %vm1435, %v2788, %v2772
    %v2790 = vrot.slane %v2776, 6
    %v2791 = vsel %vm1439, %v2790, %v2789
    %v2792 = vrot.slane %v2778, 5
    %v2793 = vsel %vm1443, %v2792, %v2791
    %v2794 = vrot.slane %v2780, 4
    %v2795 = vsel %vm2366, %v2794, %v2793
    %v2796 = vrot.slane %v2782, 3
    %v2797 = vsel %vm2369, %v2796, %v2795
    %v2798 = vrot.slane %v2784, 2
    %v2799 = vsel %vm2372, %v2798, %v2797
    %v2800 = vrot.slane %v2786, 1
    %v2801 = vsel %vm2375, %v2800, %v2799
    %v2802 = vrot.slane %v2775, 7
    %v2803 = vsel %vm1435, %v2802, %v2773
    %v2804 = vrot.slane %v2777, 6
    %v2805 = vsel %vm1439, %v2804, %v2803
    %v2806 = vrot.slane %v2779, 5
    %v2807 = vsel %vm1443, %v2806, %v2805
    %v2808 = vrot.slane %v2781, 4
    %v2809 = vsel %vm2366, %v2808, %v2807
    %v2810 = vrot.slane %v2783, 3
    %v2811 = vsel %vm2369, %v2810, %v2809
    %v2812 = vrot.slane %v2785, 2
    %v2813 = vsel %vm2372, %v2812, %v2811
    %v2814 = vrot.slane %v2787, 1
    %v2815 = vsel %vm2375, %v2814, %v2813
    %v2816 = vpack.c.b16 %v2801, %v2801
    %v2817 = vpack.c.b16 %v2815, %v2815
    %v2852 = vunpack.c.l.b16 %v397
    %v2853 = vunpack.c.l.b16 %v398
    %v2854 = vunpack.c.l.b16 %v399
    %v2855 = vunpack.c.l.b16 %v400
    %v2856 = vunpack.c.l.b16 %v401
    %v2857 = vunpack.c.l.b16 %v402
    %v2858 = vunpack.c.l.b16 %v403
    %v2859 = vunpack.c.l.b16 %v404
    %v2860 = vunpack.c.l.b16 %v405
    %v2861 = vunpack.c.l.b16 %v406
    %v2862 = vunpack.c.l.b16 %v407
    %v2863 = vunpack.c.l.b16 %v408
    %v2864 = vunpack.c.l.b16 %v409
    %v2865 = vunpack.c.l.b16 %v410
    %v2866 = vunpack.c.l.b16 %v411
    %v2867 = vunpack.c.l.b16 %v412
    %v2868 = vunpack.c.l.b16 %v413
    %v2869 = vunpack.c.l.b16 %v414
    %v2870 = vunpack.c.l.b16 %v415
    %v2871 = vunpack.c.l.b16 %v416
    %v2872 = vunpack.c.l.b16 %v417
    %v2873 = vunpack.c.l.b16 %v418
    %v2874 = vunpack.c.l.b16 %v419
    %v2875 = vunpack.c.l.b16 %v420
    %v2876 = vunpack.c.l.b16 %v421
    %v2877 = vunpack.c.l.b16 %v422
    %v2878 = vunpack.c.l.b16 %v423
    %v2879 = vunpack.c.l.b16 %v424
    %v2880 = vunpack.c.l.b16 %v425
    %v2881 = vunpack.c.l.b16 %v426
    %v2882 = vunpack.c.l.b16 %v427
    %v2883 = vunpack.c.l.b16 %v428
    %v2884 = vpack.c.b16 %v2853, %v2852
    %v2885 = vpack.c.b16 %v2855, %v2854
    %v2886 = vpack.c.b16 %v2857, %v2856
    %v2887 = vpack.c.b16 %v2859, %v2858
    %v2888 = vpack.c.b16 %v2861, %v2860
    %v2889 = vpack.c.b16 %v2863, %v2862
    %v2890 = vpack.c.b16 %v2865, %v2864
    %v2891 = vpack.c.b16 %v2867, %v2866
    %v2892 = vpack.c.b16 %v2869, %v2868
    %v2893 = vpack.c.b16 %v2871, %v2870
    %v2894 = vpack.c.b16 %v2873, %v2872
    %v2895 = vpack.c.b16 %v2875, %v2874
    %v2896 = vpack.c.b16 %v2877, %v2876
    %v2897 = vpack.c.b16 %v2879, %v2878
    %v2898 = vpack.c.b16 %v2881, %v2880
    %v2899 = vpack.c.b16 %v2883, %v2882
    %2916 = vmatpush.bf16.msra.mxu0 %v2891
    %2917 = vmatpush.bf16.msra.mxu0 %v2890
    %2918 = vmatpush.bf16.msra.mxu0 %v2889
    %2919 = vmatpush.bf16.msra.mxu0 %v2888
    %2920 = vmatpush.bf16.msra.mxu0 %v2887
    %2921 = vmatpush.bf16.msra.mxu0 %v2886
    %2922 = vmatpush.bf16.msra.mxu0 %v2885
    %2923 = vmatpush.bf16.msra.mxu0 %v2884
    %2924 = vmatmul.bf16.gmra.mxu0 %v2816
    %v2925 = vpop.f32.mrf.mxu0
    %v2926 = vadd.f32 0.0, %v2925
    %v2927 = vpop.f32.mrf.mxu0
    %2928 = vdwg.mxu0
    %2929 = vmatpush.bf16.msra.mxu0 %v2899
    %2930 = vmatpush.bf16.msra.mxu0 %v2898
    %2931 = vmatpush.bf16.msra.mxu0 %v2897
    %2932 = vmatpush.bf16.msra.mxu0 %v2896
    %2933 = vmatpush.bf16.msra.mxu0 %v2895
    %2934 = vmatpush.bf16.msra.mxu0 %v2894
    %2935 = vmatpush.bf16.msra.mxu0 %v2893
    %2936 = vmatpush.bf16.msra.mxu0 %v2892
    %2937 = vmatmul.bf16.gmra.mxu0 %v2817
    %v2938 = vpop.f32.mrf.mxu0
    %v2939 = vadd.f32 %v2926, %v2938
    %v2940 = vpop.f32.mrf.mxu0
    %2941 = vdwg.mxu0
    %v2942 = vunpack.c.l.b16 %v1427
    %v2943 = vunpack.c.h.b16 %v1427
    %v2944 = vpack.c.b16 %v2942, %v2942
    %v2945 = vpack.c.b16 %v2943, %v2943
    %v2980 = vunpack.c.l.b16 %v365
    %v2981 = vunpack.c.l.b16 %v366
    %v2982 = vunpack.c.l.b16 %v367
    %v2983 = vunpack.c.l.b16 %v368
    %v2984 = vunpack.c.l.b16 %v369
    %v2985 = vunpack.c.l.b16 %v370
    %v2986 = vunpack.c.l.b16 %v371
    %v2987 = vunpack.c.l.b16 %v372
    %v2988 = vunpack.c.l.b16 %v373
    %v2989 = vunpack.c.l.b16 %v374
    %v2990 = vunpack.c.l.b16 %v375
    %v2991 = vunpack.c.l.b16 %v376
    %v2992 = vunpack.c.l.b16 %v377
    %v2993 = vunpack.c.l.b16 %v378
    %v2994 = vunpack.c.l.b16 %v379
    %v2995 = vunpack.c.l.b16 %v380
    %v2996 = vunpack.c.l.b16 %v381
    %v2997 = vunpack.c.l.b16 %v382
    %v2998 = vunpack.c.l.b16 %v383
    %v2999 = vunpack.c.l.b16 %v384
    %v3000 = vunpack.c.l.b16 %v385
    %v3001 = vunpack.c.l.b16 %v386
    %v3002 = vunpack.c.l.b16 %v387
    %v3003 = vunpack.c.l.b16 %v388
    %v3004 = vunpack.c.l.b16 %v389
    %v3005 = vunpack.c.l.b16 %v390
    %v3006 = vunpack.c.l.b16 %v391
    %v3007 = vunpack.c.l.b16 %v392
    %v3008 = vunpack.c.l.b16 %v393
    %v3009 = vunpack.c.l.b16 %v394
    %v3010 = vunpack.c.l.b16 %v395
    %v3011 = vunpack.c.l.b16 %v396
    %v3012 = vpack.c.b16 %v2981, %v2980
    %v3013 = vpack.c.b16 %v2983, %v2982
    %v3014 = vpack.c.b16 %v2985, %v2984
    %v3015 = vpack.c.b16 %v2987, %v2986
    %v3016 = vpack.c.b16 %v2989, %v2988
    %v3017 = vpack.c.b16 %v2991, %v2990
    %v3018 = vpack.c.b16 %v2993, %v2992
    %v3019 = vpack.c.b16 %v2995, %v2994
    %v3020 = vpack.c.b16 %v2997, %v2996
    %v3021 = vpack.c.b16 %v2999, %v2998
    %v3022 = vpack.c.b16 %v3001, %v3000
    %v3023 = vpack.c.b16 %v3003, %v3002
    %v3024 = vpack.c.b16 %v3005, %v3004
    %v3025 = vpack.c.b16 %v3007, %v3006
    %v3026 = vpack.c.b16 %v3009, %v3008
    %v3027 = vpack.c.b16 %v3011, %v3010
    %3044 = vmatpush.bf16.msra.mxu0 %v3019
    %3045 = vmatpush.bf16.msra.mxu0 %v3018
    %3046 = vmatpush.bf16.msra.mxu0 %v3017
    %3047 = vmatpush.bf16.msra.mxu0 %v3016
    %3048 = vmatpush.bf16.msra.mxu0 %v3015
    %3049 = vmatpush.bf16.msra.mxu0 %v3014
    %3050 = vmatpush.bf16.msra.mxu0 %v3013
    %3051 = vmatpush.bf16.msra.mxu0 %v3012
    %3052 = vmatmul.bf16.gmra.mxu0 %v2944
    %v3053 = vpop.f32.mrf.mxu0
    %v3054 = vadd.f32 %v2939, %v3053
    %v3055 = vpop.f32.mrf.mxu0
    %3056 = vdwg.mxu0
    %3057 = vmatpush.bf16.msra.mxu0 %v3027
    %3058 = vmatpush.bf16.msra.mxu0 %v3026
    %3059 = vmatpush.bf16.msra.mxu0 %v3025
    %3060 = vmatpush.bf16.msra.mxu0 %v3024
    %3061 = vmatpush.bf16.msra.mxu0 %v3023
    %3062 = vmatpush.bf16.msra.mxu0 %v3022
    %3063 = vmatpush.bf16.msra.mxu0 %v3021
    %3064 = vmatpush.bf16.msra.mxu0 %v3020
    %3065 = vmatmul.bf16.gmra.mxu0 %v2945
    %v3066 = vpop.f32.mrf.mxu0
    %v3067 = vadd.f32 %v3054, %v3066
    %v3068 = vpop.f32.mrf.mxu0
    %3069 = vdwg.mxu0
    %v3070 = vadd.f32 %v3067, %v431
    %3071 = vmax.xlane.f32.xlu0 %v3070
    %v3072 = vpop.xlane.xlu0 %3071
    %v3073 = vsub.f32 %v3070, %v3072
    %v3074 = vmul.f32 %v3073, 1.442695
    %v3075 = vpow.pop %v3074
    %3076 = vadd.xlane.f32.xlu0 %v3075
    %v3077 = vpop.xlane.xlu0 %3076
    %v3078 = vlog2.pop %v3077
    %v3079 = vmul.f32 %v3078, 0.6931472
    %v3080 = vsub.f32 %v3073, %v3079
    %3081 = vst [vmem:[#allocation11] sm:$0xff] %v3080
    %s3082 = scalar_lea.vmem [#allocation2], 64
    %v3083 = vld [vmem:[%s3082] sm:$0xff]
    %v3084 = vld [vmem:[%s3082 + $0x8] sm:$0xff]
    %v3085 = vld [vmem:[%s3082 + $0x10] sm:$0xff]
    %v3086 = vld [vmem:[%s3082 + $0x18] sm:$0xff]
    %v3087 = vld [vmem:[%s3082 + $0x20] sm:$0xff]
    %v3088 = vld [vmem:[%s3082 + $0x28] sm:$0xff]
    %v3089 = vld [vmem:[%s3082 + $0x30] sm:$0xff]
    %v3090 = vld [vmem:[%s3082 + $0x38] sm:$0xff]
    %3091 = vmatpush.bf16.msra.mxu0 %v885
    %3092 = vmatpush.bf16.msra.mxu0 %v877
    %3093 = vmatpush.bf16.msra.mxu0 %v869
    %3094 = vmatpush.bf16.msra.mxu0 %v861
    %3095 = vmatpush.bf16.msra.mxu0 %v853
    %3096 = vmatpush.bf16.msra.mxu0 %v845
    %3097 = vmatpush.bf16.msra.mxu0 %v837
    %3098 = vmatpush.bf16.msra.mxu0 %v829
    %3099 = vmatmul.bf16.gmra.mxu0 %v2944
    %v3100 = vpop.f32.mrf.mxu0
    %v3101 = vadd.f32 0.0, %v3100
    %v3102 = vpop.f32.mrf.mxu0
    %3103 = vdwg.mxu0
    %3104 = vmatpush.bf16.msra.mxu0 %v949
    %3105 = vmatpush.bf16.msra.mxu0 %v941
    %3106 = vmatpush.bf16.msra.mxu0 %v933
    %3107 = vmatpush.bf16.msra.mxu0 %v925
    %3108 = vmatpush.bf16.msra.mxu0 %v917
    %3109 = vmatpush.bf16.msra.mxu0 %v909
    %3110 = vmatpush.bf16.msra.mxu0 %v901
    %3111 = vmatpush.bf16.msra.mxu0 %v893
    %3112 = vmatmul.bf16.gmra.mxu0 %v2945
    %v3113 = vpop.f32.mrf.mxu0
    %v3114 = vadd.f32 %v3101, %v3113
    %v3115 = vpop.f32.mrf.mxu0
    %3116 = vdwg.mxu0
    %3117 = vmatpush.bf16.msra.mxu0 %v886
    %3118 = vmatpush.bf16.msra.mxu0 %v878
    %3119 = vmatpush.bf16.msra.mxu0 %v870
    %3120 = vmatpush.bf16.msra.mxu0 %v862
    %3121 = vmatpush.bf16.msra.mxu0 %v854
    %3122 = vmatpush.bf16.msra.mxu0 %v846
    %3123 = vmatpush.bf16.msra.mxu0 %v838
    %3124 = vmatpush.bf16.msra.mxu0 %v830
    %3125 = vmatmul.bf16.gmra.mxu0 %v2944
    %v3126 = vpop.f32.mrf.mxu0
    %v3127 = vadd.f32 0.0, %v3126
    %v3128 = vpop.f32.mrf.mxu0
    %3129 = vdwg.mxu0
    %3130 = vmatpush.bf16.msra.mxu0 %v950
    %3131 = vmatpush.bf16.msra.mxu0 %v942
    %3132 = vmatpush.bf16.msra.mxu0 %v934
    %3133 = vmatpush.bf16.msra.mxu0 %v926
    %3134 = vmatpush.bf16.msra.mxu0 %v918
    %3135 = vmatpush.bf16.msra.mxu0 %v910
    %3136 = vmatpush.bf16.msra.mxu0 %v902
    %3137 = vmatpush.bf16.msra.mxu0 %v894
    %3138 = vmatmul.bf16.gmra.mxu0 %v2945
    %v3139 = vpop.f32.mrf.mxu0
    %v3140 = vadd.f32 %v3127, %v3139
    %v3141 = vpop.f32.mrf.mxu0
    %3142 = vdwg.mxu0
    %3143 = vmatpush.bf16.msra.mxu0 %v887
    %3144 = vmatpush.bf16.msra.mxu0 %v879
    %3145 = vmatpush.bf16.msra.mxu0 %v871
    %3146 = vmatpush.bf16.msra.mxu0 %v863
    %3147 = vmatpush.bf16.msra.mxu0 %v855
    %3148 = vmatpush.bf16.msra.mxu0 %v847
    %3149 = vmatpush.bf16.msra.mxu0 %v839
    %3150 = vmatpush.bf16.msra.mxu0 %v831
    %3151 = vmatmul.bf16.gmra.mxu0 %v2944
    %v3152 = vpop.f32.mrf.mxu0
    %v3153 = vadd.f32 0.0, %v3152
    %v3154 = vpop.f32.mrf.mxu0
    %3155 = vdwg.mxu0
    %3156 = vmatpush.bf16.msra.mxu0 %v951
    %3157 = vmatpush.bf16.msra.mxu0 %v943
    %3158 = vmatpush.bf16.msra.mxu0 %v935
    %3159 = vmatpush.bf16.msra.mxu0 %v927
    %3160 = vmatpush.bf16.msra.mxu0 %v919
    %3161 = vmatpush.bf16.msra.mxu0 %v911
    %3162 = vmatpush.bf16.msra.mxu0 %v903
    %3163 = vmatpush.bf16.msra.mxu0 %v895
    %3164 = vmatmul.bf16.gmra.mxu0 %v2945
    %v3165 = vpop.f32.mrf.mxu0
    %v3166 = vadd.f32 %v3153, %v3165
    %v3167 = vpop.f32.mrf.mxu0
    %3168 = vdwg.mxu0
    %3169 = vmatpush.bf16.msra.mxu0 %v888
    %3170 = vmatpush.bf16.msra.mxu0 %v880
    %3171 = vmatpush.bf16.msra.mxu0 %v872
    %3172 = vmatpush.bf16.msra.mxu0 %v864
    %3173 = vmatpush.bf16.msra.mxu0 %v856
    %3174 = vmatpush.bf16.msra.mxu0 %v848
    %3175 = vmatpush.bf16.msra.mxu0 %v840
    %3176 = vmatpush.bf16.msra.mxu0 %v832
    %3177 = vmatmul.bf16.gmra.mxu0 %v2944
    %v3178 = vpop.f32.mrf.mxu0
    %v3179 = vadd.f32 0.0, %v3178
    %v3180 = vpop.f32.mrf.mxu0
    %3181 = vdwg.mxu0
    %3182 = vmatpush.bf16.msra.mxu0 %v952
    %3183 = vmatpush.bf16.msra.mxu0 %v944
    %3184 = vmatpush.bf16.msra.mxu0 %v936
    %3185 = vmatpush.bf16.msra.mxu0 %v928
    %3186 = vmatpush.bf16.msra.mxu0 %v920
    %3187 = vmatpush.bf16.msra.mxu0 %v912
    %3188 = vmatpush.bf16.msra.mxu0 %v904
    %3189 = vmatpush.bf16.msra.mxu0 %v896
    %3190 = vmatmul.bf16.gmra.mxu0 %v2945
    %v3191 = vpop.f32.mrf.mxu0
    %v3192 = vadd.f32 %v3179, %v3191
    %v3193 = vpop.f32.mrf.mxu0
    %3194 = vdwg.mxu0
    %3195 = vmatpush.bf16.msra.mxu0 %v889
    %3196 = vmatpush.bf16.msra.mxu0 %v881
    %3197 = vmatpush.bf16.msra.mxu0 %v873
    %3198 = vmatpush.bf16.msra.mxu0 %v865
    %3199 = vmatpush.bf16.msra.mxu0 %v857
    %3200 = vmatpush.bf16.msra.mxu0 %v849
    %3201 = vmatpush.bf16.msra.mxu0 %v841
    %3202 = vmatpush.bf16.msra.mxu0 %v833
    %3203 = vmatmul.bf16.gmra.mxu0 %v2944
    %v3204 = vpop.f32.mrf.mxu0
    %v3205 = vadd.f32 0.0, %v3204
    %v3206 = vpop.f32.mrf.mxu0
    %3207 = vdwg.mxu0
    %3208 = vmatpush.bf16.msra.mxu0 %v953
    %3209 = vmatpush.bf16.msra.mxu0 %v945
    %3210 = vmatpush.bf16.msra.mxu0 %v937
    %3211 = vmatpush.bf16.msra.mxu0 %v929
    %3212 = vmatpush.bf16.msra.mxu0 %v921
    %3213 = vmatpush.bf16.msra.mxu0 %v913
    %3214 = vmatpush.bf16.msra.mxu0 %v905
    %3215 = vmatpush.bf16.msra.mxu0 %v897
    %3216 = vmatmul.bf16.gmra.mxu0 %v2945
    %v3217 = vpop.f32.mrf.mxu0
    %v3218 = vadd.f32 %v3205, %v3217
    %v3219 = vpop.f32.mrf.mxu0
    %3220 = vdwg.mxu0
    %3221 = vmatpush.bf16.msra.mxu0 %v890
    %3222 = vmatpush.bf16.msra.mxu0 %v882
    %3223 = vmatpush.bf16.msra.mxu0 %v874
    %3224 = vmatpush.bf16.msra.mxu0 %v866
    %3225 = vmatpush.bf16.msra.mxu0 %v858
    %3226 = vmatpush.bf16.msra.mxu0 %v850
    %3227 = vmatpush.bf16.msra.mxu0 %v842
    %3228 = vmatpush.bf16.msra.mxu0 %v834
    %3229 = vmatmul.bf16.gmra.mxu0 %v2944
    %v3230 = vpop.f32.mrf.mxu0
    %v3231 = vadd.f32 0.0, %v3230
    %v3232 = vpop.f32.mrf.mxu0
    %3233 = vdwg.mxu0
    %3234 = vmatpush.bf16.msra.mxu0 %v954
    %3235 = vmatpush.bf16.msra.mxu0 %v946
    %3236 = vmatpush.bf16.msra.mxu0 %v938
    %3237 = vmatpush.bf16.msra.mxu0 %v930
    %3238 = vmatpush.bf16.msra.mxu0 %v922
    %3239 = vmatpush.bf16.msra.mxu0 %v914
    %3240 = vmatpush.bf16.msra.mxu0 %v906
    %3241 = vmatpush.bf16.msra.mxu0 %v898
    %3242 = vmatmul.bf16.gmra.mxu0 %v2945
    %v3243 = vpop.f32.mrf.mxu0
    %v3244 = vadd.f32 %v3231, %v3243
    %v3245 = vpop.f32.mrf.mxu0
    %3246 = vdwg.mxu0
    %3247 = vmatpush.bf16.msra.mxu0 %v891
    %3248 = vmatpush.bf16.msra.mxu0 %v883
    %3249 = vmatpush.bf16.msra.mxu0 %v875
    %3250 = vmatpush.bf16.msra.mxu0 %v867
    %3251 = vmatpush.bf16.msra.mxu0 %v859
    %3252 = vmatpush.bf16.msra.mxu0 %v851
    %3253 = vmatpush.bf16.msra.mxu0 %v843
    %3254 = vmatpush.bf16.msra.mxu0 %v835
    %3255 = vmatmul.bf16.gmra.mxu0 %v2944
    %v3256 = vpop.f32.mrf.mxu0
    %v3257 = vadd.f32 0.0, %v3256
    %v3258 = vpop.f32.mrf.mxu0
    %3259 = vdwg.mxu0
    %3260 = vmatpush.bf16.msra.mxu0 %v955
    %3261 = vmatpush.bf16.msra.mxu0 %v947
    %3262 = vmatpush.bf16.msra.mxu0 %v939
    %3263 = vmatpush.bf16.msra.mxu0 %v931
    %3264 = vmatpush.bf16.msra.mxu0 %v923
    %3265 = vmatpush.bf16.msra.mxu0 %v915
    %3266 = vmatpush.bf16.msra.mxu0 %v907
    %3267 = vmatpush.bf16.msra.mxu0 %v899
    %3268 = vmatmul.bf16.gmra.mxu0 %v2945
    %v3269 = vpop.f32.mrf.mxu0
    %v3270 = vadd.f32 %v3257, %v3269
    %v3271 = vpop.f32.mrf.mxu0
    %3272 = vdwg.mxu0
    %3273 = vmatpush.bf16.msra.mxu0 %v892
    %3274 = vmatpush.bf16.msra.mxu0 %v884
    %3275 = vmatpush.bf16.msra.mxu0 %v876
    %3276 = vmatpush.bf16.msra.mxu0 %v868
    %3277 = vmatpush.bf16.msra.mxu0 %v860
    %3278 = vmatpush.bf16.msra.mxu0 %v852
    %3279 = vmatpush.bf16.msra.mxu0 %v844
    %3280 = vmatpush.bf16.msra.mxu0 %v836
    %3281 = vmatmul.bf16.gmra.mxu0 %v2944
    %v3282 = vpop.f32.mrf.mxu0
    %v3283 = vadd.f32 0.0, %v3282
    %v3284 = vpop.f32.mrf.mxu0
    %3285 = vdwg.mxu0
    %3286 = vmatpush.bf16.msra.mxu0 %v956
    %3287 = vmatpush.bf16.msra.mxu0 %v948
    %3288 = vmatpush.bf16.msra.mxu0 %v940
    %3289 = vmatpush.bf16.msra.mxu0 %v932
    %3290 = vmatpush.bf16.msra.mxu0 %v924
    %3291 = vmatpush.bf16.msra.mxu0 %v916
    %3292 = vmatpush.bf16.msra.mxu0 %v908
    %3293 = vmatpush.bf16.msra.mxu0 %v900
    %3294 = vmatmul.bf16.gmra.mxu0 %v2945
    %v3295 = vpop.f32.mrf.mxu0
    %v3296 = vadd.f32 %v3283, %v3295
    %v3297 = vpop.f32.mrf.mxu0
    %3298 = vdwg.mxu0
    %v3299 = vadd.f32 %v3083, %v3114
    %v3300 = vadd.f32 %v3084, %v3140
    %v3301 = vadd.f32 %v3085, %v3166
    %v3302 = vadd.f32 %v3086, %v3192
    %v3303 = vadd.f32 %v3087, %v3218
    %v3304 = vadd.f32 %v3088, %v3244
    %v3305 = vadd.f32 %v3089, %v3270
    %v3306 = vadd.f32 %v3090, %v3296
    %v3307 = vxor.u32 %v3299, 2147483648
    %v3308 = vxor.u32 %v3300, 2147483648
    %v3309 = vmul.f32 %v3307, 1.442695
    %v3310 = vpow.pop %v3309
    %v3311 = vmul.f32 %v3308, 1.442695
    %v3312 = vpow.pop %v3311
    %v3313 = vadd.f32 %v3310, 1.0
    %v3314 = vadd.f32 %v3312, 1.0
    %v3315 = vrcp.pop %v3313
    %v3316 = vmul.f32 %v3313, %v3315
    %v3317 = vsub.f32 1.0, %v3316
    %v3318 = vmul.f32 %v3315, %v3317
    %v3319 = vadd.f32 %v3315, %v3318
    %vm3320 = vweird.f32 %v3313
    %vm3321 = vweird.f32 %v3315
    %vm3322 = vmor %vm3320, %vm3321
    %v3323 = vsel %vm3322, %v3315, %v3319
    %v3324 = vand.u32 2147483647, %v3313
    %vm3325 = vcmp.eq.f32.partialorder %v3324, 8.507059e+37
    %v3326 = vand.u32 %v3313, 2147483648
    %v3327 = vor.u32 1.1754944e-38, %v3326
    %v3328 = vsel %vm3325, %v3327, %v3323
    %v3329 = vmul.f32 1.0, %v3328
    %v3330 = vrcp.pop %v3314
    %v3331 = vmul.f32 %v3314, %v3330
    %v3332 = vsub.f32 1.0, %v3331
    %v3333 = vmul.f32 %v3330, %v3332
    %v3334 = vadd.f32 %v3330, %v3333
    %vm3335 = vweird.f32 %v3314
    %vm3336 = vweird.f32 %v3330
    %vm3337 = vmor %vm3335, %vm3336
    %v3338 = vsel %vm3337, %v3330, %v3334
    %v3339 = vand.u32 2147483647, %v3314
    %vm3340 = vcmp.eq.f32.partialorder %v3339, 8.507059e+37
    %v3341 = vand.u32 %v3314, 2147483648
    %v3342 = vor.u32 1.1754944e-38, %v3341
    %v3343 = vsel %vm3340, %v3342, %v3338
    %v3344 = vmul.f32 1.0, %v3343
    %v3345 = vxor.u32 %v3301, 2147483648
    %v3346 = vxor.u32 %v3302, 2147483648
    %v3347 = vmul.f32 %v3345, 1.442695
    %v3348 = vpow.pop %v3347
    %v3349 = vmul.f32 %v3346, 1.442695
    %v3350 = vpow.pop %v3349
    %v3351 = vadd.f32 %v3348, 1.0
    %v3352 = vadd.f32 %v3350, 1.0
    %v3353 = vrcp.pop %v3351
    %v3354 = vmul.f32 %v3351, %v3353
    %v3355 = vsub.f32 1.0, %v3354
    %v3356 = vmul.f32 %v3353, %v3355
    %v3357 = vadd.f32 %v3353, %v3356
    %vm3358 = vweird.f32 %v3351
    %vm3359 = vweird.f32 %v3353
    %vm3360 = vmor %vm3358, %vm3359
    %v3361 = vsel %vm3360, %v3353, %v3357
    %v3362 = vand.u32 2147483647, %v3351
    %vm3363 = vcmp.eq.f32.partialorder %v3362, 8.507059e+37
    %v3364 = vand.u32 %v3351, 2147483648
    %v3365 = vor.u32 1.1754944e-38, %v3364
    %v3366 = vsel %vm3363, %v3365, %v3361
    %v3367 = vmul.f32 1.0, %v3366
    %v3368 = vrcp.pop %v3352
    %v3369 = vmul.f32 %v3352, %v3368
    %v3370 = vsub.f32 1.0, %v3369
    %v3371 = vmul.f32 %v3368, %v3370
    %v3372 = vadd.f32 %v3368, %v3371
    %vm3373 = vweird.f32 %v3352
    %vm3374 = vweird.f32 %v3368
    %vm3375 = vmor %vm3373, %vm3374
    %v3376 = vsel %vm3375, %v3368, %v3372
    %v3377 = vand.u32 2147483647, %v3352
    %vm3378 = vcmp.eq.f32.partialorder %v3377, 8.507059e+37
    %v3379 = vand.u32 %v3352, 2147483648
    %v3380 = vor.u32 1.1754944e-38, %v3379
    %v3381 = vsel %vm3378, %v3380, %v3376
    %v3382 = vmul.f32 1.0, %v3381
    %v3383 = vtanh.pop %v3303
    %v3384 = vtanh.pop %v3304
    %v3385 = vxor.u32 %v3305, 2147483648
    %v3386 = vxor.u32 %v3306, 2147483648
    %v3387 = vmul.f32 %v3385, 1.442695
    %v3388 = vpow.pop %v3387
    %v3389 = vmul.f32 %v3386, 1.442695
    %v3390 = vpow.pop %v3389
    %v3391 = vadd.f32 %v3388, 1.0
    %v3392 = vadd.f32 %v3390, 1.0
    %v3393 = vrcp.pop %v3391
    %v3394 = vmul.f32 %v3391, %v3393
    %v3395 = vsub.f32 1.0, %v3394
    %v3396 = vmul.f32 %v3393, %v3395
    %v3397 = vadd.f32 %v3393, %v3396
    %vm3398 = vweird.f32 %v3391
    %vm3399 = vweird.f32 %v3393
    %vm3400 = vmor %vm3398, %vm3399
    %v3401 = vsel %vm3400, %v3393, %v3397
    %v3402 = vand.u32 2147483647, %v3391
    %vm3403 = vcmp.eq.f32.partialorder %v3402, 8.507059e+37
    %v3404 = vand.u32 %v3391, 2147483648
    %v3405 = vor.u32 1.1754944e-38, %v3404
    %v3406 = vsel %vm3403, %v3405, %v3401
    %v3407 = vmul.f32 1.0, %v3406
    %v3408 = vrcp.pop %v3392
    %v3409 = vmul.f32 %v3392, %v3408
    %v3410 = vsub.f32 1.0, %v3409
    %v3411 = vmul.f32 %v3408, %v3410
    %v3412 = vadd.f32 %v3408, %v3411
    %vm3413 = vweird.f32 %v3392
    %vm3414 = vweird.f32 %v3408
    %vm3415 = vmor %vm3413, %vm3414
    %v3416 = vsel %vm3415, %v3408, %v3412
    %v3417 = vand.u32 2147483647, %v3392
    %vm3418 = vcmp.eq.f32.partialorder %v3417, 8.507059e+37
    %v3419 = vand.u32 %v3392, 2147483648
    %v3420 = vor.u32 1.1754944e-38, %v3419
    %v3421 = vsel %vm3418, %v3420, %v3416
    %v3422 = vmul.f32 1.0, %v3421
    %v3423 = vmul.f32 %v3367, %v1421
    %v3424 = vmul.f32 %v3382, %v1422
    %v3425 = vmul.f32 %v3329, %v3383
    %v3426 = vmul.f32 %v3344, %v3384
    %v3427 = vadd.f32 %v3423, %v3425
    %v3428 = vadd.f32 %v3424, %v3426
    %v3429 = vtanh.pop %v3427
    %v3430 = vtanh.pop %v3428
    %v3431 = vmul.f32 %v3407, %v3429
    %v3432 = vmul.f32 %v3422, %v3430
    %v3433 = vpack.c.bf16 %v3432, %v3431
    %v3435 = vrot.slane %v3433, 3
    %v3438 = vsel %vm1430, %v3433, %v3435
    %v3440 = vsel %vm1435, %v3433, %v3435
    %v3442 = vrot.slane %v3440, 1
    %v3443 = vsel %vm1439, %v3433, %v3435
    %v3445 = vrot.slane %v3443, 2
    %v3446 = vsel %vm1443, %v3433, %v3435
    %v3448 = vrot.slane %v3446, 3
    %v3449 = vunpack.i.l.s16 %v3438
    %v3450 = vunpack.i.h.s16 %v3438
    %v3451 = vunpack.i.l.s16 %v3442
    %v3452 = vunpack.i.h.s16 %v3442
    %v3453 = vunpack.i.l.s16 %v3445
    %v3454 = vunpack.i.h.s16 %v3445
    %v3455 = vunpack.i.l.s16 %v3448
    %v3456 = vunpack.i.h.s16 %v3448
    %v3457 = vpack.i.b16 %v3449, %v3449
    %v3458 = vperm.slane %v3457, 0
    %v3459 = vperm.slane %v3457, 1
    %3462 = vmatpush.bf16.xpose.msra.mxu0 %v1522
    %3463 = vmatpush.bf16.xpose.msra.mxu0 %v1520
    %3464 = vmatpush.bf16.xpose.msra.mxu0 %v1518
    %3465 = vmatpush.bf16.xpose.msra.mxu0 %v1516
    %3466 = vmatpush.bf16.xpose.msra.mxu0 %v1514
    %3467 = vmatpush.bf16.xpose.msra.mxu0 %v1512
    %3468 = vmatpush.bf16.xpose.msra.mxu0 %v1510
    %3469 = vmatpush.bf16.xpose.msra.mxu0 %v1508
    %3470 = vmatmul.bf16.gmra.mxu0 %v3458
    %v3471 = vpop.f32.mrf.mxu0
    %v3472 = vadd.f32 0.0, %v3471
    %v3473 = vpop.f32.mrf.mxu0
    %3474 = vdwg.mxu0
    %3475 = vmatpush.bf16.xpose.msra.mxu0 %v1523
    %3476 = vmatpush.bf16.xpose.msra.mxu0 %v1521
    %3477 = vmatpush.bf16.xpose.msra.mxu0 %v1519
    %3478 = vmatpush.bf16.xpose.msra.mxu0 %v1517
    %3479 = vmatpush.bf16.xpose.msra.mxu0 %v1515
    %3480 = vmatpush.bf16.xpose.msra.mxu0 %v1513
    %3481 = vmatpush.bf16.xpose.msra.mxu0 %v1511
    %3482 = vmatpush.bf16.xpose.msra.mxu0 %v1509
    %3483 = vmatmul.bf16.gmra.mxu0 %v3459
    %v3484 = vpop.f32.mrf.mxu0
    %v3485 = vadd.f32 %v3472, %v3484
    %v3486 = vpop.f32.mrf.mxu0
    %3487 = vdwg.mxu0
    %v3488 = vpack.i.b16 %v3450, %v3450
    %v3489 = vperm.slane %v3488, 0
    %v3490 = vperm.slane %v3488, 1
    %3493 = vmatpush.bf16.xpose.msra.mxu0 %v1633
    %3494 = vmatpush.bf16.xpose.msra.mxu0 %v1631
    %3495 = vmatpush.bf16.xpose.msra.mxu0 %v1629
    %3496 = vmatpush.bf16.xpose.msra.mxu0 %v1627
    %3497 = vmatpush.bf16.xpose.msra.mxu0 %v1625
    %3498 = vmatpush.bf16.xpose.msra.mxu0 %v1623
    %3499 = vmatpush.bf16.xpose.msra.mxu0 %v1621
    %3500 = vmatpush.bf16.xpose.msra.mxu0 %v1619
    %3501 = vmatmul.bf16.gmra.mxu0 %v3489
    %v3502 = vpop.f32.mrf.mxu0
    %v3503 = vadd.f32 0.0, %v3502
    %v3504 = vpop.f32.mrf.mxu0
    %3505 = vdwg.mxu0
    %3506 = vmatpush.bf16.xpose.msra.mxu0 %v1634
    %3507 = vmatpush.bf16.xpose.msra.mxu0 %v1632
    %3508 = vmatpush.bf16.xpose.msra.mxu0 %v1630
    %3509 = vmatpush.bf16.xpose.msra.mxu0 %v1628
    %3510 = vmatpush.bf16.xpose.msra.mxu0 %v1626
    %3511 = vmatpush.bf16.xpose.msra.mxu0 %v1624
    %3512 = vmatpush.bf16.xpose.msra.mxu0 %v1622
    %3513 = vmatpush.bf16.xpose.msra.mxu0 %v1620
    %3514 = vmatmul.bf16.gmra.mxu0 %v3490
    %v3515 = vpop.f32.mrf.mxu0
    %v3516 = vadd.f32 %v3503, %v3515
    %v3517 = vpop.f32.mrf.mxu0
    %3518 = vdwg.mxu0
    %v3519 = vpack.i.b16 %v3451, %v3451
    %v3520 = vperm.slane %v3519, 0
    %v3521 = vperm.slane %v3519, 1
    %3524 = vmatpush.bf16.xpose.msra.mxu0 %v1744
    %3525 = vmatpush.bf16.xpose.msra.mxu0 %v1742
    %3526 = vmatpush.bf16.xpose.msra.mxu0 %v1740
    %3527 = vmatpush.bf16.xpose.msra.mxu0 %v1738
    %3528 = vmatpush.bf16.xpose.msra.mxu0 %v1736
    %3529 = vmatpush.bf16.xpose.msra.mxu0 %v1734
    %3530 = vmatpush.bf16.xpose.msra.mxu0 %v1732
    %3531 = vmatpush.bf16.xpose.msra.mxu0 %v1730
    %3532 = vmatmul.bf16.gmra.mxu0 %v3520
    %v3533 = vpop.f32.mrf.mxu0
    %v3534 = vadd.f32 0.0, %v3533
    %v3535 = vpop.f32.mrf.mxu0
    %3536 = vdwg.mxu0
    %3537 = vmatpush.bf16.xpose.msra.mxu0 %v1745
    %3538 = vmatpush.bf16.xpose.msra.mxu0 %v1743
    %3539 = vmatpush.bf16.xpose.msra.mxu0 %v1741
    %3540 = vmatpush.bf16.xpose.msra.mxu0 %v1739
    %3541 = vmatpush.bf16.xpose.msra.mxu0 %v1737
    %3542 = vmatpush.bf16.xpose.msra.mxu0 %v1735
    %3543 = vmatpush.bf16.xpose.msra.mxu0 %v1733
    %3544 = vmatpush.bf16.xpose.msra.mxu0 %v1731
    %3545 = vmatmul.bf16.gmra.mxu0 %v3521
    %v3546 = vpop.f32.mrf.mxu0
    %v3547 = vadd.f32 %v3534, %v3546
    %v3548 = vpop.f32.mrf.mxu0
    %3549 = vdwg.mxu0
    %v3550 = vpack.i.b16 %v3452, %v3452
    %v3551 = vperm.slane %v3550, 0
    %v3552 = vperm.slane %v3550, 1
    %3555 = vmatpush.bf16.xpose.msra.mxu0 %v1855
    %3556 = vmatpush.bf16.xpose.msra.mxu0 %v1853
    %3557 = vmatpush.bf16.xpose.msra.mxu0 %v1851
    %3558 = vmatpush.bf16.xpose.msra.mxu0 %v1849
    %3559 = vmatpush.bf16.xpose.msra.mxu0 %v1847
    %3560 = vmatpush.bf16.xpose.msra.mxu0 %v1845
    %3561 = vmatpush.bf16.xpose.msra.mxu0 %v1843
    %3562 = vmatpush.bf16.xpose.msra.mxu0 %v1841
    %3563 = vmatmul.bf16.gmra.mxu0 %v3551
    %v3564 = vpop.f32.mrf.mxu0
    %v3565 = vadd.f32 0.0, %v3564
    %v3566 = vpop.f32.mrf.mxu0
    %3567 = vdwg.mxu0
    %3568 = vmatpush.bf16.xpose.msra.mxu0 %v1856
    %3569 = vmatpush.bf16.xpose.msra.mxu0 %v1854
    %3570 = vmatpush.bf16.xpose.msra.mxu0 %v1852
    %3571 = vmatpush.bf16.xpose.msra.mxu0 %v1850
    %3572 = vmatpush.bf16.xpose.msra.mxu0 %v1848
    %3573 = vmatpush.bf16.xpose.msra.mxu0 %v1846
    %3574 = vmatpush.bf16.xpose.msra.mxu0 %v1844
    %3575 = vmatpush.bf16.xpose.msra.mxu0 %v1842
    %3576 = vmatmul.bf16.gmra.mxu0 %v3552
    %v3577 = vpop.f32.mrf.mxu0
    %v3578 = vadd.f32 %v3565, %v3577
    %v3579 = vpop.f32.mrf.mxu0
    %3580 = vdwg.mxu0
    %v3581 = vpack.i.b16 %v3453, %v3453
    %v3582 = vperm.slane %v3581, 0
    %v3583 = vperm.slane %v3581, 1
    %3586 = vmatpush.bf16.xpose.msra.mxu0 %v1966
    %3587 = vmatpush.bf16.xpose.msra.mxu0 %v1964
    %3588 = vmatpush.bf16.xpose.msra.mxu0 %v1962
    %3589 = vmatpush.bf16.xpose.msra.mxu0 %v1960
    %3590 = vmatpush.bf16.xpose.msra.mxu0 %v1958
    %3591 = vmatpush.bf16.xpose.msra.mxu0 %v1956
    %3592 = vmatpush.bf16.xpose.msra.mxu0 %v1954
    %3593 = vmatpush.bf16.xpose.msra.mxu0 %v1952
    %3594 = vmatmul.bf16.gmra.mxu0 %v3582
    %v3595 = vpop.f32.mrf.mxu0
    %v3596 = vadd.f32 0.0, %v3595
    %v3597 = vpop.f32.mrf.mxu0
    %3598 = vdwg.mxu0
    %3599 = vmatpush.bf16.xpose.msra.mxu0 %v1967
    %3600 = vmatpush.bf16.xpose.msra.mxu0 %v1965
    %3601 = vmatpush.bf16.xpose.msra.mxu0 %v1963
    %3602 = vmatpush.bf16.xpose.msra.mxu0 %v1961
    %3603 = vmatpush.bf16.xpose.msra.mxu0 %v1959
    %3604 = vmatpush.bf16.xpose.msra.mxu0 %v1957
    %3605 = vmatpush.bf16.xpose.msra.mxu0 %v1955
    %3606 = vmatpush.bf16.xpose.msra.mxu0 %v1953
    %3607 = vmatmul.bf16.gmra.mxu0 %v3583
    %v3608 = vpop.f32.mrf.mxu0
    %v3609 = vadd.f32 %v3596, %v3608
    %v3610 = vpop.f32.mrf.mxu0
    %3611 = vdwg.mxu0
    %v3612 = vpack.i.b16 %v3454, %v3454
    %v3613 = vperm.slane %v3612, 0
    %v3614 = vperm.slane %v3612, 1
    %3617 = vmatpush.bf16.xpose.msra.mxu0 %v2077
    %3618 = vmatpush.bf16.xpose.msra.mxu0 %v2075
    %3619 = vmatpush.bf16.xpose.msra.mxu0 %v2073
    %3620 = vmatpush.bf16.xpose.msra.mxu0 %v2071
    %3621 = vmatpush.bf16.xpose.msra.mxu0 %v2069
    %3622 = vmatpush.bf16.xpose.msra.mxu0 %v2067
    %3623 = vmatpush.bf16.xpose.msra.mxu0 %v2065
    %3624 = vmatpush.bf16.xpose.msra.mxu0 %v2063
    %3625 = vmatmul.bf16.gmra.mxu0 %v3613
    %v3626 = vpop.f32.mrf.mxu0
    %v3627 = vadd.f32 0.0, %v3626
    %v3628 = vpop.f32.mrf.mxu0
    %3629 = vdwg.mxu0
    %3630 = vmatpush.bf16.xpose.msra.mxu0 %v2078
    %3631 = vmatpush.bf16.xpose.msra.mxu0 %v2076
    %3632 = vmatpush.bf16.xpose.msra.mxu0 %v2074
    %3633 = vmatpush.bf16.xpose.msra.mxu0 %v2072
    %3634 = vmatpush.bf16.xpose.msra.mxu0 %v2070
    %3635 = vmatpush.bf16.xpose.msra.mxu0 %v2068
    %3636 = vmatpush.bf16.xpose.msra.mxu0 %v2066
    %3637 = vmatpush.bf16.xpose.msra.mxu0 %v2064
    %3638 = vmatmul.bf16.gmra.mxu0 %v3614
    %v3639 = vpop.f32.mrf.mxu0
    %v3640 = vadd.f32 %v3627, %v3639
    %v3641 = vpop.f32.mrf.mxu0
    %3642 = vdwg.mxu0
    %v3643 = vpack.i.b16 %v3455, %v3455
    %v3644 = vperm.slane %v3643, 0
    %v3645 = vperm.slane %v3643, 1
    %3648 = vmatpush.bf16.xpose.msra.mxu0 %v2188
    %3649 = vmatpush.bf16.xpose.msra.mxu0 %v2186
    %3650 = vmatpush.bf16.xpose.msra.mxu0 %v2184
    %3651 = vmatpush.bf16.xpose.msra.mxu0 %v2182
    %3652 = vmatpush.bf16.xpose.msra.mxu0 %v2180
    %3653 = vmatpush.bf16.xpose.msra.mxu0 %v2178
    %3654 = vmatpush.bf16.xpose.msra.mxu0 %v2176
    %3655 = vmatpush.bf16.xpose.msra.mxu0 %v2174
    %3656 = vmatmul.bf16.gmra.mxu0 %v3644
    %v3657 = vpop.f32.mrf.mxu0
    %v3658 = vadd.f32 0.0, %v3657
    %v3659 = vpop.f32.mrf.mxu0
    %3660 = vdwg.mxu0
    %3661 = vmatpush.bf16.xpose.msra.mxu0 %v2189
    %3662 = vmatpush.bf16.xpose.msra.mxu0 %v2187
    %3663 = vmatpush.bf16.xpose.msra.mxu0 %v2185
    %3664 = vmatpush.bf16.xpose.msra.mxu0 %v2183
    %3665 = vmatpush.bf16.xpose.msra.mxu0 %v2181
    %3666 = vmatpush.bf16.xpose.msra.mxu0 %v2179
    %3667 = vmatpush.bf16.xpose.msra.mxu0 %v2177
    %3668 = vmatpush.bf16.xpose.msra.mxu0 %v2175
    %3669 = vmatmul.bf16.gmra.mxu0 %v3645
    %v3670 = vpop.f32.mrf.mxu0
    %v3671 = vadd.f32 %v3658, %v3670
    %v3672 = vpop.f32.mrf.mxu0
    %3673 = vdwg.mxu0
    %v3674 = vpack.i.b16 %v3456, %v3456
    %v3675 = vperm.slane %v3674, 0
    %v3676 = vperm.slane %v3674, 1
    %3679 = vmatpush.bf16.xpose.msra.mxu0 %v2299
    %3680 = vmatpush.bf16.xpose.msra.mxu0 %v2297
    %3681 = vmatpush.bf16.xpose.msra.mxu0 %v2295
    %3682 = vmatpush.bf16.xpose.msra.mxu0 %v2293
    %3683 = vmatpush.bf16.xpose.msra.mxu0 %v2291
    %3684 = vmatpush.bf16.xpose.msra.mxu0 %v2289
    %3685 = vmatpush.bf16.xpose.msra.mxu0 %v2287
    %3686 = vmatpush.bf16.xpose.msra.mxu0 %v2285
    %3687 = vmatmul.bf16.gmra.mxu0 %v3675
    %v3688 = vpop.f32.mrf.mxu0
    %v3689 = vadd.f32 0.0, %v3688
    %v3690 = vpop.f32.mrf.mxu0
    %3691 = vdwg.mxu0
    %3692 = vmatpush.bf16.xpose.msra.mxu0 %v2300
    %3693 = vmatpush.bf16.xpose.msra.mxu0 %v2298
    %3694 = vmatpush.bf16.xpose.msra.mxu0 %v2296
    %3695 = vmatpush.bf16.xpose.msra.mxu0 %v2294
    %3696 = vmatpush.bf16.xpose.msra.mxu0 %v2292
    %3697 = vmatpush.bf16.xpose.msra.mxu0 %v2290
    %3698 = vmatpush.bf16.xpose.msra.mxu0 %v2288
    %3699 = vmatpush.bf16.xpose.msra.mxu0 %v2286
    %3700 = vmatmul.bf16.gmra.mxu0 %v3676
    %v3701 = vpop.f32.mrf.mxu0
    %v3702 = vadd.f32 %v3689, %v3701
    %v3703 = vpop.f32.mrf.mxu0
    %3704 = vdwg.mxu0
    %v3705 = vadd.f32 %v3485, %v435
    %v3706 = vadd.f32 %v3516, %v435
    %v3707 = vadd.f32 %v3547, %v435
    %v3708 = vadd.f32 %v3578, %v435
    %v3709 = vadd.f32 %v3609, %v435
    %v3710 = vadd.f32 %v3640, %v435
    %v3711 = vadd.f32 %v3671, %v435
    %v3712 = vadd.f32 %v3702, %v435
    %v3721 = vrot.slane %v3706, 7
    %v3722 = vsel %vm1435, %v3721, %v3705
    %v3723 = vrot.slane %v3707, 6
    %v3724 = vsel %vm1439, %v3723, %v3722
    %v3725 = vrot.slane %v3708, 5
    %v3726 = vsel %vm1443, %v3725, %v3724
    %v3727 = vrot.slane %v3709, 4
    %v3728 = vsel %vm2366, %v3727, %v3726
    %v3729 = vrot.slane %v3710, 3
    %v3730 = vsel %vm2369, %v3729, %v3728
    %v3731 = vrot.slane %v3711, 2
    %v3732 = vsel %vm2372, %v3731, %v3730
    %v3733 = vrot.slane %v3712, 1
    %v3734 = vsel %vm2375, %v3733, %v3732
    %3736 = vmax.xlane.f32.xlu0 %v3734
    %v3737 = vpop.xlane.xlu0 %3736
    %v3739 = vrot.slane %v3737, 1
    %v3740 = vrot.slane %v3737, 2
    %v3741 = vrot.slane %v3737, 3
    %v3742 = vrot.slane %v3737, 4
    %v3743 = vrot.slane %v3737, 5
    %v3744 = vrot.slane %v3737, 6
    %v3745 = vrot.slane %v3737, 7
    %v3754 = vsub.f32 %v3705, %v3737
    %v3755 = vsub.f32 %v3706, %v3739
    %v3756 = vsub.f32 %v3707, %v3740
    %v3757 = vsub.f32 %v3708, %v3741
    %v3758 = vsub.f32 %v3709, %v3742
    %v3759 = vsub.f32 %v3710, %v3743
    %v3760 = vsub.f32 %v3711, %v3744
    %v3761 = vsub.f32 %v3712, %v3745
    %v3762 = vmul.f32 %v3754, 1.442695
    %v3763 = vpow.pop %v3762
    %v3764 = vmul.f32 %v3755, 1.442695
    %v3765 = vpow.pop %v3764
    %v3766 = vmul.f32 %v3756, 1.442695
    %v3767 = vpow.pop %v3766
    %v3768 = vmul.f32 %v3757, 1.442695
    %v3769 = vpow.pop %v3768
    %v3770 = vmul.f32 %v3758, 1.442695
    %v3771 = vpow.pop %v3770
    %v3772 = vmul.f32 %v3759, 1.442695
    %v3773 = vpow.pop %v3772
    %v3774 = vmul.f32 %v3760, 1.442695
    %v3775 = vpow.pop %v3774
    %v3776 = vmul.f32 %v3761, 1.442695
    %v3777 = vpow.pop %v3776
    %v3786 = vrot.slane %v3765, 7
    %v3787 = vsel %vm1435, %v3786, %v3763
    %v3788 = vrot.slane %v3767, 6
    %v3789 = vsel %vm1439, %v3788, %v3787
    %v3790 = vrot.slane %v3769, 5
    %v3791 = vsel %vm1443, %v3790, %v3789
    %v3792 = vrot.slane %v3771, 4
    %v3793 = vsel %vm2366, %v3792, %v3791
    %v3794 = vrot.slane %v3773, 3
    %v3795 = vsel %vm2369, %v3794, %v3793
    %v3796 = vrot.slane %v3775, 2
    %v3797 = vsel %vm2372, %v3796, %v3795
    %v3798 = vrot.slane %v3777, 1
    %v3799 = vsel %vm2375, %v3798, %v3797
    %3801 = vadd.xlane.f32.xlu0 %v3799
    %v3802 = vpop.xlane.xlu0 %3801
    %v3803 = vrcp.pop %v3802
    %v3804 = vmul.f32 %v3802, %v3803
    %v3805 = vsub.f32 1.0, %v3804
    %v3806 = vmul.f32 %v3803, %v3805
    %v3807 = vadd.f32 %v3803, %v3806
    %vm3808 = vweird.f32 %v3802
    %vm3809 = vweird.f32 %v3803
    %vm3810 = vmor %vm3808, %vm3809
    %v3811 = vsel %vm3810, %v3803, %v3807
    %v3812 = vand.u32 2147483647, %v3802
    %vm3813 = vcmp.eq.f32.partialorder %v3812, 8.507059e+37
    %v3814 = vand.u32 %v3802, 2147483648
    %v3815 = vor.u32 1.1754944e-38, %v3814
    %v3816 = vsel %vm3813, %v3815, %v3811
    %v3817 = vmul.f32 1.0, %v3816
    %v3818 = vpack.c.bf16 %v3763, %v3763
    %v3819 = vpack.c.bf16 %v3765, %v3765
    %v3820 = vpack.c.bf16 %v3767, %v3767
    %v3821 = vpack.c.bf16 %v3769, %v3769
    %v3822 = vpack.c.bf16 %v3771, %v3771
    %v3823 = vpack.c.bf16 %v3773, %v3773
    %v3824 = vpack.c.bf16 %v3775, %v3775
    %v3825 = vpack.c.bf16 %v3777, %v3777
    %3826 = vmatpush.bf16.msra.mxu0 %v1522
    %3827 = vmatpush.bf16.msra.mxu0 %v1520
    %3828 = vmatpush.bf16.msra.mxu0 %v1518
    %3829 = vmatpush.bf16.msra.mxu0 %v1516
    %3830 = vmatpush.bf16.msra.mxu0 %v1514
    %3831 = vmatpush.bf16.msra.mxu0 %v1512
    %3832 = vmatpush.bf16.msra.mxu0 %v1510
    %3833 = vmatpush.bf16.msra.mxu0 %v1508
    %3834 = vmatmul.bf16.gmra.mxu0 %v3818
    %v3835 = vpop.f32.mrf.mxu0
    %v3836 = vadd.f32 0.0, %v3835
    %v3837 = vpop.f32.mrf.mxu0
    %3838 = vdwg.mxu0
    %3839 = vmatpush.bf16.msra.mxu0 %v1523
    %3840 = vmatpush.bf16.msra.mxu0 %v1521
    %3841 = vmatpush.bf16.msra.mxu0 %v1519
    %3842 = vmatpush.bf16.msra.mxu0 %v1517
    %3843 = vmatpush.bf16.msra.mxu0 %v1515
    %3844 = vmatpush.bf16.msra.mxu0 %v1513
    %3845 = vmatpush.bf16.msra.mxu0 %v1511
    %3846 = vmatpush.bf16.msra.mxu0 %v1509
    %3847 = vmatmul.bf16.gmra.mxu0 %v3818
    %v3848 = vpop.f32.mrf.mxu0
    %v3849 = vadd.f32 0.0, %v3848
    %v3850 = vpop.f32.mrf.mxu0
    %3851 = vdwg.mxu0
    %3852 = vmatpush.bf16.msra.mxu0 %v1633
    %3853 = vmatpush.bf16.msra.mxu0 %v1631
    %3854 = vmatpush.bf16.msra.mxu0 %v1629
    %3855 = vmatpush.bf16.msra.mxu0 %v1627
    %3856 = vmatpush.bf16.msra.mxu0 %v1625
    %3857 = vmatpush.bf16.msra.mxu0 %v1623
    %3858 = vmatpush.bf16.msra.mxu0 %v1621
    %3859 = vmatpush.bf16.msra.mxu0 %v1619
    %3860 = vmatmul.bf16.gmra.mxu0 %v3819
    %v3861 = vpop.f32.mrf.mxu0
    %v3862 = vadd.f32 0.0, %v3861
    %v3863 = vpop.f32.mrf.mxu0
    %3864 = vdwg.mxu0
    %3865 = vmatpush.bf16.msra.mxu0 %v1634
    %3866 = vmatpush.bf16.msra.mxu0 %v1632
    %3867 = vmatpush.bf16.msra.mxu0 %v1630
    %3868 = vmatpush.bf16.msra.mxu0 %v1628
    %3869 = vmatpush.bf16.msra.mxu0 %v1626
    %3870 = vmatpush.bf16.msra.mxu0 %v1624
    %3871 = vmatpush.bf16.msra.mxu0 %v1622
    %3872 = vmatpush.bf16.msra.mxu0 %v1620
    %3873 = vmatmul.bf16.gmra.mxu0 %v3819
    %v3874 = vpop.f32.mrf.mxu0
    %v3875 = vadd.f32 0.0, %v3874
    %v3876 = vpop.f32.mrf.mxu0
    %3877 = vdwg.mxu0
    %3878 = vmatpush.bf16.msra.mxu0 %v1744
    %3879 = vmatpush.bf16.msra.mxu0 %v1742
    %3880 = vmatpush.bf16.msra.mxu0 %v1740
    %3881 = vmatpush.bf16.msra.mxu0 %v1738
    %3882 = vmatpush.bf16.msra.mxu0 %v1736
    %3883 = vmatpush.bf16.msra.mxu0 %v1734
    %3884 = vmatpush.bf16.msra.mxu0 %v1732
    %3885 = vmatpush.bf16.msra.mxu0 %v1730
    %3886 = vmatmul.bf16.gmra.mxu0 %v3820
    %v3887 = vpop.f32.mrf.mxu0
    %v3888 = vadd.f32 0.0, %v3887
    %v3889 = vpop.f32.mrf.mxu0
    %3890 = vdwg.mxu0
    %3891 = vmatpush.bf16.msra.mxu0 %v1745
    %3892 = vmatpush.bf16.msra.mxu0 %v1743
    %3893 = vmatpush.bf16.msra.mxu0 %v1741
    %3894 = vmatpush.bf16.msra.mxu0 %v1739
    %3895 = vmatpush.bf16.msra.mxu0 %v1737
    %3896 = vmatpush.bf16.msra.mxu0 %v1735
    %3897 = vmatpush.bf16.msra.mxu0 %v1733
    %3898 = vmatpush.bf16.msra.mxu0 %v1731
    %3899 = vmatmul.bf16.gmra.mxu0 %v3820
    %v3900 = vpop.f32.mrf.mxu0
    %v3901 = vadd.f32 0.0, %v3900
    %v3902 = vpop.f32.mrf.mxu0
    %3903 = vdwg.mxu0
    %3904 = vmatpush.bf16.msra.mxu0 %v1855
    %3905 = vmatpush.bf16.msra.mxu0 %v1853
    %3906 = vmatpush.bf16.msra.mxu0 %v1851
    %3907 = vmatpush.bf16.msra.mxu0 %v1849
    %3908 = vmatpush.bf16.msra.mxu0 %v1847
    %3909 = vmatpush.bf16.msra.mxu0 %v1845
    %3910 = vmatpush.bf16.msra.mxu0 %v1843
    %3911 = vmatpush.bf16.msra.mxu0 %v1841
    %3912 = vmatmul.bf16.gmra.mxu0 %v3821
    %v3913 = vpop.f32.mrf.mxu0
    %v3914 = vadd.f32 0.0, %v3913
    %v3915 = vpop.f32.mrf.mxu0
    %3916 = vdwg.mxu0
    %3917 = vmatpush.bf16.msra.mxu0 %v1856
    %3918 = vmatpush.bf16.msra.mxu0 %v1854
    %3919 = vmatpush.bf16.msra.mxu0 %v1852
    %3920 = vmatpush.bf16.msra.mxu0 %v1850
    %3921 = vmatpush.bf16.msra.mxu0 %v1848
    %3922 = vmatpush.bf16.msra.mxu0 %v1846
    %3923 = vmatpush.bf16.msra.mxu0 %v1844
    %3924 = vmatpush.bf16.msra.mxu0 %v1842
    %3925 = vmatmul.bf16.gmra.mxu0 %v3821
    %v3926 = vpop.f32.mrf.mxu0
    %v3927 = vadd.f32 0.0, %v3926
    %v3928 = vpop.f32.mrf.mxu0
    %3929 = vdwg.mxu0
    %3930 = vmatpush.bf16.msra.mxu0 %v1966
    %3931 = vmatpush.bf16.msra.mxu0 %v1964
    %3932 = vmatpush.bf16.msra.mxu0 %v1962
    %3933 = vmatpush.bf16.msra.mxu0 %v1960
    %3934 = vmatpush.bf16.msra.mxu0 %v1958
    %3935 = vmatpush.bf16.msra.mxu0 %v1956
    %3936 = vmatpush.bf16.msra.mxu0 %v1954
    %3937 = vmatpush.bf16.msra.mxu0 %v1952
    %3938 = vmatmul.bf16.gmra.mxu0 %v3822
    %v3939 = vpop.f32.mrf.mxu0
    %v3940 = vadd.f32 0.0, %v3939
    %v3941 = vpop.f32.mrf.mxu0
    %3942 = vdwg.mxu0
    %3943 = vmatpush.bf16.msra.mxu0 %v1967
    %3944 = vmatpush.bf16.msra.mxu0 %v1965
    %3945 = vmatpush.bf16.msra.mxu0 %v1963
    %3946 = vmatpush.bf16.msra.mxu0 %v1961
    %3947 = vmatpush.bf16.msra.mxu0 %v1959
    %3948 = vmatpush.bf16.msra.mxu0 %v1957
    %3949 = vmatpush.bf16.msra.mxu0 %v1955
    %3950 = vmatpush.bf16.msra.mxu0 %v1953
    %3951 = vmatmul.bf16.gmra.mxu0 %v3822
    %v3952 = vpop.f32.mrf.mxu0
    %v3953 = vadd.f32 0.0, %v3952
    %v3954 = vpop.f32.mrf.mxu0
    %3955 = vdwg.mxu0
    %3956 = vmatpush.bf16.msra.mxu0 %v2077
    %3957 = vmatpush.bf16.msra.mxu0 %v2075
    %3958 = vmatpush.bf16.msra.mxu0 %v2073
    %3959 = vmatpush.bf16.msra.mxu0 %v2071
    %3960 = vmatpush.bf16.msra.mxu0 %v2069
    %3961 = vmatpush.bf16.msra.mxu0 %v2067
    %3962 = vmatpush.bf16.msra.mxu0 %v2065
    %3963 = vmatpush.bf16.msra.mxu0 %v2063
    %3964 = vmatmul.bf16.gmra.mxu0 %v3823
    %v3965 = vpop.f32.mrf.mxu0
    %v3966 = vadd.f32 0.0, %v3965
    %v3967 = vpop.f32.mrf.mxu0
    %3968 = vdwg.mxu0
    %3969 = vmatpush.bf16.msra.mxu0 %v2078
    %3970 = vmatpush.bf16.msra.mxu0 %v2076
    %3971 = vmatpush.bf16.msra.mxu0 %v2074
    %3972 = vmatpush.bf16.msra.mxu0 %v2072
    %3973 = vmatpush.bf16.msra.mxu0 %v2070
    %3974 = vmatpush.bf16.msra.mxu0 %v2068
    %3975 = vmatpush.bf16.msra.mxu0 %v2066
    %3976 = vmatpush.bf16.msra.mxu0 %v2064
    %3977 = vmatmul.bf16.gmra.mxu0 %v3823
    %v3978 = vpop.f32.mrf.mxu0
    %v3979 = vadd.f32 0.0, %v3978
    %v3980 = vpop.f32.mrf.mxu0
    %3981 = vdwg.mxu0
    %3982 = vmatpush.bf16.msra.mxu0 %v2188
    %3983 = vmatpush.bf16.msra.mxu0 %v2186
    %3984 = vmatpush.bf16.msra.mxu0 %v2184
    %3985 = vmatpush.bf16.msra.mxu0 %v2182
    %3986 = vmatpush.bf16.msra.mxu0 %v2180
    %3987 = vmatpush.bf16.msra.mxu0 %v2178
    %3988 = vmatpush.bf16.msra.mxu0 %v2176
    %3989 = vmatpush.bf16.msra.mxu0 %v2174
    %3990 = vmatmul.bf16.gmra.mxu0 %v3824
    %v3991 = vpop.f32.mrf.mxu0
    %v3992 = vadd.f32 0.0, %v3991
    %v3993 = vpop.f32.mrf.mxu0
    %3994 = vdwg.mxu0
    %3995 = vmatpush.bf16.msra.mxu0 %v2189
    %3996 = vmatpush.bf16.msra.mxu0 %v2187
    %3997 = vmatpush.bf16.msra.mxu0 %v2185
    %3998 = vmatpush.bf16.msra.mxu0 %v2183
    %3999 = vmatpush.bf16.msra.mxu0 %v2181
    %4000 = vmatpush.bf16.msra.mxu0 %v2179
    %4001 = vmatpush.bf16.msra.mxu0 %v2177
    %4002 = vmatpush.bf16.msra.mxu0 %v2175
    %4003 = vmatmul.bf16.gmra.mxu0 %v3824
    %v4004 = vpop.f32.mrf.mxu0
    %v4005 = vadd.f32 0.0, %v4004
    %v4006 = vpop.f32.mrf.mxu0
    %4007 = vdwg.mxu0
    %4008 = vmatpush.bf16.msra.mxu0 %v2299
    %4009 = vmatpush.bf16.msra.mxu0 %v2297
    %4010 = vmatpush.bf16.msra.mxu0 %v2295
    %4011 = vmatpush.bf16.msra.mxu0 %v2293
    %4012 = vmatpush.bf16.msra.mxu0 %v2291
    %4013 = vmatpush.bf16.msra.mxu0 %v2289
    %4014 = vmatpush.bf16.msra.mxu0 %v2287
    %4015 = vmatpush.bf16.msra.mxu0 %v2285
    %4016 = vmatmul.bf16.gmra.mxu0 %v3825
    %v4017 = vpop.f32.mrf.mxu0
    %v4018 = vadd.f32 0.0, %v4017
    %v4019 = vpop.f32.mrf.mxu0
    %4020 = vdwg.mxu0
    %4021 = vmatpush.bf16.msra.mxu0 %v2300
    %4022 = vmatpush.bf16.msra.mxu0 %v2298
    %4023 = vmatpush.bf16.msra.mxu0 %v2296
    %4024 = vmatpush.bf16.msra.mxu0 %v2294
    %4025 = vmatpush.bf16.msra.mxu0 %v2292
    %4026 = vmatpush.bf16.msra.mxu0 %v2290
    %4027 = vmatpush.bf16.msra.mxu0 %v2288
    %4028 = vmatpush.bf16.msra.mxu0 %v2286
    %4029 = vmatmul.bf16.gmra.mxu0 %v3825
    %v4030 = vpop.f32.mrf.mxu0
    %v4031 = vadd.f32 0.0, %v4030
    %v4032 = vpop.f32.mrf.mxu0
    %4033 = vdwg.mxu0
    %v4035 = vrot.slane %v3817, 1
    %v4036 = vrot.slane %v3817, 2
    %v4037 = vrot.slane %v3817, 3
    %v4038 = vrot.slane %v3817, 4
    %v4039 = vrot.slane %v3817, 5
    %v4040 = vrot.slane %v3817, 6
    %v4041 = vrot.slane %v3817, 7
    %v4050 = vmul.f32 %v3836, %v3817
    %v4051 = vmul.f32 %v3849, %v3817
    %v4052 = vmul.f32 %v3862, %v4035
    %v4053 = vmul.f32 %v3875, %v4035
    %v4054 = vmul.f32 %v3888, %v4036
    %v4055 = vmul.f32 %v3901, %v4036
    %v4056 = vmul.f32 %v3914, %v4037
    %v4057 = vmul.f32 %v3927, %v4037
    %v4058 = vmul.f32 %v3940, %v4038
    %v4059 = vmul.f32 %v3953, %v4038
    %v4060 = vmul.f32 %v3966, %v4039
    %v4061 = vmul.f32 %v3979, %v4039
    %v4062 = vmul.f32 %v3992, %v4040
    %v4063 = vmul.f32 %v4005, %v4040
    %v4064 = vmul.f32 %v4018, %v4041
    %v4065 = vmul.f32 %v4031, %v4041
    %v4066 = vmul.f32 %v3763, %v3817
    %v4067 = vmul.f32 %v3765, %v4035
    %v4068 = vmul.f32 %v3767, %v4036
    %v4069 = vmul.f32 %v3769, %v4037
    %v4070 = vmul.f32 %v3771, %v4038
    %v4071 = vmul.f32 %v3773, %v4039
    %v4072 = vmul.f32 %v3775, %v4040
    %v4073 = vmul.f32 %v3777, %v4041
    %v4082 = vrot.slane %v4067, 7
    %v4083 = vsel %vm1435, %v4082, %v4066
    %v4084 = vrot.slane %v4068, 6
    %v4085 = vsel %vm1439, %v4084, %v4083
    %v4086 = vrot.slane %v4069, 5
    %v4087 = vsel %vm1443, %v4086, %v4085
    %v4088 = vrot.slane %v4070, 4
    %v4089 = vsel %vm2366, %v4088, %v4087
    %v4090 = vrot.slane %v4071, 3
    %v4091 = vsel %vm2369, %v4090, %v4089
    %v4092 = vrot.slane %v4072, 2
    %v4093 = vsel %vm2372, %v4092, %v4091
    %v4094 = vrot.slane %v4073, 1
    %v4095 = vsel %vm2375, %v4094, %v4093
    %s4097 = scalar_lea.vmem [#allocation12], 8
    %4098 = vst [vmem:[%s4097] sm:$0xff] %v4095
    %v4099 = vpack.c.bf16 %v4050, %v4050
    %v4100 = vpack.c.bf16 %v4051, %v4051
    %v4101 = vpack.c.bf16 %v4052, %v4052
    %v4102 = vpack.c.bf16 %v4053, %v4053
    %v4103 = vpack.c.bf16 %v4054, %v4054
    %v4104 = vpack.c.bf16 %v4055, %v4055
    %v4105 = vpack.c.bf16 %v4056, %v4056
    %v4106 = vpack.c.bf16 %v4057, %v4057
    %v4107 = vpack.c.bf16 %v4058, %v4058
    %v4108 = vpack.c.bf16 %v4059, %v4059
    %v4109 = vpack.c.bf16 %v4060, %v4060
    %v4110 = vpack.c.bf16 %v4061, %v4061
    %v4111 = vpack.c.bf16 %v4062, %v4062
    %v4112 = vpack.c.bf16 %v4063, %v4063
    %v4113 = vpack.c.bf16 %v4064, %v4064
    %v4114 = vpack.c.bf16 %v4065, %v4065
    %v4131 = vunpack.c.l.b16 %v4099
    %v4132 = vunpack.c.l.b16 %v4100
    %v4133 = vunpack.c.l.b16 %v4101
    %v4134 = vunpack.c.l.b16 %v4102
    %v4135 = vunpack.c.l.b16 %v4103
    %v4136 = vunpack.c.l.b16 %v4104
    %v4137 = vunpack.c.l.b16 %v4105
    %v4138 = vunpack.c.l.b16 %v4106
    %v4139 = vunpack.c.l.b16 %v4107
    %v4140 = vunpack.c.l.b16 %v4108
    %v4141 = vunpack.c.l.b16 %v4109
    %v4142 = vunpack.c.l.b16 %v4110
    %v4143 = vunpack.c.l.b16 %v4111
    %v4144 = vunpack.c.l.b16 %v4112
    %v4145 = vunpack.c.l.b16 %v4113
    %v4146 = vunpack.c.l.b16 %v4114
    %v4147 = vrot.slane %v4133, 7
    %v4148 = vsel %vm1435, %v4147, %v4131
    %v4149 = vrot.slane %v4135, 6
    %v4150 = vsel %vm1439, %v4149, %v4148
    %v4151 = vrot.slane %v4137, 5
    %v4152 = vsel %vm1443, %v4151, %v4150
    %v4153 = vrot.slane %v4139, 4
    %v4154 = vsel %vm2366, %v4153, %v4152
    %v4155 = vrot.slane %v4141, 3
    %v4156 = vsel %vm2369, %v4155, %v4154
    %v4157 = vrot.slane %v4143, 2
    %v4158 = vsel %vm2372, %v4157, %v4156
    %v4159 = vrot.slane %v4145, 1
    %v4160 = vsel %vm2375, %v4159, %v4158
    %v4161 = vrot.slane %v4134, 7
    %v4162 = vsel %vm1435, %v4161, %v4132
    %v4163 = vrot.slane %v4136, 6
    %v4164 = vsel %vm1439, %v4163, %v4162
    %v4165 = vrot.slane %v4138, 5
    %v4166 = vsel %vm1443, %v4165, %v4164
    %v4167 = vrot.slane %v4140, 4
    %v4168 = vsel %vm2366, %v4167, %v4166
    %v4169 = vrot.slane %v4142, 3
    %v4170 = vsel %vm2369, %v4169, %v4168
    %v4171 = vrot.slane %v4144, 2
    %v4172 = vsel %vm2372, %v4171, %v4170
    %v4173 = vrot.slane %v4146, 1
    %v4174 = vsel %vm2375, %v4173, %v4172
    %v4175 = vpack.c.b16 %v4160, %v4160
    %v4176 = vpack.c.b16 %v4174, %v4174
    %4179 = vmatpush.bf16.msra.mxu0 %v2891
    %4180 = vmatpush.bf16.msra.mxu0 %v2890
    %4181 = vmatpush.bf16.msra.mxu0 %v2889
    %4182 = vmatpush.bf16.msra.mxu0 %v2888
    %4183 = vmatpush.bf16.msra.mxu0 %v2887
    %4184 = vmatpush.bf16.msra.mxu0 %v2886
    %4185 = vmatpush.bf16.msra.mxu0 %v2885
    %4186 = vmatpush.bf16.msra.mxu0 %v2884
    %4187 = vmatmul.bf16.gmra.mxu0 %v4175
    %v4188 = vpop.f32.mrf.mxu0
    %v4189 = vadd.f32 0.0, %v4188
    %v4190 = vpop.f32.mrf.mxu0
    %4191 = vdwg.mxu0
    %4192 = vmatpush.bf16.msra.mxu0 %v2899
    %4193 = vmatpush.bf16.msra.mxu0 %v2898
    %4194 = vmatpush.bf16.msra.mxu0 %v2897
    %4195 = vmatpush.bf16.msra.mxu0 %v2896
    %4196 = vmatpush.bf16.msra.mxu0 %v2895
    %4197 = vmatpush.bf16.msra.mxu0 %v2894
    %4198 = vmatpush.bf16.msra.mxu0 %v2893
    %4199 = vmatpush.bf16.msra.mxu0 %v2892
    %4200 = vmatmul.bf16.gmra.mxu0 %v4176
    %v4201 = vpop.f32.mrf.mxu0
    %v4202 = vadd.f32 %v4189, %v4201
    %v4203 = vpop.f32.mrf.mxu0
    %4204 = vdwg.mxu0
    %v4205 = vunpack.c.l.b16 %v3433
    %v4206 = vunpack.c.h.b16 %v3433
    %v4207 = vpack.c.b16 %v4205, %v4205
    %v4208 = vpack.c.b16 %v4206, %v4206
    %4211 = vmatpush.bf16.msra.mxu0 %v3019
    %4212 = vmatpush.bf16.msra.mxu0 %v3018
    %4213 = vmatpush.bf16.msra.mxu0 %v3017
    %4214 = vmatpush.bf16.msra.mxu0 %v3016
    %4215 = vmatpush.bf16.msra.mxu0 %v3015
    %4216 = vmatpush.bf16.msra.mxu0 %v3014
    %4217 = vmatpush.bf16.msra.mxu0 %v3013
    %4218 = vmatpush.bf16.msra.mxu0 %v3012
    %4219 = vmatmul.bf16.gmra.mxu0 %v4207
    %v4220 = vpop.f32.mrf.mxu0
    %v4221 = vadd.f32 %v4202, %v4220
    %v4222 = vpop.f32.mrf.mxu0
    %4223 = vdwg.mxu0
    %4224 = vmatpush.bf16.msra.mxu0 %v3027
    %4225 = vmatpush.bf16.msra.mxu0 %v3026
    %4226 = vmatpush.bf16.msra.mxu0 %v3025
    %4227 = vmatpush.bf16.msra.mxu0 %v3024
    %4228 = vmatpush.bf16.msra.mxu0 %v3023
    %4229 = vmatpush.bf16.msra.mxu0 %v3022
    %4230 = vmatpush.bf16.msra.mxu0 %v3021
    %4231 = vmatpush.bf16.msra.mxu0 %v3020
    %4232 = vmatmul.bf16.gmra.mxu0 %v4208
    %v4233 = vpop.f32.mrf.mxu0
    %v4234 = vadd.f32 %v4221, %v4233
    %v4235 = vpop.f32.mrf.mxu0
    %4236 = vdwg.mxu0
    %v4237 = vadd.f32 %v4234, %v431
    %4238 = vmax.xlane.f32.xlu0 %v4237
    %v4239 = vpop.xlane.xlu0 %4238
    %v4240 = vsub.f32 %v4237, %v4239
    %v4241 = vmul.f32 %v4240, 1.442695
    %v4242 = vpow.pop %v4241
    %4243 = vadd.xlane.f32.xlu0 %v4242
    %v4244 = vpop.xlane.xlu0 %4243
    %v4245 = vlog2.pop %v4244
    %v4246 = vmul.f32 %v4245, 0.6931472
    %v4247 = vsub.f32 %v4240, %v4246
    %s4248 = scalar_lea.vmem [#allocation11], 8
    %4249 = vst [vmem:[%s4248] sm:$0xff] %v4247
    %s4250 = scalar_lea.vmem [#allocation2], 128
    %v4251 = vld [vmem:[%s4250] sm:$0xff]
    %v4252 = vld [vmem:[%s4250 + $0x8] sm:$0xff]
    %v4253 = vld [vmem:[%s4250 + $0x10] sm:$0xff]
    %v4254 = vld [vmem:[%s4250 + $0x18] sm:$0xff]
    %v4255 = vld [vmem:[%s4250 + $0x20] sm:$0xff]
    %v4256 = vld [vmem:[%s4250 + $0x28] sm:$0xff]
    %v4257 = vld [vmem:[%s4250 + $0x30] sm:$0xff]
    %v4258 = vld [vmem:[%s4250 + $0x38] sm:$0xff]
    %4259 = vmatpush.bf16.msra.mxu0 %v885
    %4260 = vmatpush.bf16.msra.mxu0 %v877
    %4261 = vmatpush.bf16.msra.mxu0 %v869
    %4262 = vmatpush.bf16.msra.mxu0 %v861
    %4263 = vmatpush.bf16.msra.mxu0 %v853
    %4264 = vmatpush.bf16.msra.mxu0 %v845
    %4265 = vmatpush.bf16.msra.mxu0 %v837
    %4266 = vmatpush.bf16.msra.mxu0 %v829
    %4267 = vmatmul.bf16.gmra.mxu0 %v4207
    %v4268 = vpop.f32.mrf.mxu0
    %v4269 = vadd.f32 0.0, %v4268
    %v4270 = vpop.f32.mrf.mxu0
    %4271 = vdwg.mxu0
    %4272 = vmatpush.bf16.msra.mxu0 %v949
    %4273 = vmatpush.bf16.msra.mxu0 %v941
    %4274 = vmatpush.bf16.msra.mxu0 %v933
    %4275 = vmatpush.bf16.msra.mxu0 %v925
    %4276 = vmatpush.bf16.msra.mxu0 %v917
    %4277 = vmatpush.bf16.msra.mxu0 %v909
    %4278 = vmatpush.bf16.msra.mxu0 %v901
    %4279 = vmatpush.bf16.msra.mxu0 %v893
    %4280 = vmatmul.bf16.gmra.mxu0 %v4208
    %v4281 = vpop.f32.mrf.mxu0
    %v4282 = vadd.f32 %v4269, %v4281
    %v4283 = vpop.f32.mrf.mxu0
    %4284 = vdwg.mxu0
    %4285 = vmatpush.bf16.msra.mxu0 %v886
    %4286 = vmatpush.bf16.msra.mxu0 %v878
    %4287 = vmatpush.bf16.msra.mxu0 %v870
    %4288 = vmatpush.bf16.msra.mxu0 %v862
    %4289 = vmatpush.bf16.msra.mxu0 %v854
    %4290 = vmatpush.bf16.msra.mxu0 %v846
    %4291 = vmatpush.bf16.msra.mxu0 %v838
    %4292 = vmatpush.bf16.msra.mxu0 %v830
    %4293 = vmatmul.bf16.gmra.mxu0 %v4207
    %v4294 = vpop.f32.mrf.mxu0
    %v4295 = vadd.f32 0.0, %v4294
    %v4296 = vpop.f32.mrf.mxu0
    %4297 = vdwg.mxu0
    %4298 = vmatpush.bf16.msra.mxu0 %v950
    %4299 = vmatpush.bf16.msra.mxu0 %v942
    %4300 = vmatpush.bf16.msra.mxu0 %v934
    %4301 = vmatpush.bf16.msra.mxu0 %v926
    %4302 = vmatpush.bf16.msra.mxu0 %v918
    %4303 = vmatpush.bf16.msra.mxu0 %v910
    %4304 = vmatpush.bf16.msra.mxu0 %v902
    %4305 = vmatpush.bf16.msra.mxu0 %v894
    %4306 = vmatmul.bf16.gmra.mxu0 %v4208
    %v4307 = vpop.f32.mrf.mxu0
    %v4308 = vadd.f32 %v4295, %v4307
    %v4309 = vpop.f32.mrf.mxu0
    %4310 = vdwg.mxu0
    %4311 = vmatpush.bf16.msra.mxu0 %v887
    %4312 = vmatpush.bf16.msra.mxu0 %v879
    %4313 = vmatpush.bf16.msra.mxu0 %v871
    %4314 = vmatpush.bf16.msra.mxu0 %v863
    %4315 = vmatpush.bf16.msra.mxu0 %v855
    %4316 = vmatpush.bf16.msra.mxu0 %v847
    %4317 = vmatpush.bf16.msra.mxu0 %v839
    %4318 = vmatpush.bf16.msra.mxu0 %v831
    %4319 = vmatmul.bf16.gmra.mxu0 %v4207
    %v4320 = vpop.f32.mrf.mxu0
    %v4321 = vadd.f32 0.0, %v4320
    %v4322 = vpop.f32.mrf.mxu0
    %4323 = vdwg.mxu0
    %4324 = vmatpush.bf16.msra.mxu0 %v951
    %4325 = vmatpush.bf16.msra.mxu0 %v943
    %4326 = vmatpush.bf16.msra.mxu0 %v935
    %4327 = vmatpush.bf16.msra.mxu0 %v927
    %4328 = vmatpush.bf16.msra.mxu0 %v919
    %4329 = vmatpush.bf16.msra.mxu0 %v911
    %4330 = vmatpush.bf16.msra.mxu0 %v903
    %4331 = vmatpush.bf16.msra.mxu0 %v895
    %4332 = vmatmul.bf16.gmra.mxu0 %v4208
    %v4333 = vpop.f32.mrf.mxu0
    %v4334 = vadd.f32 %v4321, %v4333
    %v4335 = vpop.f32.mrf.mxu0
    %4336 = vdwg.mxu0
    %4337 = vmatpush.bf16.msra.mxu0 %v888
    %4338 = vmatpush.bf16.msra.mxu0 %v880
    %4339 = vmatpush.bf16.msra.mxu0 %v872
    %4340 = vmatpush.bf16.msra.mxu0 %v864
    %4341 = vmatpush.bf16.msra.mxu0 %v856
    %4342 = vmatpush.bf16.msra.mxu0 %v848
    %4343 = vmatpush.bf16.msra.mxu0 %v840
    %4344 = vmatpush.bf16.msra.mxu0 %v832
    %4345 = vmatmul.bf16.gmra.mxu0 %v4207
    %v4346 = vpop.f32.mrf.mxu0
    %v4347 = vadd.f32 0.0, %v4346
    %v4348 = vpop.f32.mrf.mxu0
    %4349 = vdwg.mxu0
    %4350 = vmatpush.bf16.msra.mxu0 %v952
    %4351 = vmatpush.bf16.msra.mxu0 %v944
    %4352 = vmatpush.bf16.msra.mxu0 %v936
    %4353 = vmatpush.bf16.msra.mxu0 %v928
    %4354 = vmatpush.bf16.msra.mxu0 %v920
    %4355 = vmatpush.bf16.msra.mxu0 %v912
    %4356 = vmatpush.bf16.msra.mxu0 %v904
    %4357 = vmatpush.bf16.msra.mxu0 %v896
    %4358 = vmatmul.bf16.gmra.mxu0 %v4208
    %v4359 = vpop.f32.mrf.mxu0
    %v4360 = vadd.f32 %v4347, %v4359
    %v4361 = vpop.f32.mrf.mxu0
    %4362 = vdwg.mxu0
    %4363 = vmatpush.bf16.msra.mxu0 %v889
    %4364 = vmatpush.bf16.msra.mxu0 %v881
    %4365 = vmatpush.bf16.msra.mxu0 %v873
    %4366 = vmatpush.bf16.msra.mxu0 %v865
    %4367 = vmatpush.bf16.msra.mxu0 %v857
    %4368 = vmatpush.bf16.msra.mxu0 %v849
    %4369 = vmatpush.bf16.msra.mxu0 %v841
    %4370 = vmatpush.bf16.msra.mxu0 %v833
    %4371 = vmatmul.bf16.gmra.mxu0 %v4207
    %v4372 = vpop.f32.mrf.mxu0
    %v4373 = vadd.f32 0.0, %v4372
    %v4374 = vpop.f32.mrf.mxu0
    %4375 = vdwg.mxu0
    %4376 = vmatpush.bf16.msra.mxu0 %v953
    %4377 = vmatpush.bf16.msra.mxu0 %v945
    %4378 = vmatpush.bf16.msra.mxu0 %v937
    %4379 = vmatpush.bf16.msra.mxu0 %v929
    %4380 = vmatpush.bf16.msra.mxu0 %v921
    %4381 = vmatpush.bf16.msra.mxu0 %v913
    %4382 = vmatpush.bf16.msra.mxu0 %v905
    %4383 = vmatpush.bf16.msra.mxu0 %v897
    %4384 = vmatmul.bf16.gmra.mxu0 %v4208
    %v4385 = vpop.f32.mrf.mxu0
    %v4386 = vadd.f32 %v4373, %v4385
    %v4387 = vpop.f32.mrf.mxu0
    %4388 = vdwg.mxu0
    %4389 = vmatpush.bf16.msra.mxu0 %v890
    %4390 = vmatpush.bf16.msra.mxu0 %v882
    %4391 = vmatpush.bf16.msra.mxu0 %v874
    %4392 = vmatpush.bf16.msra.mxu0 %v866
    %4393 = vmatpush.bf16.msra.mxu0 %v858
    %4394 = vmatpush.bf16.msra.mxu0 %v850
    %4395 = vmatpush.bf16.msra.mxu0 %v842
    %4396 = vmatpush.bf16.msra.mxu0 %v834
    %4397 = vmatmul.bf16.gmra.mxu0 %v4207
    %v4398 = vpop.f32.mrf.mxu0
    %v4399 = vadd.f32 0.0, %v4398
    %v4400 = vpop.f32.mrf.mxu0
    %4401 = vdwg.mxu0
    %4402 = vmatpush.bf16.msra.mxu0 %v954
    %4403 = vmatpush.bf16.msra.mxu0 %v946
    %4404 = vmatpush.bf16.msra.mxu0 %v938
    %4405 = vmatpush.bf16.msra.mxu0 %v930
    %4406 = vmatpush.bf16.msra.mxu0 %v922
    %4407 = vmatpush.bf16.msra.mxu0 %v914
    %4408 = vmatpush.bf16.msra.mxu0 %v906
    %4409 = vmatpush.bf16.msra.mxu0 %v898
    %4410 = vmatmul.bf16.gmra.mxu0 %v4208
    %v4411 = vpop.f32.mrf.mxu0
    %v4412 = vadd.f32 %v4399, %v4411
    %v4413 = vpop.f32.mrf.mxu0
    %4414 = vdwg.mxu0
    %4415 = vmatpush.bf16.msra.mxu0 %v891
    %4416 = vmatpush.bf16.msra.mxu0 %v883
    %4417 = vmatpush.bf16.msra.mxu0 %v875
    %4418 = vmatpush.bf16.msra.mxu0 %v867
    %4419 = vmatpush.bf16.msra.mxu0 %v859
    %4420 = vmatpush.bf16.msra.mxu0 %v851
    %4421 = vmatpush.bf16.msra.mxu0 %v843
    %4422 = vmatpush.bf16.msra.mxu0 %v835
    %4423 = vmatmul.bf16.gmra.mxu0 %v4207
    %v4424 = vpop.f32.mrf.mxu0
    %v4425 = vadd.f32 0.0, %v4424
    %v4426 = vpop.f32.mrf.mxu0
    %4427 = vdwg.mxu0
    %4428 = vmatpush.bf16.msra.mxu0 %v955
    %4429 = vmatpush.bf16.msra.mxu0 %v947
    %4430 = vmatpush.bf16.msra.mxu0 %v939
    %4431 = vmatpush.bf16.msra.mxu0 %v931
    %4432 = vmatpush.bf16.msra.mxu0 %v923
    %4433 = vmatpush.bf16.msra.mxu0 %v915
    %4434 = vmatpush.bf16.msra.mxu0 %v907
    %4435 = vmatpush.bf16.msra.mxu0 %v899
    %4436 = vmatmul.bf16.gmra.mxu0 %v4208
    %v4437 = vpop.f32.mrf.mxu0
    %v4438 = vadd.f32 %v4425, %v4437
    %v4439 = vpop.f32.mrf.mxu0
    %4440 = vdwg.mxu0
    %4441 = vmatpush.bf16.msra.mxu0 %v892
    %4442 = vmatpush.bf16.msra.mxu0 %v884
    %4443 = vmatpush.bf16.msra.mxu0 %v876
    %4444 = vmatpush.bf16.msra.mxu0 %v868
    %4445 = vmatpush.bf16.msra.mxu0 %v860
    %4446 = vmatpush.bf16.msra.mxu0 %v852
    %4447 = vmatpush.bf16.msra.mxu0 %v844
    %4448 = vmatpush.bf16.msra.mxu0 %v836
    %4449 = vmatmul.bf16.gmra.mxu0 %v4207
    %v4450 = vpop.f32.mrf.mxu0
    %v4451 = vadd.f32 0.0, %v4450
    %v4452 = vpop.f32.mrf.mxu0
    %4453 = vdwg.mxu0
    %4454 = vmatpush.bf16.msra.mxu0 %v956
    %4455 = vmatpush.bf16.msra.mxu0 %v948
    %4456 = vmatpush.bf16.msra.mxu0 %v940
    %4457 = vmatpush.bf16.msra.mxu0 %v932
    %4458 = vmatpush.bf16.msra.mxu0 %v924
    %4459 = vmatpush.bf16.msra.mxu0 %v916
    %4460 = vmatpush.bf16.msra.mxu0 %v908
    %4461 = vmatpush.bf16.msra.mxu0 %v900
    %4462 = vmatmul.bf16.gmra.mxu0 %v4208
    %v4463 = vpop.f32.mrf.mxu0
    %v4464 = vadd.f32 %v4451, %v4463
    %v4465 = vpop.f32.mrf.mxu0
    %4466 = vdwg.mxu0
    %v4467 = vadd.f32 %v4251, %v4282
    %v4468 = vadd.f32 %v4252, %v4308
    %v4469 = vadd.f32 %v4253, %v4334
    %v4470 = vadd.f32 %v4254, %v4360
    %v4471 = vadd.f32 %v4255, %v4386
    %v4472 = vadd.f32 %v4256, %v4412
    %v4473 = vadd.f32 %v4257, %v4438
    %v4474 = vadd.f32 %v4258, %v4464
    %v4475 = vxor.u32 %v4467, 2147483648
    %v4476 = vxor.u32 %v4468, 2147483648
    %v4477 = vmul.f32 %v4475, 1.442695
    %v4478 = vpow.pop %v4477
    %v4479 = vmul.f32 %v4476, 1.442695
    %v4480 = vpow.pop %v4479
    %v4481 = vadd.f32 %v4478, 1.0
    %v4482 = vadd.f32 %v4480, 1.0
    %v4483 = vrcp.pop %v4481
    %v4484 = vmul.f32 %v4481, %v4483
    %v4485 = vsub.f32 1.0, %v4484
    %v4486 = vmul.f32 %v4483, %v4485
    %v4487 = vadd.f32 %v4483, %v4486
    %vm4488 = vweird.f32 %v4481
    %vm4489 = vweird.f32 %v4483
    %vm4490 = vmor %vm4488, %vm4489
    %v4491 = vsel %vm4490, %v4483, %v4487
    %v4492 = vand.u32 2147483647, %v4481
    %vm4493 = vcmp.eq.f32.partialorder %v4492, 8.507059e+37
    %v4494 = vand.u32 %v4481, 2147483648
    %v4495 = vor.u32 1.1754944e-38, %v4494
    %v4496 = vsel %vm4493, %v4495, %v4491
    %v4497 = vmul.f32 1.0, %v4496
    %v4498 = vrcp.pop %v4482
    %v4499 = vmul.f32 %v4482, %v4498
    %v4500 = vsub.f32 1.0, %v4499
    %v4501 = vmul.f32 %v4498, %v4500
    %v4502 = vadd.f32 %v4498, %v4501
    %vm4503 = vweird.f32 %v4482
    %vm4504 = vweird.f32 %v4498
    %vm4505 = vmor %vm4503, %vm4504
    %v4506 = vsel %vm4505, %v4498, %v4502
    %v4507 = vand.u32 2147483647, %v4482
    %vm4508 = vcmp.eq.f32.partialorder %v4507, 8.507059e+37
    %v4509 = vand.u32 %v4482, 2147483648
    %v4510 = vor.u32 1.1754944e-38, %v4509
    %v4511 = vsel %vm4508, %v4510, %v4506
    %v4512 = vmul.f32 1.0, %v4511
    %v4513 = vxor.u32 %v4469, 2147483648
    %v4514 = vxor.u32 %v4470, 2147483648
    %v4515 = vmul.f32 %v4513, 1.442695
    %v4516 = vpow.pop %v4515
    %v4517 = vmul.f32 %v4514, 1.442695
    %v4518 = vpow.pop %v4517
    %v4519 = vadd.f32 %v4516, 1.0
    %v4520 = vadd.f32 %v4518, 1.0
    %v4521 = vrcp.pop %v4519
    %v4522 = vmul.f32 %v4519, %v4521
    %v4523 = vsub.f32 1.0, %v4522
    %v4524 = vmul.f32 %v4521, %v4523
    %v4525 = vadd.f32 %v4521, %v4524
    %vm4526 = vweird.f32 %v4519
    %vm4527 = vweird.f32 %v4521
    %vm4528 = vmor %vm4526, %vm4527
    %v4529 = vsel %vm4528, %v4521, %v4525
    %v4530 = vand.u32 2147483647, %v4519
    %vm4531 = vcmp.eq.f32.partialorder %v4530, 8.507059e+37
    %v4532 = vand.u32 %v4519, 2147483648
    %v4533 = vor.u32 1.1754944e-38, %v4532
    %v4534 = vsel %vm4531, %v4533, %v4529
    %v4535 = vmul.f32 1.0, %v4534
    %v4536 = vrcp.pop %v4520
    %v4537 = vmul.f32 %v4520, %v4536
    %v4538 = vsub.f32 1.0, %v4537
    %v4539 = vmul.f32 %v4536, %v4538
    %v4540 = vadd.f32 %v4536, %v4539
    %vm4541 = vweird.f32 %v4520
    %vm4542 = vweird.f32 %v4536
    %vm4543 = vmor %vm4541, %vm4542
    %v4544 = vsel %vm4543, %v4536, %v4540
    %v4545 = vand.u32 2147483647, %v4520
    %vm4546 = vcmp.eq.f32.partialorder %v4545, 8.507059e+37
    %v4547 = vand.u32 %v4520, 2147483648
    %v4548 = vor.u32 1.1754944e-38, %v4547
    %v4549 = vsel %vm4546, %v4548, %v4544
    %v4550 = vmul.f32 1.0, %v4549
    %v4551 = vtanh.pop %v4471
    %v4552 = vtanh.pop %v4472
    %v4553 = vxor.u32 %v4473, 2147483648
    %v4554 = vxor.u32 %v4474, 2147483648
    %v4555 = vmul.f32 %v4553, 1.442695
    %v4556 = vpow.pop %v4555
    %v4557 = vmul.f32 %v4554, 1.442695
    %v4558 = vpow.pop %v4557
    %v4559 = vadd.f32 %v4556, 1.0
    %v4560 = vadd.f32 %v4558, 1.0
    %v4561 = vrcp.pop %v4559
    %v4562 = vmul.f32 %v4559, %v4561
    %v4563 = vsub.f32 1.0, %v4562
    %v4564 = vmul.f32 %v4561, %v4563
    %v4565 = vadd.f32 %v4561, %v4564
    %vm4566 = vweird.f32 %v4559
    %vm4567 = vweird.f32 %v4561
    %vm4568 = vmor %vm4566, %vm4567
    %v4569 = vsel %vm4568, %v4561, %v4565
    %v4570 = vand.u32 2147483647, %v4559
    %vm4571 = vcmp.eq.f32.partialorder %v4570, 8.507059e+37
    %v4572 = vand.u32 %v4559, 2147483648
    %v4573 = vor.u32 1.1754944e-38, %v4572
    %v4574 = vsel %vm4571, %v4573, %v4569
    %v4575 = vmul.f32 1.0, %v4574
    %v4576 = vrcp.pop %v4560
    %v4577 = vmul.f32 %v4560, %v4576
    %v4578 = vsub.f32 1.0, %v4577
    %v4579 = vmul.f32 %v4576, %v4578
    %v4580 = vadd.f32 %v4576, %v4579
    %vm4581 = vweird.f32 %v4560
    %vm4582 = vweird.f32 %v4576
    %vm4583 = vmor %vm4581, %vm4582
    %v4584 = vsel %vm4583, %v4576, %v4580
    %v4585 = vand.u32 2147483647, %v4560
    %vm4586 = vcmp.eq.f32.partialorder %v4585, 8.507059e+37
    %v4587 = vand.u32 %v4560, 2147483648
    %v4588 = vor.u32 1.1754944e-38, %v4587
    %v4589 = vsel %vm4586, %v4588, %v4584
    %v4590 = vmul.f32 1.0, %v4589
    %v4591 = vmul.f32 %v4535, %v3427
    %v4592 = vmul.f32 %v4550, %v3428
    %v4593 = vmul.f32 %v4497, %v4551
    %v4594 = vmul.f32 %v4512, %v4552
    %v4595 = vadd.f32 %v4591, %v4593
    %v4596 = vadd.f32 %v4592, %v4594
    %v4597 = vtanh.pop %v4595
    %v4598 = vtanh.pop %v4596
    %v4599 = vmul.f32 %v4575, %v4597
    %v4600 = vmul.f32 %v4590, %v4598
    %v4601 = vpack.c.bf16 %v4600, %v4599
    %v4603 = vrot.slane %v4601, 3
    %v4606 = vsel %vm1430, %v4601, %v4603
    %v4608 = vsel %vm1435, %v4601, %v4603
    %v4610 = vrot.slane %v4608, 1
    %v4611 = vsel %vm1439, %v4601, %v4603
    %v4613 = vrot.slane %v4611, 2
    %v4614 = vsel %vm1443, %v4601, %v4603
    %v4616 = vrot.slane %v4614, 3
    %v4617 = vunpack.i.l.s16 %v4606
    %v4618 = vunpack.i.h.s16 %v4606
    %v4619 = vunpack.i.l.s16 %v4610
    %v4620 = vunpack.i.h.s16 %v4610
    %v4621 = vunpack.i.l.s16 %v4613
    %v4622 = vunpack.i.h.s16 %v4613
    %v4623 = vunpack.i.l.s16 %v4616
    %v4624 = vunpack.i.h.s16 %v4616
    %v4625 = vpack.i.b16 %v4617, %v4617
    %v4626 = vperm.slane %v4625, 0
    %v4627 = vperm.slane %v4625, 1
    %4630 = vmatpush.bf16.xpose.msra.mxu0 %v1522
    %4631 = vmatpush.bf16.xpose.msra.mxu0 %v1520
    %4632 = vmatpush.bf16.xpose.msra.mxu0 %v1518
    %4633 = vmatpush.bf16.xpose.msra.mxu0 %v1516
    %4634 = vmatpush.bf16.xpose.msra.mxu0 %v1514
    %4635 = vmatpush.bf16.xpose.msra.mxu0 %v1512
    %4636 = vmatpush.bf16.xpose.msra.mxu0 %v1510
    %4637 = vmatpush.bf16.xpose.msra.mxu0 %v1508
    %4638 = vmatmul.bf16.gmra.mxu0 %v4626
    %v4639 = vpop.f32.mrf.mxu0
    %v4640 = vadd.f32 0.0, %v4639
    %v4641 = vpop.f32.mrf.mxu0
    %4642 = vdwg.mxu0
    %4643 = vmatpush.bf16.xpose.msra.mxu0 %v1523
    %4644 = vmatpush.bf16.xpose.msra.mxu0 %v1521
    %4645 = vmatpush.bf16.xpose.msra.mxu0 %v1519
    %4646 = vmatpush.bf16.xpose.msra.mxu0 %v1517
    %4647 = vmatpush.bf16.xpose.msra.mxu0 %v1515
    %4648 = vmatpush.bf16.xpose.msra.mxu0 %v1513
    %4649 = vmatpush.bf16.xpose.msra.mxu0 %v1511
    %4650 = vmatpush.bf16.xpose.msra.mxu0 %v1509
    %4651 = vmatmul.bf16.gmra.mxu0 %v4627
    %v4652 = vpop.f32.mrf.mxu0
    %v4653 = vadd.f32 %v4640, %v4652
    %v4654 = vpop.f32.mrf.mxu0
    %4655 = vdwg.mxu0
    %v4656 = vpack.i.b16 %v4618, %v4618
    %v4657 = vperm.slane %v4656, 0
    %v4658 = vperm.slane %v4656, 1
    %4661 = vmatpush.bf16.xpose.msra.mxu0 %v1633
    %4662 = vmatpush.bf16.xpose.msra.mxu0 %v1631
    %4663 = vmatpush.bf16.xpose.msra.mxu0 %v1629
    %4664 = vmatpush.bf16.xpose.msra.mxu0 %v1627
    %4665 = vmatpush.bf16.xpose.msra.mxu0 %v1625
    %4666 = vmatpush.bf16.xpose.msra.mxu0 %v1623
    %4667 = vmatpush.bf16.xpose.msra.mxu0 %v1621
    %4668 = vmatpush.bf16.xpose.msra.mxu0 %v1619
    %4669 = vmatmul.bf16.gmra.mxu0 %v4657
    %v4670 = vpop.f32.mrf.mxu0
    %v4671 = vadd.f32 0.0, %v4670
    %v4672 = vpop.f32.mrf.mxu0
    %4673 = vdwg.mxu0
    %4674 = vmatpush.bf16.xpose.msra.mxu0 %v1634
    %4675 = vmatpush.bf16.xpose.msra.mxu0 %v1632
    %4676 = vmatpush.bf16.xpose.msra.mxu0 %v1630
    %4677 = vmatpush.bf16.xpose.msra.mxu0 %v1628
    %4678 = vmatpush.bf16.xpose.msra.mxu0 %v1626
    %4679 = vmatpush.bf16.xpose.msra.mxu0 %v1624
    %4680 = vmatpush.bf16.xpose.msra.mxu0 %v1622
    %4681 = vmatpush.bf16.xpose.msra.mxu0 %v1620
    %4682 = vmatmul.bf16.gmra.mxu0 %v4658
    %v4683 = vpop.f32.mrf.mxu0
    %v4684 = vadd.f32 %v4671, %v4683
    %v4685 = vpop.f32.mrf.mxu0
    %4686 = vdwg.mxu0
    %v4687 = vpack.i.b16 %v4619, %v4619
    %v4688 = vperm.slane %v4687, 0
    %v4689 = vperm.slane %v4687, 1
    %4692 = vmatpush.bf16.xpose.msra.mxu0 %v1744
    %4693 = vmatpush.bf16.xpose.msra.mxu0 %v1742
    %4694 = vmatpush.bf16.xpose.msra.mxu0 %v1740
    %4695 = vmatpush.bf16.xpose.msra.mxu0 %v1738
    %4696 = vmatpush.bf16.xpose.msra.mxu0 %v1736
    %4697 = vmatpush.bf16.xpose.msra.mxu0 %v1734
    %4698 = vmatpush.bf16.xpose.msra.mxu0 %v1732
    %4699 = vmatpush.bf16.xpose.msra.mxu0 %v1730
    %4700 = vmatmul.bf16.gmra.mxu0 %v4688
    %v4701 = vpop.f32.mrf.mxu0
    %v4702 = vadd.f32 0.0, %v4701
    %v4703 = vpop.f32.mrf.mxu0
    %4704 = vdwg.mxu0
    %4705 = vmatpush.bf16.xpose.msra.mxu0 %v1745
    %4706 = vmatpush.bf16.xpose.msra.mxu0 %v1743
    %4707 = vmatpush.bf16.xpose.msra.mxu0 %v1741
    %4708 = vmatpush.bf16.xpose.msra.mxu0 %v1739
    %4709 = vmatpush.bf16.xpose.msra.mxu0 %v1737
    %4710 = vmatpush.bf16.xpose.msra.mxu0 %v1735
    %4711 = vmatpush.bf16.xpose.msra.mxu0 %v1733
    %4712 = vmatpush.bf16.xpose.msra.mxu0 %v1731
    %4713 = vmatmul.bf16.gmra.mxu0 %v4689
    %v4714 = vpop.f32.mrf.mxu0
    %v4715 = vadd.f32 %v4702, %v4714
    %v4716 = vpop.f32.mrf.mxu0
    %4717 = vdwg.mxu0
    %v4718 = vpack.i.b16 %v4620, %v4620
    %v4719 = vperm.slane %v4718, 0
    %v4720 = vperm.slane %v4718, 1
    %4723 = vmatpush.bf16.xpose.msra.mxu0 %v1855
    %4724 = vmatpush.bf16.xpose.msra.mxu0 %v1853
    %4725 = vmatpush.bf16.xpose.msra.mxu0 %v1851
    %4726 = vmatpush.bf16.xpose.msra.mxu0 %v1849
    %4727 = vmatpush.bf16.xpose.msra.mxu0 %v1847
    %4728 = vmatpush.bf16.xpose.msra.mxu0 %v1845
    %4729 = vmatpush.bf16.xpose.msra.mxu0 %v1843
    %4730 = vmatpush.bf16.xpose.msra.mxu0 %v1841
    %4731 = vmatmul.bf16.gmra.mxu0 %v4719
    %v4732 = vpop.f32.mrf.mxu0
    %v4733 = vadd.f32 0.0, %v4732
    %v4734 = vpop.f32.mrf.mxu0
    %4735 = vdwg.mxu0
    %4736 = vmatpush.bf16.xpose.msra.mxu0 %v1856
    %4737 = vmatpush.bf16.xpose.msra.mxu0 %v1854
    %4738 = vmatpush.bf16.xpose.msra.mxu0 %v1852
    %4739 = vmatpush.bf16.xpose.msra.mxu0 %v1850
    %4740 = vmatpush.bf16.xpose.msra.mxu0 %v1848
    %4741 = vmatpush.bf16.xpose.msra.mxu0 %v1846
    %4742 = vmatpush.bf16.xpose.msra.mxu0 %v1844
    %4743 = vmatpush.bf16.xpose.msra.mxu0 %v1842
    %4744 = vmatmul.bf16.gmra.mxu0 %v4720
    %v4745 = vpop.f32.mrf.mxu0
    %v4746 = vadd.f32 %v4733, %v4745
    %v4747 = vpop.f32.mrf.mxu0
    %4748 = vdwg.mxu0
    %v4749 = vpack.i.b16 %v4621, %v4621
    %v4750 = vperm.slane %v4749, 0
    %v4751 = vperm.slane %v4749, 1
    %4754 = vmatpush.bf16.xpose.msra.mxu0 %v1966
    %4755 = vmatpush.bf16.xpose.msra.mxu0 %v1964
    %4756 = vmatpush.bf16.xpose.msra.mxu0 %v1962
    %4757 = vmatpush.bf16.xpose.msra.mxu0 %v1960
    %4758 = vmatpush.bf16.xpose.msra.mxu0 %v1958
    %4759 = vmatpush.bf16.xpose.msra.mxu0 %v1956
    %4760 = vmatpush.bf16.xpose.msra.mxu0 %v1954
    %4761 = vmatpush.bf16.xpose.msra.mxu0 %v1952
    %4762 = vmatmul.bf16.gmra.mxu0 %v4750
    %v4763 = vpop.f32.mrf.mxu0
    %v4764 = vadd.f32 0.0, %v4763
    %v4765 = vpop.f32.mrf.mxu0
    %4766 = vdwg.mxu0
    %4767 = vmatpush.bf16.xpose.msra.mxu0 %v1967
    %4768 = vmatpush.bf16.xpose.msra.mxu0 %v1965
    %4769 = vmatpush.bf16.xpose.msra.mxu0 %v1963
    %4770 = vmatpush.bf16.xpose.msra.mxu0 %v1961
    %4771 = vmatpush.bf16.xpose.msra.mxu0 %v1959
    %4772 = vmatpush.bf16.xpose.msra.mxu0 %v1957
    %4773 = vmatpush.bf16.xpose.msra.mxu0 %v1955
    %4774 = vmatpush.bf16.xpose.msra.mxu0 %v1953
    %4775 = vmatmul.bf16.gmra.mxu0 %v4751
    %v4776 = vpop.f32.mrf.mxu0
    %v4777 = vadd.f32 %v4764, %v4776
    %v4778 = vpop.f32.mrf.mxu0
    %4779 = vdwg.mxu0
    %v4780 = vpack.i.b16 %v4622, %v4622
    %v4781 = vperm.slane %v4780, 0
    %v4782 = vperm.slane %v4780, 1
    %4785 = vmatpush.bf16.xpose.msra.mxu0 %v2077
    %4786 = vmatpush.bf16.xpose.msra.mxu0 %v2075
    %4787 = vmatpush.bf16.xpose.msra.mxu0 %v2073
    %4788 = vmatpush.bf16.xpose.msra.mxu0 %v2071
    %4789 = vmatpush.bf16.xpose.msra.mxu0 %v2069
    %4790 = vmatpush.bf16.xpose.msra.mxu0 %v2067
    %4791 = vmatpush.bf16.xpose.msra.mxu0 %v2065
    %4792 = vmatpush.bf16.xpose.msra.mxu0 %v2063
    %4793 = vmatmul.bf16.gmra.mxu0 %v4781
    %v4794 = vpop.f32.mrf.mxu0
    %v4795 = vadd.f32 0.0, %v4794
    %v4796 = vpop.f32.mrf.mxu0
    %4797 = vdwg.mxu0
    %4798 = vmatpush.bf16.xpose.msra.mxu0 %v2078
    %4799 = vmatpush.bf16.xpose.msra.mxu0 %v2076
    %4800 = vmatpush.bf16.xpose.msra.mxu0 %v2074
    %4801 = vmatpush.bf16.xpose.msra.mxu0 %v2072
    %4802 = vmatpush.bf16.xpose.msra.mxu0 %v2070
    %4803 = vmatpush.bf16.xpose.msra.mxu0 %v2068
    %4804 = vmatpush.bf16.xpose.msra.mxu0 %v2066
    %4805 = vmatpush.bf16.xpose.msra.mxu0 %v2064
    %4806 = vmatmul.bf16.gmra.mxu0 %v4782
    %v4807 = vpop.f32.mrf.mxu0
    %v4808 = vadd.f32 %v4795, %v4807
    %v4809 = vpop.f32.mrf.mxu0
    %4810 = vdwg.mxu0
    %v4811 = vpack.i.b16 %v4623, %v4623
    %v4812 = vperm.slane %v4811, 0
    %v4813 = vperm.slane %v4811, 1
    %4816 = vmatpush.bf16.xpose.msra.mxu0 %v2188
    %4817 = vmatpush.bf16.xpose.msra.mxu0 %v2186
    %4818 = vmatpush.bf16.xpose.msra.mxu0 %v2184
    %4819 = vmatpush.bf16.xpose.msra.mxu0 %v2182
    %4820 = vmatpush.bf16.xpose.msra.mxu0 %v2180
    %4821 = vmatpush.bf16.xpose.msra.mxu0 %v2178
    %4822 = vmatpush.bf16.xpose.msra.mxu0 %v2176
    %4823 = vmatpush.bf16.xpose.msra.mxu0 %v2174
    %4824 = vmatmul.bf16.gmra.mxu0 %v4812
    %v4825 = vpop.f32.mrf.mxu0
    %v4826 = vadd.f32 0.0, %v4825
    %v4827 = vpop.f32.mrf.mxu0
    %4828 = vdwg.mxu0
    %4829 = vmatpush.bf16.xpose.msra.mxu0 %v2189
    %4830 = vmatpush.bf16.xpose.msra.mxu0 %v2187
    %4831 = vmatpush.bf16.xpose.msra.mxu0 %v2185
    %4832 = vmatpush.bf16.xpose.msra.mxu0 %v2183
    %4833 = vmatpush.bf16.xpose.msra.mxu0 %v2181
    %4834 = vmatpush.bf16.xpose.msra.mxu0 %v2179
    %4835 = vmatpush.bf16.xpose.msra.mxu0 %v2177
    %4836 = vmatpush.bf16.xpose.msra.mxu0 %v2175
    %4837 = vmatmul.bf16.gmra.mxu0 %v4813
    %v4838 = vpop.f32.mrf.mxu0
    %v4839 = vadd.f32 %v4826, %v4838
    %v4840 = vpop.f32.mrf.mxu0
    %4841 = vdwg.mxu0
    %v4842 = vpack.i.b16 %v4624, %v4624
    %v4843 = vperm.slane %v4842, 0
    %v4844 = vperm.slane %v4842, 1
    %4847 = vmatpush.bf16.xpose.msra.mxu0 %v2299
    %4848 = vmatpush.bf16.xpose.msra.mxu0 %v2297
    %4849 = vmatpush.bf16.xpose.msra.mxu0 %v2295
    %4850 = vmatpush.bf16.xpose.msra.mxu0 %v2293
    %4851 = vmatpush.bf16.xpose.msra.mxu0 %v2291
    %4852 = vmatpush.bf16.xpose.msra.mxu0 %v2289
    %4853 = vmatpush.bf16.xpose.msra.mxu0 %v2287
    %4854 = vmatpush.bf16.xpose.msra.mxu0 %v2285
    %4855 = vmatmul.bf16.gmra.mxu0 %v4843
    %v4856 = vpop.f32.mrf.mxu0
    %v4857 = vadd.f32 0.0, %v4856
    %v4858 = vpop.f32.mrf.mxu0
    %4859 = vdwg.mxu0
    %4860 = vmatpush.bf16.xpose.msra.mxu0 %v2300
    %4861 = vmatpush.bf16.xpose.msra.mxu0 %v2298
    %4862 = vmatpush.bf16.xpose.msra.mxu0 %v2296
    %4863 = vmatpush.bf16.xpose.msra.mxu0 %v2294
    %4864 = vmatpush.bf16.xpose.msra.mxu0 %v2292
    %4865 = vmatpush.bf16.xpose.msra.mxu0 %v2290
    %4866 = vmatpush.bf16.xpose.msra.mxu0 %v2288
    %4867 = vmatpush.bf16.xpose.msra.mxu0 %v2286
    %4868 = vmatmul.bf16.gmra.mxu0 %v4844
    %v4869 = vpop.f32.mrf.mxu0
    %v4870 = vadd.f32 %v4857, %v4869
    %v4871 = vpop.f32.mrf.mxu0
    %4872 = vdwg.mxu0
    %v4873 = vadd.f32 %v4653, %v435
    %v4874 = vadd.f32 %v4684, %v435
    %v4875 = vadd.f32 %v4715, %v435
    %v4876 = vadd.f32 %v4746, %v435
    %v4877 = vadd.f32 %v4777, %v435
    %v4878 = vadd.f32 %v4808, %v435
    %v4879 = vadd.f32 %v4839, %v435
    %v4880 = vadd.f32 %v4870, %v435
    %v4889 = vrot.slane %v4874, 7
    %v4890 = vsel %vm1435, %v4889, %v4873
    %v4891 = vrot.slane %v4875, 6
    %v4892 = vsel %vm1439, %v4891, %v4890
    %v4893 = vrot.slane %v4876, 5
    %v4894 = vsel %vm1443, %v4893, %v4892
    %v4895 = vrot.slane %v4877, 4
    %v4896 = vsel %vm2366, %v4895, %v4894
    %v4897 = vrot.slane %v4878, 3
    %v4898 = vsel %vm2369, %v4897, %v4896
    %v4899 = vrot.slane %v4879, 2
    %v4900 = vsel %vm2372, %v4899, %v4898
    %v4901 = vrot.slane %v4880, 1
    %v4902 = vsel %vm2375, %v4901, %v4900
    %4904 = vmax.xlane.f32.xlu0 %v4902
    %v4905 = vpop.xlane.xlu0 %4904
    %v4907 = vrot.slane %v4905, 1
    %v4908 = vrot.slane %v4905, 2
    %v4909 = vrot.slane %v4905, 3
    %v4910 = vrot.slane %v4905, 4
    %v4911 = vrot.slane %v4905, 5
    %v4912 = vrot.slane %v4905, 6
    %v4913 = vrot.slane %v4905, 7
    %v4922 = vsub.f32 %v4873, %v4905
    %v4923 = vsub.f32 %v4874, %v4907
    %v4924 = vsub.f32 %v4875, %v4908
    %v4925 = vsub.f32 %v4876, %v4909
    %v4926 = vsub.f32 %v4877, %v4910
    %v4927 = vsub.f32 %v4878, %v4911
    %v4928 = vsub.f32 %v4879, %v4912
    %v4929 = vsub.f32 %v4880, %v4913
    %v4930 = vmul.f32 %v4922, 1.442695
    %v4931 = vpow.pop %v4930
    %v4932 = vmul.f32 %v4923, 1.442695
    %v4933 = vpow.pop %v4932
    %v4934 = vmul.f32 %v4924, 1.442695
    %v4935 = vpow.pop %v4934
    %v4936 = vmul.f32 %v4925, 1.442695
    %v4937 = vpow.pop %v4936
    %v4938 = vmul.f32 %v4926, 1.442695
    %v4939 = vpow.pop %v4938
    %v4940 = vmul.f32 %v4927, 1.442695
    %v4941 = vpow.pop %v4940
    %v4942 = vmul.f32 %v4928, 1.442695
    %v4943 = vpow.pop %v4942
    %v4944 = vmul.f32 %v4929, 1.442695
    %v4945 = vpow.pop %v4944
    %v4954 = vrot.slane %v4933, 7
    %v4955 = vsel %vm1435, %v4954, %v4931
    %v4956 = vrot.slane %v4935, 6
    %v4957 = vsel %vm1439, %v4956, %v4955
    %v4958 = vrot.slane %v4937, 5
    %v4959 = vsel %vm1443, %v4958, %v4957
    %v4960 = vrot.slane %v4939, 4
    %v4961 = vsel %vm2366, %v4960, %v4959
    %v4962 = vrot.slane %v4941, 3
    %v4963 = vsel %vm2369, %v4962, %v4961
    %v4964 = vrot.slane %v4943, 2
    %v4965 = vsel %vm2372, %v4964, %v4963
    %v4966 = vrot.slane %v4945, 1
    %v4967 = vsel %vm2375, %v4966, %v4965
    %4969 = vadd.xlane.f32.xlu0 %v4967
    %v4970 = vpop.xlane.xlu0 %4969
    %v4971 = vrcp.pop %v4970
    %v4972 = vmul.f32 %v4970, %v4971
    %v4973 = vsub.f32 1.0, %v4972
    %v4974 = vmul.f32 %v4971, %v4973
    %v4975 = vadd.f32 %v4971, %v4974
    %vm4976 = vweird.f32 %v4970
    %vm4977 = vweird.f32 %v4971
    %vm4978 = vmor %vm4976, %vm4977
    %v4979 = vsel %vm4978, %v4971, %v4975
    %v4980 = vand.u32 2147483647, %v4970
    %vm4981 = vcmp.eq.f32.partialorder %v4980, 8.507059e+37
    %v4982 = vand.u32 %v4970, 2147483648
    %v4983 = vor.u32 1.1754944e-38, %v4982
    %v4984 = vsel %vm4981, %v4983, %v4979
    %v4985 = vmul.f32 1.0, %v4984
    %v4986 = vpack.c.bf16 %v4931, %v4931
    %v4987 = vpack.c.bf16 %v4933, %v4933
    %v4988 = vpack.c.bf16 %v4935, %v4935
    %v4989 = vpack.c.bf16 %v4937, %v4937
    %v4990 = vpack.c.bf16 %v4939, %v4939
    %v4991 = vpack.c.bf16 %v4941, %v4941
    %v4992 = vpack.c.bf16 %v4943, %v4943
    %v4993 = vpack.c.bf16 %v4945, %v4945
    %4994 = vmatpush.bf16.msra.mxu0 %v1522
    %4995 = vmatpush.bf16.msra.mxu0 %v1520
    %4996 = vmatpush.bf16.msra.mxu0 %v1518
    %4997 = vmatpush.bf16.msra.mxu0 %v1516
    %4998 = vmatpush.bf16.msra.mxu0 %v1514
    %4999 = vmatpush.bf16.msra.mxu0 %v1512
    %5000 = vmatpush.bf16.msra.mxu0 %v1510
    %5001 = vmatpush.bf16.msra.mxu0 %v1508
    %5002 = vmatmul.bf16.gmra.mxu0 %v4986
    %v5003 = vpop.f32.mrf.mxu0
    %v5004 = vadd.f32 0.0, %v5003
    %v5005 = vpop.f32.mrf.mxu0
    %5006 = vdwg.mxu0
    %5007 = vmatpush.bf16.msra.mxu0 %v1523
    %5008 = vmatpush.bf16.msra.mxu0 %v1521
    %5009 = vmatpush.bf16.msra.mxu0 %v1519
    %5010 = vmatpush.bf16.msra.mxu0 %v1517
    %5011 = vmatpush.bf16.msra.mxu0 %v1515
    %5012 = vmatpush.bf16.msra.mxu0 %v1513
    %5013 = vmatpush.bf16.msra.mxu0 %v1511
    %5014 = vmatpush.bf16.msra.mxu0 %v1509
    %5015 = vmatmul.bf16.gmra.mxu0 %v4986
    %v5016 = vpop.f32.mrf.mxu0
    %v5017 = vadd.f32 0.0, %v5016
    %v5018 = vpop.f32.mrf.mxu0
    %5019 = vdwg.mxu0
    %5020 = vmatpush.bf16.msra.mxu0 %v1633
    %5021 = vmatpush.bf16.msra.mxu0 %v1631
    %5022 = vmatpush.bf16.msra.mxu0 %v1629
    %5023 = vmatpush.bf16.msra.mxu0 %v1627
    %5024 = vmatpush.bf16.msra.mxu0 %v1625
    %5025 = vmatpush.bf16.msra.mxu0 %v1623
    %5026 = vmatpush.bf16.msra.mxu0 %v1621
    %5027 = vmatpush.bf16.msra.mxu0 %v1619
    %5028 = vmatmul.bf16.gmra.mxu0 %v4987
    %v5029 = vpop.f32.mrf.mxu0
    %v5030 = vadd.f32 0.0, %v5029
    %v5031 = vpop.f32.mrf.mxu0
    %5032 = vdwg.mxu0
    %5033 = vmatpush.bf16.msra.mxu0 %v1634
    %5034 = vmatpush.bf16.msra.mxu0 %v1632
    %5035 = vmatpush.bf16.msra.mxu0 %v1630
    %5036 = vmatpush.bf16.msra.mxu0 %v1628
    %5037 = vmatpush.bf16.msra.mxu0 %v1626
    %5038 = vmatpush.bf16.msra.mxu0 %v1624
    %5039 = vmatpush.bf16.msra.mxu0 %v1622
    %5040 = vmatpush.bf16.msra.mxu0 %v1620
    %5041 = vmatmul.bf16.gmra.mxu0 %v4987
    %v5042 = vpop.f32.mrf.mxu0
    %v5043 = vadd.f32 0.0, %v5042
    %v5044 = vpop.f32.mrf.mxu0
    %5045 = vdwg.mxu0
    %5046 = vmatpush.bf16.msra.mxu0 %v1744
    %5047 = vmatpush.bf16.msra.mxu0 %v1742
    %5048 = vmatpush.bf16.msra.mxu0 %v1740
    %5049 = vmatpush.bf16.msra.mxu0 %v1738
    %5050 = vmatpush.bf16.msra.mxu0 %v1736
    %5051 = vmatpush.bf16.msra.mxu0 %v1734
    %5052 = vmatpush.bf16.msra.mxu0 %v1732
    %5053 = vmatpush.bf16.msra.mxu0 %v1730
    %5054 = vmatmul.bf16.gmra.mxu0 %v4988
    %v5055 = vpop.f32.mrf.mxu0
    %v5056 = vadd.f32 0.0, %v5055
    %v5057 = vpop.f32.mrf.mxu0
    %5058 = vdwg.mxu0
    %5059 = vmatpush.bf16.msra.mxu0 %v1745
    %5060 = vmatpush.bf16.msra.mxu0 %v1743
    %5061 = vmatpush.bf16.msra.mxu0 %v1741
    %5062 = vmatpush.bf16.msra.mxu0 %v1739
    %5063 = vmatpush.bf16.msra.mxu0 %v1737
    %5064 = vmatpush.bf16.msra.mxu0 %v1735
    %5065 = vmatpush.bf16.msra.mxu0 %v1733
    %5066 = vmatpush.bf16.msra.mxu0 %v1731
    %5067 = vmatmul.bf16.gmra.mxu0 %v4988
    %v5068 = vpop.f32.mrf.mxu0
    %v5069 = vadd.f32 0.0, %v5068
    %v5070 = vpop.f32.mrf.mxu0
    %5071 = vdwg.mxu0
    %5072 = vmatpush.bf16.msra.mxu0 %v1855
    %5073 = vmatpush.bf16.msra.mxu0 %v1853
    %5074 = vmatpush.bf16.msra.mxu0 %v1851
    %5075 = vmatpush.bf16.msra.mxu0 %v1849
    %5076 = vmatpush.bf16.msra.mxu0 %v1847
    %5077 = vmatpush.bf16.msra.mxu0 %v1845
    %5078 = vmatpush.bf16.msra.mxu0 %v1843
    %5079 = vmatpush.bf16.msra.mxu0 %v1841
    %5080 = vmatmul.bf16.gmra.mxu0 %v4989
    %v5081 = vpop.f32.mrf.mxu0
    %v5082 = vadd.f32 0.0, %v5081
    %v5083 = vpop.f32.mrf.mxu0
    %5084 = vdwg.mxu0
    %5085 = vmatpush.bf16.msra.mxu0 %v1856
    %5086 = vmatpush.bf16.msra.mxu0 %v1854
    %5087 = vmatpush.bf16.msra.mxu0 %v1852
    %5088 = vmatpush.bf16.msra.mxu0 %v1850
    %5089 = vmatpush.bf16.msra.mxu0 %v1848
    %5090 = vmatpush.bf16.msra.mxu0 %v1846
    %5091 = vmatpush.bf16.msra.mxu0 %v1844
    %5092 = vmatpush.bf16.msra.mxu0 %v1842
    %5093 = vmatmul.bf16.gmra.mxu0 %v4989
    %v5094 = vpop.f32.mrf.mxu0
    %v5095 = vadd.f32 0.0, %v5094
    %v5096 = vpop.f32.mrf.mxu0
    %5097 = vdwg.mxu0
    %5098 = vmatpush.bf16.msra.mxu0 %v1966
    %5099 = vmatpush.bf16.msra.mxu0 %v1964
    %5100 = vmatpush.bf16.msra.mxu0 %v1962
    %5101 = vmatpush.bf16.msra.mxu0 %v1960
    %5102 = vmatpush.bf16.msra.mxu0 %v1958
    %5103 = vmatpush.bf16.msra.mxu0 %v1956
    %5104 = vmatpush.bf16.msra.mxu0 %v1954
    %5105 = vmatpush.bf16.msra.mxu0 %v1952
    %5106 = vmatmul.bf16.gmra.mxu0 %v4990
    %v5107 = vpop.f32.mrf.mxu0
    %v5108 = vadd.f32 0.0, %v5107
    %v5109 = vpop.f32.mrf.mxu0
    %5110 = vdwg.mxu0
    %5111 = vmatpush.bf16.msra.mxu0 %v1967
    %5112 = vmatpush.bf16.msra.mxu0 %v1965
    %5113 = vmatpush.bf16.msra.mxu0 %v1963
    %5114 = vmatpush.bf16.msra.mxu0 %v1961
    %5115 = vmatpush.bf16.msra.mxu0 %v1959
    %5116 = vmatpush.bf16.msra.mxu0 %v1957
    %5117 = vmatpush.bf16.msra.mxu0 %v1955
    %5118 = vmatpush.bf16.msra.mxu0 %v1953
    %5119 = vmatmul.bf16.gmra.mxu0 %v4990
    %v5120 = vpop.f32.mrf.mxu0
    %v5121 = vadd.f32 0.0, %v5120
    %v5122 = vpop.f32.mrf.mxu0
    %5123 = vdwg.mxu0
    %5124 = vmatpush.bf16.msra.mxu0 %v2077
    %5125 = vmatpush.bf16.msra.mxu0 %v2075
    %5126 = vmatpush.bf16.msra.mxu0 %v2073
    %5127 = vmatpush.bf16.msra.mxu0 %v2071
    %5128 = vmatpush.bf16.msra.mxu0 %v2069
    %5129 = vmatpush.bf16.msra.mxu0 %v2067
    %5130 = vmatpush.bf16.msra.mxu0 %v2065
    %5131 = vmatpush.bf16.msra.mxu0 %v2063
    %5132 = vmatmul.bf16.gmra.mxu0 %v4991
    %v5133 = vpop.f32.mrf.mxu0
    %v5134 = vadd.f32 0.0, %v5133
    %v5135 = vpop.f32.mrf.mxu0
    %5136 = vdwg.mxu0
    %5137 = vmatpush.bf16.msra.mxu0 %v2078
    %5138 = vmatpush.bf16.msra.mxu0 %v2076
    %5139 = vmatpush.bf16.msra.mxu0 %v2074
    %5140 = vmatpush.bf16.msra.mxu0 %v2072
    %5141 = vmatpush.bf16.msra.mxu0 %v2070
    %5142 = vmatpush.bf16.msra.mxu0 %v2068
    %5143 = vmatpush.bf16.msra.mxu0 %v2066
    %5144 = vmatpush.bf16.msra.mxu0 %v2064
    %5145 = vmatmul.bf16.gmra.mxu0 %v4991
    %v5146 = vpop.f32.mrf.mxu0
    %v5147 = vadd.f32 0.0, %v5146
    %v5148 = vpop.f32.mrf.mxu0
    %5149 = vdwg.mxu0
    %5150 = vmatpush.bf16.msra.mxu0 %v2188
    %5151 = vmatpush.bf16.msra.mxu0 %v2186
    %5152 = vmatpush.bf16.msra.mxu0 %v2184
    %5153 = vmatpush.bf16.msra.mxu0 %v2182
    %5154 = vmatpush.bf16.msra.mxu0 %v2180
    %5155 = vmatpush.bf16.msra.mxu0 %v2178
    %5156 = vmatpush.bf16.msra.mxu0 %v2176
    %5157 = vmatpush.bf16.msra.mxu0 %v2174
    %5158 = vmatmul.bf16.gmra.mxu0 %v4992
    %v5159 = vpop.f32.mrf.mxu0
    %v5160 = vadd.f32 0.0, %v5159
    %v5161 = vpop.f32.mrf.mxu0
    %5162 = vdwg.mxu0
    %5163 = vmatpush.bf16.msra.mxu0 %v2189
    %5164 = vmatpush.bf16.msra.mxu0 %v2187
    %5165 = vmatpush.bf16.msra.mxu0 %v2185
    %5166 = vmatpush.bf16.msra.mxu0 %v2183
    %5167 = vmatpush.bf16.msra.mxu0 %v2181
    %5168 = vmatpush.bf16.msra.mxu0 %v2179
    %5169 = vmatpush.bf16.msra.mxu0 %v2177
    %5170 = vmatpush.bf16.msra.mxu0 %v2175
    %5171 = vmatmul.bf16.gmra.mxu0 %v4992
    %v5172 = vpop.f32.mrf.mxu0
    %v5173 = vadd.f32 0.0, %v5172
    %v5174 = vpop.f32.mrf.mxu0
    %5175 = vdwg.mxu0
    %5176 = vmatpush.bf16.msra.mxu0 %v2299
    %5177 = vmatpush.bf16.msra.mxu0 %v2297
    %5178 = vmatpush.bf16.msra.mxu0 %v2295
    %5179 = vmatpush.bf16.msra.mxu0 %v2293
    %5180 = vmatpush.bf16.msra.mxu0 %v2291
    %5181 = vmatpush.bf16.msra.mxu0 %v2289
    %5182 = vmatpush.bf16.msra.mxu0 %v2287
    %5183 = vmatpush.bf16.msra.mxu0 %v2285
    %5184 = vmatmul.bf16.gmra.mxu0 %v4993
    %v5185 = vpop.f32.mrf.mxu0
    %v5186 = vadd.f32 0.0, %v5185
    %v5187 = vpop.f32.mrf.mxu0
    %5188 = vdwg.mxu0
    %5189 = vmatpush.bf16.msra.mxu0 %v2300
    %5190 = vmatpush.bf16.msra.mxu0 %v2298
    %5191 = vmatpush.bf16.msra.mxu0 %v2296
    %5192 = vmatpush.bf16.msra.mxu0 %v2294
    %5193 = vmatpush.bf16.msra.mxu0 %v2292
    %5194 = vmatpush.bf16.msra.mxu0 %v2290
    %5195 = vmatpush.bf16.msra.mxu0 %v2288
    %5196 = vmatpush.bf16.msra.mxu0 %v2286
    %5197 = vmatmul.bf16.gmra.mxu0 %v4993
    %v5198 = vpop.f32.mrf.mxu0
    %v5199 = vadd.f32 0.0, %v5198
    %v5200 = vpop.f32.mrf.mxu0
    %5201 = vdwg.mxu0
    %v5203 = vrot.slane %v4985, 1
    %v5204 = vrot.slane %v4985, 2
    %v5205 = vrot.slane %v4985, 3
    %v5206 = vrot.slane %v4985, 4
    %v5207 = vrot.slane %v4985, 5
    %v5208 = vrot.slane %v4985, 6
    %v5209 = vrot.slane %v4985, 7
    %v5218 = vmul.f32 %v5004, %v4985
    %v5219 = vmul.f32 %v5017, %v4985
    %v5220 = vmul.f32 %v5030, %v5203
    %v5221 = vmul.f32 %v5043, %v5203
    %v5222 = vmul.f32 %v5056, %v5204
    %v5223 = vmul.f32 %v5069, %v5204
    %v5224 = vmul.f32 %v5082, %v5205
    %v5225 = vmul.f32 %v5095, %v5205
    %v5226 = vmul.f32 %v5108, %v5206
    %v5227 = vmul.f32 %v5121, %v5206
    %v5228 = vmul.f32 %v5134, %v5207
    %v5229 = vmul.f32 %v5147, %v5207
    %v5230 = vmul.f32 %v5160, %v5208
    %v5231 = vmul.f32 %v5173, %v5208
    %v5232 = vmul.f32 %v5186, %v5209
    %v5233 = vmul.f32 %v5199, %v5209
    %v5234 = vmul.f32 %v4931, %v4985
    %v5235 = vmul.f32 %v4933, %v5203
    %v5236 = vmul.f32 %v4935, %v5204
    %v5237 = vmul.f32 %v4937, %v5205
    %v5238 = vmul.f32 %v4939, %v5206
    %v5239 = vmul.f32 %v4941, %v5207
    %v5240 = vmul.f32 %v4943, %v5208
    %v5241 = vmul.f32 %v4945, %v5209
    %v5250 = vrot.slane %v5235, 7
    %v5251 = vsel %vm1435, %v5250, %v5234
    %v5252 = vrot.slane %v5236, 6
    %v5253 = vsel %vm1439, %v5252, %v5251
    %v5254 = vrot.slane %v5237, 5
    %v5255 = vsel %vm1443, %v5254, %v5253
    %v5256 = vrot.slane %v5238, 4
    %v5257 = vsel %vm2366, %v5256, %v5255
    %v5258 = vrot.slane %v5239, 3
    %v5259 = vsel %vm2369, %v5258, %v5257
    %v5260 = vrot.slane %v5240, 2
    %v5261 = vsel %vm2372, %v5260, %v5259
    %v5262 = vrot.slane %v5241, 1
    %v5263 = vsel %vm2375, %v5262, %v5261
    %s5265 = scalar_lea.vmem [#allocation12], 16
    %5266 = vst [vmem:[%s5265] sm:$0xff] %v5263
    %v5267 = vpack.c.bf16 %v5218, %v5218
    %v5268 = vpack.c.bf16 %v5219, %v5219
    %v5269 = vpack.c.bf16 %v5220, %v5220
    %v5270 = vpack.c.bf16 %v5221, %v5221
    %v5271 = vpack.c.bf16 %v5222, %v5222
    %v5272 = vpack.c.bf16 %v5223, %v5223
    %v5273 = vpack.c.bf16 %v5224, %v5224
    %v5274 = vpack.c.bf16 %v5225, %v5225
    %v5275 = vpack.c.bf16 %v5226, %v5226
    %v5276 = vpack.c.bf16 %v5227, %v5227
    %v5277 = vpack.c.bf16 %v5228, %v5228
    %v5278 = vpack.c.bf16 %v5229, %v5229
    %v5279 = vpack.c.bf16 %v5230, %v5230
    %v5280 = vpack.c.bf16 %v5231, %v5231
    %v5281 = vpack.c.bf16 %v5232, %v5232
    %v5282 = vpack.c.bf16 %v5233, %v5233
    %v5299 = vunpack.c.l.b16 %v5267
    %v5300 = vunpack.c.l.b16 %v5268
    %v5301 = vunpack.c.l.b16 %v5269
    %v5302 = vunpack.c.l.b16 %v5270
    %v5303 = vunpack.c.l.b16 %v5271
    %v5304 = vunpack.c.l.b16 %v5272
    %v5305 = vunpack.c.l.b16 %v5273
    %v5306 = vunpack.c.l.b16 %v5274
    %v5307 = vunpack.c.l.b16 %v5275
    %v5308 = vunpack.c.l.b16 %v5276
    %v5309 = vunpack.c.l.b16 %v5277
    %v5310 = vunpack.c.l.b16 %v5278
    %v5311 = vunpack.c.l.b16 %v5279
    %v5312 = vunpack.c.l.b16 %v5280
    %v5313 = vunpack.c.l.b16 %v5281
    %v5314 = vunpack.c.l.b16 %v5282
    %v5315 = vrot.slane %v5301, 7
    %v5316 = vsel %vm1435, %v5315, %v5299
    %v5317 = vrot.slane %v5303, 6
    %v5318 = vsel %vm1439, %v5317, %v5316
    %v5319 = vrot.slane %v5305, 5
    %v5320 = vsel %vm1443, %v5319, %v5318
    %v5321 = vrot.slane %v5307, 4
    %v5322 = vsel %vm2366, %v5321, %v5320
    %v5323 = vrot.slane %v5309, 3
    %v5324 = vsel %vm2369, %v5323, %v5322
    %v5325 = vrot.slane %v5311, 2
    %v5326 = vsel %vm2372, %v5325, %v5324
    %v5327 = vrot.slane %v5313, 1
    %v5328 = vsel %vm2375, %v5327, %v5326
    %v5329 = vrot.slane %v5302, 7
    %v5330 = vsel %vm1435, %v5329, %v5300
    %v5331 = vrot.slane %v5304, 6
    %v5332 = vsel %vm1439, %v5331, %v5330
    %v5333 = vrot.slane %v5306, 5
    %v5334 = vsel %vm1443, %v5333, %v5332
    %v5335 = vrot.slane %v5308, 4
    %v5336 = vsel %vm2366, %v5335, %v5334
    %v5337 = vrot.slane %v5310, 3
    %v5338 = vsel %vm2369, %v5337, %v5336
    %v5339 = vrot.slane %v5312, 2
    %v5340 = vsel %vm2372, %v5339, %v5338
    %v5341 = vrot.slane %v5314, 1
    %v5342 = vsel %vm2375, %v5341, %v5340
    %v5343 = vpack.c.b16 %v5328, %v5328
    %v5344 = vpack.c.b16 %v5342, %v5342
    %5347 = vmatpush.bf16.msra.mxu0 %v2891
    %5348 = vmatpush.bf16.msra.mxu0 %v2890
    %5349 = vmatpush.bf16.msra.mxu0 %v2889
    %5350 = vmatpush.bf16.msra.mxu0 %v2888
    %5351 = vmatpush.bf16.msra.mxu0 %v2887
    %5352 = vmatpush.bf16.msra.mxu0 %v2886
    %5353 = vmatpush.bf16.msra.mxu0 %v2885
    %5354 = vmatpush.bf16.msra.mxu0 %v2884
    %5355 = vmatmul.bf16.gmra.mxu0 %v5343
    %v5356 = vpop.f32.mrf.mxu0
    %v5357 = vadd.f32 0.0, %v5356
    %v5358 = vpop.f32.mrf.mxu0
    %5359 = vdwg.mxu0
    %5360 = vmatpush.bf16.msra.mxu0 %v2899
    %5361 = vmatpush.bf16.msra.mxu0 %v2898
    %5362 = vmatpush.bf16.msra.mxu0 %v2897
    %5363 = vmatpush.bf16.msra.mxu0 %v2896
    %5364 = vmatpush.bf16.msra.mxu0 %v2895
    %5365 = vmatpush.bf16.msra.mxu0 %v2894
    %5366 = vmatpush.bf16.msra.mxu0 %v2893
    %5367 = vmatpush.bf16.msra.mxu0 %v2892
    %5368 = vmatmul.bf16.gmra.mxu0 %v5344
    %v5369 = vpop.f32.mrf.mxu0
    %v5370 = vadd.f32 %v5357, %v5369
    %v5371 = vpop.f32.mrf.mxu0
    %5372 = vdwg.mxu0
    %v5373 = vunpack.c.l.b16 %v4601
    %v5374 = vunpack.c.h.b16 %v4601
    %v5375 = vpack.c.b16 %v5373, %v5373
    %v5376 = vpack.c.b16 %v5374, %v5374
    %5379 = vmatpush.bf16.msra.mxu0 %v3019
    %5380 = vmatpush.bf16.msra.mxu0 %v3018
    %5381 = vmatpush.bf16.msra.mxu0 %v3017
    %5382 = vmatpush.bf16.msra.mxu0 %v3016
    %5383 = vmatpush.bf16.msra.mxu0 %v3015
    %5384 = vmatpush.bf16.msra.mxu0 %v3014
    %5385 = vmatpush.bf16.msra.mxu0 %v3013
    %5386 = vmatpush.bf16.msra.mxu0 %v3012
    %5387 = vmatmul.bf16.gmra.mxu0 %v5375
    %v5388 = vpop.f32.mrf.mxu0
    %v5389 = vadd.f32 %v5370, %v5388
    %v5390 = vpop.f32.mrf.mxu0
    %5391 = vdwg.mxu0
    %5392 = vmatpush.bf16.msra.mxu0 %v3027
    %5393 = vmatpush.bf16.msra.mxu0 %v3026
    %5394 = vmatpush.bf16.msra.mxu0 %v3025
    %5395 = vmatpush.bf16.msra.mxu0 %v3024
    %5396 = vmatpush.bf16.msra.mxu0 %v3023
    %5397 = vmatpush.bf16.msra.mxu0 %v3022
    %5398 = vmatpush.bf16.msra.mxu0 %v3021
    %5399 = vmatpush.bf16.msra.mxu0 %v3020
    %5400 = vmatmul.bf16.gmra.mxu0 %v5376
    %v5401 = vpop.f32.mrf.mxu0
    %v5402 = vadd.f32 %v5389, %v5401
    %v5403 = vpop.f32.mrf.mxu0
    %5404 = vdwg.mxu0
    %v5405 = vadd.f32 %v5402, %v431
    %5406 = vmax.xlane.f32.xlu0 %v5405
    %v5407 = vpop.xlane.xlu0 %5406
    %v5408 = vsub.f32 %v5405, %v5407
    %v5409 = vmul.f32 %v5408, 1.442695
    %v5410 = vpow.pop %v5409
    %5411 = vadd.xlane.f32.xlu0 %v5410
    %v5412 = vpop.xlane.xlu0 %5411
    %v5413 = vlog2.pop %v5412
    %v5414 = vmul.f32 %v5413, 0.6931472
    %v5415 = vsub.f32 %v5408, %v5414
    %s5416 = scalar_lea.vmem [#allocation11], 16
    %5417 = vst [vmem:[%s5416] sm:$0xff] %v5415
    %s5418 = scalar_lea.vmem [#allocation2], 192
    %v5419 = vld [vmem:[%s5418] sm:$0xff]
    %v5420 = vld [vmem:[%s5418 + $0x8] sm:$0xff]
    %v5421 = vld [vmem:[%s5418 + $0x10] sm:$0xff]
    %v5422 = vld [vmem:[%s5418 + $0x18] sm:$0xff]
    %v5423 = vld [vmem:[%s5418 + $0x20] sm:$0xff]
    %v5424 = vld [vmem:[%s5418 + $0x28] sm:$0xff]
    %v5425 = vld [vmem:[%s5418 + $0x30] sm:$0xff]
    %v5426 = vld [vmem:[%s5418 + $0x38] sm:$0xff]
    %5427 = vmatpush.bf16.msra.mxu0 %v885
    %5428 = vmatpush.bf16.msra.mxu0 %v877
    %5429 = vmatpush.bf16.msra.mxu0 %v869
    %5430 = vmatpush.bf16.msra.mxu0 %v861
    %5431 = vmatpush.bf16.msra.mxu0 %v853
    %5432 = vmatpush.bf16.msra.mxu0 %v845
    %5433 = vmatpush.bf16.msra.mxu0 %v837
    %5434 = vmatpush.bf16.msra.mxu0 %v829
    %5435 = vmatmul.bf16.gmra.mxu0 %v5375
    %v5436 = vpop.f32.mrf.mxu0
    %v5437 = vadd.f32 0.0, %v5436
    %v5438 = vpop.f32.mrf.mxu0
    %5439 = vdwg.mxu0
    %5440 = vmatpush.bf16.msra.mxu0 %v949
    %5441 = vmatpush.bf16.msra.mxu0 %v941
    %5442 = vmatpush.bf16.msra.mxu0 %v933
    %5443 = vmatpush.bf16.msra.mxu0 %v925
    %5444 = vmatpush.bf16.msra.mxu0 %v917
    %5445 = vmatpush.bf16.msra.mxu0 %v909
    %5446 = vmatpush.bf16.msra.mxu0 %v901
    %5447 = vmatpush.bf16.msra.mxu0 %v893
    %5448 = vmatmul.bf16.gmra.mxu0 %v5376
    %v5449 = vpop.f32.mrf.mxu0
    %v5450 = vadd.f32 %v5437, %v5449
    %v5451 = vpop.f32.mrf.mxu0
    %5452 = vdwg.mxu0
    %5453 = vmatpush.bf16.msra.mxu0 %v886
    %5454 = vmatpush.bf16.msra.mxu0 %v878
    %5455 = vmatpush.bf16.msra.mxu0 %v870
    %5456 = vmatpush.bf16.msra.mxu0 %v862
    %5457 = vmatpush.bf16.msra.mxu0 %v854
    %5458 = vmatpush.bf16.msra.mxu0 %v846
    %5459 = vmatpush.bf16.msra.mxu0 %v838
    %5460 = vmatpush.bf16.msra.mxu0 %v830
    %5461 = vmatmul.bf16.gmra.mxu0 %v5375
    %v5462 = vpop.f32.mrf.mxu0
    %v5463 = vadd.f32 0.0, %v5462
    %v5464 = vpop.f32.mrf.mxu0
    %5465 = vdwg.mxu0
    %5466 = vmatpush.bf16.msra.mxu0 %v950
    %5467 = vmatpush.bf16.msra.mxu0 %v942
    %5468 = vmatpush.bf16.msra.mxu0 %v934
    %5469 = vmatpush.bf16.msra.mxu0 %v926
    %5470 = vmatpush.bf16.msra.mxu0 %v918
    %5471 = vmatpush.bf16.msra.mxu0 %v910
    %5472 = vmatpush.bf16.msra.mxu0 %v902
    %5473 = vmatpush.bf16.msra.mxu0 %v894
    %5474 = vmatmul.bf16.gmra.mxu0 %v5376
    %v5475 = vpop.f32.mrf.mxu0
    %v5476 = vadd.f32 %v5463, %v5475
    %v5477 = vpop.f32.mrf.mxu0
    %5478 = vdwg.mxu0
    %5479 = vmatpush.bf16.msra.mxu0 %v887
    %5480 = vmatpush.bf16.msra.mxu0 %v879
    %5481 = vmatpush.bf16.msra.mxu0 %v871
    %5482 = vmatpush.bf16.msra.mxu0 %v863
    %5483 = vmatpush.bf16.msra.mxu0 %v855
    %5484 = vmatpush.bf16.msra.mxu0 %v847
    %5485 = vmatpush.bf16.msra.mxu0 %v839
    %5486 = vmatpush.bf16.msra.mxu0 %v831
    %5487 = vmatmul.bf16.gmra.mxu0 %v5375
    %v5488 = vpop.f32.mrf.mxu0
    %v5489 = vadd.f32 0.0, %v5488
    %v5490 = vpop.f32.mrf.mxu0
    %5491 = vdwg.mxu0
    %5492 = vmatpush.bf16.msra.mxu0 %v951
    %5493 = vmatpush.bf16.msra.mxu0 %v943
    %5494 = vmatpush.bf16.msra.mxu0 %v935
    %5495 = vmatpush.bf16.msra.mxu0 %v927
    %5496 = vmatpush.bf16.msra.mxu0 %v919
    %5497 = vmatpush.bf16.msra.mxu0 %v911
    %5498 = vmatpush.bf16.msra.mxu0 %v903
    %5499 = vmatpush.bf16.msra.mxu0 %v895
    %5500 = vmatmul.bf16.gmra.mxu0 %v5376
    %v5501 = vpop.f32.mrf.mxu0
    %v5502 = vadd.f32 %v5489, %v5501
    %v5503 = vpop.f32.mrf.mxu0
    %5504 = vdwg.mxu0
    %5505 = vmatpush.bf16.msra.mxu0 %v888
    %5506 = vmatpush.bf16.msra.mxu0 %v880
    %5507 = vmatpush.bf16.msra.mxu0 %v872
    %5508 = vmatpush.bf16.msra.mxu0 %v864
    %5509 = vmatpush.bf16.msra.mxu0 %v856
    %5510 = vmatpush.bf16.msra.mxu0 %v848
    %5511 = vmatpush.bf16.msra.mxu0 %v840
    %5512 = vmatpush.bf16.msra.mxu0 %v832
    %5513 = vmatmul.bf16.gmra.mxu0 %v5375
    %v5514 = vpop.f32.mrf.mxu0
    %v5515 = vadd.f32 0.0, %v5514
    %v5516 = vpop.f32.mrf.mxu0
    %5517 = vdwg.mxu0
    %5518 = vmatpush.bf16.msra.mxu0 %v952
    %5519 = vmatpush.bf16.msra.mxu0 %v944
    %5520 = vmatpush.bf16.msra.mxu0 %v936
    %5521 = vmatpush.bf16.msra.mxu0 %v928
    %5522 = vmatpush.bf16.msra.mxu0 %v920
    %5523 = vmatpush.bf16.msra.mxu0 %v912
    %5524 = vmatpush.bf16.msra.mxu0 %v904
    %5525 = vmatpush.bf16.msra.mxu0 %v896
    %5526 = vmatmul.bf16.gmra.mxu0 %v5376
    %v5527 = vpop.f32.mrf.mxu0
    %v5528 = vadd.f32 %v5515, %v5527
    %v5529 = vpop.f32.mrf.mxu0
    %5530 = vdwg.mxu0
    %5531 = vmatpush.bf16.msra.mxu0 %v889
    %5532 = vmatpush.bf16.msra.mxu0 %v881
    %5533 = vmatpush.bf16.msra.mxu0 %v873
    %5534 = vmatpush.bf16.msra.mxu0 %v865
    %5535 = vmatpush.bf16.msra.mxu0 %v857
    %5536 = vmatpush.bf16.msra.mxu0 %v849
    %5537 = vmatpush.bf16.msra.mxu0 %v841
    %5538 = vmatpush.bf16.msra.mxu0 %v833
    %5539 = vmatmul.bf16.gmra.mxu0 %v5375
    %v5540 = vpop.f32.mrf.mxu0
    %v5541 = vadd.f32 0.0, %v5540
    %v5542 = vpop.f32.mrf.mxu0
    %5543 = vdwg.mxu0
    %5544 = vmatpush.bf16.msra.mxu0 %v953
    %5545 = vmatpush.bf16.msra.mxu0 %v945
    %5546 = vmatpush.bf16.msra.mxu0 %v937
    %5547 = vmatpush.bf16.msra.mxu0 %v929
    %5548 = vmatpush.bf16.msra.mxu0 %v921
    %5549 = vmatpush.bf16.msra.mxu0 %v913
    %5550 = vmatpush.bf16.msra.mxu0 %v905
    %5551 = vmatpush.bf16.msra.mxu0 %v897
    %5552 = vmatmul.bf16.gmra.mxu0 %v5376
    %v5553 = vpop.f32.mrf.mxu0
    %v5554 = vadd.f32 %v5541, %v5553
    %v5555 = vpop.f32.mrf.mxu0
    %5556 = vdwg.mxu0
    %5557 = vmatpush.bf16.msra.mxu0 %v890
    %5558 = vmatpush.bf16.msra.mxu0 %v882
    %5559 = vmatpush.bf16.msra.mxu0 %v874
    %5560 = vmatpush.bf16.msra.mxu0 %v866
    %5561 = vmatpush.bf16.msra.mxu0 %v858
    %5562 = vmatpush.bf16.msra.mxu0 %v850
    %5563 = vmatpush.bf16.msra.mxu0 %v842
    %5564 = vmatpush.bf16.msra.mxu0 %v834
    %5565 = vmatmul.bf16.gmra.mxu0 %v5375
    %v5566 = vpop.f32.mrf.mxu0
    %v5567 = vadd.f32 0.0, %v5566
    %v5568 = vpop.f32.mrf.mxu0
    %5569 = vdwg.mxu0
    %5570 = vmatpush.bf16.msra.mxu0 %v954
    %5571 = vmatpush.bf16.msra.mxu0 %v946
    %5572 = vmatpush.bf16.msra.mxu0 %v938
    %5573 = vmatpush.bf16.msra.mxu0 %v930
    %5574 = vmatpush.bf16.msra.mxu0 %v922
    %5575 = vmatpush.bf16.msra.mxu0 %v914
    %5576 = vmatpush.bf16.msra.mxu0 %v906
    %5577 = vmatpush.bf16.msra.mxu0 %v898
    %5578 = vmatmul.bf16.gmra.mxu0 %v5376
    %v5579 = vpop.f32.mrf.mxu0
    %v5580 = vadd.f32 %v5567, %v5579
    %v5581 = vpop.f32.mrf.mxu0
    %5582 = vdwg.mxu0
    %5583 = vmatpush.bf16.msra.mxu0 %v891
    %5584 = vmatpush.bf16.msra.mxu0 %v883
    %5585 = vmatpush.bf16.msra.mxu0 %v875
    %5586 = vmatpush.bf16.msra.mxu0 %v867
    %5587 = vmatpush.bf16.msra.mxu0 %v859
    %5588 = vmatpush.bf16.msra.mxu0 %v851
    %5589 = vmatpush.bf16.msra.mxu0 %v843
    %5590 = vmatpush.bf16.msra.mxu0 %v835
    %5591 = vmatmul.bf16.gmra.mxu0 %v5375
    %v5592 = vpop.f32.mrf.mxu0
    %v5593 = vadd.f32 0.0, %v5592
    %v5594 = vpop.f32.mrf.mxu0
    %5595 = vdwg.mxu0
    %5596 = vmatpush.bf16.msra.mxu0 %v955
    %5597 = vmatpush.bf16.msra.mxu0 %v947
    %5598 = vmatpush.bf16.msra.mxu0 %v939
    %5599 = vmatpush.bf16.msra.mxu0 %v931
    %5600 = vmatpush.bf16.msra.mxu0 %v923
    %5601 = vmatpush.bf16.msra.mxu0 %v915
    %5602 = vmatpush.bf16.msra.mxu0 %v907
    %5603 = vmatpush.bf16.msra.mxu0 %v899
    %5604 = vmatmul.bf16.gmra.mxu0 %v5376
    %v5605 = vpop.f32.mrf.mxu0
    %v5606 = vadd.f32 %v5593, %v5605
    %v5607 = vpop.f32.mrf.mxu0
    %5608 = vdwg.mxu0
    %5609 = vmatpush.bf16.msra.mxu0 %v892
    %5610 = vmatpush.bf16.msra.mxu0 %v884
    %5611 = vmatpush.bf16.msra.mxu0 %v876
    %5612 = vmatpush.bf16.msra.mxu0 %v868
    %5613 = vmatpush.bf16.msra.mxu0 %v860
    %5614 = vmatpush.bf16.msra.mxu0 %v852
    %5615 = vmatpush.bf16.msra.mxu0 %v844
    %5616 = vmatpush.bf16.msra.mxu0 %v836
    %5617 = vmatmul.bf16.gmra.mxu0 %v5375
    %v5618 = vpop.f32.mrf.mxu0
    %v5619 = vadd.f32 0.0, %v5618
    %v5620 = vpop.f32.mrf.mxu0
    %5621 = vdwg.mxu0
    %5622 = vmatpush.bf16.msra.mxu0 %v956
    %5623 = vmatpush.bf16.msra.mxu0 %v948
    %5624 = vmatpush.bf16.msra.mxu0 %v940
    %5625 = vmatpush.bf16.msra.mxu0 %v932
    %5626 = vmatpush.bf16.msra.mxu0 %v924
    %5627 = vmatpush.bf16.msra.mxu0 %v916
    %5628 = vmatpush.bf16.msra.mxu0 %v908
    %5629 = vmatpush.bf16.msra.mxu0 %v900
    %5630 = vmatmul.bf16.gmra.mxu0 %v5376
    %v5631 = vpop.f32.mrf.mxu0
    %v5632 = vadd.f32 %v5619, %v5631
    %v5633 = vpop.f32.mrf.mxu0
    %5634 = vdwg.mxu0
    %v5635 = vadd.f32 %v5419, %v5450
    %v5636 = vadd.f32 %v5420, %v5476
    %v5637 = vadd.f32 %v5421, %v5502
    %v5638 = vadd.f32 %v5422, %v5528
    %v5639 = vadd.f32 %v5423, %v5554
    %v5640 = vadd.f32 %v5424, %v5580
    %v5641 = vadd.f32 %v5425, %v5606
    %v5642 = vadd.f32 %v5426, %v5632
    %v5643 = vxor.u32 %v5635, 2147483648
    %v5644 = vxor.u32 %v5636, 2147483648
    %v5645 = vmul.f32 %v5643, 1.442695
    %v5646 = vpow.pop %v5645
    %v5647 = vmul.f32 %v5644, 1.442695
    %v5648 = vpow.pop %v5647
    %v5649 = vadd.f32 %v5646, 1.0
    %v5650 = vadd.f32 %v5648, 1.0
    %v5651 = vrcp.pop %v5649
    %v5652 = vmul.f32 %v5649, %v5651
    %v5653 = vsub.f32 1.0, %v5652
    %v5654 = vmul.f32 %v5651, %v5653
    %v5655 = vadd.f32 %v5651, %v5654
    %vm5656 = vweird.f32 %v5649
    %vm5657 = vweird.f32 %v5651
    %vm5658 = vmor %vm5656, %vm5657
    %v5659 = vsel %vm5658, %v5651, %v5655
    %v5660 = vand.u32 2147483647, %v5649
    %vm5661 = vcmp.eq.f32.partialorder %v5660, 8.507059e+37
    %v5662 = vand.u32 %v5649, 2147483648
    %v5663 = vor.u32 1.1754944e-38, %v5662
    %v5664 = vsel %vm5661, %v5663, %v5659
    %v5665 = vmul.f32 1.0, %v5664
    %v5666 = vrcp.pop %v5650
    %v5667 = vmul.f32 %v5650, %v5666
    %v5668 = vsub.f32 1.0, %v5667
    %v5669 = vmul.f32 %v5666, %v5668
    %v5670 = vadd.f32 %v5666, %v5669
    %vm5671 = vweird.f32 %v5650
    %vm5672 = vweird.f32 %v5666
    %vm5673 = vmor %vm5671, %vm5672
    %v5674 = vsel %vm5673, %v5666, %v5670
    %v5675 = vand.u32 2147483647, %v5650
    %vm5676 = vcmp.eq.f32.partialorder %v5675, 8.507059e+37
    %v5677 = vand.u32 %v5650, 2147483648
    %v5678 = vor.u32 1.1754944e-38, %v5677
    %v5679 = vsel %vm5676, %v5678, %v5674
    %v5680 = vmul.f32 1.0, %v5679
    %v5681 = vxor.u32 %v5637, 2147483648
    %v5682 = vxor.u32 %v5638, 2147483648
    %v5683 = vmul.f32 %v5681, 1.442695
    %v5684 = vpow.pop %v5683
    %v5685 = vmul.f32 %v5682, 1.442695
    %v5686 = vpow.pop %v5685
    %v5687 = vadd.f32 %v5684, 1.0
    %v5688 = vadd.f32 %v5686, 1.0
    %v5689 = vrcp.pop %v5687
    %v5690 = vmul.f32 %v5687, %v5689
    %v5691 = vsub.f32 1.0, %v5690
    %v5692 = vmul.f32 %v5689, %v5691
    %v5693 = vadd.f32 %v5689, %v5692
    %vm5694 = vweird.f32 %v5687
    %vm5695 = vweird.f32 %v5689
    %vm5696 = vmor %vm5694, %vm5695
    %v5697 = vsel %vm5696, %v5689, %v5693
    %v5698 = vand.u32 2147483647, %v5687
    %vm5699 = vcmp.eq.f32.partialorder %v5698, 8.507059e+37
    %v5700 = vand.u32 %v5687, 2147483648
    %v5701 = vor.u32 1.1754944e-38, %v5700
    %v5702 = vsel %vm5699, %v5701, %v5697
    %v5703 = vmul.f32 1.0, %v5702
    %v5704 = vrcp.pop %v5688
    %v5705 = vmul.f32 %v5688, %v5704
    %v5706 = vsub.f32 1.0, %v5705
    %v5707 = vmul.f32 %v5704, %v5706
    %v5708 = vadd.f32 %v5704, %v5707
    %vm5709 = vweird.f32 %v5688
    %vm5710 = vweird.f32 %v5704
    %vm5711 = vmor %vm5709, %vm5710
    %v5712 = vsel %vm5711, %v5704, %v5708
    %v5713 = vand.u32 2147483647, %v5688
    %vm5714 = vcmp.eq.f32.partialorder %v5713, 8.507059e+37
    %v5715 = vand.u32 %v5688, 2147483648
    %v5716 = vor.u32 1.1754944e-38, %v5715
    %v5717 = vsel %vm5714, %v5716, %v5712
    %v5718 = vmul.f32 1.0, %v5717
    %v5719 = vtanh.pop %v5639
    %v5720 = vtanh.pop %v5640
    %v5721 = vxor.u32 %v5641, 2147483648
    %v5722 = vxor.u32 %v5642, 2147483648
    %v5723 = vmul.f32 %v5721, 1.442695
    %v5724 = vpow.pop %v5723
    %v5725 = vmul.f32 %v5722, 1.442695
    %v5726 = vpow.pop %v5725
    %v5727 = vadd.f32 %v5724, 1.0
    %v5728 = vadd.f32 %v5726, 1.0
    %v5729 = vrcp.pop %v5727
    %v5730 = vmul.f32 %v5727, %v5729
    %v5731 = vsub.f32 1.0, %v5730
    %v5732 = vmul.f32 %v5729, %v5731
    %v5733 = vadd.f32 %v5729, %v5732
    %vm5734 = vweird.f32 %v5727
    %vm5735 = vweird.f32 %v5729
    %vm5736 = vmor %vm5734, %vm5735
    %v5737 = vsel %vm5736, %v5729, %v5733
    %v5738 = vand.u32 2147483647, %v5727
    %vm5739 = vcmp.eq.f32.partialorder %v5738, 8.507059e+37
    %v5740 = vand.u32 %v5727, 2147483648
    %v5741 = vor.u32 1.1754944e-38, %v5740
    %v5742 = vsel %vm5739, %v5741, %v5737
    %v5743 = vmul.f32 1.0, %v5742
    %v5744 = vrcp.pop %v5728
    %v5745 = vmul.f32 %v5728, %v5744
    %v5746 = vsub.f32 1.0, %v5745
    %v5747 = vmul.f32 %v5744, %v5746
    %v5748 = vadd.f32 %v5744, %v5747
    %vm5749 = vweird.f32 %v5728
    %vm5750 = vweird.f32 %v5744
    %vm5751 = vmor %vm5749, %vm5750
    %v5752 = vsel %vm5751, %v5744, %v5748
    %v5753 = vand.u32 2147483647, %v5728
    %vm5754 = vcmp.eq.f32.partialorder %v5753, 8.507059e+37
    %v5755 = vand.u32 %v5728, 2147483648
    %v5756 = vor.u32 1.1754944e-38, %v5755
    %v5757 = vsel %vm5754, %v5756, %v5752
    %v5758 = vmul.f32 1.0, %v5757
    %v5759 = vmul.f32 %v5703, %v4595
    %v5760 = vmul.f32 %v5718, %v4596
    %v5761 = vmul.f32 %v5665, %v5719
    %v5762 = vmul.f32 %v5680, %v5720
    %v5763 = vadd.f32 %v5759, %v5761
    %v5764 = vadd.f32 %v5760, %v5762
    %v5765 = vtanh.pop %v5763
    %v5766 = vtanh.pop %v5764
    %v5767 = vmul.f32 %v5743, %v5765
    %v5768 = vmul.f32 %v5758, %v5766
    %v5769 = vpack.c.bf16 %v5768, %v5767
    %v5771 = vrot.slane %v5769, 3
    %v5774 = vsel %vm1430, %v5769, %v5771
    %v5776 = vsel %vm1435, %v5769, %v5771
    %v5778 = vrot.slane %v5776, 1
    %v5779 = vsel %vm1439, %v5769, %v5771
    %v5781 = vrot.slane %v5779, 2
    %v5782 = vsel %vm1443, %v5769, %v5771
    %v5784 = vrot.slane %v5782, 3
    %v5785 = vunpack.i.l.s16 %v5774
    %v5786 = vunpack.i.h.s16 %v5774
    %v5787 = vunpack.i.l.s16 %v5778
    %v5788 = vunpack.i.h.s16 %v5778
    %v5789 = vunpack.i.l.s16 %v5781
    %v5790 = vunpack.i.h.s16 %v5781
    %v5791 = vunpack.i.l.s16 %v5784
    %v5792 = vunpack.i.h.s16 %v5784
    %v5793 = vpack.i.b16 %v5785, %v5785
    %v5794 = vperm.slane %v5793, 0
    %v5795 = vperm.slane %v5793, 1
    %5798 = vmatpush.bf16.xpose.msra.mxu0 %v1522
    %5799 = vmatpush.bf16.xpose.msra.mxu0 %v1520
    %5800 = vmatpush.bf16.xpose.msra.mxu0 %v1518
    %5801 = vmatpush.bf16.xpose.msra.mxu0 %v1516
    %5802 = vmatpush.bf16.xpose.msra.mxu0 %v1514
    %5803 = vmatpush.bf16.xpose.msra.mxu0 %v1512
    %5804 = vmatpush.bf16.xpose.msra.mxu0 %v1510
    %5805 = vmatpush.bf16.xpose.msra.mxu0 %v1508
    %5806 = vmatmul.bf16.gmra.mxu0 %v5794
    %v5807 = vpop.f32.mrf.mxu0
    %v5808 = vadd.f32 0.0, %v5807
    %v5809 = vpop.f32.mrf.mxu0
    %5810 = vdwg.mxu0
    %5811 = vmatpush.bf16.xpose.msra.mxu0 %v1523
    %5812 = vmatpush.bf16.xpose.msra.mxu0 %v1521
    %5813 = vmatpush.bf16.xpose.msra.mxu0 %v1519
    %5814 = vmatpush.bf16.xpose.msra.mxu0 %v1517
    %5815 = vmatpush.bf16.xpose.msra.mxu0 %v1515
    %5816 = vmatpush.bf16.xpose.msra.mxu0 %v1513
    %5817 = vmatpush.bf16.xpose.msra.mxu0 %v1511
    %5818 = vmatpush.bf16.xpose.msra.mxu0 %v1509
    %5819 = vmatmul.bf16.gmra.mxu0 %v5795
    %v5820 = vpop.f32.mrf.mxu0
    %v5821 = vadd.f32 %v5808, %v5820
    %v5822 = vpop.f32.mrf.mxu0
    %5823 = vdwg.mxu0
    %v5824 = vpack.i.b16 %v5786, %v5786
    %v5825 = vperm.slane %v5824, 0
    %v5826 = vperm.slane %v5824, 1
    %5829 = vmatpush.bf16.xpose.msra.mxu0 %v1633
    %5830 = vmatpush.bf16.xpose.msra.mxu0 %v1631
    %5831 = vmatpush.bf16.xpose.msra.mxu0 %v1629
    %5832 = vmatpush.bf16.xpose.msra.mxu0 %v1627
    %5833 = vmatpush.bf16.xpose.msra.mxu0 %v1625
    %5834 = vmatpush.bf16.xpose.msra.mxu0 %v1623
    %5835 = vmatpush.bf16.xpose.msra.mxu0 %v1621
    %5836 = vmatpush.bf16.xpose.msra.mxu0 %v1619
    %5837 = vmatmul.bf16.gmra.mxu0 %v5825
    %v5838 = vpop.f32.mrf.mxu0
    %v5839 = vadd.f32 0.0, %v5838
    %v5840 = vpop.f32.mrf.mxu0
    %5841 = vdwg.mxu0
    %5842 = vmatpush.bf16.xpose.msra.mxu0 %v1634
    %5843 = vmatpush.bf16.xpose.msra.mxu0 %v1632
    %5844 = vmatpush.bf16.xpose.msra.mxu0 %v1630
    %5845 = vmatpush.bf16.xpose.msra.mxu0 %v1628
    %5846 = vmatpush.bf16.xpose.msra.mxu0 %v1626
    %5847 = vmatpush.bf16.xpose.msra.mxu0 %v1624
    %5848 = vmatpush.bf16.xpose.msra.mxu0 %v1622
    %5849 = vmatpush.bf16.xpose.msra.mxu0 %v1620
    %5850 = vmatmul.bf16.gmra.mxu0 %v5826
    %v5851 = vpop.f32.mrf.mxu0
    %v5852 = vadd.f32 %v5839, %v5851
    %v5853 = vpop.f32.mrf.mxu0
    %5854 = vdwg.mxu0
    %v5855 = vpack.i.b16 %v5787, %v5787
    %v5856 = vperm.slane %v5855, 0
    %v5857 = vperm.slane %v5855, 1
    %5860 = vmatpush.bf16.xpose.msra.mxu0 %v1744
    %5861 = vmatpush.bf16.xpose.msra.mxu0 %v1742
    %5862 = vmatpush.bf16.xpose.msra.mxu0 %v1740
    %5863 = vmatpush.bf16.xpose.msra.mxu0 %v1738
    %5864 = vmatpush.bf16.xpose.msra.mxu0 %v1736
    %5865 = vmatpush.bf16.xpose.msra.mxu0 %v1734
    %5866 = vmatpush.bf16.xpose.msra.mxu0 %v1732
    %5867 = vmatpush.bf16.xpose.msra.mxu0 %v1730
    %5868 = vmatmul.bf16.gmra.mxu0 %v5856
    %v5869 = vpop.f32.mrf.mxu0
    %v5870 = vadd.f32 0.0, %v5869
    %v5871 = vpop.f32.mrf.mxu0
    %5872 = vdwg.mxu0
    %5873 = vmatpush.bf16.xpose.msra.mxu0 %v1745
    %5874 = vmatpush.bf16.xpose.msra.mxu0 %v1743
    %5875 = vmatpush.bf16.xpose.msra.mxu0 %v1741
    %5876 = vmatpush.bf16.xpose.msra.mxu0 %v1739
    %5877 = vmatpush.bf16.xpose.msra.mxu0 %v1737
    %5878 = vmatpush.bf16.xpose.msra.mxu0 %v1735
    %5879 = vmatpush.bf16.xpose.msra.mxu0 %v1733
    %5880 = vmatpush.bf16.xpose.msra.mxu0 %v1731
    %5881 = vmatmul.bf16.gmra.mxu0 %v5857
    %v5882 = vpop.f32.mrf.mxu0
    %v5883 = vadd.f32 %v5870, %v5882
    %v5884 = vpop.f32.mrf.mxu0
    %5885 = vdwg.mxu0
    %v5886 = vpack.i.b16 %v5788, %v5788
    %v5887 = vperm.slane %v5886, 0
    %v5888 = vperm.slane %v5886, 1
    %5891 = vmatpush.bf16.xpose.msra.mxu0 %v1855
    %5892 = vmatpush.bf16.xpose.msra.mxu0 %v1853
    %5893 = vmatpush.bf16.xpose.msra.mxu0 %v1851
    %5894 = vmatpush.bf16.xpose.msra.mxu0 %v1849
    %5895 = vmatpush.bf16.xpose.msra.mxu0 %v1847
    %5896 = vmatpush.bf16.xpose.msra.mxu0 %v1845
    %5897 = vmatpush.bf16.xpose.msra.mxu0 %v1843
    %5898 = vmatpush.bf16.xpose.msra.mxu0 %v1841
    %5899 = vmatmul.bf16.gmra.mxu0 %v5887
    %v5900 = vpop.f32.mrf.mxu0
    %v5901 = vadd.f32 0.0, %v5900
    %v5902 = vpop.f32.mrf.mxu0
    %5903 = vdwg.mxu0
    %5904 = vmatpush.bf16.xpose.msra.mxu0 %v1856
    %5905 = vmatpush.bf16.xpose.msra.mxu0 %v1854
    %5906 = vmatpush.bf16.xpose.msra.mxu0 %v1852
    %5907 = vmatpush.bf16.xpose.msra.mxu0 %v1850
    %5908 = vmatpush.bf16.xpose.msra.mxu0 %v1848
    %5909 = vmatpush.bf16.xpose.msra.mxu0 %v1846
    %5910 = vmatpush.bf16.xpose.msra.mxu0 %v1844
    %5911 = vmatpush.bf16.xpose.msra.mxu0 %v1842
    %5912 = vmatmul.bf16.gmra.mxu0 %v5888
    %v5913 = vpop.f32.mrf.mxu0
    %v5914 = vadd.f32 %v5901, %v5913
    %v5915 = vpop.f32.mrf.mxu0
    %5916 = vdwg.mxu0
    %v5917 = vpack.i.b16 %v5789, %v5789
    %v5918 = vperm.slane %v5917, 0
    %v5919 = vperm.slane %v5917, 1
    %5922 = vmatpush.bf16.xpose.msra.mxu0 %v1966
    %5923 = vmatpush.bf16.xpose.msra.mxu0 %v1964
    %5924 = vmatpush.bf16.xpose.msra.mxu0 %v1962
    %5925 = vmatpush.bf16.xpose.msra.mxu0 %v1960
    %5926 = vmatpush.bf16.xpose.msra.mxu0 %v1958
    %5927 = vmatpush.bf16.xpose.msra.mxu0 %v1956
    %5928 = vmatpush.bf16.xpose.msra.mxu0 %v1954
    %5929 = vmatpush.bf16.xpose.msra.mxu0 %v1952
    %5930 = vmatmul.bf16.gmra.mxu0 %v5918
    %v5931 = vpop.f32.mrf.mxu0
    %v5932 = vadd.f32 0.0, %v5931
    %v5933 = vpop.f32.mrf.mxu0
    %5934 = vdwg.mxu0
    %5935 = vmatpush.bf16.xpose.msra.mxu0 %v1967
    %5936 = vmatpush.bf16.xpose.msra.mxu0 %v1965
    %5937 = vmatpush.bf16.xpose.msra.mxu0 %v1963
    %5938 = vmatpush.bf16.xpose.msra.mxu0 %v1961
    %5939 = vmatpush.bf16.xpose.msra.mxu0 %v1959
    %5940 = vmatpush.bf16.xpose.msra.mxu0 %v1957
    %5941 = vmatpush.bf16.xpose.msra.mxu0 %v1955
    %5942 = vmatpush.bf16.xpose.msra.mxu0 %v1953
    %5943 = vmatmul.bf16.gmra.mxu0 %v5919
    %v5944 = vpop.f32.mrf.mxu0
    %v5945 = vadd.f32 %v5932, %v5944
    %v5946 = vpop.f32.mrf.mxu0
    %5947 = vdwg.mxu0
    %v5948 = vpack.i.b16 %v5790, %v5790
    %v5949 = vperm.slane %v5948, 0
    %v5950 = vperm.slane %v5948, 1
    %5953 = vmatpush.bf16.xpose.msra.mxu0 %v2077
    %5954 = vmatpush.bf16.xpose.msra.mxu0 %v2075
    %5955 = vmatpush.bf16.xpose.msra.mxu0 %v2073
    %5956 = vmatpush.bf16.xpose.msra.mxu0 %v2071
    %5957 = vmatpush.bf16.xpose.msra.mxu0 %v2069
    %5958 = vmatpush.bf16.xpose.msra.mxu0 %v2067
    %5959 = vmatpush.bf16.xpose.msra.mxu0 %v2065
    %5960 = vmatpush.bf16.xpose.msra.mxu0 %v2063
    %5961 = vmatmul.bf16.gmra.mxu0 %v5949
    %v5962 = vpop.f32.mrf.mxu0
    %v5963 = vadd.f32 0.0, %v5962
    %v5964 = vpop.f32.mrf.mxu0
    %5965 = vdwg.mxu0
    %5966 = vmatpush.bf16.xpose.msra.mxu0 %v2078
    %5967 = vmatpush.bf16.xpose.msra.mxu0 %v2076
    %5968 = vmatpush.bf16.xpose.msra.mxu0 %v2074
    %5969 = vmatpush.bf16.xpose.msra.mxu0 %v2072
    %5970 = vmatpush.bf16.xpose.msra.mxu0 %v2070
    %5971 = vmatpush.bf16.xpose.msra.mxu0 %v2068
    %5972 = vmatpush.bf16.xpose.msra.mxu0 %v2066
    %5973 = vmatpush.bf16.xpose.msra.mxu0 %v2064
    %5974 = vmatmul.bf16.gmra.mxu0 %v5950
    %v5975 = vpop.f32.mrf.mxu0
    %v5976 = vadd.f32 %v5963, %v5975
    %v5977 = vpop.f32.mrf.mxu0
    %5978 = vdwg.mxu0
    %v5979 = vpack.i.b16 %v5791, %v5791
    %v5980 = vperm.slane %v5979, 0
    %v5981 = vperm.slane %v5979, 1
    %5984 = vmatpush.bf16.xpose.msra.mxu0 %v2188
    %5985 = vmatpush.bf16.xpose.msra.mxu0 %v2186
    %5986 = vmatpush.bf16.xpose.msra.mxu0 %v2184
    %5987 = vmatpush.bf16.xpose.msra.mxu0 %v2182
    %5988 = vmatpush.bf16.xpose.msra.mxu0 %v2180
    %5989 = vmatpush.bf16.xpose.msra.mxu0 %v2178
    %5990 = vmatpush.bf16.xpose.msra.mxu0 %v2176
    %5991 = vmatpush.bf16.xpose.msra.mxu0 %v2174
    %5992 = vmatmul.bf16.gmra.mxu0 %v5980
    %v5993 = vpop.f32.mrf.mxu0
    %v5994 = vadd.f32 0.0, %v5993
    %v5995 = vpop.f32.mrf.mxu0
    %5996 = vdwg.mxu0
    %5997 = vmatpush.bf16.xpose.msra.mxu0 %v2189
    %5998 = vmatpush.bf16.xpose.msra.mxu0 %v2187
    %5999 = vmatpush.bf16.xpose.msra.mxu0 %v2185
    %6000 = vmatpush.bf16.xpose.msra.mxu0 %v2183
    %6001 = vmatpush.bf16.xpose.msra.mxu0 %v2181
    %6002 = vmatpush.bf16.xpose.msra.mxu0 %v2179
    %6003 = vmatpush.bf16.xpose.msra.mxu0 %v2177
    %6004 = vmatpush.bf16.xpose.msra.mxu0 %v2175
    %6005 = vmatmul.bf16.gmra.mxu0 %v5981
    %v6006 = vpop.f32.mrf.mxu0
    %v6007 = vadd.f32 %v5994, %v6006
    %v6008 = vpop.f32.mrf.mxu0
    %6009 = vdwg.mxu0
    %v6010 = vpack.i.b16 %v5792, %v5792
    %v6011 = vperm.slane %v6010, 0
    %v6012 = vperm.slane %v6010, 1
    %6015 = vmatpush.bf16.xpose.msra.mxu0 %v2299
    %6016 = vmatpush.bf16.xpose.msra.mxu0 %v2297
    %6017 = vmatpush.bf16.xpose.msra.mxu0 %v2295
    %6018 = vmatpush.bf16.xpose.msra.mxu0 %v2293
    %6019 = vmatpush.bf16.xpose.msra.mxu0 %v2291
    %6020 = vmatpush.bf16.xpose.msra.mxu0 %v2289
    %6021 = vmatpush.bf16.xpose.msra.mxu0 %v2287
    %6022 = vmatpush.bf16.xpose.msra.mxu0 %v2285
    %6023 = vmatmul.bf16.gmra.mxu0 %v6011
    %v6024 = vpop.f32.mrf.mxu0
    %v6025 = vadd.f32 0.0, %v6024
    %v6026 = vpop.f32.mrf.mxu0
    %6027 = vdwg.mxu0
    %6028 = vmatpush.bf16.xpose.msra.mxu0 %v2300
    %6029 = vmatpush.bf16.xpose.msra.mxu0 %v2298
    %6030 = vmatpush.bf16.xpose.msra.mxu0 %v2296
    %6031 = vmatpush.bf16.xpose.msra.mxu0 %v2294
    %6032 = vmatpush.bf16.xpose.msra.mxu0 %v2292
    %6033 = vmatpush.bf16.xpose.msra.mxu0 %v2290
    %6034 = vmatpush.bf16.xpose.msra.mxu0 %v2288
    %6035 = vmatpush.bf16.xpose.msra.mxu0 %v2286
    %6036 = vmatmul.bf16.gmra.mxu0 %v6012
    %v6037 = vpop.f32.mrf.mxu0
    %v6038 = vadd.f32 %v6025, %v6037
    %v6039 = vpop.f32.mrf.mxu0
    %6040 = vdwg.mxu0
    %v6041 = vadd.f32 %v5821, %v435
    %v6042 = vadd.f32 %v5852, %v435
    %v6043 = vadd.f32 %v5883, %v435
    %v6044 = vadd.f32 %v5914, %v435
    %v6045 = vadd.f32 %v5945, %v435
    %v6046 = vadd.f32 %v5976, %v435
    %v6047 = vadd.f32 %v6007, %v435
    %v6048 = vadd.f32 %v6038, %v435
    %v6057 = vrot.slane %v6042, 7
    %v6058 = vsel %vm1435, %v6057, %v6041
    %v6059 = vrot.slane %v6043, 6
    %v6060 = vsel %vm1439, %v6059, %v6058
    %v6061 = vrot.slane %v6044, 5
    %v6062 = vsel %vm1443, %v6061, %v6060
    %v6063 = vrot.slane %v6045, 4
    %v6064 = vsel %vm2366, %v6063, %v6062
    %v6065 = vrot.slane %v6046, 3
    %v6066 = vsel %vm2369, %v6065, %v6064
    %v6067 = vrot.slane %v6047, 2
    %v6068 = vsel %vm2372, %v6067, %v6066
    %v6069 = vrot.slane %v6048, 1
    %v6070 = vsel %vm2375, %v6069, %v6068
    %6072 = vmax.xlane.f32.xlu0 %v6070
    %v6073 = vpop.xlane.xlu0 %6072
    %v6075 = vrot.slane %v6073, 1
    %v6076 = vrot.slane %v6073, 2
    %v6077 = vrot.slane %v6073, 3
    %v6078 = vrot.slane %v6073, 4
    %v6079 = vrot.slane %v6073, 5
    %v6080 = vrot.slane %v6073, 6
    %v6081 = vrot.slane %v6073, 7
    %v6090 = vsub.f32 %v6041, %v6073
    %v6091 = vsub.f32 %v6042, %v6075
    %v6092 = vsub.f32 %v6043, %v6076
    %v6093 = vsub.f32 %v6044, %v6077
    %v6094 = vsub.f32 %v6045, %v6078
    %v6095 = vsub.f32 %v6046, %v6079
    %v6096 = vsub.f32 %v6047, %v6080
    %v6097 = vsub.f32 %v6048, %v6081
    %v6098 = vmul.f32 %v6090, 1.442695
    %v6099 = vpow.pop %v6098
    %v6100 = vmul.f32 %v6091, 1.442695
    %v6101 = vpow.pop %v6100
    %v6102 = vmul.f32 %v6092, 1.442695
    %v6103 = vpow.pop %v6102
    %v6104 = vmul.f32 %v6093, 1.442695
    %v6105 = vpow.pop %v6104
    %v6106 = vmul.f32 %v6094, 1.442695
    %v6107 = vpow.pop %v6106
    %v6108 = vmul.f32 %v6095, 1.442695
    %v6109 = vpow.pop %v6108
    %v6110 = vmul.f32 %v6096, 1.442695
    %v6111 = vpow.pop %v6110
    %v6112 = vmul.f32 %v6097, 1.442695
    %v6113 = vpow.pop %v6112
    %v6122 = vrot.slane %v6101, 7
    %v6123 = vsel %vm1435, %v6122, %v6099
    %v6124 = vrot.slane %v6103, 6
    %v6125 = vsel %vm1439, %v6124, %v6123
    %v6126 = vrot.slane %v6105, 5
    %v6127 = vsel %vm1443, %v6126, %v6125
    %v6128 = vrot.slane %v6107, 4
    %v6129 = vsel %vm2366, %v6128, %v6127
    %v6130 = vrot.slane %v6109, 3
    %v6131 = vsel %vm2369, %v6130, %v6129
    %v6132 = vrot.slane %v6111, 2
    %v6133 = vsel %vm2372, %v6132, %v6131
    %v6134 = vrot.slane %v6113, 1
    %v6135 = vsel %vm2375, %v6134, %v6133
    %6137 = vadd.xlane.f32.xlu0 %v6135
    %v6138 = vpop.xlane.xlu0 %6137
    %v6139 = vrcp.pop %v6138
    %v6140 = vmul.f32 %v6138, %v6139
    %v6141 = vsub.f32 1.0, %v6140
    %v6142 = vmul.f32 %v6139, %v6141
    %v6143 = vadd.f32 %v6139, %v6142
    %vm6144 = vweird.f32 %v6138
    %vm6145 = vweird.f32 %v6139
    %vm6146 = vmor %vm6144, %vm6145
    %v6147 = vsel %vm6146, %v6139, %v6143
    %v6148 = vand.u32 2147483647, %v6138
    %vm6149 = vcmp.eq.f32.partialorder %v6148, 8.507059e+37
    %v6150 = vand.u32 %v6138, 2147483648
    %v6151 = vor.u32 1.1754944e-38, %v6150
    %v6152 = vsel %vm6149, %v6151, %v6147
    %v6153 = vmul.f32 1.0, %v6152
    %v6154 = vpack.c.bf16 %v6099, %v6099
    %v6155 = vpack.c.bf16 %v6101, %v6101
    %v6156 = vpack.c.bf16 %v6103, %v6103
    %v6157 = vpack.c.bf16 %v6105, %v6105
    %v6158 = vpack.c.bf16 %v6107, %v6107
    %v6159 = vpack.c.bf16 %v6109, %v6109
    %v6160 = vpack.c.bf16 %v6111, %v6111
    %v6161 = vpack.c.bf16 %v6113, %v6113
    %6162 = vmatpush.bf16.msra.mxu0 %v1522
    %6163 = vmatpush.bf16.msra.mxu0 %v1520
    %6164 = vmatpush.bf16.msra.mxu0 %v1518
    %6165 = vmatpush.bf16.msra.mxu0 %v1516
    %6166 = vmatpush.bf16.msra.mxu0 %v1514
    %6167 = vmatpush.bf16.msra.mxu0 %v1512
    %6168 = vmatpush.bf16.msra.mxu0 %v1510
    %6169 = vmatpush.bf16.msra.mxu0 %v1508
    %6170 = vmatmul.bf16.gmra.mxu0 %v6154
    %v6171 = vpop.f32.mrf.mxu0
    %v6172 = vadd.f32 0.0, %v6171
    %v6173 = vpop.f32.mrf.mxu0
    %6174 = vdwg.mxu0
    %6175 = vmatpush.bf16.msra.mxu0 %v1523
    %6176 = vmatpush.bf16.msra.mxu0 %v1521
    %6177 = vmatpush.bf16.msra.mxu0 %v1519
    %6178 = vmatpush.bf16.msra.mxu0 %v1517
    %6179 = vmatpush.bf16.msra.mxu0 %v1515
    %6180 = vmatpush.bf16.msra.mxu0 %v1513
    %6181 = vmatpush.bf16.msra.mxu0 %v1511
    %6182 = vmatpush.bf16.msra.mxu0 %v1509
    %6183 = vmatmul.bf16.gmra.mxu0 %v6154
    %v6184 = vpop.f32.mrf.mxu0
    %v6185 = vadd.f32 0.0, %v6184
    %v6186 = vpop.f32.mrf.mxu0
    %6187 = vdwg.mxu0
    %6188 = vmatpush.bf16.msra.mxu0 %v1633
    %6189 = vmatpush.bf16.msra.mxu0 %v1631
    %6190 = vmatpush.bf16.msra.mxu0 %v1629
    %6191 = vmatpush.bf16.msra.mxu0 %v1627
    %6192 = vmatpush.bf16.msra.mxu0 %v1625
    %6193 = vmatpush.bf16.msra.mxu0 %v1623
    %6194 = vmatpush.bf16.msra.mxu0 %v1621
    %6195 = vmatpush.bf16.msra.mxu0 %v1619
    %6196 = vmatmul.bf16.gmra.mxu0 %v6155
    %v6197 = vpop.f32.mrf.mxu0
    %v6198 = vadd.f32 0.0, %v6197
    %v6199 = vpop.f32.mrf.mxu0
    %6200 = vdwg.mxu0
    %6201 = vmatpush.bf16.msra.mxu0 %v1634
    %6202 = vmatpush.bf16.msra.mxu0 %v1632
    %6203 = vmatpush.bf16.msra.mxu0 %v1630
    %6204 = vmatpush.bf16.msra.mxu0 %v1628
    %6205 = vmatpush.bf16.msra.mxu0 %v1626
    %6206 = vmatpush.bf16.msra.mxu0 %v1624
    %6207 = vmatpush.bf16.msra.mxu0 %v1622
    %6208 = vmatpush.bf16.msra.mxu0 %v1620
    %6209 = vmatmul.bf16.gmra.mxu0 %v6155
    %v6210 = vpop.f32.mrf.mxu0
    %v6211 = vadd.f32 0.0, %v6210
    %v6212 = vpop.f32.mrf.mxu0
    %6213 = vdwg.mxu0
    %6214 = vmatpush.bf16.msra.mxu0 %v1744
    %6215 = vmatpush.bf16.msra.mxu0 %v1742
    %6216 = vmatpush.bf16.msra.mxu0 %v1740
    %6217 = vmatpush.bf16.msra.mxu0 %v1738
    %6218 = vmatpush.bf16.msra.mxu0 %v1736
    %6219 = vmatpush.bf16.msra.mxu0 %v1734
    %6220 = vmatpush.bf16.msra.mxu0 %v1732
    %6221 = vmatpush.bf16.msra.mxu0 %v1730
    %6222 = vmatmul.bf16.gmra.mxu0 %v6156
    %v6223 = vpop.f32.mrf.mxu0
    %v6224 = vadd.f32 0.0, %v6223
    %v6225 = vpop.f32.mrf.mxu0
    %6226 = vdwg.mxu0
    %6227 = vmatpush.bf16.msra.mxu0 %v1745
    %6228 = vmatpush.bf16.msra.mxu0 %v1743
    %6229 = vmatpush.bf16.msra.mxu0 %v1741
    %6230 = vmatpush.bf16.msra.mxu0 %v1739
    %6231 = vmatpush.bf16.msra.mxu0 %v1737
    %6232 = vmatpush.bf16.msra.mxu0 %v1735
    %6233 = vmatpush.bf16.msra.mxu0 %v1733
    %6234 = vmatpush.bf16.msra.mxu0 %v1731
    %6235 = vmatmul.bf16.gmra.mxu0 %v6156
    %v6236 = vpop.f32.mrf.mxu0
    %v6237 = vadd.f32 0.0, %v6236
    %v6238 = vpop.f32.mrf.mxu0
    %6239 = vdwg.mxu0
    %6240 = vmatpush.bf16.msra.mxu0 %v1855
    %6241 = vmatpush.bf16.msra.mxu0 %v1853
    %6242 = vmatpush.bf16.msra.mxu0 %v1851
    %6243 = vmatpush.bf16.msra.mxu0 %v1849
    %6244 = vmatpush.bf16.msra.mxu0 %v1847
    %6245 = vmatpush.bf16.msra.mxu0 %v1845
    %6246 = vmatpush.bf16.msra.mxu0 %v1843
    %6247 = vmatpush.bf16.msra.mxu0 %v1841
    %6248 = vmatmul.bf16.gmra.mxu0 %v6157
    %v6249 = vpop.f32.mrf.mxu0
    %v6250 = vadd.f32 0.0, %v6249
    %v6251 = vpop.f32.mrf.mxu0
    %6252 = vdwg.mxu0
    %6253 = vmatpush.bf16.msra.mxu0 %v1856
    %6254 = vmatpush.bf16.msra.mxu0 %v1854
    %6255 = vmatpush.bf16.msra.mxu0 %v1852
    %6256 = vmatpush.bf16.msra.mxu0 %v1850
    %6257 = vmatpush.bf16.msra.mxu0 %v1848
    %6258 = vmatpush.bf16.msra.mxu0 %v1846
    %6259 = vmatpush.bf16.msra.mxu0 %v1844
    %6260 = vmatpush.bf16.msra.mxu0 %v1842
    %6261 = vmatmul.bf16.gmra.mxu0 %v6157
    %v6262 = vpop.f32.mrf.mxu0
    %v6263 = vadd.f32 0.0, %v6262
    %v6264 = vpop.f32.mrf.mxu0
    %6265 = vdwg.mxu0
    %6266 = vmatpush.bf16.msra.mxu0 %v1966
    %6267 = vmatpush.bf16.msra.mxu0 %v1964
    %6268 = vmatpush.bf16.msra.mxu0 %v1962
    %6269 = vmatpush.bf16.msra.mxu0 %v1960
    %6270 = vmatpush.bf16.msra.mxu0 %v1958
    %6271 = vmatpush.bf16.msra.mxu0 %v1956
    %6272 = vmatpush.bf16.msra.mxu0 %v1954
    %6273 = vmatpush.bf16.msra.mxu0 %v1952
    %6274 = vmatmul.bf16.gmra.mxu0 %v6158
    %v6275 = vpop.f32.mrf.mxu0
    %v6276 = vadd.f32 0.0, %v6275
    %v6277 = vpop.f32.mrf.mxu0
    %6278 = vdwg.mxu0
    %6279 = vmatpush.bf16.msra.mxu0 %v1967
    %6280 = vmatpush.bf16.msra.mxu0 %v1965
    %6281 = vmatpush.bf16.msra.mxu0 %v1963
    %6282 = vmatpush.bf16.msra.mxu0 %v1961
    %6283 = vmatpush.bf16.msra.mxu0 %v1959
    %6284 = vmatpush.bf16.msra.mxu0 %v1957
    %6285 = vmatpush.bf16.msra.mxu0 %v1955
    %6286 = vmatpush.bf16.msra.mxu0 %v1953
    %6287 = vmatmul.bf16.gmra.mxu0 %v6158
    %v6288 = vpop.f32.mrf.mxu0
    %v6289 = vadd.f32 0.0, %v6288
    %v6290 = vpop.f32.mrf.mxu0
    %6291 = vdwg.mxu0
    %6292 = vmatpush.bf16.msra.mxu0 %v2077
    %6293 = vmatpush.bf16.msra.mxu0 %v2075
    %6294 = vmatpush.bf16.msra.mxu0 %v2073
    %6295 = vmatpush.bf16.msra.mxu0 %v2071
    %6296 = vmatpush.bf16.msra.mxu0 %v2069
    %6297 = vmatpush.bf16.msra.mxu0 %v2067
    %6298 = vmatpush.bf16.msra.mxu0 %v2065
    %6299 = vmatpush.bf16.msra.mxu0 %v2063
    %6300 = vmatmul.bf16.gmra.mxu0 %v6159
    %v6301 = vpop.f32.mrf.mxu0
    %v6302 = vadd.f32 0.0, %v6301
    %v6303 = vpop.f32.mrf.mxu0
    %6304 = vdwg.mxu0
    %6305 = vmatpush.bf16.msra.mxu0 %v2078
    %6306 = vmatpush.bf16.msra.mxu0 %v2076
    %6307 = vmatpush.bf16.msra.mxu0 %v2074
    %6308 = vmatpush.bf16.msra.mxu0 %v2072
    %6309 = vmatpush.bf16.msra.mxu0 %v2070
    %6310 = vmatpush.bf16.msra.mxu0 %v2068
    %6311 = vmatpush.bf16.msra.mxu0 %v2066
    %6312 = vmatpush.bf16.msra.mxu0 %v2064
    %6313 = vmatmul.bf16.gmra.mxu0 %v6159
    %v6314 = vpop.f32.mrf.mxu0
    %v6315 = vadd.f32 0.0, %v6314
    %v6316 = vpop.f32.mrf.mxu0
    %6317 = vdwg.mxu0
    %6318 = vmatpush.bf16.msra.mxu0 %v2188
    %6319 = vmatpush.bf16.msra.mxu0 %v2186
    %6320 = vmatpush.bf16.msra.mxu0 %v2184
    %6321 = vmatpush.bf16.msra.mxu0 %v2182
    %6322 = vmatpush.bf16.msra.mxu0 %v2180
    %6323 = vmatpush.bf16.msra.mxu0 %v2178
    %6324 = vmatpush.bf16.msra.mxu0 %v2176
    %6325 = vmatpush.bf16.msra.mxu0 %v2174
    %6326 = vmatmul.bf16.gmra.mxu0 %v6160
    %v6327 = vpop.f32.mrf.mxu0
    %v6328 = vadd.f32 0.0, %v6327
    %v6329 = vpop.f32.mrf.mxu0
    %6330 = vdwg.mxu0
    %6331 = vmatpush.bf16.msra.mxu0 %v2189
    %6332 = vmatpush.bf16.msra.mxu0 %v2187
    %6333 = vmatpush.bf16.msra.mxu0 %v2185
    %6334 = vmatpush.bf16.msra.mxu0 %v2183
    %6335 = vmatpush.bf16.msra.mxu0 %v2181
    %6336 = vmatpush.bf16.msra.mxu0 %v2179
    %6337 = vmatpush.bf16.msra.mxu0 %v2177
    %6338 = vmatpush.bf16.msra.mxu0 %v2175
    %6339 = vmatmul.bf16.gmra.mxu0 %v6160
    %v6340 = vpop.f32.mrf.mxu0
    %v6341 = vadd.f32 0.0, %v6340
    %v6342 = vpop.f32.mrf.mxu0
    %6343 = vdwg.mxu0
    %6344 = vmatpush.bf16.msra.mxu0 %v2299
    %6345 = vmatpush.bf16.msra.mxu0 %v2297
    %6346 = vmatpush.bf16.msra.mxu0 %v2295
    %6347 = vmatpush.bf16.msra.mxu0 %v2293
    %6348 = vmatpush.bf16.msra.mxu0 %v2291
    %6349 = vmatpush.bf16.msra.mxu0 %v2289
    %6350 = vmatpush.bf16.msra.mxu0 %v2287
    %6351 = vmatpush.bf16.msra.mxu0 %v2285
    %6352 = vmatmul.bf16.gmra.mxu0 %v6161
    %v6353 = vpop.f32.mrf.mxu0
    %v6354 = vadd.f32 0.0, %v6353
    %v6355 = vpop.f32.mrf.mxu0
    %6356 = vdwg.mxu0
    %6357 = vmatpush.bf16.msra.mxu0 %v2300
    %6358 = vmatpush.bf16.msra.mxu0 %v2298
    %6359 = vmatpush.bf16.msra.mxu0 %v2296
    %6360 = vmatpush.bf16.msra.mxu0 %v2294
    %6361 = vmatpush.bf16.msra.mxu0 %v2292
    %6362 = vmatpush.bf16.msra.mxu0 %v2290
    %6363 = vmatpush.bf16.msra.mxu0 %v2288
    %6364 = vmatpush.bf16.msra.mxu0 %v2286
    %6365 = vmatmul.bf16.gmra.mxu0 %v6161
    %v6366 = vpop.f32.mrf.mxu0
    %v6367 = vadd.f32 0.0, %v6366
    %v6368 = vpop.f32.mrf.mxu0
    %6369 = vdwg.mxu0
    %v6371 = vrot.slane %v6153, 1
    %v6372 = vrot.slane %v6153, 2
    %v6373 = vrot.slane %v6153, 3
    %v6374 = vrot.slane %v6153, 4
    %v6375 = vrot.slane %v6153, 5
    %v6376 = vrot.slane %v6153, 6
    %v6377 = vrot.slane %v6153, 7
    %v6386 = vmul.f32 %v6172, %v6153
    %v6387 = vmul.f32 %v6185, %v6153
    %v6388 = vmul.f32 %v6198, %v6371
    %v6389 = vmul.f32 %v6211, %v6371
    %v6390 = vmul.f32 %v6224, %v6372
    %v6391 = vmul.f32 %v6237, %v6372
    %v6392 = vmul.f32 %v6250, %v6373
    %v6393 = vmul.f32 %v6263, %v6373
    %v6394 = vmul.f32 %v6276, %v6374
    %v6395 = vmul.f32 %v6289, %v6374
    %v6396 = vmul.f32 %v6302, %v6375
    %v6397 = vmul.f32 %v6315, %v6375
    %v6398 = vmul.f32 %v6328, %v6376
    %v6399 = vmul.f32 %v6341, %v6376
    %v6400 = vmul.f32 %v6354, %v6377
    %v6401 = vmul.f32 %v6367, %v6377
    %v6402 = vmul.f32 %v6099, %v6153
    %v6403 = vmul.f32 %v6101, %v6371
    %v6404 = vmul.f32 %v6103, %v6372
    %v6405 = vmul.f32 %v6105, %v6373
    %v6406 = vmul.f32 %v6107, %v6374
    %v6407 = vmul.f32 %v6109, %v6375
    %v6408 = vmul.f32 %v6111, %v6376
    %v6409 = vmul.f32 %v6113, %v6377
    %v6418 = vrot.slane %v6403, 7
    %v6419 = vsel %vm1435, %v6418, %v6402
    %v6420 = vrot.slane %v6404, 6
    %v6421 = vsel %vm1439, %v6420, %v6419
    %v6422 = vrot.slane %v6405, 5
    %v6423 = vsel %vm1443, %v6422, %v6421
    %v6424 = vrot.slane %v6406, 4
    %v6425 = vsel %vm2366, %v6424, %v6423
    %v6426 = vrot.slane %v6407, 3
    %v6427 = vsel %vm2369, %v6426, %v6425
    %v6428 = vrot.slane %v6408, 2
    %v6429 = vsel %vm2372, %v6428, %v6427
    %v6430 = vrot.slane %v6409, 1
    %v6431 = vsel %vm2375, %v6430, %v6429
    %s6433 = scalar_lea.vmem [#allocation12], 24
    %6434 = vst [vmem:[%s6433] sm:$0xff] %v6431
    %v6435 = vpack.c.bf16 %v6386, %v6386
    %v6436 = vpack.c.bf16 %v6387, %v6387
    %v6437 = vpack.c.bf16 %v6388, %v6388
    %v6438 = vpack.c.bf16 %v6389, %v6389
    %v6439 = vpack.c.bf16 %v6390, %v6390
    %v6440 = vpack.c.bf16 %v6391, %v6391
    %v6441 = vpack.c.bf16 %v6392, %v6392
    %v6442 = vpack.c.bf16 %v6393, %v6393
    %v6443 = vpack.c.bf16 %v6394, %v6394
    %v6444 = vpack.c.bf16 %v6395, %v6395
    %v6445 = vpack.c.bf16 %v6396, %v6396
    %v6446 = vpack.c.bf16 %v6397, %v6397
    %v6447 = vpack.c.bf16 %v6398, %v6398
    %v6448 = vpack.c.bf16 %v6399, %v6399
    %v6449 = vpack.c.bf16 %v6400, %v6400
    %v6450 = vpack.c.bf16 %v6401, %v6401
    %v6467 = vunpack.c.l.b16 %v6435
    %v6468 = vunpack.c.l.b16 %v6436
    %v6469 = vunpack.c.l.b16 %v6437
    %v6470 = vunpack.c.l.b16 %v6438
    %v6471 = vunpack.c.l.b16 %v6439
    %v6472 = vunpack.c.l.b16 %v6440
    %v6473 = vunpack.c.l.b16 %v6441
    %v6474 = vunpack.c.l.b16 %v6442
    %v6475 = vunpack.c.l.b16 %v6443
    %v6476 = vunpack.c.l.b16 %v6444
    %v6477 = vunpack.c.l.b16 %v6445
    %v6478 = vunpack.c.l.b16 %v6446
    %v6479 = vunpack.c.l.b16 %v6447
    %v6480 = vunpack.c.l.b16 %v6448
    %v6481 = vunpack.c.l.b16 %v6449
    %v6482 = vunpack.c.l.b16 %v6450
    %v6483 = vrot.slane %v6469, 7
    %v6484 = vsel %vm1435, %v6483, %v6467
    %v6485 = vrot.slane %v6471, 6
    %v6486 = vsel %vm1439, %v6485, %v6484
    %v6487 = vrot.slane %v6473, 5
    %v6488 = vsel %vm1443, %v6487, %v6486
    %v6489 = vrot.slane %v6475, 4
    %v6490 = vsel %vm2366, %v6489, %v6488
    %v6491 = vrot.slane %v6477, 3
    %v6492 = vsel %vm2369, %v6491, %v6490
    %v6493 = vrot.slane %v6479, 2
    %v6494 = vsel %vm2372, %v6493, %v6492
    %v6495 = vrot.slane %v6481, 1
    %v6496 = vsel %vm2375, %v6495, %v6494
    %v6497 = vrot.slane %v6470, 7
    %v6498 = vsel %vm1435, %v6497, %v6468
    %v6499 = vrot.slane %v6472, 6
    %v6500 = vsel %vm1439, %v6499, %v6498
    %v6501 = vrot.slane %v6474, 5
    %v6502 = vsel %vm1443, %v6501, %v6500
    %v6503 = vrot.slane %v6476, 4
    %v6504 = vsel %vm2366, %v6503, %v6502
    %v6505 = vrot.slane %v6478, 3
    %v6506 = vsel %vm2369, %v6505, %v6504
    %v6507 = vrot.slane %v6480, 2
    %v6508 = vsel %vm2372, %v6507, %v6506
    %v6509 = vrot.slane %v6482, 1
    %v6510 = vsel %vm2375, %v6509, %v6508
    %v6511 = vpack.c.b16 %v6496, %v6496
    %v6512 = vpack.c.b16 %v6510, %v6510
    %6515 = vmatpush.bf16.msra.mxu0 %v2891
    %6516 = vmatpush.bf16.msra.mxu0 %v2890
    %6517 = vmatpush.bf16.msra.mxu0 %v2889
    %6518 = vmatpush.bf16.msra.mxu0 %v2888
    %6519 = vmatpush.bf16.msra.mxu0 %v2887
    %6520 = vmatpush.bf16.msra.mxu0 %v2886
    %6521 = vmatpush.bf16.msra.mxu0 %v2885
    %6522 = vmatpush.bf16.msra.mxu0 %v2884
    %6523 = vmatmul.bf16.gmra.mxu0 %v6511
    %v6524 = vpop.f32.mrf.mxu0
    %v6525 = vadd.f32 0.0, %v6524
    %v6526 = vpop.f32.mrf.mxu0
    %6527 = vdwg.mxu0
    %6528 = vmatpush.bf16.msra.mxu0 %v2899
    %6529 = vmatpush.bf16.msra.mxu0 %v2898
    %6530 = vmatpush.bf16.msra.mxu0 %v2897
    %6531 = vmatpush.bf16.msra.mxu0 %v2896
    %6532 = vmatpush.bf16.msra.mxu0 %v2895
    %6533 = vmatpush.bf16.msra.mxu0 %v2894
    %6534 = vmatpush.bf16.msra.mxu0 %v2893
    %6535 = vmatpush.bf16.msra.mxu0 %v2892
    %6536 = vmatmul.bf16.gmra.mxu0 %v6512
    %v6537 = vpop.f32.mrf.mxu0
    %v6538 = vadd.f32 %v6525, %v6537
    %v6539 = vpop.f32.mrf.mxu0
    %6540 = vdwg.mxu0
    %v6541 = vunpack.c.l.b16 %v5769
    %v6542 = vunpack.c.h.b16 %v5769
    %v6543 = vpack.c.b16 %v6541, %v6541
    %v6544 = vpack.c.b16 %v6542, %v6542
    %6547 = vmatpush.bf16.msra.mxu0 %v3019
    %6548 = vmatpush.bf16.msra.mxu0 %v3018
    %6549 = vmatpush.bf16.msra.mxu0 %v3017
    %6550 = vmatpush.bf16.msra.mxu0 %v3016
    %6551 = vmatpush.bf16.msra.mxu0 %v3015
    %6552 = vmatpush.bf16.msra.mxu0 %v3014
    %6553 = vmatpush.bf16.msra.mxu0 %v3013
    %6554 = vmatpush.bf16.msra.mxu0 %v3012
    %6555 = vmatmul.bf16.gmra.mxu0 %v6543
    %v6556 = vpop.f32.mrf.mxu0
    %v6557 = vadd.f32 %v6538, %v6556
    %v6558 = vpop.f32.mrf.mxu0
    %6559 = vdwg.mxu0
    %6560 = vmatpush.bf16.msra.mxu0 %v3027
    %6561 = vmatpush.bf16.msra.mxu0 %v3026
    %6562 = vmatpush.bf16.msra.mxu0 %v3025
    %6563 = vmatpush.bf16.msra.mxu0 %v3024
    %6564 = vmatpush.bf16.msra.mxu0 %v3023
    %6565 = vmatpush.bf16.msra.mxu0 %v3022
    %6566 = vmatpush.bf16.msra.mxu0 %v3021
    %6567 = vmatpush.bf16.msra.mxu0 %v3020
    %6568 = vmatmul.bf16.gmra.mxu0 %v6544
    %v6569 = vpop.f32.mrf.mxu0
    %v6570 = vadd.f32 %v6557, %v6569
    %v6571 = vpop.f32.mrf.mxu0
    %6572 = vdwg.mxu0
    %v6573 = vadd.f32 %v6570, %v431
    %6574 = vmax.xlane.f32.xlu0 %v6573
    %v6575 = vpop.xlane.xlu0 %6574
    %v6576 = vsub.f32 %v6573, %v6575
    %v6577 = vmul.f32 %v6576, 1.442695
    %v6578 = vpow.pop %v6577
    %6579 = vadd.xlane.f32.xlu0 %v6578
    %v6580 = vpop.xlane.xlu0 %6579
    %v6581 = vlog2.pop %v6580
    %v6582 = vmul.f32 %v6581, 0.6931472
    %v6583 = vsub.f32 %v6576, %v6582
    %s6584 = scalar_lea.vmem [#allocation11], 24
    %6585 = vst [vmem:[%s6584] sm:$0xff] %v6583
    // Predicated region
    $region50: #{tpu_custom_call.1} parent=1 // pred_check
      _
    $region51: #{tpu_custom_call.1} parent=1 // pred_check_branch
      %6587 = sbr.rel (0) target = $region53
    $region52: #{tpu_custom_call.1} parent=1 // pred_region
      %6589 = vsyncadd [#allocation4], 0
      %s6590 = sshll.u32 [#allocation11], 4
      %s6591 = int_to_ptr.vmem [resolvable:$true] %s6590
      %s6592 = sshll.u32 %s7, 4
      %s6593 = int_to_ptr.hbm [resolvable:$true] %s6592
      %6598 = dma.vmem_to_hbm [thread:$0]  %s6591, 512, %s6593, [#allocation4], 128, 128, 8
    $region53: #{tpu_custom_call.1} parent=1 // pred_fallthru
      _
    // Predicated region
    $region54: #{tpu_custom_call.1} parent=1 // pred_check
      _
    $region55: #{tpu_custom_call.1} parent=1 // pred_check_branch
      %6600 = sbr.rel (0) target = $region57
    $region56: #{tpu_custom_call.1} parent=1 // pred_region
      %6602 = vsyncadd [#allocation13], 0
      %s6603 = sshll.u32 [#allocation12], 4
      %s6604 = int_to_ptr.vmem [resolvable:$true] %s6603
      %s6605 = sshll.u32 %s8, 4
      %s6606 = int_to_ptr.hbm [resolvable:$true] %s6605
      %6611 = dma.vmem_to_hbm [thread:$0]  %s6604, 512, %s6606, [#allocation13], 128, 128, 8
    $region57: #{tpu_custom_call.1} parent=1 // pred_fallthru
      _
    // Predicated region
    $region58: #{tpu_custom_call.1} parent=1 // pred_check
      _
    $region59: #{tpu_custom_call.1} parent=1 // pred_check_branch
      %6613 = sbr.rel (0) target = $region61
    $region60: #{tpu_custom_call.1} parent=1 // pred_region
      %6615 = dma.done [#allocation4], 512
    $region61: #{tpu_custom_call.1} parent=1 // pred_fallthru
      _
    // Predicated region
    $region62: #{tpu_custom_call.1} parent=1 // pred_check
      _
    $region63: #{tpu_custom_call.1} parent=1 // pred_check_branch
      %6617 = sbr.rel (0) target = $region65
    $region64: #{tpu_custom_call.1} parent=1 // pred_region
      %6619 = dma.done [#allocation13], 512
    $region65: #{tpu_custom_call.1} parent=1 // pred_fallthru
      _
    %6620 = vsyncpa [#allocation3], 1
    %6621 = vsyncpa [#allocation6], 1
    %6622 = vsyncpa [#allocation9], 1
    %6623 = vsyncpa [#allocation4], 1
    %6624 = vsyncpa [#allocation13], 1

</llo_original>
